<compile_context>
chip_gen: v7x
topology: tpu7x:2x2x1
jax: 0.10.0
libtpu: 0.0.40
codegen_flags: <defaults>
</compile_context>

<pallas_src>
import functools

import jax
import jax.numpy as jnp
from jax.experimental import pallas as pl
from jax.experimental.pallas import tpu as pltpu


_VMEM_BUDGET = 24 * 1024 * 1024  # per-call working-set target (fits all gens)


def _round_up(x, m):
    return ((x + m - 1) // m) * m


def _largest_divisor_leq(n, cap):
    for d in range(min(n, cap), 0, -1):
        if n % d == 0:
            return d
    return 1


def _choose_m_tiling(M):
    """tm, M_pad with minimal padded work (feedback: bound M padding waste)."""
    M8 = _round_up(max(M, 8), 8)
    if M8 <= 256:
        return M8, M8
    best_tm, best_pad = None, None
    for tm in (512, 256, 128):
        m_pad = _round_up(M, tm)
        if best_pad is None or m_pad < best_pad:
            best_tm, best_pad = tm, m_pad
    return best_tm, best_pad


def _choose_n_tiling(cout, m_tiles):
    N_pad = _round_up(cout, 128)
    if m_tiles >= 2:
        # M already provides parallel tiles -> widest lane-dense N tile so the
        # (9x-inflated) patch tile is read only once per N.
        if N_pad <= 512:
            tn = N_pad
        elif N_pad % 512 == 0:
            tn = 512
        elif N_pad % 256 == 0:
            tn = 256
        else:
            tn = 128
    else:
        # Single M tile: keep >=2 N tiles so a v7x megacore parallel axis has
        # extent >= 2 (still only 2 tiles -> near-minimal grid steps).
        half = N_pad // 2
        tn = half if (N_pad >= 256 and half % 128 == 0) else N_pad
    return tn, N_pad


def _choose_k_tiling(K, tm, tn):
    K_pad = _round_up(K, 128)
    for tk in (4608, 2304, 2048, 1536, 1152, 1024, 768, 576, 512, 384, 256, 128):
        if tk > K_pad or K_pad % tk != 0:
            continue
        vmem = (2 * tm * tk * 2          # A, double-buffered bf16
                + 2 * tk * tn * 2        # W, double-buffered bf16
                + 2 * tm * tn * 2 * 2    # output + residual, db bf16
                + tm * tn * 4            # f32 accumulator scratch
                + 2 * tn * 4 * 2)        # bias
        if vmem <= _VMEM_BUDGET:
            return tk, K_pad
    return 128, K_pad


# ----------------------------- Pallas kernels ------------------------------

def _conv_bn_kernel(a_ref, w_ref, b_ref, *rest, relu, add_res):
    """Fused (patches @ W_scale_folded) + bias [+ residual] [+ relu].

    Grid = (M tiles, N tiles, K tiles); K is the innermost "arbitrary"
    reduction axis, accumulated in a VMEM f32 scratch.  Output is bf16.
    """
    if add_res:
        r_ref, o_ref, acc_ref = rest
    else:
        o_ref, acc_ref = rest
        r_ref = None

    k = pl.program_id(2)

    @pl.when(k == 0)
    def _():
        acc_ref[...] = jnp.zeros_like(acc_ref)

    acc_ref[...] += jnp.dot(a_ref[...], w_ref[...],
                            preferred_element_type=jnp.float32)

    @pl.when(k == pl.num_programs(2) - 1)
    def _():
        out = acc_ref[...] + b_ref[...]
        if add_res:
            out = out + r_ref[...].astype(jnp.float32)
        if relu:
            out = jnp.maximum(out, 0.0)
        o_ref[...] = out.astype(o_ref.dtype)


def _maxpool_nonoverlap_kernel(x_ref, o_ref):
    """Non-overlapping pool; x block (tm, kh, Wo, kw*C) -> out (tm, Wo, C)."""
    c = o_ref.shape[-1]
    kh = x_ref.shape[1]
    kw = x_ref.shape[-1] // c
    v = x_ref[...]
    m = v[:, 0]
    for i in range(1, kh):
        m = jnp.maximum(m, v[:, i])                # (tm, Wo, kw*C)
    out = m[..., :c]
    for j in range(1, kw):
        out = jnp.maximum(out, m[..., j * c:(j + 1) * c])
    o_ref[...] = out


def _maxpool_windows_kernel(*refs):
    # refs = (win_0, ..., win_{kh*kw-1}, out); elementwise max over windows.
    *in_refs, o_ref = refs
    m = in_refs[0][...]
    for r in in_refs[1:]:
        m = jnp.maximum(m, r[...])
    o_ref[...] = m


# ------------------------------ JAX glue ops --------------------------------

def _im2col(x, kh, kw, stride, padding):
    """x: (N, H, W, C) -> patches (N, Ho, Wo, kh*kw*C)."""
    sh, sw = stride
    ph, pw = padding
    xp = jnp.pad(x, ((0, 0), (ph, ph), (pw, pw), (0, 0)))
    N, Hp, Wp, C = xp.shape
    Ho = (Hp - kh) // sh + 1
    Wo = (Wp - kw) // sw + 1
    cols = []
    for i in range(kh):
        for j in range(kw):
            cols.append(xp[:, i:i + sh * Ho:sh, j:j + sw * Wo:sw, :])
    patches = jnp.concatenate(cols, axis=-1)
    return patches, Ho, Wo


def conv_bn(x, w, scale, bias, stride=(1, 1), padding=(1, 1), relu=True,
            residual=None):
    """Fused Conv2d (no bias) + BatchNorm(eval) [+ residual] [+ ReLU], bf16 out."""
    kh, kw, cin, cout = w.shape
    x = x.astype(jnp.bfloat16)  # im2col blow-up is materialized in bf16
    patches, Ho, Wo = _im2col(x, kh, kw, stride, padding)
    N = x.shape[0]
    M = N * Ho * Wo
    K = kh * kw * cin

    tm, M_pad = _choose_m_tiling(M)
    tn, N_pad = _choose_n_tiling(cout, M_pad // tm)
    tk, K_pad = _choose_k_tiling(K, tm, tn)

    a = patches.reshape(M, K)
    if (M_pad, K_pad) != (M, K):
        a = jnp.pad(a, ((0, M_pad - M), (0, K_pad - K)))

    # Fold BN scale into the weights (f32 multiply, then bf16 for the MXU).
    wm = (w.reshape(K, cout).astype(jnp.float32)
          * scale.astype(jnp.float32)[None, :]).astype(jnp.bfloat16)
    if (K_pad, N_pad) != (K, cout):
        wm = jnp.pad(wm, ((0, K_pad - K), (0, N_pad - cout)))
    b = jnp.pad(bias.reshape(1, cout).astype(jnp.float32),
                ((0, 0), (0, N_pad - cout)))

    in_specs = [
        pl.BlockSpec((tm, tk), lambda i, j, k: (i, k)),
        pl.BlockSpec((tk, tn), lambda i, j, k: (k, j)),
        pl.BlockSpec((1, tn), lambda i, j, k: (0, j)),
    ]
    inputs = [a, wm, b]

    add_res = residual is not None
    if add_res:
        r = residual.reshape(M, cout).astype(jnp.bfloat16)
        if (M_pad, N_pad) != (M, cout):
            r = jnp.pad(r, ((0, M_pad - M), (0, N_pad - cout)))
        in_specs.append(pl.BlockSpec((tm, tn), lambda i, j, k: (i, j)))
        inputs.append(r)

    n_i, n_j, n_k = M_pad // tm, N_pad // tn, K_pad // tk
    flops = 2 * M_pad * K_pad * N_pad
    bytes_accessed = int(
        M_pad * K_pad * 2 * n_j          # patches re-read once per N tile
        + K_pad * N_pad * 2 * n_i        # weights re-read once per M tile
        + N_pad * 4 * n_i * n_j          # bias
        + (M_pad * N_pad * 2 if add_res else 0)
        + M_pad * N_pad * 2)             # bf16 output writeback

    out = pl.pallas_call(
        functools.partial(_conv_bn_kernel, relu=relu, add_res=add_res),
        out_shape=jax.ShapeDtypeStruct((M_pad, N_pad), jnp.bfloat16),
        grid=(n_i, n_j, n_k),
        in_specs=in_specs,
        out_specs=pl.BlockSpec((tm, tn), lambda i, j, k: (i, j)),
        scratch_shapes=[pltpu.VMEM((tm, tn), jnp.float32)],
        compiler_params=pltpu.CompilerParams(
            dimension_semantics=("parallel", "parallel", "arbitrary"),
            vmem_limit_bytes=32 * 1024 * 1024),
        cost_estimate=pl.CostEstimate(
            flops=flops, transcendentals=0, bytes_accessed=bytes_accessed),
    )(*inputs)

    return out[:M, :cout].reshape(N, Ho, Wo, cout)


def maxpool2d(x, kernel=(2, 2), stride=(2, 2), padding=(0, 0)):
    kh, kw = kernel
    sh, sw = stride
    ph, pw = padding
    N, H, W, C = x.shape

    if (kh, kw) == (sh, sw) and (ph, pw) == (0, 0):
        # Non-overlapping pool: single reshaped input (no HBM window copies).
        Ho, Wo = H // kh, W // kw
        x = x[:, :Ho * kh, :Wo * kw, :]          # floor-mode crop (no-op if even)
        rows = N * Ho
        x5 = x.reshape(rows, kh, Wo, kw * C)     # pure row-major reshape
        bytes_per_row = kh * max(Wo, 8) * max(kw * C, 128) * x.dtype.itemsize
        cap = max(1, (2 * 1024 * 1024) // bytes_per_row)
        tm = _largest_divisor_leq(rows, cap)
        out = pl.pallas_call(
            _maxpool_nonoverlap_kernel,
            out_shape=jax.ShapeDtypeStruct((rows, Wo, C), x.dtype),
            grid=(rows // tm,),
            in_specs=[pl.BlockSpec((tm, kh, Wo, kw * C),
                                   lambda i: (i, 0, 0, 0))],
            out_specs=pl.BlockSpec((tm, Wo, C), lambda i: (i, 0, 0)),
            compiler_params=pltpu.CompilerParams(
                dimension_semantics=("parallel",),
                vmem_limit_bytes=32 * 1024 * 1024),
        )(x5)
        return out.reshape(N, Ho, Wo, C)

    # Overlapping / padded pool: per-window strided slices (bf16, unpadded C).
    xp = jnp.pad(x, ((0, 0), (ph, ph), (pw, pw), (0, 0)),
                 constant_values=float("-inf"))
    Hp, Wp = xp.shape[1], xp.shape[2]
    Ho = (Hp - kh) // sh + 1
    Wo = (Wp - kw) // sw + 1
    M = N * Ho * Wo
    tm, M_pad = _choose_m_tiling(M)

    wins = []
    for i in range(kh):
        for j in range(kw):
            win = xp[:, i:i + sh * Ho:sh, j:j + sw * Wo:sw, :].reshape(M, C)
            if M_pad != M:
                win = jnp.pad(win, ((0, M_pad - M), (0, 0)))
            wins.append(win)

    out = pl.pallas_call(
        _maxpool_windows_kernel,
        out_shape=jax.ShapeDtypeStruct((M_pad, C), x.dtype),
        grid=(M_pad // tm,),
        in_specs=[pl.BlockSpec((tm, C), lambda i: (i, 0)) for _ in wins],
        out_specs=pl.BlockSpec((tm, C), lambda i: (i, 0)),
        compiler_params=pltpu.CompilerParams(
            dimension_semantics=("parallel",),
            vmem_limit_bytes=32 * 1024 * 1024),
    )(*wins)
    return out[:M].reshape(N, Ho, Wo, C)


# ----------------------------- parameter init -------------------------------

def _make_conv(key, kh, kw, cin, cout):
    fan_in = kh * kw * cin
    return (jax.random.normal(key, (kh, kw, cin, cout), jnp.float32)
            * (1.0 / jnp.sqrt(float(fan_in))))


def _make_bn(key, c, eps=1e-5):
    k1, k2, k3, k4 = jax.random.split(key, 4)
    gamma = jax.random.uniform(k1, (c,), jnp.float32, 0.5, 1.5)
    beta = jax.random.normal(k2, (c,), jnp.float32) * 0.1
    mean = jax.random.normal(k3, (c,), jnp.float32) * 0.1
    var = jax.random.uniform(k4, (c,), jnp.float32, 0.5, 1.5)
    scale = gamma / jnp.sqrt(var + eps)
    bias = beta - mean * scale
    return scale, bias


def init_params(key, input_channel, output_channel, layers):
    state = {"key": key}

    def nk():
        state["key"], k = jax.random.split(state["key"])
        return k

    oc = output_channel
    p = {}
    p["conv0_1_w"] = _make_conv(nk(), 3, 3, input_channel, oc // 16)
    p["bn0_1"] = _make_bn(nk(), oc // 16)
    p["conv0_2_w"] = _make_conv(nk(), 3, 3, oc // 16, oc // 8)
    p["bn0_2"] = _make_bn(nk(), oc // 8)

    inplanes = [oc // 8]

    # NOTE: every BasicBlock in this architecture uses stride=1 (matches the
    # PyTorch spec), so stride is not stored in the (jit-traced) param pytree.
    def make_layer(planes, blocks):
        layer = []
        for bidx in range(blocks):
            cin = inplanes[0]
            blk = {}
            if bidx == 0 and cin != planes:
                blk["downsample"] = {
                    "w": _make_conv(nk(), 1, 1, cin, planes),
                    "bn": _make_bn(nk(), planes),
                }
            else:
                blk["downsample"] = None
            blk["conv1_w"] = _make_conv(nk(), 3, 3, cin, planes)
            blk["bn1"] = _make_bn(nk(), planes)
            blk["conv2_w"] = _make_conv(nk(), 3, 3, planes, planes)
            blk["bn2"] = _make_bn(nk(), planes)
            layer.append(blk)
            inplanes[0] = planes
        return layer

    p["layer1"] = make_layer(oc // 4, layers[0])
    p["conv1_w"] = _make_conv(nk(), 3, 3, oc // 4, oc // 4)
    p["bn1"] = _make_bn(nk(), oc // 4)
    p["layer2"] = make_layer(oc // 2, layers[1])
    p["conv2_w"] = _make_conv(nk(), 3, 3, oc // 2, oc // 2)
    p["bn2"] = _make_bn(nk(), oc // 2)
    p["layer3"] = make_layer(oc, layers[2])
    p["conv3_w"] = _make_conv(nk(), 3, 3, oc, oc)
    p["bn3"] = _make_bn(nk(), oc)
    p["layer4"] = make_layer(oc, layers[3])
    p["conv4_1_w"] = _make_conv(nk(), 2, 2, oc, oc)
    p["bn4_1"] = _make_bn(nk(), oc)
    p["conv4_2_w"] = _make_conv(nk(), 2, 2, oc, oc)
    p["bn4_2"] = _make_bn(nk(), oc)
    return p


# ------------------------------- forward pass --------------------------------

def basic_block(x, blk, stride=1):
    if blk["downsample"] is not None:
        d = blk["downsample"]
        residual = conv_bn(x, d["w"], d["bn"][0], d["bn"][1],
                           stride=(stride, stride), padding=(0, 0), relu=False)
    else:
        residual = x
    out = conv_bn(x, blk["conv1_w"], blk["bn1"][0], blk["bn1"][1],
                  stride=(stride, stride), padding=(1, 1), relu=True)
    # conv2 -> bn2 -> (+ residual) -> relu, fused in one Pallas kernel.
    out = conv_bn(out, blk["conv2_w"], blk["bn2"][0], blk["bn2"][1],
                  stride=(1, 1), padding=(1, 1), relu=True, residual=residual)
    return out


def resnet_feature_extractor(x_nchw, p):
    x = jnp.transpose(x_nchw, (0, 2, 3, 1)).astype(jnp.bfloat16)  # NCHW->NHWC

    x = conv_bn(x, p["conv0_1_w"], p["bn0_1"][0], p["bn0_1"][1], relu=True)
    x = conv_bn(x, p["conv0_2_w"], p["bn0_2"][0], p["bn0_2"][1], relu=True)
    x = maxpool2d(x, kernel=(2, 2), stride=(2, 2), padding=(0, 0))

    for blk in p["layer1"]:
        x = basic_block(x, blk)
    x = conv_bn(x, p["conv1_w"], p["bn1"][0], p["bn1"][1], relu=True)
    x = maxpool2d(x, kernel=(2, 2), stride=(2, 2), padding=(0, 0))

    for blk in p["layer2"]:
        x = basic_block(x, blk)
    x = conv_bn(x, p["conv2_w"], p["bn2"][0], p["bn2"][1], relu=True)
    x = maxpool2d(x, kernel=(2, 2), stride=(2, 1), padding=(0, 1))

    for blk in p["layer3"]:
        x = basic_block(x, blk)
    x = conv_bn(x, p["conv3_w"], p["bn3"][0], p["bn3"][1], relu=True)

    for blk in p["layer4"]:
        x = basic_block(x, blk)
    x = conv_bn(x, p["conv4_1_w"], p["bn4_1"][0], p["bn4_1"][1],
                stride=(2, 1), padding=(0, 1), relu=True)
    x = conv_bn(x, p["conv4_2_w"], p["bn4_2"][0], p["bn4_2"][1],
                stride=(1, 1), padding=(0, 0), relu=True)

    # NHWC -> NCHW, back to f32 at the module boundary (internals are bf16).
    return jnp.transpose(x, (0, 3, 1, 2)).astype(jnp.float32)


# ---------------------------------- main -------------------------------------

if __name__ == "__main__":
    INPUT_CHANNEL = 1    # CRNN grayscale input
    OUTPUT_CHANNEL = 32  # small synthetic width (real CRNN uses 512)

    key = jax.random.PRNGKey(0)
    kx, kp = jax.random.split(key)

    # NCHW like PyTorch; H=32 so the final feature map has height 1.
    x = jax.random.normal(kx, (2, INPUT_CHANNEL, 32, 16), jnp.float32)

    params = init_params(kp, INPUT_CHANNEL, OUTPUT_CHANNEL, [1, 2, 5, 3])

    forward = jax.jit(resnet_feature_extractor)
    out = jax.block_until_ready(forward(x, params))

    # Expected: (N, OUTPUT_CHANNEL, 1, W/4 + 1) = (2, 32, 1, 5)
    assert out.shape == (2, OUTPUT_CHANNEL, 1, 5), out.shape
    assert bool(jnp.all(jnp.isfinite(out)))
    print("KERNEL_OK")
</pallas_src>

<mosaic_0001>
module attributes {stable_mosaic.version = 11 : i64} {
  func.func @_conv_bn_kernel(%arg0: i32, %arg1: i32, %arg2: i32, %arg3: memref<512x128xbf16, #tpu.memory_space<vmem>>, %arg4: memref<128x128xbf16, #tpu.memory_space<vmem>>, %arg5: memref<1x128xf32, #tpu.memory_space<vmem>>, %arg6: memref<512x128xbf16, #tpu.memory_space<vmem>>, %arg7: memref<512x128xf32, #tpu.memory_space<vmem>>) attributes {dimension_semantics = [#tpu.dimension_semantics<parallel>, #tpu.dimension_semantics<parallel>, #tpu.dimension_semantics<arbitrary>], iteration_bounds = array<i64: 2, 1, 1>, scalar_prefetch = 0 : i64, scratch_operands = 1 : i64, tpu.core_type = #tpu.core_type<tc>, window_params = [{transform_indices = @transform_0, window_bounds = array<i64: 512, 128>}, {transform_indices = @transform_1, window_bounds = array<i64: 128, 128>}, {transform_indices = @transform_2, window_bounds = array<i64: 1, 128>}, {transform_indices = @transform_3, window_bounds = array<i64: 512, 128>}]} {
    %c0_i32 = arith.constant 0 : i32
    %0 = arith.cmpi eq, %arg2, %c0_i32 : i32
    %1 = arith.extui %0 : i1 to i32
    %c0_i32_0 = arith.constant 0 : i32
    %2 = arith.cmpi ne, %1, %c0_i32_0 : i32
    scf.if %2 {
      %cst_10 = arith.constant 0.000000e+00 : f32
      %12 = vector.broadcast %cst_10 : f32 to vector<512x128xf32>
      %c0_11 = arith.constant 0 : index
      %c0_12 = arith.constant 0 : index
      %13 = vector.load %arg7[%c0_11, %c0_12] : memref<512x128xf32, #tpu.memory_space<vmem>>, vector<512x128xf32>
      tpu.vector_store %arg7[%c0_11, %c0_12], %12 {strides = array<i32>} : memref<512x128xf32, #tpu.memory_space<vmem>>, vector<512x128xf32>,
    } else {
    }
    %c0 = arith.constant 0 : index
    %c0_1 = arith.constant 0 : index
    %3 = vector.load %arg7[%c0, %c0_1] : memref<512x128xf32, #tpu.memory_space<vmem>>, vector<512x128xf32>
    %c0_2 = arith.constant 0 : index
    %c0_3 = arith.constant 0 : index
    %4 = vector.load %arg3[%c0_2, %c0_3] : memref<512x128xbf16, #tpu.memory_space<vmem>>, vector<512x128xbf16>
    %c0_4 = arith.constant 0 : index
    %c0_5 = arith.constant 0 : index
    %5 = vector.load %arg4[%c0_4, %c0_5] : memref<128x128xbf16, #tpu.memory_space<vmem>>, vector<128x128xbf16>
    %cst = arith.constant dense<0.000000e+00> : vector<512x128xf32>
    %6 = tpu.matmul %4, %5, %cst {dimension_numbers = #tpu.dot_dimension_numbers<[1], [0], [0], [1], [0, 0, 1, 1], [], []>} : vector<512x128xbf16>, vector<128x128xbf16>, vector<512x128xf32> -> vector<512x128xf32>
    %7 = arith.addf %3, %6 : vector<512x128xf32>
    %c0_6 = arith.constant 0 : index
    %c0_7 = arith.constant 0 : index
    %8 = vector.load %arg7[%c0_6, %c0_7] : memref<512x128xf32, #tpu.memory_space<vmem>>, vector<512x128xf32>
    tpu.vector_store %arg7[%c0_6, %c0_7], %7 {strides = array<i32>} : memref<512x128xf32, #tpu.memory_space<vmem>>, vector<512x128xf32>,
    %c0_i32_8 = arith.constant 0 : i32
    %9 = arith.cmpi eq, %arg2, %c0_i32_8 : i32
    %10 = arith.extui %9 : i1 to i32
    %c0_i32_9 = arith.constant 0 : i32
    %11 = arith.cmpi ne, %10, %c0_i32_9 : i32
    scf.if %11 {
      %c0_10 = arith.constant 0 : index
      %c0_11 = arith.constant 0 : index
      %12 = vector.load %arg7[%c0_10, %c0_11] : memref<512x128xf32, #tpu.memory_space<vmem>>, vector<512x128xf32>
      %c0_12 = arith.constant 0 : index
      %c0_13 = arith.constant 0 : index
      %13 = vector.load %arg5[%c0_12, %c0_13] : memref<1x128xf32, #tpu.memory_space<vmem>>, vector<1x128xf32>
      %14 = vector.broadcast %13 : vector<1x128xf32> to vector<512x128xf32>
      %15 = arith.addf %12, %14 : vector<512x128xf32>
      %cst_14 = arith.constant 0.000000e+00 : f32
      %16 = vector.broadcast %cst_14 : f32 to vector<512x128xf32>
      %17 = arith.maximumf %15, %16 : vector<512x128xf32>
      %18 = arith.truncf %17 : vector<512x128xf32> to vector<512x128xbf16>
      %c0_15 = arith.constant 0 : index
      %c0_16 = arith.constant 0 : index
      %19 = vector.load %arg6[%c0_15, %c0_16] : memref<512x128xbf16, #tpu.memory_space<vmem>>, vector<512x128xbf16>
      tpu.vector_store %arg6[%c0_15, %c0_16], %18 {strides = array<i32>} : memref<512x128xbf16, #tpu.memory_space<vmem>>, vector<512x128xbf16>,
    } else {
    }
    return
  }
  func.func @transform_0(%arg0: i32, %arg1: i32, %arg2: i32) -> (i32, i32) {
    %c0_i32 = arith.constant 0 : i32
    return %arg0, %arg2 : i32, i32
  }
  func.func @transform_1(%arg0: i32, %arg1: i32, %arg2: i32) -> (i32, i32) {
    %c0_i32 = arith.constant 0 : i32
    return %arg2, %arg1 : i32, i32
  }
  func.func @transform_2(%arg0: i32, %arg1: i32, %arg2: i32) -> (i32, i32) {
    %c0_i32 = arith.constant 0 : i32
    %c0_i32_0 = arith.constant 0 : i32
    return %c0_i32, %arg1 : i32, i32
  }
  func.func @transform_3(%arg0: i32, %arg1: i32, %arg2: i32) -> (i32, i32) {
    %c0_i32 = arith.constant 0 : i32
    return %arg0, %arg1 : i32, i32
  }
}

module attributes {stable_mosaic.version = 11 : i64} {
  func.func @_maxpool_nonoverlap_kernel(%arg0: i32, %arg1: memref<32x2x8x8xbf16, #tpu.memory_space<vmem>>, %arg2: memref<32x8x4xbf16, #tpu.memory_space<vmem>>) attributes {dimension_semantics = [#tpu.dimension_semantics<parallel>], iteration_bounds = array<i64: 1>, scalar_prefetch = 0 : i64, scratch_operands = 0 : i64, tpu.core_type = #tpu.core_type<tc>, window_params = [{transform_indices = @transform_0, window_bounds = array<i64: 32, 2, 8, 8>}, {transform_indices = @transform_1, window_bounds = array<i64: 32, 8, 4>}]} {
    %c0 = arith.constant 0 : index
    %c0_0 = arith.constant 0 : index
    %c0_1 = arith.constant 0 : index
    %c0_2 = arith.constant 0 : index
    %0 = vector.load %arg1[%c0, %c0_0, %c0_1, %c0_2] : memref<32x2x8x8xbf16, #tpu.memory_space<vmem>>, vector<32x2x8x8xbf16>
    %1 = vector.extract_strided_slice %0 {offsets = [0, 0, 0, 0], sizes = [32, 1, 8, 8], strides = [1, 1, 1, 1]} : vector<32x2x8x8xbf16> to vector<32x1x8x8xbf16>
    %2 = vector.shape_cast %1 : vector<32x1x8x8xbf16> to vector<32x8x8xbf16>
    %3 = vector.extract_strided_slice %0 {offsets = [0, 1, 0, 0], sizes = [32, 1, 8, 8], strides = [1, 1, 1, 1]} : vector<32x2x8x8xbf16> to vector<32x1x8x8xbf16>
    %4 = vector.shape_cast %3 : vector<32x1x8x8xbf16> to vector<32x8x8xbf16>
    %5 = arith.maximumf %2, %4 : vector<32x8x8xbf16>
    %6 = vector.extract_strided_slice %5 {offsets = [0, 0, 0], sizes = [32, 8, 4], strides = [1, 1, 1]} : vector<32x8x8xbf16> to vector<32x8x4xbf16>
    %7 = vector.extract_strided_slice %5 {offsets = [0, 0, 4], sizes = [32, 8, 4], strides = [1, 1, 1]} : vector<32x8x8xbf16> to vector<32x8x4xbf16>
    %8 = arith.maximumf %6, %7 : vector<32x8x4xbf16>
    %c0_3 = arith.constant 0 : index
    %c0_4 = arith.constant 0 : index
    %c0_5 = arith.constant 0 : index
    %9 = vector.load %arg2[%c0_3, %c0_4, %c0_5] : memref<32x8x4xbf16, #tpu.memory_space<vmem>>, vector<32x8x4xbf16>
    tpu.vector_store %arg2[%c0_3, %c0_4, %c0_5], %8 {strides = array<i32>} : memref<32x8x4xbf16, #tpu.memory_space<vmem>>, vector<32x8x4xbf16>,
    return
  }
  func.func @transform_0(%arg0: i32) -> (i32, i32, i32, i32) {
    %c0_i32 = arith.constant 0 : i32
    %c0_i32_0 = arith.constant 0 : i32
    %c0_i32_1 = arith.constant 0 : i32
    %c0_i32_2 = arith.constant 0 : i32
    return %arg0, %c0_i32, %c0_i32_0, %c0_i32_1 : i32, i32, i32, i32
  }
  func.func @transform_1(%arg0: i32) -> (i32, i32, i32) {
    %c0_i32 = arith.constant 0 : i32
    %c0_i32_0 = arith.constant 0 : i32
    %c0_i32_1 = arith.constant 0 : i32
    return %arg0, %c0_i32, %c0_i32_0 : i32, i32, i32
  }
}

module attributes {stable_mosaic.version = 11 : i64} {
  func.func @_conv_bn_kernel(%arg0: i32, %arg1: i32, %arg2: i32, %arg3: memref<256x128xbf16, #tpu.memory_space<vmem>>, %arg4: memref<128x128xbf16, #tpu.memory_space<vmem>>, %arg5: memref<1x128xf32, #tpu.memory_space<vmem>>, %arg6: memref<256x128xbf16, #tpu.memory_space<vmem>>, %arg7: memref<256x128xf32, #tpu.memory_space<vmem>>) attributes {dimension_semantics = [#tpu.dimension_semantics<parallel>, #tpu.dimension_semantics<parallel>, #tpu.dimension_semantics<arbitrary>], iteration_bounds = array<i64: 1, 1, 1>, scalar_prefetch = 0 : i64, scratch_operands = 1 : i64, tpu.core_type = #tpu.core_type<tc>, window_params = [{transform_indices = @transform_0, window_bounds = array<i64: 256, 128>}, {transform_indices = @transform_1, window_bounds = array<i64: 128, 128>}, {transform_indices = @transform_2, window_bounds = array<i64: 1, 128>}, {transform_indices = @transform_3, window_bounds = array<i64: 256, 128>}]} {
    %c0_i32 = arith.constant 0 : i32
    %0 = arith.cmpi eq, %arg2, %c0_i32 : i32
    %1 = arith.extui %0 : i1 to i32
    %c0_i32_0 = arith.constant 0 : i32
    %2 = arith.cmpi ne, %1, %c0_i32_0 : i32
    scf.if %2 {
      %cst_10 = arith.constant 0.000000e+00 : f32
      %12 = vector.broadcast %cst_10 : f32 to vector<256x128xf32>
      %c0_11 = arith.constant 0 : index
      %c0_12 = arith.constant 0 : index
      %13 = vector.load %arg7[%c0_11, %c0_12] : memref<256x128xf32, #tpu.memory_space<vmem>>, vector<256x128xf32>
      tpu.vector_store %arg7[%c0_11, %c0_12], %12 {strides = array<i32>} : memref<256x128xf32, #tpu.memory_space<vmem>>, vector<256x128xf32>,
    } else {
    }
    %c0 = arith.constant 0 : index
    %c0_1 = arith.constant 0 : index
    %3 = vector.load %arg7[%c0, %c0_1] : memref<256x128xf32, #tpu.memory_space<vmem>>, vector<256x128xf32>
    %c0_2 = arith.constant 0 : index
    %c0_3 = arith.constant 0 : index
    %4 = vector.load %arg3[%c0_2, %c0_3] : memref<256x128xbf16, #tpu.memory_space<vmem>>, vector<256x128xbf16>
    %c0_4 = arith.constant 0 : index
    %c0_5 = arith.constant 0 : index
    %5 = vector.load %arg4[%c0_4, %c0_5] : memref<128x128xbf16, #tpu.memory_space<vmem>>, vector<128x128xbf16>
    %cst = arith.constant dense<0.000000e+00> : vector<256x128xf32>
    %6 = tpu.matmul %4, %5, %cst {dimension_numbers = #tpu.dot_dimension_numbers<[1], [0], [0], [1], [0, 0, 1, 1], [], []>} : vector<256x128xbf16>, vector<128x128xbf16>, vector<256x128xf32> -> vector<256x128xf32>
    %7 = arith.addf %3, %6 : vector<256x128xf32>
    %c0_6 = arith.constant 0 : index
    %c0_7 = arith.constant 0 : index
    %8 = vector.load %arg7[%c0_6, %c0_7] : memref<256x128xf32, #tpu.memory_space<vmem>>, vector<256x128xf32>
    tpu.vector_store %arg7[%c0_6, %c0_7], %7 {strides = array<i32>} : memref<256x128xf32, #tpu.memory_space<vmem>>, vector<256x128xf32>,
    %c0_i32_8 = arith.constant 0 : i32
    %9 = arith.cmpi eq, %arg2, %c0_i32_8 : i32
    %10 = arith.extui %9 : i1 to i32
    %c0_i32_9 = arith.constant 0 : i32
    %11 = arith.cmpi ne, %10, %c0_i32_9 : i32
    scf.if %11 {
      %c0_10 = arith.constant 0 : index
      %c0_11 = arith.constant 0 : index
      %12 = vector.load %arg7[%c0_10, %c0_11] : memref<256x128xf32, #tpu.memory_space<vmem>>, vector<256x128xf32>
      %c0_12 = arith.constant 0 : index
      %c0_13 = arith.constant 0 : index
      %13 = vector.load %arg5[%c0_12, %c0_13] : memref<1x128xf32, #tpu.memory_space<vmem>>, vector<1x128xf32>
      %14 = vector.broadcast %13 : vector<1x128xf32> to vector<256x128xf32>
      %15 = arith.addf %12, %14 : vector<256x128xf32>
      %cst_14 = arith.constant 0.000000e+00 : f32
      %16 = vector.broadcast %cst_14 : f32 to vector<256x128xf32>
      %17 = arith.maximumf %15, %16 : vector<256x128xf32>
      %18 = arith.truncf %17 : vector<256x128xf32> to vector<256x128xbf16>
      %c0_15 = arith.constant 0 : index
      %c0_16 = arith.constant 0 : index
      %19 = vector.load %arg6[%c0_15, %c0_16] : memref<256x128xbf16, #tpu.memory_space<vmem>>, vector<256x128xbf16>
      tpu.vector_store %arg6[%c0_15, %c0_16], %18 {strides = array<i32>} : memref<256x128xbf16, #tpu.memory_space<vmem>>, vector<256x128xbf16>,
    } else {
    }
    return
  }
  func.func @transform_0(%arg0: i32, %arg1: i32, %arg2: i32) -> (i32, i32) {
    %c0_i32 = arith.constant 0 : i32
    return %arg0, %arg2 : i32, i32
  }
  func.func @transform_1(%arg0: i32, %arg1: i32, %arg2: i32) -> (i32, i32) {
    %c0_i32 = arith.constant 0 : i32
    return %arg2, %arg1 : i32, i32
  }
  func.func @transform_2(%arg0: i32, %arg1: i32, %arg2: i32) -> (i32, i32) {
    %c0_i32 = arith.constant 0 : i32
    %c0_i32_0 = arith.constant 0 : i32
    return %c0_i32, %arg1 : i32, i32
  }
  func.func @transform_3(%arg0: i32, %arg1: i32, %arg2: i32) -> (i32, i32) {
    %c0_i32 = arith.constant 0 : i32
    return %arg0, %arg1 : i32, i32
  }
}

module attributes {stable_mosaic.version = 11 : i64} {
  func.func @_conv_bn_kernel(%arg0: i32, %arg1: i32, %arg2: i32, %arg3: memref<256x128xbf16, #tpu.memory_space<vmem>>, %arg4: memref<128x128xbf16, #tpu.memory_space<vmem>>, %arg5: memref<1x128xf32, #tpu.memory_space<vmem>>, %arg6: memref<256x128xbf16, #tpu.memory_space<vmem>>, %arg7: memref<256x128xf32, #tpu.memory_space<vmem>>) attributes {dimension_semantics = [#tpu.dimension_semantics<parallel>, #tpu.dimension_semantics<parallel>, #tpu.dimension_semantics<arbitrary>], iteration_bounds = array<i64: 1, 1, 1>, scalar_prefetch = 0 : i64, scratch_operands = 1 : i64, tpu.core_type = #tpu.core_type<tc>, window_params = [{transform_indices = @transform_0, window_bounds = array<i64: 256, 128>}, {transform_indices = @transform_1, window_bounds = array<i64: 128, 128>}, {transform_indices = @transform_2, window_bounds = array<i64: 1, 128>}, {transform_indices = @transform_3, window_bounds = array<i64: 256, 128>}]} {
    %c0_i32 = arith.constant 0 : i32
    %0 = arith.cmpi eq, %arg2, %c0_i32 : i32
    %1 = arith.extui %0 : i1 to i32
    %c0_i32_0 = arith.constant 0 : i32
    %2 = arith.cmpi ne, %1, %c0_i32_0 : i32
    scf.if %2 {
      %cst_10 = arith.constant 0.000000e+00 : f32
      %12 = vector.broadcast %cst_10 : f32 to vector<256x128xf32>
      %c0_11 = arith.constant 0 : index
      %c0_12 = arith.constant 0 : index
      %13 = vector.load %arg7[%c0_11, %c0_12] : memref<256x128xf32, #tpu.memory_space<vmem>>, vector<256x128xf32>
      tpu.vector_store %arg7[%c0_11, %c0_12], %12 {strides = array<i32>} : memref<256x128xf32, #tpu.memory_space<vmem>>, vector<256x128xf32>,
    } else {
    }
    %c0 = arith.constant 0 : index
    %c0_1 = arith.constant 0 : index
    %3 = vector.load %arg7[%c0, %c0_1] : memref<256x128xf32, #tpu.memory_space<vmem>>, vector<256x128xf32>
    %c0_2 = arith.constant 0 : index
    %c0_3 = arith.constant 0 : index
    %4 = vector.load %arg3[%c0_2, %c0_3] : memref<256x128xbf16, #tpu.memory_space<vmem>>, vector<256x128xbf16>
    %c0_4 = arith.constant 0 : index
    %c0_5 = arith.constant 0 : index
    %5 = vector.load %arg4[%c0_4, %c0_5] : memref<128x128xbf16, #tpu.memory_space<vmem>>, vector<128x128xbf16>
    %cst = arith.constant dense<0.000000e+00> : vector<256x128xf32>
    %6 = tpu.matmul %4, %5, %cst {dimension_numbers = #tpu.dot_dimension_numbers<[1], [0], [0], [1], [0, 0, 1, 1], [], []>} : vector<256x128xbf16>, vector<128x128xbf16>, vector<256x128xf32> -> vector<256x128xf32>
    %7 = arith.addf %3, %6 : vector<256x128xf32>
    %c0_6 = arith.constant 0 : index
    %c0_7 = arith.constant 0 : index
    %8 = vector.load %arg7[%c0_6, %c0_7] : memref<256x128xf32, #tpu.memory_space<vmem>>, vector<256x128xf32>
    tpu.vector_store %arg7[%c0_6, %c0_7], %7 {strides = array<i32>} : memref<256x128xf32, #tpu.memory_space<vmem>>, vector<256x128xf32>,
    %c0_i32_8 = arith.constant 0 : i32
    %9 = arith.cmpi eq, %arg2, %c0_i32_8 : i32
    %10 = arith.extui %9 : i1 to i32
    %c0_i32_9 = arith.constant 0 : i32
    %11 = arith.cmpi ne, %10, %c0_i32_9 : i32
    scf.if %11 {
      %c0_10 = arith.constant 0 : index
      %c0_11 = arith.constant 0 : index
      %12 = vector.load %arg7[%c0_10, %c0_11] : memref<256x128xf32, #tpu.memory_space<vmem>>, vector<256x128xf32>
      %c0_12 = arith.constant 0 : index
      %c0_13 = arith.constant 0 : index
      %13 = vector.load %arg5[%c0_12, %c0_13] : memref<1x128xf32, #tpu.memory_space<vmem>>, vector<1x128xf32>
      %14 = vector.broadcast %13 : vector<1x128xf32> to vector<256x128xf32>
      %15 = arith.addf %12, %14 : vector<256x128xf32>
      %16 = arith.truncf %15 : vector<256x128xf32> to vector<256x128xbf16>
      %c0_14 = arith.constant 0 : index
      %c0_15 = arith.constant 0 : index
      %17 = vector.load %arg6[%c0_14, %c0_15] : memref<256x128xbf16, #tpu.memory_space<vmem>>, vector<256x128xbf16>
      tpu.vector_store %arg6[%c0_14, %c0_15], %16 {strides = array<i32>} : memref<256x128xbf16, #tpu.memory_space<vmem>>, vector<256x128xbf16>,
    } else {
    }
    return
  }
  func.func @transform_0(%arg0: i32, %arg1: i32, %arg2: i32) -> (i32, i32) {
    %c0_i32 = arith.constant 0 : i32
    return %arg0, %arg2 : i32, i32
  }
  func.func @transform_1(%arg0: i32, %arg1: i32, %arg2: i32) -> (i32, i32) {
    %c0_i32 = arith.constant 0 : i32
    return %arg2, %arg1 : i32, i32
  }
  func.func @transform_2(%arg0: i32, %arg1: i32, %arg2: i32) -> (i32, i32) {
    %c0_i32 = arith.constant 0 : i32
    %c0_i32_0 = arith.constant 0 : i32
    return %c0_i32, %arg1 : i32, i32
  }
  func.func @transform_3(%arg0: i32, %arg1: i32, %arg2: i32) -> (i32, i32) {
    %c0_i32 = arith.constant 0 : i32
    return %arg0, %arg1 : i32, i32
  }
}

module attributes {stable_mosaic.version = 11 : i64} {
  func.func @_conv_bn_kernel(%arg0: i32, %arg1: i32, %arg2: i32, %arg3: memref<256x128xbf16, #tpu.memory_space<vmem>>, %arg4: memref<128x128xbf16, #tpu.memory_space<vmem>>, %arg5: memref<1x128xf32, #tpu.memory_space<vmem>>, %arg6: memref<256x128xbf16, #tpu.memory_space<vmem>>, %arg7: memref<256x128xbf16, #tpu.memory_space<vmem>>, %arg8: memref<256x128xf32, #tpu.memory_space<vmem>>) attributes {dimension_semantics = [#tpu.dimension_semantics<parallel>, #tpu.dimension_semantics<parallel>, #tpu.dimension_semantics<arbitrary>], iteration_bounds = array<i64: 1, 1, 1>, scalar_prefetch = 0 : i64, scratch_operands = 1 : i64, tpu.core_type = #tpu.core_type<tc>, window_params = [{transform_indices = @transform_0, window_bounds = array<i64: 256, 128>}, {transform_indices = @transform_1, window_bounds = array<i64: 128, 128>}, {transform_indices = @transform_2, window_bounds = array<i64: 1, 128>}, {transform_indices = @transform_3, window_bounds = array<i64: 256, 128>}, {transform_indices = @transform_4, window_bounds = array<i64: 256, 128>}]} {
    %c0_i32 = arith.constant 0 : i32
    %0 = arith.cmpi eq, %arg2, %c0_i32 : i32
    %1 = arith.extui %0 : i1 to i32
    %c0_i32_0 = arith.constant 0 : i32
    %2 = arith.cmpi ne, %1, %c0_i32_0 : i32
    scf.if %2 {
      %cst_10 = arith.constant 0.000000e+00 : f32
      %12 = vector.broadcast %cst_10 : f32 to vector<256x128xf32>
      %c0_11 = arith.constant 0 : index
      %c0_12 = arith.constant 0 : index
      %13 = vector.load %arg8[%c0_11, %c0_12] : memref<256x128xf32, #tpu.memory_space<vmem>>, vector<256x128xf32>
      tpu.vector_store %arg8[%c0_11, %c0_12], %12 {strides = array<i32>} : memref<256x128xf32, #tpu.memory_space<vmem>>, vector<256x128xf32>,
    } else {
    }
    %c0 = arith.constant 0 : index
    %c0_1 = arith.constant 0 : index
    %3 = vector.load %arg8[%c0, %c0_1] : memref<256x128xf32, #tpu.memory_space<vmem>>, vector<256x128xf32>
    %c0_2 = arith.constant 0 : index
    %c0_3 = arith.constant 0 : index
    %4 = vector.load %arg3[%c0_2, %c0_3] : memref<256x128xbf16, #tpu.memory_space<vmem>>, vector<256x128xbf16>
    %c0_4 = arith.constant 0 : index
    %c0_5 = arith.constant 0 : index
    %5 = vector.load %arg4[%c0_4, %c0_5] : memref<128x128xbf16, #tpu.memory_space<vmem>>, vector<128x128xbf16>
    %cst = arith.constant dense<0.000000e+00> : vector<256x128xf32>
    %6 = tpu.matmul %4, %5, %cst {dimension_numbers = #tpu.dot_dimension_numbers<[1], [0], [0], [1], [0, 0, 1, 1], [], []>} : vector<256x128xbf16>, vector<128x128xbf16>, vector<256x128xf32> -> vector<256x128xf32>
    %7 = arith.addf %3, %6 : vector<256x128xf32>
    %c0_6 = arith.constant 0 : index
    %c0_7 = arith.constant 0 : index
    %8 = vector.load %arg8[%c0_6, %c0_7] : memref<256x128xf32, #tpu.memory_space<vmem>>, vector<256x128xf32>
    tpu.vector_store %arg8[%c0_6, %c0_7], %7 {strides = array<i32>} : memref<256x128xf32, #tpu.memory_space<vmem>>, vector<256x128xf32>,
    %c0_i32_8 = arith.constant 0 : i32
    %9 = arith.cmpi eq, %arg2, %c0_i32_8 : i32
    %10 = arith.extui %9 : i1 to i32
    %c0_i32_9 = arith.constant 0 : i32
    %11 = arith.cmpi ne, %10, %c0_i32_9 : i32
    scf.if %11 {
      %c0_10 = arith.constant 0 : index
      %c0_11 = arith.constant 0 : index
      %12 = vector.load %arg8[%c0_10, %c0_11] : memref<256x128xf32, #tpu.memory_space<vmem>>, vector<256x128xf32>
      %c0_12 = arith.constant 0 : index
      %c0_13 = arith.constant 0 : index
      %13 = vector.load %arg5[%c0_12, %c0_13] : memref<1x128xf32, #tpu.memory_space<vmem>>, vector<1x128xf32>
      %14 = vector.broadcast %13 : vector<1x128xf32> to vector<256x128xf32>
      %15 = arith.addf %12, %14 : vector<256x128xf32>
      %c0_14 = arith.constant 0 : index
      %c0_15 = arith.constant 0 : index
      %16 = vector.load %arg6[%c0_14, %c0_15] : memref<256x128xbf16, #tpu.memory_space<vmem>>, vector<256x128xbf16>
      %17 = arith.extf %16 : vector<256x128xbf16> to vector<256x128xf32>
      %18 = arith.addf %15, %17 : vector<256x128xf32>
      %cst_16 = arith.constant 0.000000e+00 : f32
      %19 = vector.broadcast %cst_16 : f32 to vector<256x128xf32>
      %20 = arith.maximumf %18, %19 : vector<256x128xf32>
      %21 = arith.truncf %20 : vector<256x128xf32> to vector<256x128xbf16>
      %c0_17 = arith.constant 0 : index
      %c0_18 = arith.constant 0 : index
      %22 = vector.load %arg7[%c0_17, %c0_18] : memref<256x128xbf16, #tpu.memory_space<vmem>>, vector<256x128xbf16>
      tpu.vector_store %arg7[%c0_17, %c0_18], %21 {strides = array<i32>} : memref<256x128xbf16, #tpu.memory_space<vmem>>, vector<256x128xbf16>,
    } else {
    }
    return
  }
  func.func @transform_0(%arg0: i32, %arg1: i32, %arg2: i32) -> (i32, i32) {
    %c0_i32 = arith.constant 0 : i32
    return %arg0, %arg2 : i32, i32
  }
  func.func @transform_1(%arg0: i32, %arg1: i32, %arg2: i32) -> (i32, i32) {
    %c0_i32 = arith.constant 0 : i32
    return %arg2, %arg1 : i32, i32
  }
  func.func @transform_2(%arg0: i32, %arg1: i32, %arg2: i32) -> (i32, i32) {
    %c0_i32 = arith.constant 0 : i32
    %c0_i32_0 = arith.constant 0 : i32
    return %c0_i32, %arg1 : i32, i32
  }
  func.func @transform_3(%arg0: i32, %arg1: i32, %arg2: i32) -> (i32, i32) {
    %c0_i32 = arith.constant 0 : i32
    return %arg0, %arg1 : i32, i32
  }
  func.func @transform_4(%arg0: i32, %arg1: i32, %arg2: i32) -> (i32, i32) {
    %c0_i32 = arith.constant 0 : i32
    return %arg0, %arg1 : i32, i32
  }
}

module attributes {stable_mosaic.version = 11 : i64} {
  func.func @_maxpool_nonoverlap_kernel(%arg0: i32, %arg1: memref<16x2x4x16xbf16, #tpu.memory_space<vmem>>, %arg2: memref<16x4x8xbf16, #tpu.memory_space<vmem>>) attributes {dimension_semantics = [#tpu.dimension_semantics<parallel>], iteration_bounds = array<i64: 1>, scalar_prefetch = 0 : i64, scratch_operands = 0 : i64, tpu.core_type = #tpu.core_type<tc>, window_params = [{transform_indices = @transform_0, window_bounds = array<i64: 16, 2, 4, 16>}, {transform_indices = @transform_1, window_bounds = array<i64: 16, 4, 8>}]} {
    %c0 = arith.constant 0 : index
    %c0_0 = arith.constant 0 : index
    %c0_1 = arith.constant 0 : index
    %c0_2 = arith.constant 0 : index
    %0 = vector.load %arg1[%c0, %c0_0, %c0_1, %c0_2] : memref<16x2x4x16xbf16, #tpu.memory_space<vmem>>, vector<16x2x4x16xbf16>
    %1 = vector.extract_strided_slice %0 {offsets = [0, 0, 0, 0], sizes = [16, 1, 4, 16], strides = [1, 1, 1, 1]} : vector<16x2x4x16xbf16> to vector<16x1x4x16xbf16>
    %2 = vector.shape_cast %1 : vector<16x1x4x16xbf16> to vector<16x4x16xbf16>
    %3 = vector.extract_strided_slice %0 {offsets = [0, 1, 0, 0], sizes = [16, 1, 4, 16], strides = [1, 1, 1, 1]} : vector<16x2x4x16xbf16> to vector<16x1x4x16xbf16>
    %4 = vector.shape_cast %3 : vector<16x1x4x16xbf16> to vector<16x4x16xbf16>
    %5 = arith.maximumf %2, %4 : vector<16x4x16xbf16>
    %6 = vector.extract_strided_slice %5 {offsets = [0, 0, 0], sizes = [16, 4, 8], strides = [1, 1, 1]} : vector<16x4x16xbf16> to vector<16x4x8xbf16>
    %7 = vector.extract_strided_slice %5 {offsets = [0, 0, 8], sizes = [16, 4, 8], strides = [1, 1, 1]} : vector<16x4x16xbf16> to vector<16x4x8xbf16>
    %8 = arith.maximumf %6, %7 : vector<16x4x8xbf16>
    %c0_3 = arith.constant 0 : index
    %c0_4 = arith.constant 0 : index
    %c0_5 = arith.constant 0 : index
    %9 = vector.load %arg2[%c0_3, %c0_4, %c0_5] : memref<16x4x8xbf16, #tpu.memory_space<vmem>>, vector<16x4x8xbf16>
    tpu.vector_store %arg2[%c0_3, %c0_4, %c0_5], %8 {strides = array<i32>} : memref<16x4x8xbf16, #tpu.memory_space<vmem>>, vector<16x4x8xbf16>,
    return
  }
  func.func @transform_0(%arg0: i32) -> (i32, i32, i32, i32) {
    %c0_i32 = arith.constant 0 : i32
    %c0_i32_0 = arith.constant 0 : i32
    %c0_i32_1 = arith.constant 0 : i32
    %c0_i32_2 = arith.constant 0 : i32
    return %arg0, %c0_i32, %c0_i32_0, %c0_i32_1 : i32, i32, i32, i32
  }
  func.func @transform_1(%arg0: i32) -> (i32, i32, i32) {
    %c0_i32 = arith.constant 0 : i32
    %c0_i32_0 = arith.constant 0 : i32
    %c0_i32_1 = arith.constant 0 : i32
    return %arg0, %c0_i32, %c0_i32_0 : i32, i32, i32
  }
}

module attributes {stable_mosaic.version = 11 : i64} {
  func.func @_conv_bn_kernel(%arg0: i32, %arg1: i32, %arg2: i32, %arg3: memref<64x128xbf16, #tpu.memory_space<vmem>>, %arg4: memref<128x128xbf16, #tpu.memory_space<vmem>>, %arg5: memref<1x128xf32, #tpu.memory_space<vmem>>, %arg6: memref<64x128xbf16, #tpu.memory_space<vmem>>, %arg7: memref<64x128xf32, #tpu.memory_space<vmem>>) attributes {dimension_semantics = [#tpu.dimension_semantics<parallel>, #tpu.dimension_semantics<parallel>, #tpu.dimension_semantics<arbitrary>], iteration_bounds = array<i64: 1, 1, 1>, scalar_prefetch = 0 : i64, scratch_operands = 1 : i64, tpu.core_type = #tpu.core_type<tc>, window_params = [{transform_indices = @transform_0, window_bounds = array<i64: 64, 128>}, {transform_indices = @transform_1, window_bounds = array<i64: 128, 128>}, {transform_indices = @transform_2, window_bounds = array<i64: 1, 128>}, {transform_indices = @transform_3, window_bounds = array<i64: 64, 128>}]} {
    %c0_i32 = arith.constant 0 : i32
    %0 = arith.cmpi eq, %arg2, %c0_i32 : i32
    %1 = arith.extui %0 : i1 to i32
    %c0_i32_0 = arith.constant 0 : i32
    %2 = arith.cmpi ne, %1, %c0_i32_0 : i32
    scf.if %2 {
      %cst_10 = arith.constant 0.000000e+00 : f32
      %12 = vector.broadcast %cst_10 : f32 to vector<64x128xf32>
      %c0_11 = arith.constant 0 : index
      %c0_12 = arith.constant 0 : index
      %13 = vector.load %arg7[%c0_11, %c0_12] : memref<64x128xf32, #tpu.memory_space<vmem>>, vector<64x128xf32>
      tpu.vector_store %arg7[%c0_11, %c0_12], %12 {strides = array<i32>} : memref<64x128xf32, #tpu.memory_space<vmem>>, vector<64x128xf32>,
    } else {
    }
    %c0 = arith.constant 0 : index
    %c0_1 = arith.constant 0 : index
    %3 = vector.load %arg7[%c0, %c0_1] : memref<64x128xf32, #tpu.memory_space<vmem>>, vector<64x128xf32>
    %c0_2 = arith.constant 0 : index
    %c0_3 = arith.constant 0 : index
    %4 = vector.load %arg3[%c0_2, %c0_3] : memref<64x128xbf16, #tpu.memory_space<vmem>>, vector<64x128xbf16>
    %c0_4 = arith.constant 0 : index
    %c0_5 = arith.constant 0 : index
    %5 = vector.load %arg4[%c0_4, %c0_5] : memref<128x128xbf16, #tpu.memory_space<vmem>>, vector<128x128xbf16>
    %cst = arith.constant dense<0.000000e+00> : vector<64x128xf32>
    %6 = tpu.matmul %4, %5, %cst {dimension_numbers = #tpu.dot_dimension_numbers<[1], [0], [0], [1], [0, 0, 1, 1], [], []>} : vector<64x128xbf16>, vector<128x128xbf16>, vector<64x128xf32> -> vector<64x128xf32>
    %7 = arith.addf %3, %6 : vector<64x128xf32>
    %c0_6 = arith.constant 0 : index
    %c0_7 = arith.constant 0 : index
    %8 = vector.load %arg7[%c0_6, %c0_7] : memref<64x128xf32, #tpu.memory_space<vmem>>, vector<64x128xf32>
    tpu.vector_store %arg7[%c0_6, %c0_7], %7 {strides = array<i32>} : memref<64x128xf32, #tpu.memory_space<vmem>>, vector<64x128xf32>,
    %c0_i32_8 = arith.constant 0 : i32
    %9 = arith.cmpi eq, %arg2, %c0_i32_8 : i32
    %10 = arith.extui %9 : i1 to i32
    %c0_i32_9 = arith.constant 0 : i32
    %11 = arith.cmpi ne, %10, %c0_i32_9 : i32
    scf.if %11 {
      %c0_10 = arith.constant 0 : index
      %c0_11 = arith.constant 0 : index
      %12 = vector.load %arg7[%c0_10, %c0_11] : memref<64x128xf32, #tpu.memory_space<vmem>>, vector<64x128xf32>
      %c0_12 = arith.constant 0 : index
      %c0_13 = arith.constant 0 : index
      %13 = vector.load %arg5[%c0_12, %c0_13] : memref<1x128xf32, #tpu.memory_space<vmem>>, vector<1x128xf32>
      %14 = vector.broadcast %13 : vector<1x128xf32> to vector<64x128xf32>
      %15 = arith.addf %12, %14 : vector<64x128xf32>
      %cst_14 = arith.constant 0.000000e+00 : f32
      %16 = vector.broadcast %cst_14 : f32 to vector<64x128xf32>
      %17 = arith.maximumf %15, %16 : vector<64x128xf32>
      %18 = arith.truncf %17 : vector<64x128xf32> to vector<64x128xbf16>
      %c0_15 = arith.constant 0 : index
      %c0_16 = arith.constant 0 : index
      %19 = vector.load %arg6[%c0_15, %c0_16] : memref<64x128xbf16, #tpu.memory_space<vmem>>, vector<64x128xbf16>
      tpu.vector_store %arg6[%c0_15, %c0_16], %18 {strides = array<i32>} : memref<64x128xbf16, #tpu.memory_space<vmem>>, vector<64x128xbf16>,
    } else {
    }
    return
  }
  func.func @transform_0(%arg0: i32, %arg1: i32, %arg2: i32) -> (i32, i32) {
    %c0_i32 = arith.constant 0 : i32
    return %arg0, %arg2 : i32, i32
  }
  func.func @transform_1(%arg0: i32, %arg1: i32, %arg2: i32) -> (i32, i32) {
    %c0_i32 = arith.constant 0 : i32
    return %arg2, %arg1 : i32, i32
  }
  func.func @transform_2(%arg0: i32, %arg1: i32, %arg2: i32) -> (i32, i32) {
    %c0_i32 = arith.constant 0 : i32
    %c0_i32_0 = arith.constant 0 : i32
    return %c0_i32, %arg1 : i32, i32
  }
  func.func @transform_3(%arg0: i32, %arg1: i32, %arg2: i32) -> (i32, i32) {
    %c0_i32 = arith.constant 0 : i32
    return %arg0, %arg1 : i32, i32
  }
}

module attributes {stable_mosaic.version = 11 : i64} {
  func.func @_conv_bn_kernel(%arg0: i32, %arg1: i32, %arg2: i32, %arg3: memref<64x128xbf16, #tpu.memory_space<vmem>>, %arg4: memref<128x128xbf16, #tpu.memory_space<vmem>>, %arg5: memref<1x128xf32, #tpu.memory_space<vmem>>, %arg6: memref<64x128xbf16, #tpu.memory_space<vmem>>, %arg7: memref<64x128xf32, #tpu.memory_space<vmem>>) attributes {dimension_semantics = [#tpu.dimension_semantics<parallel>, #tpu.dimension_semantics<parallel>, #tpu.dimension_semantics<arbitrary>], iteration_bounds = array<i64: 1, 1, 1>, scalar_prefetch = 0 : i64, scratch_operands = 1 : i64, tpu.core_type = #tpu.core_type<tc>, window_params = [{transform_indices = @transform_0, window_bounds = array<i64: 64, 128>}, {transform_indices = @transform_1, window_bounds = array<i64: 128, 128>}, {transform_indices = @transform_2, window_bounds = array<i64: 1, 128>}, {transform_indices = @transform_3, window_bounds = array<i64: 64, 128>}]} {
    %c0_i32 = arith.constant 0 : i32
    %0 = arith.cmpi eq, %arg2, %c0_i32 : i32
    %1 = arith.extui %0 : i1 to i32
    %c0_i32_0 = arith.constant 0 : i32
    %2 = arith.cmpi ne, %1, %c0_i32_0 : i32
    scf.if %2 {
      %cst_10 = arith.constant 0.000000e+00 : f32
      %12 = vector.broadcast %cst_10 : f32 to vector<64x128xf32>
      %c0_11 = arith.constant 0 : index
      %c0_12 = arith.constant 0 : index
      %13 = vector.load %arg7[%c0_11, %c0_12] : memref<64x128xf32, #tpu.memory_space<vmem>>, vector<64x128xf32>
      tpu.vector_store %arg7[%c0_11, %c0_12], %12 {strides = array<i32>} : memref<64x128xf32, #tpu.memory_space<vmem>>, vector<64x128xf32>,
    } else {
    }
    %c0 = arith.constant 0 : index
    %c0_1 = arith.constant 0 : index
    %3 = vector.load %arg7[%c0, %c0_1] : memref<64x128xf32, #tpu.memory_space<vmem>>, vector<64x128xf32>
    %c0_2 = arith.constant 0 : index
    %c0_3 = arith.constant 0 : index
    %4 = vector.load %arg3[%c0_2, %c0_3] : memref<64x128xbf16, #tpu.memory_space<vmem>>, vector<64x128xbf16>
    %c0_4 = arith.constant 0 : index
    %c0_5 = arith.constant 0 : index
    %5 = vector.load %arg4[%c0_4, %c0_5] : memref<128x128xbf16, #tpu.memory_space<vmem>>, vector<128x128xbf16>
    %cst = arith.constant dense<0.000000e+00> : vector<64x128xf32>
    %6 = tpu.matmul %4, %5, %cst {dimension_numbers = #tpu.dot_dimension_numbers<[1], [0], [0], [1], [0, 0, 1, 1], [], []>} : vector<64x128xbf16>, vector<128x128xbf16>, vector<64x128xf32> -> vector<64x128xf32>
    %7 = arith.addf %3, %6 : vector<64x128xf32>
    %c0_6 = arith.constant 0 : index
    %c0_7 = arith.constant 0 : index
    %8 = vector.load %arg7[%c0_6, %c0_7] : memref<64x128xf32, #tpu.memory_space<vmem>>, vector<64x128xf32>
    tpu.vector_store %arg7[%c0_6, %c0_7], %7 {strides = array<i32>} : memref<64x128xf32, #tpu.memory_space<vmem>>, vector<64x128xf32>,
    %c0_i32_8 = arith.constant 0 : i32
    %9 = arith.cmpi eq, %arg2, %c0_i32_8 : i32
    %10 = arith.extui %9 : i1 to i32
    %c0_i32_9 = arith.constant 0 : i32
    %11 = arith.cmpi ne, %10, %c0_i32_9 : i32
    scf.if %11 {
      %c0_10 = arith.constant 0 : index
      %c0_11 = arith.constant 0 : index
      %12 = vector.load %arg7[%c0_10, %c0_11] : memref<64x128xf32, #tpu.memory_space<vmem>>, vector<64x128xf32>
      %c0_12 = arith.constant 0 : index
      %c0_13 = arith.constant 0 : index
      %13 = vector.load %arg5[%c0_12, %c0_13] : memref<1x128xf32, #tpu.memory_space<vmem>>, vector<1x128xf32>
      %14 = vector.broadcast %13 : vector<1x128xf32> to vector<64x128xf32>
      %15 = arith.addf %12, %14 : vector<64x128xf32>
      %16 = arith.truncf %15 : vector<64x128xf32> to vector<64x128xbf16>
      %c0_14 = arith.constant 0 : index
      %c0_15 = arith.constant 0 : index
      %17 = vector.load %arg6[%c0_14, %c0_15] : memref<64x128xbf16, #tpu.memory_space<vmem>>, vector<64x128xbf16>
      tpu.vector_store %arg6[%c0_14, %c0_15], %16 {strides = array<i32>} : memref<64x128xbf16, #tpu.memory_space<vmem>>, vector<64x128xbf16>,
    } else {
    }
    return
  }
  func.func @transform_0(%arg0: i32, %arg1: i32, %arg2: i32) -> (i32, i32) {
    %c0_i32 = arith.constant 0 : i32
    return %arg0, %arg2 : i32, i32
  }
  func.func @transform_1(%arg0: i32, %arg1: i32, %arg2: i32) -> (i32, i32) {
    %c0_i32 = arith.constant 0 : i32
    return %arg2, %arg1 : i32, i32
  }
  func.func @transform_2(%arg0: i32, %arg1: i32, %arg2: i32) -> (i32, i32) {
    %c0_i32 = arith.constant 0 : i32
    %c0_i32_0 = arith.constant 0 : i32
    return %c0_i32, %arg1 : i32, i32
  }
  func.func @transform_3(%arg0: i32, %arg1: i32, %arg2: i32) -> (i32, i32) {
    %c0_i32 = arith.constant 0 : i32
    return %arg0, %arg1 : i32, i32
  }
}

module attributes {stable_mosaic.version = 11 : i64} {
  func.func @_conv_bn_kernel(%arg0: i32, %arg1: i32, %arg2: i32, %arg3: memref<64x256xbf16, #tpu.memory_space<vmem>>, %arg4: memref<256x128xbf16, #tpu.memory_space<vmem>>, %arg5: memref<1x128xf32, #tpu.memory_space<vmem>>, %arg6: memref<64x128xbf16, #tpu.memory_space<vmem>>, %arg7: memref<64x128xbf16, #tpu.memory_space<vmem>>, %arg8: memref<64x128xf32, #tpu.memory_space<vmem>>) attributes {dimension_semantics = [#tpu.dimension_semantics<parallel>, #tpu.dimension_semantics<parallel>, #tpu.dimension_semantics<arbitrary>], iteration_bounds = array<i64: 1, 1, 1>, scalar_prefetch = 0 : i64, scratch_operands = 1 : i64, tpu.core_type = #tpu.core_type<tc>, window_params = [{transform_indices = @transform_0, window_bounds = array<i64: 64, 256>}, {transform_indices = @transform_1, window_bounds = array<i64: 256, 128>}, {transform_indices = @transform_2, window_bounds = array<i64: 1, 128>}, {transform_indices = @transform_3, window_bounds = array<i64: 64, 128>}, {transform_indices = @transform_4, window_bounds = array<i64: 64, 128>}]} {
    %c0_i32 = arith.constant 0 : i32
    %0 = arith.cmpi eq, %arg2, %c0_i32 : i32
    %1 = arith.extui %0 : i1 to i32
    %c0_i32_0 = arith.constant 0 : i32
    %2 = arith.cmpi ne, %1, %c0_i32_0 : i32
    scf.if %2 {
      %cst_10 = arith.constant 0.000000e+00 : f32
      %12 = vector.broadcast %cst_10 : f32 to vector<64x128xf32>
      %c0_11 = arith.constant 0 : index
      %c0_12 = arith.constant 0 : index
      %13 = vector.load %arg8[%c0_11, %c0_12] : memref<64x128xf32, #tpu.memory_space<vmem>>, vector<64x128xf32>
      tpu.vector_store %arg8[%c0_11, %c0_12], %12 {strides = array<i32>} : memref<64x128xf32, #tpu.memory_space<vmem>>, vector<64x128xf32>,
    } else {
    }
    %c0 = arith.constant 0 : index
    %c0_1 = arith.constant 0 : index
    %3 = vector.load %arg8[%c0, %c0_1] : memref<64x128xf32, #tpu.memory_space<vmem>>, vector<64x128xf32>
    %c0_2 = arith.constant 0 : index
    %c0_3 = arith.constant 0 : index
    %4 = vector.load %arg3[%c0_2, %c0_3] : memref<64x256xbf16, #tpu.memory_space<vmem>>, vector<64x256xbf16>
    %c0_4 = arith.constant 0 : index
    %c0_5 = arith.constant 0 : index
    %5 = vector.load %arg4[%c0_4, %c0_5] : memref<256x128xbf16, #tpu.memory_space<vmem>>, vector<256x128xbf16>
    %cst = arith.constant dense<0.000000e+00> : vector<64x128xf32>
    %6 = tpu.matmul %4, %5, %cst {dimension_numbers = #tpu.dot_dimension_numbers<[1], [0], [0], [1], [0, 0, 1, 1], [], []>} : vector<64x256xbf16>, vector<256x128xbf16>, vector<64x128xf32> -> vector<64x128xf32>
    %7 = arith.addf %3, %6 : vector<64x128xf32>
    %c0_6 = arith.constant 0 : index
    %c0_7 = arith.constant 0 : index
    %8 = vector.load %arg8[%c0_6, %c0_7] : memref<64x128xf32, #tpu.memory_space<vmem>>, vector<64x128xf32>
    tpu.vector_store %arg8[%c0_6, %c0_7], %7 {strides = array<i32>} : memref<64x128xf32, #tpu.memory_space<vmem>>, vector<64x128xf32>,
    %c0_i32_8 = arith.constant 0 : i32
    %9 = arith.cmpi eq, %arg2, %c0_i32_8 : i32
    %10 = arith.extui %9 : i1 to i32
    %c0_i32_9 = arith.constant 0 : i32
    %11 = arith.cmpi ne, %10, %c0_i32_9 : i32
    scf.if %11 {
      %c0_10 = arith.constant 0 : index
      %c0_11 = arith.constant 0 : index
      %12 = vector.load %arg8[%c0_10, %c0_11] : memref<64x128xf32, #tpu.memory_space<vmem>>, vector<64x128xf32>
      %c0_12 = arith.constant 0 : index
      %c0_13 = arith.constant 0 : index
      %13 = vector.load %arg5[%c0_12, %c0_13] : memref<1x128xf32, #tpu.memory_space<vmem>>, vector<1x128xf32>
      %14 = vector.broadcast %13 : vector<1x128xf32> to vector<64x128xf32>
      %15 = arith.addf %12, %14 : vector<64x128xf32>
      %c0_14 = arith.constant 0 : index
      %c0_15 = arith.constant 0 : index
      %16 = vector.load %arg6[%c0_14, %c0_15] : memref<64x128xbf16, #tpu.memory_space<vmem>>, vector<64x128xbf16>
      %17 = arith.extf %16 : vector<64x128xbf16> to vector<64x128xf32>
      %18 = arith.addf %15, %17 : vector<64x128xf32>
      %cst_16 = arith.constant 0.000000e+00 : f32
      %19 = vector.broadcast %cst_16 : f32 to vector<64x128xf32>
      %20 = arith.maximumf %18, %19 : vector<64x128xf32>
      %21 = arith.truncf %20 : vector<64x128xf32> to vector<64x128xbf16>
      %c0_17 = arith.constant 0 : index
      %c0_18 = arith.constant 0 : index
      %22 = vector.load %arg7[%c0_17, %c0_18] : memref<64x128xbf16, #tpu.memory_space<vmem>>, vector<64x128xbf16>
      tpu.vector_store %arg7[%c0_17, %c0_18], %21 {strides = array<i32>} : memref<64x128xbf16, #tpu.memory_space<vmem>>, vector<64x128xbf16>,
    } else {
    }
    return
  }
  func.func @transform_0(%arg0: i32, %arg1: i32, %arg2: i32) -> (i32, i32) {
    %c0_i32 = arith.constant 0 : i32
    return %arg0, %arg2 : i32, i32
  }
  func.func @transform_1(%arg0: i32, %arg1: i32, %arg2: i32) -> (i32, i32) {
    %c0_i32 = arith.constant 0 : i32
    return %arg2, %arg1 : i32, i32
  }
  func.func @transform_2(%arg0: i32, %arg1: i32, %arg2: i32) -> (i32, i32) {
    %c0_i32 = arith.constant 0 : i32
    %c0_i32_0 = arith.constant 0 : i32
    return %c0_i32, %arg1 : i32, i32
  }
  func.func @transform_3(%arg0: i32, %arg1: i32, %arg2: i32) -> (i32, i32) {
    %c0_i32 = arith.constant 0 : i32
    return %arg0, %arg1 : i32, i32
  }
  func.func @transform_4(%arg0: i32, %arg1: i32, %arg2: i32) -> (i32, i32) {
    %c0_i32 = arith.constant 0 : i32
    return %arg0, %arg1 : i32, i32
  }
}

module attributes {stable_mosaic.version = 11 : i64} {
  func.func @_conv_bn_kernel(%arg0: i32, %arg1: i32, %arg2: i32, %arg3: memref<64x256xbf16, #tpu.memory_space<vmem>>, %arg4: memref<256x128xbf16, #tpu.memory_space<vmem>>, %arg5: memref<1x128xf32, #tpu.memory_space<vmem>>, %arg6: memref<64x128xbf16, #tpu.memory_space<vmem>>, %arg7: memref<64x128xf32, #tpu.memory_space<vmem>>) attributes {dimension_semantics = [#tpu.dimension_semantics<parallel>, #tpu.dimension_semantics<parallel>, #tpu.dimension_semantics<arbitrary>], iteration_bounds = array<i64: 1, 1, 1>, scalar_prefetch = 0 : i64, scratch_operands = 1 : i64, tpu.core_type = #tpu.core_type<tc>, window_params = [{transform_indices = @transform_0, window_bounds = array<i64: 64, 256>}, {transform_indices = @transform_1, window_bounds = array<i64: 256, 128>}, {transform_indices = @transform_2, window_bounds = array<i64: 1, 128>}, {transform_indices = @transform_3, window_bounds = array<i64: 64, 128>}]} {
    %c0_i32 = arith.constant 0 : i32
    %0 = arith.cmpi eq, %arg2, %c0_i32 : i32
    %1 = arith.extui %0 : i1 to i32
    %c0_i32_0 = arith.constant 0 : i32
    %2 = arith.cmpi ne, %1, %c0_i32_0 : i32
    scf.if %2 {
      %cst_10 = arith.constant 0.000000e+00 : f32
      %12 = vector.broadcast %cst_10 : f32 to vector<64x128xf32>
      %c0_11 = arith.constant 0 : index
      %c0_12 = arith.constant 0 : index
      %13 = vector.load %arg7[%c0_11, %c0_12] : memref<64x128xf32, #tpu.memory_space<vmem>>, vector<64x128xf32>
      tpu.vector_store %arg7[%c0_11, %c0_12], %12 {strides = array<i32>} : memref<64x128xf32, #tpu.memory_space<vmem>>, vector<64x128xf32>,
    } else {
    }
    %c0 = arith.constant 0 : index
    %c0_1 = arith.constant 0 : index
    %3 = vector.load %arg7[%c0, %c0_1] : memref<64x128xf32, #tpu.memory_space<vmem>>, vector<64x128xf32>
    %c0_2 = arith.constant 0 : index
    %c0_3 = arith.constant 0 : index
    %4 = vector.load %arg3[%c0_2, %c0_3] : memref<64x256xbf16, #tpu.memory_space<vmem>>, vector<64x256xbf16>
    %c0_4 = arith.constant 0 : index
    %c0_5 = arith.constant 0 : index
    %5 = vector.load %arg4[%c0_4, %c0_5] : memref<256x128xbf16, #tpu.memory_space<vmem>>, vector<256x128xbf16>
    %cst = arith.constant dense<0.000000e+00> : vector<64x128xf32>
    %6 = tpu.matmul %4, %5, %cst {dimension_numbers = #tpu.dot_dimension_numbers<[1], [0], [0], [1], [0, 0, 1, 1], [], []>} : vector<64x256xbf16>, vector<256x128xbf16>, vector<64x128xf32> -> vector<64x128xf32>
    %7 = arith.addf %3, %6 : vector<64x128xf32>
    %c0_6 = arith.constant 0 : index
    %c0_7 = arith.constant 0 : index
    %8 = vector.load %arg7[%c0_6, %c0_7] : memref<64x128xf32, #tpu.memory_space<vmem>>, vector<64x128xf32>
    tpu.vector_store %arg7[%c0_6, %c0_7], %7 {strides = array<i32>} : memref<64x128xf32, #tpu.memory_space<vmem>>, vector<64x128xf32>,
    %c0_i32_8 = arith.constant 0 : i32
    %9 = arith.cmpi eq, %arg2, %c0_i32_8 : i32
    %10 = arith.extui %9 : i1 to i32
    %c0_i32_9 = arith.constant 0 : i32
    %11 = arith.cmpi ne, %10, %c0_i32_9 : i32
    scf.if %11 {
      %c0_10 = arith.constant 0 : index
      %c0_11 = arith.constant 0 : index
      %12 = vector.load %arg7[%c0_10, %c0_11] : memref<64x128xf32, #tpu.memory_space<vmem>>, vector<64x128xf32>
      %c0_12 = arith.constant 0 : index
      %c0_13 = arith.constant 0 : index
      %13 = vector.load %arg5[%c0_12, %c0_13] : memref<1x128xf32, #tpu.memory_space<vmem>>, vector<1x128xf32>
      %14 = vector.broadcast %13 : vector<1x128xf32> to vector<64x128xf32>
      %15 = arith.addf %12, %14 : vector<64x128xf32>
      %cst_14 = arith.constant 0.000000e+00 : f32
      %16 = vector.broadcast %cst_14 : f32 to vector<64x128xf32>
      %17 = arith.maximumf %15, %16 : vector<64x128xf32>
      %18 = arith.truncf %17 : vector<64x128xf32> to vector<64x128xbf16>
      %c0_15 = arith.constant 0 : index
      %c0_16 = arith.constant 0 : index
      %19 = vector.load %arg6[%c0_15, %c0_16] : memref<64x128xbf16, #tpu.memory_space<vmem>>, vector<64x128xbf16>
      tpu.vector_store %arg6[%c0_15, %c0_16], %18 {strides = array<i32>} : memref<64x128xbf16, #tpu.memory_space<vmem>>, vector<64x128xbf16>,
    } else {
    }
    return
  }
  func.func @transform_0(%arg0: i32, %arg1: i32, %arg2: i32) -> (i32, i32) {
    %c0_i32 = arith.constant 0 : i32
    return %arg0, %arg2 : i32, i32
  }
  func.func @transform_1(%arg0: i32, %arg1: i32, %arg2: i32) -> (i32, i32) {
    %c0_i32 = arith.constant 0 : i32
    return %arg2, %arg1 : i32, i32
  }
  func.func @transform_2(%arg0: i32, %arg1: i32, %arg2: i32) -> (i32, i32) {
    %c0_i32 = arith.constant 0 : i32
    %c0_i32_0 = arith.constant 0 : i32
    return %c0_i32, %arg1 : i32, i32
  }
  func.func @transform_3(%arg0: i32, %arg1: i32, %arg2: i32) -> (i32, i32) {
    %c0_i32 = arith.constant 0 : i32
    return %arg0, %arg1 : i32, i32
  }
}

module attributes {stable_mosaic.version = 11 : i64} {
  func.func @_maxpool_windows_kernel(%arg0: i32, %arg1: memref<40x16xbf16, #tpu.memory_space<vmem>>, %arg2: memref<40x16xbf16, #tpu.memory_space<vmem>>, %arg3: memref<40x16xbf16, #tpu.memory_space<vmem>>, %arg4: memref<40x16xbf16, #tpu.memory_space<vmem>>, %arg5: memref<40x16xbf16, #tpu.memory_space<vmem>>) attributes {dimension_semantics = [#tpu.dimension_semantics<parallel>], iteration_bounds = array<i64: 1>, scalar_prefetch = 0 : i64, scratch_operands = 0 : i64, tpu.core_type = #tpu.core_type<tc>, window_params = [{transform_indices = @transform_0, window_bounds = array<i64: 40, 16>}, {transform_indices = @transform_1, window_bounds = array<i64: 40, 16>}, {transform_indices = @transform_2, window_bounds = array<i64: 40, 16>}, {transform_indices = @transform_3, window_bounds = array<i64: 40, 16>}, {transform_indices = @transform_4, window_bounds = array<i64: 40, 16>}]} {
    %c0 = arith.constant 0 : index
    %c0_0 = arith.constant 0 : index
    %0 = vector.load %arg1[%c0, %c0_0] : memref<40x16xbf16, #tpu.memory_space<vmem>>, vector<40x16xbf16>
    %c0_1 = arith.constant 0 : index
    %c0_2 = arith.constant 0 : index
    %1 = vector.load %arg2[%c0_1, %c0_2] : memref<40x16xbf16, #tpu.memory_space<vmem>>, vector<40x16xbf16>
    %2 = arith.maximumf %0, %1 : vector<40x16xbf16>
    %c0_3 = arith.constant 0 : index
    %c0_4 = arith.constant 0 : index
    %3 = vector.load %arg3[%c0_3, %c0_4] : memref<40x16xbf16, #tpu.memory_space<vmem>>, vector<40x16xbf16>
    %4 = arith.maximumf %2, %3 : vector<40x16xbf16>
    %c0_5 = arith.constant 0 : index
    %c0_6 = arith.constant 0 : index
    %5 = vector.load %arg4[%c0_5, %c0_6] : memref<40x16xbf16, #tpu.memory_space<vmem>>, vector<40x16xbf16>
    %6 = arith.maximumf %4, %5 : vector<40x16xbf16>
    %c0_7 = arith.constant 0 : index
    %c0_8 = arith.constant 0 : index
    %7 = vector.load %arg5[%c0_7, %c0_8] : memref<40x16xbf16, #tpu.memory_space<vmem>>, vector<40x16xbf16>
    tpu.vector_store %arg5[%c0_7, %c0_8], %6 {strides = array<i32>} : memref<40x16xbf16, #tpu.memory_space<vmem>>, vector<40x16xbf16>,
    return
  }
  func.func @transform_0(%arg0: i32) -> (i32, i32) {
    %c0_i32 = arith.constant 0 : i32
    %c0_i32_0 = arith.constant 0 : i32
    return %arg0, %c0_i32 : i32, i32
  }
  func.func @transform_1(%arg0: i32) -> (i32, i32) {
    %c0_i32 = arith.constant 0 : i32
    %c0_i32_0 = arith.constant 0 : i32
    return %arg0, %c0_i32 : i32, i32
  }
  func.func @transform_2(%arg0: i32) -> (i32, i32) {
    %c0_i32 = arith.constant 0 : i32
    %c0_i32_0 = arith.constant 0 : i32
    return %arg0, %c0_i32 : i32, i32
  }
  func.func @transform_3(%arg0: i32) -> (i32, i32) {
    %c0_i32 = arith.constant 0 : i32
    %c0_i32_0 = arith.constant 0 : i32
    return %arg0, %c0_i32 : i32, i32
  }
  func.func @transform_4(%arg0: i32) -> (i32, i32) {
    %c0_i32 = arith.constant 0 : i32
    %c0_i32_0 = arith.constant 0 : i32
    return %arg0, %c0_i32 : i32, i32
  }
}

module attributes {stable_mosaic.version = 11 : i64} {
  func.func @_conv_bn_kernel(%arg0: i32, %arg1: i32, %arg2: i32, %arg3: memref<40x256xbf16, #tpu.memory_space<vmem>>, %arg4: memref<256x128xbf16, #tpu.memory_space<vmem>>, %arg5: memref<1x128xf32, #tpu.memory_space<vmem>>, %arg6: memref<40x128xbf16, #tpu.memory_space<vmem>>, %arg7: memref<40x128xf32, #tpu.memory_space<vmem>>) attributes {dimension_semantics = [#tpu.dimension_semantics<parallel>, #tpu.dimension_semantics<parallel>, #tpu.dimension_semantics<arbitrary>], iteration_bounds = array<i64: 1, 1, 1>, scalar_prefetch = 0 : i64, scratch_operands = 1 : i64, tpu.core_type = #tpu.core_type<tc>, window_params = [{transform_indices = @transform_0, window_bounds = array<i64: 40, 256>}, {transform_indices = @transform_1, window_bounds = array<i64: 256, 128>}, {transform_indices = @transform_2, window_bounds = array<i64: 1, 128>}, {transform_indices = @transform_3, window_bounds = array<i64: 40, 128>}]} {
    %c0_i32 = arith.constant 0 : i32
    %0 = arith.cmpi eq, %arg2, %c0_i32 : i32
    %1 = arith.extui %0 : i1 to i32
    %c0_i32_0 = arith.constant 0 : i32
    %2 = arith.cmpi ne, %1, %c0_i32_0 : i32
    scf.if %2 {
      %cst_10 = arith.constant 0.000000e+00 : f32
      %12 = vector.broadcast %cst_10 : f32 to vector<40x128xf32>
      %c0_11 = arith.constant 0 : index
      %c0_12 = arith.constant 0 : index
      %13 = vector.load %arg7[%c0_11, %c0_12] : memref<40x128xf32, #tpu.memory_space<vmem>>, vector<40x128xf32>
      tpu.vector_store %arg7[%c0_11, %c0_12], %12 {strides = array<i32>} : memref<40x128xf32, #tpu.memory_space<vmem>>, vector<40x128xf32>,
    } else {
    }
    %c0 = arith.constant 0 : index
    %c0_1 = arith.constant 0 : index
    %3 = vector.load %arg7[%c0, %c0_1] : memref<40x128xf32, #tpu.memory_space<vmem>>, vector<40x128xf32>
    %c0_2 = arith.constant 0 : index
    %c0_3 = arith.constant 0 : index
    %4 = vector.load %arg3[%c0_2, %c0_3] : memref<40x256xbf16, #tpu.memory_space<vmem>>, vector<40x256xbf16>
    %c0_4 = arith.constant 0 : index
    %c0_5 = arith.constant 0 : index
    %5 = vector.load %arg4[%c0_4, %c0_5] : memref<256x128xbf16, #tpu.memory_space<vmem>>, vector<256x128xbf16>
    %cst = arith.constant dense<0.000000e+00> : vector<40x128xf32>
    %6 = tpu.matmul %4, %5, %cst {dimension_numbers = #tpu.dot_dimension_numbers<[1], [0], [0], [1], [0, 0, 1, 1], [], []>} : vector<40x256xbf16>, vector<256x128xbf16>, vector<40x128xf32> -> vector<40x128xf32>
    %7 = arith.addf %3, %6 : vector<40x128xf32>
    %c0_6 = arith.constant 0 : index
    %c0_7 = arith.constant 0 : index
    %8 = vector.load %arg7[%c0_6, %c0_7] : memref<40x128xf32, #tpu.memory_space<vmem>>, vector<40x128xf32>
    tpu.vector_store %arg7[%c0_6, %c0_7], %7 {strides = array<i32>} : memref<40x128xf32, #tpu.memory_space<vmem>>, vector<40x128xf32>,
    %c0_i32_8 = arith.constant 0 : i32
    %9 = arith.cmpi eq, %arg2, %c0_i32_8 : i32
    %10 = arith.extui %9 : i1 to i32
    %c0_i32_9 = arith.constant 0 : i32
    %11 = arith.cmpi ne, %10, %c0_i32_9 : i32
    scf.if %11 {
      %c0_10 = arith.constant 0 : index
      %c0_11 = arith.constant 0 : index
      %12 = vector.load %arg7[%c0_10, %c0_11] : memref<40x128xf32, #tpu.memory_space<vmem>>, vector<40x128xf32>
      %c0_12 = arith.constant 0 : index
      %c0_13 = arith.constant 0 : index
      %13 = vector.load %arg5[%c0_12, %c0_13] : memref<1x128xf32, #tpu.memory_space<vmem>>, vector<1x128xf32>
      %14 = vector.broadcast %13 : vector<1x128xf32> to vector<40x128xf32>
      %15 = arith.addf %12, %14 : vector<40x128xf32>
      %cst_14 = arith.constant 0.000000e+00 : f32
      %16 = vector.broadcast %cst_14 : f32 to vector<40x128xf32>
      %17 = arith.maximumf %15, %16 : vector<40x128xf32>
      %18 = arith.truncf %17 : vector<40x128xf32> to vector<40x128xbf16>
      %c0_15 = arith.constant 0 : index
      %c0_16 = arith.constant 0 : index
      %19 = vector.load %arg6[%c0_15, %c0_16] : memref<40x128xbf16, #tpu.memory_space<vmem>>, vector<40x128xbf16>
      tpu.vector_store %arg6[%c0_15, %c0_16], %18 {strides = array<i32>} : memref<40x128xbf16, #tpu.memory_space<vmem>>, vector<40x128xbf16>,
    } else {
    }
    return
  }
  func.func @transform_0(%arg0: i32, %arg1: i32, %arg2: i32) -> (i32, i32) {
    %c0_i32 = arith.constant 0 : i32
    return %arg0, %arg2 : i32, i32
  }
  func.func @transform_1(%arg0: i32, %arg1: i32, %arg2: i32) -> (i32, i32) {
    %c0_i32 = arith.constant 0 : i32
    return %arg2, %arg1 : i32, i32
  }
  func.func @transform_2(%arg0: i32, %arg1: i32, %arg2: i32) -> (i32, i32) {
    %c0_i32 = arith.constant 0 : i32
    %c0_i32_0 = arith.constant 0 : i32
    return %c0_i32, %arg1 : i32, i32
  }
  func.func @transform_3(%arg0: i32, %arg1: i32, %arg2: i32) -> (i32, i32) {
    %c0_i32 = arith.constant 0 : i32
    return %arg0, %arg1 : i32, i32
  }
}

module attributes {stable_mosaic.version = 11 : i64} {
  func.func @_conv_bn_kernel(%arg0: i32, %arg1: i32, %arg2: i32, %arg3: memref<40x128xbf16, #tpu.memory_space<vmem>>, %arg4: memref<128x128xbf16, #tpu.memory_space<vmem>>, %arg5: memref<1x128xf32, #tpu.memory_space<vmem>>, %arg6: memref<40x128xbf16, #tpu.memory_space<vmem>>, %arg7: memref<40x128xf32, #tpu.memory_space<vmem>>) attributes {dimension_semantics = [#tpu.dimension_semantics<parallel>, #tpu.dimension_semantics<parallel>, #tpu.dimension_semantics<arbitrary>], iteration_bounds = array<i64: 1, 1, 1>, scalar_prefetch = 0 : i64, scratch_operands = 1 : i64, tpu.core_type = #tpu.core_type<tc>, window_params = [{transform_indices = @transform_0, window_bounds = array<i64: 40, 128>}, {transform_indices = @transform_1, window_bounds = array<i64: 128, 128>}, {transform_indices = @transform_2, window_bounds = array<i64: 1, 128>}, {transform_indices = @transform_3, window_bounds = array<i64: 40, 128>}]} {
    %c0_i32 = arith.constant 0 : i32
    %0 = arith.cmpi eq, %arg2, %c0_i32 : i32
    %1 = arith.extui %0 : i1 to i32
    %c0_i32_0 = arith.constant 0 : i32
    %2 = arith.cmpi ne, %1, %c0_i32_0 : i32
    scf.if %2 {
      %cst_10 = arith.constant 0.000000e+00 : f32
      %12 = vector.broadcast %cst_10 : f32 to vector<40x128xf32>
      %c0_11 = arith.constant 0 : index
      %c0_12 = arith.constant 0 : index
      %13 = vector.load %arg7[%c0_11, %c0_12] : memref<40x128xf32, #tpu.memory_space<vmem>>, vector<40x128xf32>
      tpu.vector_store %arg7[%c0_11, %c0_12], %12 {strides = array<i32>} : memref<40x128xf32, #tpu.memory_space<vmem>>, vector<40x128xf32>,
    } else {
    }
    %c0 = arith.constant 0 : index
    %c0_1 = arith.constant 0 : index
    %3 = vector.load %arg7[%c0, %c0_1] : memref<40x128xf32, #tpu.memory_space<vmem>>, vector<40x128xf32>
    %c0_2 = arith.constant 0 : index
    %c0_3 = arith.constant 0 : index
    %4 = vector.load %arg3[%c0_2, %c0_3] : memref<40x128xbf16, #tpu.memory_space<vmem>>, vector<40x128xbf16>
    %c0_4 = arith.constant 0 : index
    %c0_5 = arith.constant 0 : index
    %5 = vector.load %arg4[%c0_4, %c0_5] : memref<128x128xbf16, #tpu.memory_space<vmem>>, vector<128x128xbf16>
    %cst = arith.constant dense<0.000000e+00> : vector<40x128xf32>
    %6 = tpu.matmul %4, %5, %cst {dimension_numbers = #tpu.dot_dimension_numbers<[1], [0], [0], [1], [0, 0, 1, 1], [], []>} : vector<40x128xbf16>, vector<128x128xbf16>, vector<40x128xf32> -> vector<40x128xf32>
    %7 = arith.addf %3, %6 : vector<40x128xf32>
    %c0_6 = arith.constant 0 : index
    %c0_7 = arith.constant 0 : index
    %8 = vector.load %arg7[%c0_6, %c0_7] : memref<40x128xf32, #tpu.memory_space<vmem>>, vector<40x128xf32>
    tpu.vector_store %arg7[%c0_6, %c0_7], %7 {strides = array<i32>} : memref<40x128xf32, #tpu.memory_space<vmem>>, vector<40x128xf32>,
    %c0_i32_8 = arith.constant 0 : i32
    %9 = arith.cmpi eq, %arg2, %c0_i32_8 : i32
    %10 = arith.extui %9 : i1 to i32
    %c0_i32_9 = arith.constant 0 : i32
    %11 = arith.cmpi ne, %10, %c0_i32_9 : i32
    scf.if %11 {
      %c0_10 = arith.constant 0 : index
      %c0_11 = arith.constant 0 : index
      %12 = vector.load %arg7[%c0_10, %c0_11] : memref<40x128xf32, #tpu.memory_space<vmem>>, vector<40x128xf32>
      %c0_12 = arith.constant 0 : index
      %c0_13 = arith.constant 0 : index
      %13 = vector.load %arg5[%c0_12, %c0_13] : memref<1x128xf32, #tpu.memory_space<vmem>>, vector<1x128xf32>
      %14 = vector.broadcast %13 : vector<1x128xf32> to vector<40x128xf32>
      %15 = arith.addf %12, %14 : vector<40x128xf32>
      %16 = arith.truncf %15 : vector<40x128xf32> to vector<40x128xbf16>
      %c0_14 = arith.constant 0 : index
      %c0_15 = arith.constant 0 : index
      %17 = vector.load %arg6[%c0_14, %c0_15] : memref<40x128xbf16, #tpu.memory_space<vmem>>, vector<40x128xbf16>
      tpu.vector_store %arg6[%c0_14, %c0_15], %16 {strides = array<i32>} : memref<40x128xbf16, #tpu.memory_space<vmem>>, vector<40x128xbf16>,
    } else {
    }
    return
  }
  func.func @transform_0(%arg0: i32, %arg1: i32, %arg2: i32) -> (i32, i32) {
    %c0_i32 = arith.constant 0 : i32
    return %arg0, %arg2 : i32, i32
  }
  func.func @transform_1(%arg0: i32, %arg1: i32, %arg2: i32) -> (i32, i32) {
    %c0_i32 = arith.constant 0 : i32
    return %arg2, %arg1 : i32, i32
  }
  func.func @transform_2(%arg0: i32, %arg1: i32, %arg2: i32) -> (i32, i32) {
    %c0_i32 = arith.constant 0 : i32
    %c0_i32_0 = arith.constant 0 : i32
    return %c0_i32, %arg1 : i32, i32
  }
  func.func @transform_3(%arg0: i32, %arg1: i32, %arg2: i32) -> (i32, i32) {
    %c0_i32 = arith.constant 0 : i32
    return %arg0, %arg1 : i32, i32
  }
}

module attributes {stable_mosaic.version = 11 : i64} {
  func.func @_conv_bn_kernel(%arg0: i32, %arg1: i32, %arg2: i32, %arg3: memref<40x384xbf16, #tpu.memory_space<vmem>>, %arg4: memref<384x128xbf16, #tpu.memory_space<vmem>>, %arg5: memref<1x128xf32, #tpu.memory_space<vmem>>, %arg6: memref<40x128xbf16, #tpu.memory_space<vmem>>, %arg7: memref<40x128xf32, #tpu.memory_space<vmem>>) attributes {dimension_semantics = [#tpu.dimension_semantics<parallel>, #tpu.dimension_semantics<parallel>, #tpu.dimension_semantics<arbitrary>], iteration_bounds = array<i64: 1, 1, 1>, scalar_prefetch = 0 : i64, scratch_operands = 1 : i64, tpu.core_type = #tpu.core_type<tc>, window_params = [{transform_indices = @transform_0, window_bounds = array<i64: 40, 384>}, {transform_indices = @transform_1, window_bounds = array<i64: 384, 128>}, {transform_indices = @transform_2, window_bounds = array<i64: 1, 128>}, {transform_indices = @transform_3, window_bounds = array<i64: 40, 128>}]} {
    %c0_i32 = arith.constant 0 : i32
    %0 = arith.cmpi eq, %arg2, %c0_i32 : i32
    %1 = arith.extui %0 : i1 to i32
    %c0_i32_0 = arith.constant 0 : i32
    %2 = arith.cmpi ne, %1, %c0_i32_0 : i32
    scf.if %2 {
      %cst_10 = arith.constant 0.000000e+00 : f32
      %12 = vector.broadcast %cst_10 : f32 to vector<40x128xf32>
      %c0_11 = arith.constant 0 : index
      %c0_12 = arith.constant 0 : index
      %13 = vector.load %arg7[%c0_11, %c0_12] : memref<40x128xf32, #tpu.memory_space<vmem>>, vector<40x128xf32>
      tpu.vector_store %arg7[%c0_11, %c0_12], %12 {strides = array<i32>} : memref<40x128xf32, #tpu.memory_space<vmem>>, vector<40x128xf32>,
    } else {
    }
    %c0 = arith.constant 0 : index
    %c0_1 = arith.constant 0 : index
    %3 = vector.load %arg7[%c0, %c0_1] : memref<40x128xf32, #tpu.memory_space<vmem>>, vector<40x128xf32>
    %c0_2 = arith.constant 0 : index
    %c0_3 = arith.constant 0 : index
    %4 = vector.load %arg3[%c0_2, %c0_3] : memref<40x384xbf16, #tpu.memory_space<vmem>>, vector<40x384xbf16>
    %c0_4 = arith.constant 0 : index
    %c0_5 = arith.constant 0 : index
    %5 = vector.load %arg4[%c0_4, %c0_5] : memref<384x128xbf16, #tpu.memory_space<vmem>>, vector<384x128xbf16>
    %cst = arith.constant dense<0.000000e+00> : vector<40x128xf32>
    %6 = tpu.matmul %4, %5, %cst {dimension_numbers = #tpu.dot_dimension_numbers<[1], [0], [0], [1], [0, 0, 1, 1], [], []>} : vector<40x384xbf16>, vector<384x128xbf16>, vector<40x128xf32> -> vector<40x128xf32>
    %7 = arith.addf %3, %6 : vector<40x128xf32>
    %c0_6 = arith.constant 0 : index
    %c0_7 = arith.constant 0 : index
    %8 = vector.load %arg7[%c0_6, %c0_7] : memref<40x128xf32, #tpu.memory_space<vmem>>, vector<40x128xf32>
    tpu.vector_store %arg7[%c0_6, %c0_7], %7 {strides = array<i32>} : memref<40x128xf32, #tpu.memory_space<vmem>>, vector<40x128xf32>,
    %c0_i32_8 = arith.constant 0 : i32
    %9 = arith.cmpi eq, %arg2, %c0_i32_8 : i32
    %10 = arith.extui %9 : i1 to i32
    %c0_i32_9 = arith.constant 0 : i32
    %11 = arith.cmpi ne, %10, %c0_i32_9 : i32
    scf.if %11 {
      %c0_10 = arith.constant 0 : index
      %c0_11 = arith.constant 0 : index
      %12 = vector.load %arg7[%c0_10, %c0_11] : memref<40x128xf32, #tpu.memory_space<vmem>>, vector<40x128xf32>
      %c0_12 = arith.constant 0 : index
      %c0_13 = arith.constant 0 : index
      %13 = vector.load %arg5[%c0_12, %c0_13] : memref<1x128xf32, #tpu.memory_space<vmem>>, vector<1x128xf32>
      %14 = vector.broadcast %13 : vector<1x128xf32> to vector<40x128xf32>
      %15 = arith.addf %12, %14 : vector<40x128xf32>
      %cst_14 = arith.constant 0.000000e+00 : f32
      %16 = vector.broadcast %cst_14 : f32 to vector<40x128xf32>
      %17 = arith.maximumf %15, %16 : vector<40x128xf32>
      %18 = arith.truncf %17 : vector<40x128xf32> to vector<40x128xbf16>
      %c0_15 = arith.constant 0 : index
      %c0_16 = arith.constant 0 : index
      %19 = vector.load %arg6[%c0_15, %c0_16] : memref<40x128xbf16, #tpu.memory_space<vmem>>, vector<40x128xbf16>
      tpu.vector_store %arg6[%c0_15, %c0_16], %18 {strides = array<i32>} : memref<40x128xbf16, #tpu.memory_space<vmem>>, vector<40x128xbf16>,
    } else {
    }
    return
  }
  func.func @transform_0(%arg0: i32, %arg1: i32, %arg2: i32) -> (i32, i32) {
    %c0_i32 = arith.constant 0 : i32
    return %arg0, %arg2 : i32, i32
  }
  func.func @transform_1(%arg0: i32, %arg1: i32, %arg2: i32) -> (i32, i32) {
    %c0_i32 = arith.constant 0 : i32
    return %arg2, %arg1 : i32, i32
  }
  func.func @transform_2(%arg0: i32, %arg1: i32, %arg2: i32) -> (i32, i32) {
    %c0_i32 = arith.constant 0 : i32
    %c0_i32_0 = arith.constant 0 : i32
    return %c0_i32, %arg1 : i32, i32
  }
  func.func @transform_3(%arg0: i32, %arg1: i32, %arg2: i32) -> (i32, i32) {
    %c0_i32 = arith.constant 0 : i32
    return %arg0, %arg1 : i32, i32
  }
}

module attributes {stable_mosaic.version = 11 : i64} {
  func.func @_conv_bn_kernel(%arg0: i32, %arg1: i32, %arg2: i32, %arg3: memref<40x384xbf16, #tpu.memory_space<vmem>>, %arg4: memref<384x128xbf16, #tpu.memory_space<vmem>>, %arg5: memref<1x128xf32, #tpu.memory_space<vmem>>, %arg6: memref<40x128xbf16, #tpu.memory_space<vmem>>, %arg7: memref<40x128xbf16, #tpu.memory_space<vmem>>, %arg8: memref<40x128xf32, #tpu.memory_space<vmem>>) attributes {dimension_semantics = [#tpu.dimension_semantics<parallel>, #tpu.dimension_semantics<parallel>, #tpu.dimension_semantics<arbitrary>], iteration_bounds = array<i64: 1, 1, 1>, scalar_prefetch = 0 : i64, scratch_operands = 1 : i64, tpu.core_type = #tpu.core_type<tc>, window_params = [{transform_indices = @transform_0, window_bounds = array<i64: 40, 384>}, {transform_indices = @transform_1, window_bounds = array<i64: 384, 128>}, {transform_indices = @transform_2, window_bounds = array<i64: 1, 128>}, {transform_indices = @transform_3, window_bounds = array<i64: 40, 128>}, {transform_indices = @transform_4, window_bounds = array<i64: 40, 128>}]} {
    %c0_i32 = arith.constant 0 : i32
    %0 = arith.cmpi eq, %arg2, %c0_i32 : i32
    %1 = arith.extui %0 : i1 to i32
    %c0_i32_0 = arith.constant 0 : i32
    %2 = arith.cmpi ne, %1, %c0_i32_0 : i32
    scf.if %2 {
      %cst_10 = arith.constant 0.000000e+00 : f32
      %12 = vector.broadcast %cst_10 : f32 to vector<40x128xf32>
      %c0_11 = arith.constant 0 : index
      %c0_12 = arith.constant 0 : index
      %13 = vector.load %arg8[%c0_11, %c0_12] : memref<40x128xf32, #tpu.memory_space<vmem>>, vector<40x128xf32>
      tpu.vector_store %arg8[%c0_11, %c0_12], %12 {strides = array<i32>} : memref<40x128xf32, #tpu.memory_space<vmem>>, vector<40x128xf32>,
    } else {
    }
    %c0 = arith.constant 0 : index
    %c0_1 = arith.constant 0 : index
    %3 = vector.load %arg8[%c0, %c0_1] : memref<40x128xf32, #tpu.memory_space<vmem>>, vector<40x128xf32>
    %c0_2 = arith.constant 0 : index
    %c0_3 = arith.constant 0 : index
    %4 = vector.load %arg3[%c0_2, %c0_3] : memref<40x384xbf16, #tpu.memory_space<vmem>>, vector<40x384xbf16>
    %c0_4 = arith.constant 0 : index
    %c0_5 = arith.constant 0 : index
    %5 = vector.load %arg4[%c0_4, %c0_5] : memref<384x128xbf16, #tpu.memory_space<vmem>>, vector<384x128xbf16>
    %cst = arith.constant dense<0.000000e+00> : vector<40x128xf32>
    %6 = tpu.matmul %4, %5, %cst {dimension_numbers = #tpu.dot_dimension_numbers<[1], [0], [0], [1], [0, 0, 1, 1], [], []>} : vector<40x384xbf16>, vector<384x128xbf16>, vector<40x128xf32> -> vector<40x128xf32>
    %7 = arith.addf %3, %6 : vector<40x128xf32>
    %c0_6 = arith.constant 0 : index
    %c0_7 = arith.constant 0 : index
    %8 = vector.load %arg8[%c0_6, %c0_7] : memref<40x128xf32, #tpu.memory_space<vmem>>, vector<40x128xf32>
    tpu.vector_store %arg8[%c0_6, %c0_7], %7 {strides = array<i32>} : memref<40x128xf32, #tpu.memory_space<vmem>>, vector<40x128xf32>,
    %c0_i32_8 = arith.constant 0 : i32
    %9 = arith.cmpi eq, %arg2, %c0_i32_8 : i32
    %10 = arith.extui %9 : i1 to i32
    %c0_i32_9 = arith.constant 0 : i32
    %11 = arith.cmpi ne, %10, %c0_i32_9 : i32
    scf.if %11 {
      %c0_10 = arith.constant 0 : index
      %c0_11 = arith.constant 0 : index
      %12 = vector.load %arg8[%c0_10, %c0_11] : memref<40x128xf32, #tpu.memory_space<vmem>>, vector<40x128xf32>
      %c0_12 = arith.constant 0 : index
      %c0_13 = arith.constant 0 : index
      %13 = vector.load %arg5[%c0_12, %c0_13] : memref<1x128xf32, #tpu.memory_space<vmem>>, vector<1x128xf32>
      %14 = vector.broadcast %13 : vector<1x128xf32> to vector<40x128xf32>
      %15 = arith.addf %12, %14 : vector<40x128xf32>
      %c0_14 = arith.constant 0 : index
      %c0_15 = arith.constant 0 : index
      %16 = vector.load %arg6[%c0_14, %c0_15] : memref<40x128xbf16, #tpu.memory_space<vmem>>, vector<40x128xbf16>
      %17 = arith.extf %16 : vector<40x128xbf16> to vector<40x128xf32>
      %18 = arith.addf %15, %17 : vector<40x128xf32>
      %cst_16 = arith.constant 0.000000e+00 : f32
      %19 = vector.broadcast %cst_16 : f32 to vector<40x128xf32>
      %20 = arith.maximumf %18, %19 : vector<40x128xf32>
      %21 = arith.truncf %20 : vector<40x128xf32> to vector<40x128xbf16>
      %c0_17 = arith.constant 0 : index
      %c0_18 = arith.constant 0 : index
      %22 = vector.load %arg7[%c0_17, %c0_18] : memref<40x128xbf16, #tpu.memory_space<vmem>>, vector<40x128xbf16>
      tpu.vector_store %arg7[%c0_17, %c0_18], %21 {strides = array<i32>} : memref<40x128xbf16, #tpu.memory_space<vmem>>, vector<40x128xbf16>,
    } else {
    }
    return
  }
  func.func @transform_0(%arg0: i32, %arg1: i32, %arg2: i32) -> (i32, i32) {
    %c0_i32 = arith.constant 0 : i32
    return %arg0, %arg2 : i32, i32
  }
  func.func @transform_1(%arg0: i32, %arg1: i32, %arg2: i32) -> (i32, i32) {
    %c0_i32 = arith.constant 0 : i32
    return %arg2, %arg1 : i32, i32
  }
  func.func @transform_2(%arg0: i32, %arg1: i32, %arg2: i32) -> (i32, i32) {
    %c0_i32 = arith.constant 0 : i32
    %c0_i32_0 = arith.constant 0 : i32
    return %c0_i32, %arg1 : i32, i32
  }
  func.func @transform_3(%arg0: i32, %arg1: i32, %arg2: i32) -> (i32, i32) {
    %c0_i32 = arith.constant 0 : i32
    return %arg0, %arg1 : i32, i32
  }
  func.func @transform_4(%arg0: i32, %arg1: i32, %arg2: i32) -> (i32, i32) {
    %c0_i32 = arith.constant 0 : i32
    return %arg0, %arg1 : i32, i32
  }
}

module attributes {stable_mosaic.version = 11 : i64} {
  func.func @_conv_bn_kernel(%arg0: i32, %arg1: i32, %arg2: i32, %arg3: memref<24x128xbf16, #tpu.memory_space<vmem>>, %arg4: memref<128x128xbf16, #tpu.memory_space<vmem>>, %arg5: memref<1x128xf32, #tpu.memory_space<vmem>>, %arg6: memref<24x128xbf16, #tpu.memory_space<vmem>>, %arg7: memref<24x128xf32, #tpu.memory_space<vmem>>) attributes {dimension_semantics = [#tpu.dimension_semantics<parallel>, #tpu.dimension_semantics<parallel>, #tpu.dimension_semantics<arbitrary>], iteration_bounds = array<i64: 1, 1, 1>, scalar_prefetch = 0 : i64, scratch_operands = 1 : i64, tpu.core_type = #tpu.core_type<tc>, window_params = [{transform_indices = @transform_0, window_bounds = array<i64: 24, 128>}, {transform_indices = @transform_1, window_bounds = array<i64: 128, 128>}, {transform_indices = @transform_2, window_bounds = array<i64: 1, 128>}, {transform_indices = @transform_3, window_bounds = array<i64: 24, 128>}]} {
    %c0_i32 = arith.constant 0 : i32
    %0 = arith.cmpi eq, %arg2, %c0_i32 : i32
    %1 = arith.extui %0 : i1 to i32
    %c0_i32_0 = arith.constant 0 : i32
    %2 = arith.cmpi ne, %1, %c0_i32_0 : i32
    scf.if %2 {
      %cst_10 = arith.constant 0.000000e+00 : f32
      %12 = vector.broadcast %cst_10 : f32 to vector<24x128xf32>
      %c0_11 = arith.constant 0 : index
      %c0_12 = arith.constant 0 : index
      %13 = vector.load %arg7[%c0_11, %c0_12] : memref<24x128xf32, #tpu.memory_space<vmem>>, vector<24x128xf32>
      tpu.vector_store %arg7[%c0_11, %c0_12], %12 {strides = array<i32>} : memref<24x128xf32, #tpu.memory_space<vmem>>, vector<24x128xf32>,
    } else {
    }
    %c0 = arith.constant 0 : index
    %c0_1 = arith.constant 0 : index
    %3 = vector.load %arg7[%c0, %c0_1] : memref<24x128xf32, #tpu.memory_space<vmem>>, vector<24x128xf32>
    %c0_2 = arith.constant 0 : index
    %c0_3 = arith.constant 0 : index
    %4 = vector.load %arg3[%c0_2, %c0_3] : memref<24x128xbf16, #tpu.memory_space<vmem>>, vector<24x128xbf16>
    %c0_4 = arith.constant 0 : index
    %c0_5 = arith.constant 0 : index
    %5 = vector.load %arg4[%c0_4, %c0_5] : memref<128x128xbf16, #tpu.memory_space<vmem>>, vector<128x128xbf16>
    %cst = arith.constant dense<0.000000e+00> : vector<24x128xf32>
    %6 = tpu.matmul %4, %5, %cst {dimension_numbers = #tpu.dot_dimension_numbers<[1], [0], [0], [1], [0, 0, 1, 1], [], []>} : vector<24x128xbf16>, vector<128x128xbf16>, vector<24x128xf32> -> vector<24x128xf32>
    %7 = arith.addf %3, %6 : vector<24x128xf32>
    %c0_6 = arith.constant 0 : index
    %c0_7 = arith.constant 0 : index
    %8 = vector.load %arg7[%c0_6, %c0_7] : memref<24x128xf32, #tpu.memory_space<vmem>>, vector<24x128xf32>
    tpu.vector_store %arg7[%c0_6, %c0_7], %7 {strides = array<i32>} : memref<24x128xf32, #tpu.memory_space<vmem>>, vector<24x128xf32>,
    %c0_i32_8 = arith.constant 0 : i32
    %9 = arith.cmpi eq, %arg2, %c0_i32_8 : i32
    %10 = arith.extui %9 : i1 to i32
    %c0_i32_9 = arith.constant 0 : i32
    %11 = arith.cmpi ne, %10, %c0_i32_9 : i32
    scf.if %11 {
      %c0_10 = arith.constant 0 : index
      %c0_11 = arith.constant 0 : index
      %12 = vector.load %arg7[%c0_10, %c0_11] : memref<24x128xf32, #tpu.memory_space<vmem>>, vector<24x128xf32>
      %c0_12 = arith.constant 0 : index
      %c0_13 = arith.constant 0 : index
      %13 = vector.load %arg5[%c0_12, %c0_13] : memref<1x128xf32, #tpu.memory_space<vmem>>, vector<1x128xf32>
      %14 = vector.broadcast %13 : vector<1x128xf32> to vector<24x128xf32>
      %15 = arith.addf %12, %14 : vector<24x128xf32>
      %cst_14 = arith.constant 0.000000e+00 : f32
      %16 = vector.broadcast %cst_14 : f32 to vector<24x128xf32>
      %17 = arith.maximumf %15, %16 : vector<24x128xf32>
      %18 = arith.truncf %17 : vector<24x128xf32> to vector<24x128xbf16>
      %c0_15 = arith.constant 0 : index
      %c0_16 = arith.constant 0 : index
      %19 = vector.load %arg6[%c0_15, %c0_16] : memref<24x128xbf16, #tpu.memory_space<vmem>>, vector<24x128xbf16>
      tpu.vector_store %arg6[%c0_15, %c0_16], %18 {strides = array<i32>} : memref<24x128xbf16, #tpu.memory_space<vmem>>, vector<24x128xbf16>,
    } else {
    }
    return
  }
  func.func @transform_0(%arg0: i32, %arg1: i32, %arg2: i32) -> (i32, i32) {
    %c0_i32 = arith.constant 0 : i32
    return %arg0, %arg2 : i32, i32
  }
  func.func @transform_1(%arg0: i32, %arg1: i32, %arg2: i32) -> (i32, i32) {
    %c0_i32 = arith.constant 0 : i32
    return %arg2, %arg1 : i32, i32
  }
  func.func @transform_2(%arg0: i32, %arg1: i32, %arg2: i32) -> (i32, i32) {
    %c0_i32 = arith.constant 0 : i32
    %c0_i32_0 = arith.constant 0 : i32
    return %c0_i32, %arg1 : i32, i32
  }
  func.func @transform_3(%arg0: i32, %arg1: i32, %arg2: i32) -> (i32, i32) {
    %c0_i32 = arith.constant 0 : i32
    return %arg0, %arg1 : i32, i32
  }
}

module attributes {stable_mosaic.version = 11 : i64} {
  func.func @_conv_bn_kernel(%arg0: i32, %arg1: i32, %arg2: i32, %arg3: memref<16x128xbf16, #tpu.memory_space<vmem>>, %arg4: memref<128x128xbf16, #tpu.memory_space<vmem>>, %arg5: memref<1x128xf32, #tpu.memory_space<vmem>>, %arg6: memref<16x128xbf16, #tpu.memory_space<vmem>>, %arg7: memref<16x128xf32, #tpu.memory_space<vmem>>) attributes {dimension_semantics = [#tpu.dimension_semantics<parallel>, #tpu.dimension_semantics<parallel>, #tpu.dimension_semantics<arbitrary>], iteration_bounds = array<i64: 1, 1, 1>, scalar_prefetch = 0 : i64, scratch_operands = 1 : i64, tpu.core_type = #tpu.core_type<tc>, window_params = [{transform_indices = @transform_0, window_bounds = array<i64: 16, 128>}, {transform_indices = @transform_1, window_bounds = array<i64: 128, 128>}, {transform_indices = @transform_2, window_bounds = array<i64: 1, 128>}, {transform_indices = @transform_3, window_bounds = array<i64: 16, 128>}]} {
    %c0_i32 = arith.constant 0 : i32
    %0 = arith.cmpi eq, %arg2, %c0_i32 : i32
    %1 = arith.extui %0 : i1 to i32
    %c0_i32_0 = arith.constant 0 : i32
    %2 = arith.cmpi ne, %1, %c0_i32_0 : i32
    scf.if %2 {
      %cst_10 = arith.constant 0.000000e+00 : f32
      %12 = vector.broadcast %cst_10 : f32 to vector<16x128xf32>
      %c0_11 = arith.constant 0 : index
      %c0_12 = arith.constant 0 : index
      %13 = vector.load %arg7[%c0_11, %c0_12] : memref<16x128xf32, #tpu.memory_space<vmem>>, vector<16x128xf32>
      tpu.vector_store %arg7[%c0_11, %c0_12], %12 {strides = array<i32>} : memref<16x128xf32, #tpu.memory_space<vmem>>, vector<16x128xf32>,
    } else {
    }
    %c0 = arith.constant 0 : index
    %c0_1 = arith.constant 0 : index
    %3 = vector.load %arg7[%c0, %c0_1] : memref<16x128xf32, #tpu.memory_space<vmem>>, vector<16x128xf32>
    %c0_2 = arith.constant 0 : index
    %c0_3 = arith.constant 0 : index
    %4 = vector.load %arg3[%c0_2, %c0_3] : memref<16x128xbf16, #tpu.memory_space<vmem>>, vector<16x128xbf16>
    %c0_4 = arith.constant 0 : index
    %c0_5 = arith.constant 0 : index
    %5 = vector.load %arg4[%c0_4, %c0_5] : memref<128x128xbf16, #tpu.memory_space<vmem>>, vector<128x128xbf16>
    %cst = arith.constant dense<0.000000e+00> : vector<16x128xf32>
    %6 = tpu.matmul %4, %5, %cst {dimension_numbers = #tpu.dot_dimension_numbers<[1], [0], [0], [1], [0, 0, 1, 1], [], []>} : vector<16x128xbf16>, vector<128x128xbf16>, vector<16x128xf32> -> vector<16x128xf32>
    %7 = arith.addf %3, %6 : vector<16x128xf32>
    %c0_6 = arith.constant 0 : index
    %c0_7 = arith.constant 0 : index
    %8 = vector.load %arg7[%c0_6, %c0_7] : memref<16x128xf32, #tpu.memory_space<vmem>>, vector<16x128xf32>
    tpu.vector_store %arg7[%c0_6, %c0_7], %7 {strides = array<i32>} : memref<16x128xf32, #tpu.memory_space<vmem>>, vector<16x128xf32>,
    %c0_i32_8 = arith.constant 0 : i32
    %9 = arith.cmpi eq, %arg2, %c0_i32_8 : i32
    %10 = arith.extui %9 : i1 to i32
    %c0_i32_9 = arith.constant 0 : i32
    %11 = arith.cmpi ne, %10, %c0_i32_9 : i32
    scf.if %11 {
      %c0_10 = arith.constant 0 : index
      %c0_11 = arith.constant 0 : index
      %12 = vector.load %arg7[%c0_10, %c0_11] : memref<16x128xf32, #tpu.memory_space<vmem>>, vector<16x128xf32>
      %c0_12 = arith.constant 0 : index
      %c0_13 = arith.constant 0 : index
      %13 = vector.load %arg5[%c0_12, %c0_13] : memref<1x128xf32, #tpu.memory_space<vmem>>, vector<1x128xf32>
      %14 = vector.broadcast %13 : vector<1x128xf32> to vector<16x128xf32>
      %15 = arith.addf %12, %14 : vector<16x128xf32>
      %cst_14 = arith.constant 0.000000e+00 : f32
      %16 = vector.broadcast %cst_14 : f32 to vector<16x128xf32>
      %17 = arith.maximumf %15, %16 : vector<16x128xf32>
      %18 = arith.truncf %17 : vector<16x128xf32> to vector<16x128xbf16>
      %c0_15 = arith.constant 0 : index
      %c0_16 = arith.constant 0 : index
      %19 = vector.load %arg6[%c0_15, %c0_16] : memref<16x128xbf16, #tpu.memory_space<vmem>>, vector<16x128xbf16>
      tpu.vector_store %arg6[%c0_15, %c0_16], %18 {strides = array<i32>} : memref<16x128xbf16, #tpu.memory_space<vmem>>, vector<16x128xbf16>,
    } else {
    }
    return
  }
  func.func @transform_0(%arg0: i32, %arg1: i32, %arg2: i32) -> (i32, i32) {
    %c0_i32 = arith.constant 0 : i32
    return %arg0, %arg2 : i32, i32
  }
  func.func @transform_1(%arg0: i32, %arg1: i32, %arg2: i32) -> (i32, i32) {
    %c0_i32 = arith.constant 0 : i32
    return %arg2, %arg1 : i32, i32
  }
  func.func @transform_2(%arg0: i32, %arg1: i32, %arg2: i32) -> (i32, i32) {
    %c0_i32 = arith.constant 0 : i32
    %c0_i32_0 = arith.constant 0 : i32
    return %c0_i32, %arg1 : i32, i32
  }
  func.func @transform_3(%arg0: i32, %arg1: i32, %arg2: i32) -> (i32, i32) {
    %c0_i32 = arith.constant 0 : i32
    return %arg0, %arg1 : i32, i32
  }
}

</mosaic_0001>

<llo_original>
// kernel: resnet_feature_extractor.35
$region0: #{resnet_feature_extractor.35}
  #allocation0 [shape = 'u32[]', space=smem, size = 0x4, offset = 0x4, fixed_abs, tag = 'smem constant byte address 0x4 - core index']
  #allocation1 [shape = 'u32[144,128]{1,0:T(1,128)}', space=vmem, size = 0x12000, scoped, tag = 'internal scratch']
  #allocation2 [shape = 'f32[512,128]{1,0:T(8,128)}', space=vmem, size = 0x40000, scoped, tag = 'scratch operand']
  %s0 = inlined_call_operand.vmem [shape: bf16[1024,128], index: 0, kind: input, shape index: {}]
  %s1 = inlined_call_operand.vmem [shape: bf16[128,128], index: 1, kind: input, shape index: {}]
  %s2 = inlined_call_operand.vmem [shape: f32[1,128], index: 2, kind: input, shape index: {}]
  %s3 = inlined_call_operand.vmem [shape: bf16[1024,128], index: 3, kind: output, shape index: {}]
  %s4 = sld [smem:[#allocation0]]
  $region53: #{resnet_feature_extractor.35} parent=0
    _
  %s6 = ssub.s32 1, %s4
  %s7 = scalar_select 0, %s6, %s4
  loop: start=0, step=1, limit=4
  $region2: #{resnet_feature_extractor.35} parent=0 // loop_pre_header
    _
  $region3: #{resnet_feature_extractor.35} parent=0 // loop_header
    %s9 = sphi 0, %s13
    %p10 = scmp.ge.s32.totalorder %s9, 4
    %s16 = sphi 0, %s35
    %s17 = sphi 0, %s31
    %s18 = sphi 0, %s27
    %s19 = sphi 0, %s16
    %s20 = sphi 0, %s17
    %s21 = sphi 0, %s18
    %s22 = sphi 0, %s19
    %s23 = sphi 0, %s20
    %s24 = sphi 0, %s21
    %s40 = sphi 0, %s42
    %s43 = sphi 0, %s40
    %s44 = sphi 0, %s43
    %s60 = sphi 0, %s44
    %s68 = sphi 0, %s70
    %s71 = sphi 0, %s68
    %s72 = sphi 0, %s71
    %s88 = sphi 0, %s72
    %s94 = sphi 0, %s96
    %s97 = sphi 0, %s94
    %s98 = sphi 0, %s97
    %s114 = sphi 0, %s98
    %s122 = sphi 0, %s124
    %s125 = sphi 0, %s122
    %s126 = sphi 0, %s125
    %s142 = sphi 0, %s126
  $region4: #{resnet_feature_extractor.35} parent=0 // loop_header_branch
    %12 = sbr.rel (%p10) target = $region8
  $region5: #{resnet_feature_extractor.35} parent=0 // loop_body
    %s14 = ssub.s32 %s9, 1
    %s15 = ssub.s32 %s9, 2
    %s25 = sadd.s32 1, %s18
    %p26 = scmp.ge.s32.totalorder %s25, 1
    %s27 = scalar_select %p26, 0, %s25
    %s28 = sadd.s32 1, %s17
    %s29 = scalar_select %p26, %s28, %s17
    %p30 = scmp.ge.s32.totalorder %s29, 1
    %s31 = scalar_select %p30, 0, %s29
    %s32 = sadd.s32 1, %s16
    %s33 = scalar_select %p30, %s32, %s16
    %p34 = scmp.ge.s32.totalorder %s33, 2
    %s35 = scalar_select %p34, 0, %s33
    %s36 = ssub.s32 %s16, %s35
    %s37 = ssub.s32 %s18, %s27
    %s38 = sor.u32 %s36, %s37
    %p39 = scmp.eq.s32.totalorder %s38, 0
    %s41 = sadd.s32 %s40, 1
    %s42 = scalar_select %p39, %s40, %s41
    %p45 = pneg %p39
    %p46 = scmp.eq.s32.totalorder %s9, 1
    %p47 = por %p45, %p46
    %p48 = scmp.ne.s32.totalorder %s40, %s43
    %p49 = scmp.eq.s32.totalorder %s9, 0
    %p50 = por %p48, %p49
    %p51 = scmp.ne.s32.totalorder %s40, %s43
    %p52 = scmp.eq.s32.totalorder %s14, 1
    %p53 = por %p51, %p52
    %p54 = scmp.ne.s32.totalorder %s43, %s44
    %p55 = scmp.eq.s32.totalorder %s14, 0
    %p56 = por %p54, %p55
    %p57 = scmp.ne.s32.totalorder %s43, %s44
    %p58 = scmp.eq.s32.totalorder %s15, 1
    %p59 = por %p57, %p58
    %p61 = scmp.ne.s32.totalorder %s44, %s60
    %p62 = scmp.eq.s32.totalorder %s15, 0
    %p63 = por %p61, %p62
    %s64 = ssub.s32 %s18, %s27
    %s65 = ssub.s32 %s17, %s31
    %s66 = sor.u32 %s64, %s65
    %p67 = scmp.eq.s32.totalorder %s66, 0
    %s69 = sadd.s32 %s68, 1
    %s70 = scalar_select %p67, %s68, %s69
    %p73 = pneg %p67
    %p74 = scmp.eq.s32.totalorder %s9, 1
    %p75 = por %p73, %p74
    %p76 = scmp.ne.s32.totalorder %s68, %s71
    %p77 = scmp.eq.s32.totalorder %s9, 0
    %p78 = por %p76, %p77
    %p79 = scmp.ne.s32.totalorder %s68, %s71
    %p80 = scmp.eq.s32.totalorder %s14, 1
    %p81 = por %p79, %p80
    %p82 = scmp.ne.s32.totalorder %s71, %s72
    %p83 = scmp.eq.s32.totalorder %s14, 0
    %p84 = por %p82, %p83
    %p85 = scmp.ne.s32.totalorder %s71, %s72
    %p86 = scmp.eq.s32.totalorder %s15, 1
    %p87 = por %p85, %p86
    %p89 = scmp.ne.s32.totalorder %s72, %s88
    %p90 = scmp.eq.s32.totalorder %s15, 0
    %p91 = por %p89, %p90
    %s92 = ssub.s32 %s17, %s31
    %p93 = scmp.eq.s32.totalorder %s92, 0
    %s95 = sadd.s32 %s94, 1
    %s96 = scalar_select %p93, %s94, %s95
    %p99 = pneg %p93
    %p100 = scmp.eq.s32.totalorder %s9, 1
    %p101 = por %p99, %p100
    %p102 = scmp.ne.s32.totalorder %s94, %s97
    %p103 = scmp.eq.s32.totalorder %s9, 0
    %p104 = por %p102, %p103
    %p105 = scmp.ne.s32.totalorder %s94, %s97
    %p106 = scmp.eq.s32.totalorder %s14, 1
    %p107 = por %p105, %p106
    %p108 = scmp.ne.s32.totalorder %s97, %s98
    %p109 = scmp.eq.s32.totalorder %s14, 0
    %p110 = por %p108, %p109
    %p111 = scmp.ne.s32.totalorder %s97, %s98
    %p112 = scmp.eq.s32.totalorder %s15, 1
    %p113 = por %p111, %p112
    %p115 = scmp.ne.s32.totalorder %s98, %s114
    %p116 = scmp.eq.s32.totalorder %s15, 0
    %p117 = por %p115, %p116
    %s118 = ssub.s32 %s16, %s35
    %s119 = ssub.s32 %s17, %s31
    %s120 = sor.u32 %s118, %s119
    %p121 = scmp.eq.s32.totalorder %s120, 0
    %s123 = sadd.s32 %s122, 1
    %s124 = scalar_select %p121, %s122, %s123
    %p127 = pneg %p121
    %p128 = scmp.eq.s32.totalorder %s9, 1
    %p129 = por %p127, %p128
    %p130 = scmp.ne.s32.totalorder %s122, %s125
    %p131 = scmp.eq.s32.totalorder %s9, 0
    %p132 = por %p130, %p131
    %p133 = scmp.ne.s32.totalorder %s122, %s125
    %p134 = scmp.eq.s32.totalorder %s14, 1
    %p135 = por %p133, %p134
    %p136 = scmp.ne.s32.totalorder %s125, %s126
    %p137 = scmp.eq.s32.totalorder %s14, 0
    %p138 = por %p136, %p137
    %p139 = scmp.ne.s32.totalorder %s125, %s126
    %p140 = scmp.eq.s32.totalorder %s15, 1
    %p141 = por %p139, %p140
    %p143 = scmp.ne.s32.totalorder %s126, %s142
    %p144 = scmp.eq.s32.totalorder %s15, 0
    %p145 = por %p143, %p144
    %p146 = scmp.le.s32.totalorder 1, %s9
    %p147 = scmp.lt.s32.totalorder %s9, 3
    %p148 = pnand %p146, %p147
    %p149 = pneg %p148
    // Predicated region
    $region9: #{resnet_feature_extractor.35} parent=5 // pred_check
      _
    $region10: #{resnet_feature_extractor.35} parent=5 // pred_check_branch
      %151 = sbr.rel (%p148) target = $region12
    $region11: #{resnet_feature_extractor.35} parent=5 // pred_region
      %s152 = ssub.s32 %s9, 1
      // Predicated region
      $region13: #{resnet_feature_extractor.35} parent=11 // pred_check
        %p153 = pneg %p84
      $region14: #{resnet_feature_extractor.35} parent=11 // pred_check_branch
        %155 = sbr.rel (%p153) target = $region16
      $region15: #{resnet_feature_extractor.35} parent=11 // pred_region
        %s156 = smul.u32 16, %s21
        %p157 = scmp.lt.s32.totalorder %s156, 15
        %s158 = scalar_select %p157, %s156, 15
        %p159 = scmp.lt.s32.totalorder %s20, 0
        %s160 = scalar_select %p159, %s20, 0
        %s161 = sadd.s32 %s160, %s158
        %s162 = smul.addr %s161, 4
        %s163 = scalar_lea.vmem %s1, %s162
        %s164 = smul.u32 16, %s21
      $region16: #{resnet_feature_extractor.35} parent=11 // pred_fallthru
        _
      // Predicated region
      $region17: #{resnet_feature_extractor.35} parent=11 // pred_check
        %p165 = pneg %p110
      $region18: #{resnet_feature_extractor.35} parent=11 // pred_check_branch
        %167 = sbr.rel (%p165) target = $region20
      $region19: #{resnet_feature_extractor.35} parent=11 // pred_region
        %p168 = scmp.lt.s32.totalorder %s20, 0
        %s169 = scalar_select %p168, %s20, 0
        %s170 = scalar_lea.vmem %s2, %s169
      $region20: #{resnet_feature_extractor.35} parent=11 // pred_fallthru
        _
    $region12: #{resnet_feature_extractor.35} parent=5 // pred_fallthru
      _
    %p171 = scmp.lt.s32.totalorder %s9, 2
    // Predicated region
    $region21: #{resnet_feature_extractor.35} parent=5 // pred_check
      %p172 = pneg %p171
    $region22: #{resnet_feature_extractor.35} parent=5 // pred_check_branch
      %174 = sbr.rel (%p172) target = $region24
    $region23: #{resnet_feature_extractor.35} parent=5 // pred_region
      // Predicated region
      $region25: #{resnet_feature_extractor.35} parent=23 // pred_check
        %p175 = pneg %p50
      $region26: #{resnet_feature_extractor.35} parent=23 // pred_check_branch
        %177 = sbr.rel (%p175) target = $region28
      $region27: #{resnet_feature_extractor.35} parent=23 // pred_region
        %s178 = smul.u32 64, %s16
        %p179 = scmp.lt.s32.totalorder %s178, 127
        %s180 = scalar_select %p179, %s178, 127
        %p181 = scmp.lt.s32.totalorder %s18, 0
        %s182 = scalar_select %p181, %s18, 0
        %s183 = sadd.s32 %s182, %s180
        %s184 = smul.addr %s183, 4
        %s185 = scalar_lea.vmem %s0, %s184
        %s186 = smul.u32 64, %s16
      $region28: #{resnet_feature_extractor.35} parent=23 // pred_fallthru
        _
    $region24: #{resnet_feature_extractor.35} parent=5 // pred_fallthru
      _
    %p187 = scmp.le.s32.totalorder 1, %s9
    %p188 = scmp.lt.s32.totalorder %s9, 3
    %p189 = pnand %p187, %p188
    %p190 = pneg %p189
    // Predicated region
    $region29: #{resnet_feature_extractor.35} parent=5 // pred_check
      _
    $region30: #{resnet_feature_extractor.35} parent=5 // pred_check_branch
      %192 = sbr.rel (%p189) target = $region32
    $region31: #{resnet_feature_extractor.35} parent=5 // pred_region
      %s193 = ssub.s32 %s9, 1
      %s194 = smul.u32 64, %s19
      %p195 = scmp.lt.s32.totalorder %s194, 127
      %s196 = scalar_select %p195, %s194, 127
      %p197 = scmp.lt.s32.totalorder %s21, 0
      %s198 = scalar_select %p197, %s21, 0
      %s199 = sadd.s32 %s198, %s196
      %s200 = smul.addr %s199, 4
      %s201 = scalar_lea.vmem %s0, %s200
      %p202 = pneg %p56
      %p203 = pneg %p53
      %s204 = smul.u32 16, %s21
      %p205 = scmp.lt.s32.totalorder %s204, 15
      %s206 = scalar_select %p205, %s204, 15
      %p207 = scmp.lt.s32.totalorder %s20, 0
      %s208 = scalar_select %p207, %s20, 0
      %s209 = sadd.s32 %s208, %s206
      %s210 = smul.addr %s209, 4
      %s211 = scalar_lea.vmem %s1, %s210
      %p212 = pneg %p84
      %p213 = pneg %p81
      %p214 = scmp.lt.s32.totalorder %s20, 0
      %s215 = scalar_select %p214, %s20, 0
      %s216 = scalar_lea.vmem %s2, %s215
      %p217 = pneg %p110
      %p218 = pneg %p107
      %p219 = pneg %p138
      %p220 = pneg %p135
      %s221 = smul.u32 64, %s19
      %p222 = scmp.lt.s32.totalorder %s221, 127
      %s223 = scalar_select %p222, %s221, 127
      %p224 = scmp.lt.s32.totalorder %s20, 0
      %s225 = scalar_select %p224, %s20, 0
      %s226 = sadd.s32 %s225, %s223
      %s227 = smul.addr %s226, 4
      %s228 = scalar_lea.vmem %s3, %s227
      %s229 = smul.u32 64, %s19
      %p230 = scmp.lt.s32.totalorder %s229, 127
      %s231 = scalar_select %p230, %s229, 127
      %p232 = scmp.lt.s32.totalorder %s21, 0
      %s233 = scalar_select %p232, %s21, 0
      %s234 = sadd.s32 %s233, %s231
      %s235 = smul.addr %s234, 4
      %s236 = scalar_lea.vmem %s0, %s235
      %s237 = smul.u32 64, %s19
      %s238 = smul.u32 16, %s21
      %p239 = scmp.lt.s32.totalorder %s238, 15
      %s240 = scalar_select %p239, %s238, 15
      %p241 = scmp.lt.s32.totalorder %s20, 0
      %s242 = scalar_select %p241, %s20, 0
      %s243 = sadd.s32 %s242, %s240
      %s244 = smul.addr %s243, 4
      %s245 = scalar_lea.vmem %s1, %s244
      %s246 = smul.u32 16, %s21
      %p247 = scmp.lt.s32.totalorder %s20, 0
      %s248 = scalar_select %p247, %s20, 0
      %s249 = scalar_lea.vmem %s2, %s248
      %s250 = smul.u32 64, %s19
      %p251 = scmp.lt.s32.totalorder %s250, 127
      %s252 = scalar_select %p251, %s250, 127
      %p253 = scmp.lt.s32.totalorder %s20, 0
      %s254 = scalar_select %p253, %s20, 0
      %s255 = sadd.s32 %s254, %s252
      %s256 = smul.addr %s255, 4
      %s257 = scalar_lea.vmem %s3, %s256
      %s258 = smul.u32 64, %s19
      %p260 = scmp.eq.s32.totalorder %s21, 0
      // Predicated region
      $region33: #{resnet_feature_extractor.35} parent=31 // pred_check
        %p261 = pneg %p260
      $region34: #{resnet_feature_extractor.35} parent=31 // pred_check_branch
        %263 = sbr.rel (%p261) target = $region36
      $region35: #{resnet_feature_extractor.35} parent=31 // pred_region
        %264 = vst [vmem:[#allocation2] sm:$0xff] 0.0
        %265 = vst [vmem:[#allocation2 + $0x8] sm:$0xff] 0.0
        %266 = vst [vmem:[#allocation2 + $0x10] sm:$0xff] 0.0
        %267 = vst [vmem:[#allocation2 + $0x18] sm:$0xff] 0.0
        %268 = vst [vmem:[#allocation2 + $0x20] sm:$0xff] 0.0
        %269 = vst [vmem:[#allocation2 + $0x28] sm:$0xff] 0.0
        %270 = vst [vmem:[#allocation2 + $0x30] sm:$0xff] 0.0
        %271 = vst [vmem:[#allocation2 + $0x38] sm:$0xff] 0.0
        %272 = vst [vmem:[#allocation2 + $0x40] sm:$0xff] 0.0
        %273 = vst [vmem:[#allocation2 + $0x48] sm:$0xff] 0.0
        %274 = vst [vmem:[#allocation2 + $0x50] sm:$0xff] 0.0
        %275 = vst [vmem:[#allocation2 + $0x58] sm:$0xff] 0.0
        %276 = vst [vmem:[#allocation2 + $0x60] sm:$0xff] 0.0
        %277 = vst [vmem:[#allocation2 + $0x68] sm:$0xff] 0.0
        %278 = vst [vmem:[#allocation2 + $0x70] sm:$0xff] 0.0
        %279 = vst [vmem:[#allocation2 + $0x78] sm:$0xff] 0.0
        %280 = vst [vmem:[#allocation2 + $0x80] sm:$0xff] 0.0
        %281 = vst [vmem:[#allocation2 + $0x88] sm:$0xff] 0.0
        %282 = vst [vmem:[#allocation2 + $0x90] sm:$0xff] 0.0
        %283 = vst [vmem:[#allocation2 + $0x98] sm:$0xff] 0.0
        %284 = vst [vmem:[#allocation2 + $0xa0] sm:$0xff] 0.0
        %285 = vst [vmem:[#allocation2 + $0xa8] sm:$0xff] 0.0
        %286 = vst [vmem:[#allocation2 + $0xb0] sm:$0xff] 0.0
        %287 = vst [vmem:[#allocation2 + $0xb8] sm:$0xff] 0.0
        %288 = vst [vmem:[#allocation2 + $0xc0] sm:$0xff] 0.0
        %289 = vst [vmem:[#allocation2 + $0xc8] sm:$0xff] 0.0
        %290 = vst [vmem:[#allocation2 + $0xd0] sm:$0xff] 0.0
        %291 = vst [vmem:[#allocation2 + $0xd8] sm:$0xff] 0.0
        %292 = vst [vmem:[#allocation2 + $0xe0] sm:$0xff] 0.0
        %293 = vst [vmem:[#allocation2 + $0xe8] sm:$0xff] 0.0
        %294 = vst [vmem:[#allocation2 + $0xf0] sm:$0xff] 0.0
        %295 = vst [vmem:[#allocation2 + $0xf8] sm:$0xff] 0.0
        %296 = vst [vmem:[#allocation2 + $0x100] sm:$0xff] 0.0
        %297 = vst [vmem:[#allocation2 + $0x108] sm:$0xff] 0.0
        %298 = vst [vmem:[#allocation2 + $0x110] sm:$0xff] 0.0
        %299 = vst [vmem:[#allocation2 + $0x118] sm:$0xff] 0.0
        %300 = vst [vmem:[#allocation2 + $0x120] sm:$0xff] 0.0
        %301 = vst [vmem:[#allocation2 + $0x128] sm:$0xff] 0.0
        %302 = vst [vmem:[#allocation2 + $0x130] sm:$0xff] 0.0
        %303 = vst [vmem:[#allocation2 + $0x138] sm:$0xff] 0.0
        %304 = vst [vmem:[#allocation2 + $0x140] sm:$0xff] 0.0
        %305 = vst [vmem:[#allocation2 + $0x148] sm:$0xff] 0.0
        %306 = vst [vmem:[#allocation2 + $0x150] sm:$0xff] 0.0
        %307 = vst [vmem:[#allocation2 + $0x158] sm:$0xff] 0.0
        %308 = vst [vmem:[#allocation2 + $0x160] sm:$0xff] 0.0
        %309 = vst [vmem:[#allocation2 + $0x168] sm:$0xff] 0.0
        %310 = vst [vmem:[#allocation2 + $0x170] sm:$0xff] 0.0
        %311 = vst [vmem:[#allocation2 + $0x178] sm:$0xff] 0.0
        %312 = vst [vmem:[#allocation2 + $0x180] sm:$0xff] 0.0
        %313 = vst [vmem:[#allocation2 + $0x188] sm:$0xff] 0.0
        %314 = vst [vmem:[#allocation2 + $0x190] sm:$0xff] 0.0
        %315 = vst [vmem:[#allocation2 + $0x198] sm:$0xff] 0.0
        %316 = vst [vmem:[#allocation2 + $0x1a0] sm:$0xff] 0.0
        %317 = vst [vmem:[#allocation2 + $0x1a8] sm:$0xff] 0.0
        %318 = vst [vmem:[#allocation2 + $0x1b0] sm:$0xff] 0.0
        %319 = vst [vmem:[#allocation2 + $0x1b8] sm:$0xff] 0.0
        %320 = vst [vmem:[#allocation2 + $0x1c0] sm:$0xff] 0.0
        %321 = vst [vmem:[#allocation2 + $0x1c8] sm:$0xff] 0.0
        %322 = vst [vmem:[#allocation2 + $0x1d0] sm:$0xff] 0.0
        %323 = vst [vmem:[#allocation2 + $0x1d8] sm:$0xff] 0.0
        %324 = vst [vmem:[#allocation2 + $0x1e0] sm:$0xff] 0.0
        %325 = vst [vmem:[#allocation2 + $0x1e8] sm:$0xff] 0.0
        %326 = vst [vmem:[#allocation2 + $0x1f0] sm:$0xff] 0.0
        %327 = vst [vmem:[#allocation2 + $0x1f8] sm:$0xff] 0.0
      $region36: #{resnet_feature_extractor.35} parent=31 // pred_fallthru
        _
      %v328 = vld [vmem:[#allocation2] sm:$0xff]
      %v329 = vld [vmem:[#allocation2 + $0x8] sm:$0xff]
      %v330 = vld [vmem:[#allocation2 + $0x10] sm:$0xff]
      %v331 = vld [vmem:[#allocation2 + $0x18] sm:$0xff]
      %v332 = vld [vmem:[#allocation2 + $0x20] sm:$0xff]
      %v333 = vld [vmem:[#allocation2 + $0x28] sm:$0xff]
      %v334 = vld [vmem:[#allocation2 + $0x30] sm:$0xff]
      %v335 = vld [vmem:[#allocation2 + $0x38] sm:$0xff]
      %v336 = vld [vmem:[#allocation2 + $0x40] sm:$0xff]
      %v337 = vld [vmem:[#allocation2 + $0x48] sm:$0xff]
      %v338 = vld [vmem:[#allocation2 + $0x50] sm:$0xff]
      %v339 = vld [vmem:[#allocation2 + $0x58] sm:$0xff]
      %v340 = vld [vmem:[#allocation2 + $0x60] sm:$0xff]
      %v341 = vld [vmem:[#allocation2 + $0x68] sm:$0xff]
      %v342 = vld [vmem:[#allocation2 + $0x70] sm:$0xff]
      %v343 = vld [vmem:[#allocation2 + $0x78] sm:$0xff]
      %v344 = vld [vmem:[#allocation2 + $0x80] sm:$0xff]
      %v345 = vld [vmem:[#allocation2 + $0x88] sm:$0xff]
      %v346 = vld [vmem:[#allocation2 + $0x90] sm:$0xff]
      %v347 = vld [vmem:[#allocation2 + $0x98] sm:$0xff]
      %v348 = vld [vmem:[#allocation2 + $0xa0] sm:$0xff]
      %v349 = vld [vmem:[#allocation2 + $0xa8] sm:$0xff]
      %v350 = vld [vmem:[#allocation2 + $0xb0] sm:$0xff]
      %v351 = vld [vmem:[#allocation2 + $0xb8] sm:$0xff]
      %v352 = vld [vmem:[#allocation2 + $0xc0] sm:$0xff]
      %v353 = vld [vmem:[#allocation2 + $0xc8] sm:$0xff]
      %v354 = vld [vmem:[#allocation2 + $0xd0] sm:$0xff]
      %v355 = vld [vmem:[#allocation2 + $0xd8] sm:$0xff]
      %v356 = vld [vmem:[#allocation2 + $0xe0] sm:$0xff]
      %v357 = vld [vmem:[#allocation2 + $0xe8] sm:$0xff]
      %v358 = vld [vmem:[#allocation2 + $0xf0] sm:$0xff]
      %v359 = vld [vmem:[#allocation2 + $0xf8] sm:$0xff]
      %v360 = vld [vmem:[#allocation2 + $0x100] sm:$0xff]
      %v361 = vld [vmem:[#allocation2 + $0x108] sm:$0xff]
      %v362 = vld [vmem:[#allocation2 + $0x110] sm:$0xff]
      %v363 = vld [vmem:[#allocation2 + $0x118] sm:$0xff]
      %v364 = vld [vmem:[#allocation2 + $0x120] sm:$0xff]
      %v365 = vld [vmem:[#allocation2 + $0x128] sm:$0xff]
      %v366 = vld [vmem:[#allocation2 + $0x130] sm:$0xff]
      %v367 = vld [vmem:[#allocation2 + $0x138] sm:$0xff]
      %v368 = vld [vmem:[#allocation2 + $0x140] sm:$0xff]
      %v369 = vld [vmem:[#allocation2 + $0x148] sm:$0xff]
      %v370 = vld [vmem:[#allocation2 + $0x150] sm:$0xff]
      %v371 = vld [vmem:[#allocation2 + $0x158] sm:$0xff]
      %v372 = vld [vmem:[#allocation2 + $0x160] sm:$0xff]
      %v373 = vld [vmem:[#allocation2 + $0x168] sm:$0xff]
      %v374 = vld [vmem:[#allocation2 + $0x170] sm:$0xff]
      %v375 = vld [vmem:[#allocation2 + $0x178] sm:$0xff]
      %v376 = vld [vmem:[#allocation2 + $0x180] sm:$0xff]
      %v377 = vld [vmem:[#allocation2 + $0x188] sm:$0xff]
      %v378 = vld [vmem:[#allocation2 + $0x190] sm:$0xff]
      %v379 = vld [vmem:[#allocation2 + $0x198] sm:$0xff]
      %v380 = vld [vmem:[#allocation2 + $0x1a0] sm:$0xff]
      %v381 = vld [vmem:[#allocation2 + $0x1a8] sm:$0xff]
      %v382 = vld [vmem:[#allocation2 + $0x1b0] sm:$0xff]
      %v383 = vld [vmem:[#allocation2 + $0x1b8] sm:$0xff]
      %v384 = vld [vmem:[#allocation2 + $0x1c0] sm:$0xff]
      %v385 = vld [vmem:[#allocation2 + $0x1c8] sm:$0xff]
      %v386 = vld [vmem:[#allocation2 + $0x1d0] sm:$0xff]
      %v387 = vld [vmem:[#allocation2 + $0x1d8] sm:$0xff]
      %v388 = vld [vmem:[#allocation2 + $0x1e0] sm:$0xff]
      %v389 = vld [vmem:[#allocation2 + $0x1e8] sm:$0xff]
      %v390 = vld [vmem:[#allocation2 + $0x1f0] sm:$0xff]
      %v391 = vld [vmem:[#allocation2 + $0x1f8] sm:$0xff]
      %v392 = vld [vmem:[%s236] sm:$0xf]
      %v393 = vld [vmem:[%s236 + $0x4] sm:$0xf]
      %v394 = vld [vmem:[%s236 + $0x8] sm:$0xf]
      %v395 = vld [vmem:[%s236 + $0xc] sm:$0xf]
      %v396 = vld [vmem:[%s236 + $0x10] sm:$0xf]
      %v397 = vld [vmem:[%s236 + $0x14] sm:$0xf]
      %v398 = vld [vmem:[%s236 + $0x18] sm:$0xf]
      %v399 = vld [vmem:[%s236 + $0x1c] sm:$0xf]
      %v400 = vld [vmem:[%s236 + $0x20] sm:$0xf]
      %v401 = vld [vmem:[%s236 + $0x24] sm:$0xf]
      %v402 = vld [vmem:[%s236 + $0x28] sm:$0xf]
      %v403 = vld [vmem:[%s236 + $0x2c] sm:$0xf]
      %v404 = vld [vmem:[%s236 + $0x30] sm:$0xf]
      %v405 = vld [vmem:[%s236 + $0x34] sm:$0xf]
      %v406 = vld [vmem:[%s236 + $0x38] sm:$0xf]
      %v407 = vld [vmem:[%s236 + $0x3c] sm:$0xf]
      %v408 = vld [vmem:[%s236 + $0x40] sm:$0xf]
      %v409 = vld [vmem:[%s236 + $0x44] sm:$0xf]
      %v410 = vld [vmem:[%s236 + $0x48] sm:$0xf]
      %v411 = vld [vmem:[%s236 + $0x4c] sm:$0xf]
      %v412 = vld [vmem:[%s236 + $0x50] sm:$0xf]
      %v413 = vld [vmem:[%s236 + $0x54] sm:$0xf]
      %v414 = vld [vmem:[%s236 + $0x58] sm:$0xf]
      %v415 = vld [vmem:[%s236 + $0x5c] sm:$0xf]
      %v416 = vld [vmem:[%s236 + $0x60] sm:$0xf]
      %v417 = vld [vmem:[%s236 + $0x64] sm:$0xf]
      %v418 = vld [vmem:[%s236 + $0x68] sm:$0xf]
      %v419 = vld [vmem:[%s236 + $0x6c] sm:$0xf]
      %v420 = vld [vmem:[%s236 + $0x70] sm:$0xf]
      %v421 = vld [vmem:[%s236 + $0x74] sm:$0xf]
      %v422 = vld [vmem:[%s236 + $0x78] sm:$0xf]
      %v423 = vld [vmem:[%s236 + $0x7c] sm:$0xf]
      %v424 = vld [vmem:[%s236 + $0x80] sm:$0xf]
      %v425 = vld [vmem:[%s236 + $0x84] sm:$0xf]
      %v426 = vld [vmem:[%s236 + $0x88] sm:$0xf]
      %v427 = vld [vmem:[%s236 + $0x8c] sm:$0xf]
      %v428 = vld [vmem:[%s236 + $0x90] sm:$0xf]
      %v429 = vld [vmem:[%s236 + $0x94] sm:$0xf]
      %v430 = vld [vmem:[%s236 + $0x98] sm:$0xf]
      %v431 = vld [vmem:[%s236 + $0x9c] sm:$0xf]
      %v432 = vld [vmem:[%s236 + $0xa0] sm:$0xf]
      %v433 = vld [vmem:[%s236 + $0xa4] sm:$0xf]
      %v434 = vld [vmem:[%s236 + $0xa8] sm:$0xf]
      %v435 = vld [vmem:[%s236 + $0xac] sm:$0xf]
      %v436 = vld [vmem:[%s236 + $0xb0] sm:$0xf]
      %v437 = vld [vmem:[%s236 + $0xb4] sm:$0xf]
      %v438 = vld [vmem:[%s236 + $0xb8] sm:$0xf]
      %v439 = vld [vmem:[%s236 + $0xbc] sm:$0xf]
      %v440 = vld [vmem:[%s236 + $0xc0] sm:$0xf]
      %v441 = vld [vmem:[%s236 + $0xc4] sm:$0xf]
      %v442 = vld [vmem:[%s236 + $0xc8] sm:$0xf]
      %v443 = vld [vmem:[%s236 + $0xcc] sm:$0xf]
      %v444 = vld [vmem:[%s236 + $0xd0] sm:$0xf]
      %v445 = vld [vmem:[%s236 + $0xd4] sm:$0xf]
      %v446 = vld [vmem:[%s236 + $0xd8] sm:$0xf]
      %v447 = vld [vmem:[%s236 + $0xdc] sm:$0xf]
      %v448 = vld [vmem:[%s236 + $0xe0] sm:$0xf]
      %v449 = vld [vmem:[%s236 + $0xe4] sm:$0xf]
      %v450 = vld [vmem:[%s236 + $0xe8] sm:$0xf]
      %v451 = vld [vmem:[%s236 + $0xec] sm:$0xf]
      %v452 = vld [vmem:[%s236 + $0xf0] sm:$0xf]
      %v453 = vld [vmem:[%s236 + $0xf4] sm:$0xf]
      %v454 = vld [vmem:[%s236 + $0xf8] sm:$0xf]
      %v455 = vld [vmem:[%s236 + $0xfc] sm:$0xf]
      %v456 = vld [vmem:[%s245] sm:$0xf]
      %v457 = vld [vmem:[%s245 + $0x4] sm:$0xf]
      %v458 = vld [vmem:[%s245 + $0x8] sm:$0xf]
      %v459 = vld [vmem:[%s245 + $0xc] sm:$0xf]
      %v460 = vld [vmem:[%s245 + $0x10] sm:$0xf]
      %v461 = vld [vmem:[%s245 + $0x14] sm:$0xf]
      %v462 = vld [vmem:[%s245 + $0x18] sm:$0xf]
      %v463 = vld [vmem:[%s245 + $0x1c] sm:$0xf]
      %v464 = vld [vmem:[%s245 + $0x20] sm:$0xf]
      %v465 = vld [vmem:[%s245 + $0x24] sm:$0xf]
      %v466 = vld [vmem:[%s245 + $0x28] sm:$0xf]
      %v467 = vld [vmem:[%s245 + $0x2c] sm:$0xf]
      %v468 = vld [vmem:[%s245 + $0x30] sm:$0xf]
      %v469 = vld [vmem:[%s245 + $0x34] sm:$0xf]
      %v470 = vld [vmem:[%s245 + $0x38] sm:$0xf]
      %v471 = vld [vmem:[%s245 + $0x3c] sm:$0xf]
      %v536 = vunpack.c.l.b16 %v392
      %v537 = vunpack.c.l.b16 %v393
      %v538 = vunpack.c.l.b16 %v394
      %v539 = vunpack.c.l.b16 %v395
      %v540 = vunpack.c.l.b16 %v396
      %v541 = vunpack.c.l.b16 %v397
      %v542 = vunpack.c.l.b16 %v398
      %v543 = vunpack.c.l.b16 %v399
      %v544 = vunpack.c.l.b16 %v400
      %v545 = vunpack.c.l.b16 %v401
      %v546 = vunpack.c.l.b16 %v402
      %v547 = vunpack.c.l.b16 %v403
      %v548 = vunpack.c.l.b16 %v404
      %v549 = vunpack.c.l.b16 %v405
      %v550 = vunpack.c.l.b16 %v406
      %v551 = vunpack.c.l.b16 %v407
      %v552 = vunpack.c.l.b16 %v408
      %v553 = vunpack.c.l.b16 %v409
      %v554 = vunpack.c.l.b16 %v410
      %v555 = vunpack.c.l.b16 %v411
      %v556 = vunpack.c.l.b16 %v412
      %v557 = vunpack.c.l.b16 %v413
      %v558 = vunpack.c.l.b16 %v414
      %v559 = vunpack.c.l.b16 %v415
      %v560 = vunpack.c.l.b16 %v416
      %v561 = vunpack.c.l.b16 %v417
      %v562 = vunpack.c.l.b16 %v418
      %v563 = vunpack.c.l.b16 %v419
      %v564 = vunpack.c.l.b16 %v420
      %v565 = vunpack.c.l.b16 %v421
      %v566 = vunpack.c.l.b16 %v422
      %v567 = vunpack.c.l.b16 %v423
      %v568 = vunpack.c.l.b16 %v424
      %v569 = vunpack.c.l.b16 %v425
      %v570 = vunpack.c.l.b16 %v426
      %v571 = vunpack.c.l.b16 %v427
      %v572 = vunpack.c.l.b16 %v428
      %v573 = vunpack.c.l.b16 %v429
      %v574 = vunpack.c.l.b16 %v430
      %v575 = vunpack.c.l.b16 %v431
      %v576 = vunpack.c.l.b16 %v432
      %v577 = vunpack.c.l.b16 %v433
      %v578 = vunpack.c.l.b16 %v434
      %v579 = vunpack.c.l.b16 %v435
      %v580 = vunpack.c.l.b16 %v436
      %v581 = vunpack.c.l.b16 %v437
      %v582 = vunpack.c.l.b16 %v438
      %v583 = vunpack.c.l.b16 %v439
      %v584 = vunpack.c.l.b16 %v440
      %v585 = vunpack.c.l.b16 %v441
      %v586 = vunpack.c.l.b16 %v442
      %v587 = vunpack.c.l.b16 %v443
      %v588 = vunpack.c.l.b16 %v444
      %v589 = vunpack.c.l.b16 %v445
      %v590 = vunpack.c.l.b16 %v446
      %v591 = vunpack.c.l.b16 %v447
      %v592 = vunpack.c.l.b16 %v448
      %v593 = vunpack.c.l.b16 %v449
      %v594 = vunpack.c.l.b16 %v450
      %v595 = vunpack.c.l.b16 %v451
      %v596 = vunpack.c.l.b16 %v452
      %v597 = vunpack.c.l.b16 %v453
      %v598 = vunpack.c.l.b16 %v454
      %v599 = vunpack.c.l.b16 %v455
      %v600 = vpack.c.b16 %v537, %v536
      %v601 = vpack.c.b16 %v539, %v538
      %v602 = vpack.c.b16 %v541, %v540
      %v603 = vpack.c.b16 %v543, %v542
      %v604 = vpack.c.b16 %v545, %v544
      %v605 = vpack.c.b16 %v547, %v546
      %v606 = vpack.c.b16 %v549, %v548
      %v607 = vpack.c.b16 %v551, %v550
      %v608 = vpack.c.b16 %v553, %v552
      %v609 = vpack.c.b16 %v555, %v554
      %v610 = vpack.c.b16 %v557, %v556
      %v611 = vpack.c.b16 %v559, %v558
      %v612 = vpack.c.b16 %v561, %v560
      %v613 = vpack.c.b16 %v563, %v562
      %v614 = vpack.c.b16 %v565, %v564
      %v615 = vpack.c.b16 %v567, %v566
      %v616 = vpack.c.b16 %v569, %v568
      %v617 = vpack.c.b16 %v571, %v570
      %v618 = vpack.c.b16 %v573, %v572
      %v619 = vpack.c.b16 %v575, %v574
      %v620 = vpack.c.b16 %v577, %v576
      %v621 = vpack.c.b16 %v579, %v578
      %v622 = vpack.c.b16 %v581, %v580
      %v623 = vpack.c.b16 %v583, %v582
      %v624 = vpack.c.b16 %v585, %v584
      %v625 = vpack.c.b16 %v587, %v586
      %v626 = vpack.c.b16 %v589, %v588
      %v627 = vpack.c.b16 %v591, %v590
      %v628 = vpack.c.b16 %v593, %v592
      %v629 = vpack.c.b16 %v595, %v594
      %v630 = vpack.c.b16 %v597, %v596
      %v631 = vpack.c.b16 %v599, %v598
      %v680 = vunpack.c.l.b16 %v456
      %v681 = vunpack.c.l.b16 %v457
      %v682 = vunpack.c.l.b16 %v458
      %v683 = vunpack.c.l.b16 %v459
      %v684 = vunpack.c.l.b16 %v460
      %v685 = vunpack.c.l.b16 %v461
      %v686 = vunpack.c.l.b16 %v462
      %v687 = vunpack.c.l.b16 %v463
      %v688 = vunpack.c.l.b16 %v464
      %v689 = vunpack.c.l.b16 %v465
      %v690 = vunpack.c.l.b16 %v466
      %v691 = vunpack.c.l.b16 %v467
      %v692 = vunpack.c.l.b16 %v468
      %v693 = vunpack.c.l.b16 %v469
      %v694 = vunpack.c.l.b16 %v470
      %v695 = vunpack.c.l.b16 %v471
      %v696 = vpack.c.b16 %v681, %v680
      %v697 = vpack.c.b16 %v683, %v682
      %v698 = vpack.c.b16 %v685, %v684
      %v699 = vpack.c.b16 %v687, %v686
      %v700 = vpack.c.b16 %v689, %v688
      %v701 = vpack.c.b16 %v691, %v690
      %v702 = vpack.c.b16 %v693, %v692
      %v703 = vpack.c.b16 %v695, %v694
      %712 = vmatprep.subr.bf16.mxu0 0
      %713 = vmatpush1.bf16.msra.mxu0 %v696
      %714 = vmatprep.subr.bf16.mxu0 0
      %715 = vmatpush1.bf16.msra.mxu0 %v697
      %716 = vmatprep.subr.bf16.mxu0 0
      %717 = vmatpush1.bf16.msra.mxu0 %v698
      %718 = vmatprep.subr.bf16.mxu0 0
      %719 = vmatpush1.bf16.msra.mxu0 %v699
      %720 = vmatprep.subr.bf16.mxu0 0
      %721 = vmatpush1.bf16.msra.mxu0 %v700
      %722 = vmatprep.subr.bf16.mxu0 0
      %723 = vmatpush1.bf16.msra.mxu0 %v701
      %724 = vmatprep.subr.bf16.mxu0 0
      %725 = vmatpush1.bf16.msra.mxu0 %v702
      %726 = vmatprep.subr.bf16.mxu0 0
      %727 = vmatpush1.bf16.msra.mxu0 %v703
      %728 = vmatprep.subr.bf16.mxu0 0
      %729 = vmatpush1.bf16.msra.mxu0 0
      %730 = vmatprep.subr.bf16.mxu0 0
      %731 = vmatpush1.bf16.msra.mxu0 0
      %732 = vmatprep.subr.bf16.mxu0 0
      %733 = vmatpush1.bf16.msra.mxu0 0
      %734 = vmatprep.subr.bf16.mxu0 0
      %735 = vmatpush1.bf16.msra.mxu0 0
      %736 = vmatprep.subr.bf16.mxu0 0
      %737 = vmatpush1.bf16.msra.mxu0 0
      %738 = vmatprep.subr.bf16.mxu0 0
      %739 = vmatpush1.bf16.msra.mxu0 0
      %740 = vmatprep.subr.bf16.mxu0 0
      %741 = vmatpush1.bf16.msra.mxu0 0
      %742 = vmatprep.subr.bf16.mxu0 0
      %743 = vmatpush1.bf16.msra.mxu0 0
      %744 = vmatprep.mubr.bf16.mxu0 0
      %745 = vmatmul.mubr.bf16.gmra.mrb[0].mxu0 %v600
      %v746 = vpop.f32.mrb[0].mxu0
      %v747 = vadd.f32 0.0, %v746
      %v748 = vpop.f32.mrb[0].mxu0
      %v749 = vpop.f32.mrb[0].mxu0
      %v750 = vadd.f32 0.0, %v749
      %v751 = vpop.f32.mrb[0].mxu0
      %752 = vmatprep.mubr.bf16.mxu0 0
      %753 = vmatmul.mubr.bf16.gmra.mrb[0].mxu0 %v601
      %v754 = vpop.f32.mrb[0].mxu0
      %v755 = vadd.f32 0.0, %v754
      %v756 = vpop.f32.mrb[0].mxu0
      %v757 = vpop.f32.mrb[0].mxu0
      %v758 = vadd.f32 0.0, %v757
      %v759 = vpop.f32.mrb[0].mxu0
      %760 = vmatprep.mubr.bf16.mxu0 0
      %761 = vmatmul.mubr.bf16.gmra.mrb[0].mxu0 %v602
      %v762 = vpop.f32.mrb[0].mxu0
      %v763 = vadd.f32 0.0, %v762
      %v764 = vpop.f32.mrb[0].mxu0
      %v765 = vpop.f32.mrb[0].mxu0
      %v766 = vadd.f32 0.0, %v765
      %v767 = vpop.f32.mrb[0].mxu0
      %768 = vmatprep.mubr.bf16.mxu0 0
      %769 = vmatmul.mubr.bf16.gmra.mrb[0].mxu0 %v603
      %v770 = vpop.f32.mrb[0].mxu0
      %v771 = vadd.f32 0.0, %v770
      %v772 = vpop.f32.mrb[0].mxu0
      %v773 = vpop.f32.mrb[0].mxu0
      %v774 = vadd.f32 0.0, %v773
      %v775 = vpop.f32.mrb[0].mxu0
      %776 = vmatprep.mubr.bf16.mxu0 0
      %777 = vmatmul.mubr.bf16.gmra.mrb[0].mxu0 %v604
      %v778 = vpop.f32.mrb[0].mxu0
      %v779 = vadd.f32 0.0, %v778
      %v780 = vpop.f32.mrb[0].mxu0
      %v781 = vpop.f32.mrb[0].mxu0
      %v782 = vadd.f32 0.0, %v781
      %v783 = vpop.f32.mrb[0].mxu0
      %784 = vmatprep.mubr.bf16.mxu0 0
      %785 = vmatmul.mubr.bf16.gmra.mrb[0].mxu0 %v605
      %v786 = vpop.f32.mrb[0].mxu0
      %v787 = vadd.f32 0.0, %v786
      %v788 = vpop.f32.mrb[0].mxu0
      %v789 = vpop.f32.mrb[0].mxu0
      %v790 = vadd.f32 0.0, %v789
      %v791 = vpop.f32.mrb[0].mxu0
      %792 = vmatprep.mubr.bf16.mxu0 0
      %793 = vmatmul.mubr.bf16.gmra.mrb[0].mxu0 %v606
      %v794 = vpop.f32.mrb[0].mxu0
      %v795 = vadd.f32 0.0, %v794
      %v796 = vpop.f32.mrb[0].mxu0
      %v797 = vpop.f32.mrb[0].mxu0
      %v798 = vadd.f32 0.0, %v797
      %v799 = vpop.f32.mrb[0].mxu0
      %800 = vmatprep.mubr.bf16.mxu0 0
      %801 = vmatmul.mubr.bf16.gmra.mrb[0].mxu0 %v607
      %v802 = vpop.f32.mrb[0].mxu0
      %v803 = vadd.f32 0.0, %v802
      %v804 = vpop.f32.mrb[0].mxu0
      %v805 = vpop.f32.mrb[0].mxu0
      %v806 = vadd.f32 0.0, %v805
      %v807 = vpop.f32.mrb[0].mxu0
      %808 = vmatprep.mubr.bf16.mxu0 0
      %809 = vmatmul.mubr.bf16.gmra.mrb[0].mxu0 %v608
      %v810 = vpop.f32.mrb[0].mxu0
      %v811 = vadd.f32 0.0, %v810
      %v812 = vpop.f32.mrb[0].mxu0
      %v813 = vpop.f32.mrb[0].mxu0
      %v814 = vadd.f32 0.0, %v813
      %v815 = vpop.f32.mrb[0].mxu0
      %816 = vmatprep.mubr.bf16.mxu0 0
      %817 = vmatmul.mubr.bf16.gmra.mrb[0].mxu0 %v609
      %v818 = vpop.f32.mrb[0].mxu0
      %v819 = vadd.f32 0.0, %v818
      %v820 = vpop.f32.mrb[0].mxu0
      %v821 = vpop.f32.mrb[0].mxu0
      %v822 = vadd.f32 0.0, %v821
      %v823 = vpop.f32.mrb[0].mxu0
      %824 = vmatprep.mubr.bf16.mxu0 0
      %825 = vmatmul.mubr.bf16.gmra.mrb[0].mxu0 %v610
      %v826 = vpop.f32.mrb[0].mxu0
      %v827 = vadd.f32 0.0, %v826
      %v828 = vpop.f32.mrb[0].mxu0
      %v829 = vpop.f32.mrb[0].mxu0
      %v830 = vadd.f32 0.0, %v829
      %v831 = vpop.f32.mrb[0].mxu0
      %832 = vmatprep.mubr.bf16.mxu0 0
      %833 = vmatmul.mubr.bf16.gmra.mrb[0].mxu0 %v611
      %v834 = vpop.f32.mrb[0].mxu0
      %v835 = vadd.f32 0.0, %v834
      %v836 = vpop.f32.mrb[0].mxu0
      %v837 = vpop.f32.mrb[0].mxu0
      %v838 = vadd.f32 0.0, %v837
      %v839 = vpop.f32.mrb[0].mxu0
      %840 = vmatprep.mubr.bf16.mxu0 0
      %841 = vmatmul.mubr.bf16.gmra.mrb[0].mxu0 %v612
      %v842 = vpop.f32.mrb[0].mxu0
      %v843 = vadd.f32 0.0, %v842
      %v844 = vpop.f32.mrb[0].mxu0
      %v845 = vpop.f32.mrb[0].mxu0
      %v846 = vadd.f32 0.0, %v845
      %v847 = vpop.f32.mrb[0].mxu0
      %848 = vmatprep.mubr.bf16.mxu0 0
      %849 = vmatmul.mubr.bf16.gmra.mrb[0].mxu0 %v613
      %v850 = vpop.f32.mrb[0].mxu0
      %v851 = vadd.f32 0.0, %v850
      %v852 = vpop.f32.mrb[0].mxu0
      %v853 = vpop.f32.mrb[0].mxu0
      %v854 = vadd.f32 0.0, %v853
      %v855 = vpop.f32.mrb[0].mxu0
      %856 = vmatprep.mubr.bf16.mxu0 0
      %857 = vmatmul.mubr.bf16.gmra.mrb[0].mxu0 %v614
      %v858 = vpop.f32.mrb[0].mxu0
      %v859 = vadd.f32 0.0, %v858
      %v860 = vpop.f32.mrb[0].mxu0
      %v861 = vpop.f32.mrb[0].mxu0
      %v862 = vadd.f32 0.0, %v861
      %v863 = vpop.f32.mrb[0].mxu0
      %864 = vmatprep.mubr.bf16.mxu0 0
      %865 = vmatmul.mubr.bf16.gmra.mrb[0].mxu0 %v615
      %v866 = vpop.f32.mrb[0].mxu0
      %v867 = vadd.f32 0.0, %v866
      %v868 = vpop.f32.mrb[0].mxu0
      %v869 = vpop.f32.mrb[0].mxu0
      %v870 = vadd.f32 0.0, %v869
      %v871 = vpop.f32.mrb[0].mxu0
      %872 = vmatprep.mubr.bf16.mxu0 0
      %873 = vmatmul.mubr.bf16.gmra.mrb[0].mxu0 %v616
      %v874 = vpop.f32.mrb[0].mxu0
      %v875 = vadd.f32 0.0, %v874
      %v876 = vpop.f32.mrb[0].mxu0
      %v877 = vpop.f32.mrb[0].mxu0
      %v878 = vadd.f32 0.0, %v877
      %v879 = vpop.f32.mrb[0].mxu0
      %880 = vmatprep.mubr.bf16.mxu0 0
      %881 = vmatmul.mubr.bf16.gmra.mrb[0].mxu0 %v617
      %v882 = vpop.f32.mrb[0].mxu0
      %v883 = vadd.f32 0.0, %v882
      %v884 = vpop.f32.mrb[0].mxu0
      %v885 = vpop.f32.mrb[0].mxu0
      %v886 = vadd.f32 0.0, %v885
      %v887 = vpop.f32.mrb[0].mxu0
      %888 = vmatprep.mubr.bf16.mxu0 0
      %889 = vmatmul.mubr.bf16.gmra.mrb[0].mxu0 %v618
      %v890 = vpop.f32.mrb[0].mxu0
      %v891 = vadd.f32 0.0, %v890
      %v892 = vpop.f32.mrb[0].mxu0
      %v893 = vpop.f32.mrb[0].mxu0
      %v894 = vadd.f32 0.0, %v893
      %v895 = vpop.f32.mrb[0].mxu0
      %896 = vmatprep.mubr.bf16.mxu0 0
      %897 = vmatmul.mubr.bf16.gmra.mrb[0].mxu0 %v619
      %v898 = vpop.f32.mrb[0].mxu0
      %v899 = vadd.f32 0.0, %v898
      %v900 = vpop.f32.mrb[0].mxu0
      %v901 = vpop.f32.mrb[0].mxu0
      %v902 = vadd.f32 0.0, %v901
      %v903 = vpop.f32.mrb[0].mxu0
      %904 = vmatprep.mubr.bf16.mxu0 0
      %905 = vmatmul.mubr.bf16.gmra.mrb[0].mxu0 %v620
      %v906 = vpop.f32.mrb[0].mxu0
      %v907 = vadd.f32 0.0, %v906
      %v908 = vpop.f32.mrb[0].mxu0
      %v909 = vpop.f32.mrb[0].mxu0
      %v910 = vadd.f32 0.0, %v909
      %v911 = vpop.f32.mrb[0].mxu0
      %912 = vmatprep.mubr.bf16.mxu0 0
      %913 = vmatmul.mubr.bf16.gmra.mrb[0].mxu0 %v621
      %v914 = vpop.f32.mrb[0].mxu0
      %v915 = vadd.f32 0.0, %v914
      %v916 = vpop.f32.mrb[0].mxu0
      %v917 = vpop.f32.mrb[0].mxu0
      %v918 = vadd.f32 0.0, %v917
      %v919 = vpop.f32.mrb[0].mxu0
      %920 = vmatprep.mubr.bf16.mxu0 0
      %921 = vmatmul.mubr.bf16.gmra.mrb[0].mxu0 %v622
      %v922 = vpop.f32.mrb[0].mxu0
      %v923 = vadd.f32 0.0, %v922
      %v924 = vpop.f32.mrb[0].mxu0
      %v925 = vpop.f32.mrb[0].mxu0
      %v926 = vadd.f32 0.0, %v925
      %v927 = vpop.f32.mrb[0].mxu0
      %928 = vmatprep.mubr.bf16.mxu0 0
      %929 = vmatmul.mubr.bf16.gmra.mrb[0].mxu0 %v623
      %v930 = vpop.f32.mrb[0].mxu0
      %v931 = vadd.f32 0.0, %v930
      %v932 = vpop.f32.mrb[0].mxu0
      %v933 = vpop.f32.mrb[0].mxu0
      %v934 = vadd.f32 0.0, %v933
      %v935 = vpop.f32.mrb[0].mxu0
      %936 = vmatprep.mubr.bf16.mxu0 0
      %937 = vmatmul.mubr.bf16.gmra.mrb[0].mxu0 %v624
      %v938 = vpop.f32.mrb[0].mxu0
      %v939 = vadd.f32 0.0, %v938
      %v940 = vpop.f32.mrb[0].mxu0
      %v941 = vpop.f32.mrb[0].mxu0
      %v942 = vadd.f32 0.0, %v941
      %v943 = vpop.f32.mrb[0].mxu0
      %944 = vmatprep.mubr.bf16.mxu0 0
      %945 = vmatmul.mubr.bf16.gmra.mrb[0].mxu0 %v625
      %v946 = vpop.f32.mrb[0].mxu0
      %v947 = vadd.f32 0.0, %v946
      %v948 = vpop.f32.mrb[0].mxu0
      %v949 = vpop.f32.mrb[0].mxu0
      %v950 = vadd.f32 0.0, %v949
      %v951 = vpop.f32.mrb[0].mxu0
      %952 = vmatprep.mubr.bf16.mxu0 0
      %953 = vmatmul.mubr.bf16.gmra.mrb[0].mxu0 %v626
      %v954 = vpop.f32.mrb[0].mxu0
      %v955 = vadd.f32 0.0, %v954
      %v956 = vpop.f32.mrb[0].mxu0
      %v957 = vpop.f32.mrb[0].mxu0
      %v958 = vadd.f32 0.0, %v957
      %v959 = vpop.f32.mrb[0].mxu0
      %960 = vmatprep.mubr.bf16.mxu0 0
      %961 = vmatmul.mubr.bf16.gmra.mrb[0].mxu0 %v627
      %v962 = vpop.f32.mrb[0].mxu0
      %v963 = vadd.f32 0.0, %v962
      %v964 = vpop.f32.mrb[0].mxu0
      %v965 = vpop.f32.mrb[0].mxu0
      %v966 = vadd.f32 0.0, %v965
      %v967 = vpop.f32.mrb[0].mxu0
      %968 = vmatprep.mubr.bf16.mxu0 0
      %969 = vmatmul.mubr.bf16.gmra.mrb[0].mxu0 %v628
      %v970 = vpop.f32.mrb[0].mxu0
      %v971 = vadd.f32 0.0, %v970
      %v972 = vpop.f32.mrb[0].mxu0
      %v973 = vpop.f32.mrb[0].mxu0
      %v974 = vadd.f32 0.0, %v973
      %v975 = vpop.f32.mrb[0].mxu0
      %976 = vmatprep.mubr.bf16.mxu0 0
      %977 = vmatmul.mubr.bf16.gmra.mrb[0].mxu0 %v629
      %v978 = vpop.f32.mrb[0].mxu0
      %v979 = vadd.f32 0.0, %v978
      %v980 = vpop.f32.mrb[0].mxu0
      %v981 = vpop.f32.mrb[0].mxu0
      %v982 = vadd.f32 0.0, %v981
      %v983 = vpop.f32.mrb[0].mxu0
      %984 = vmatprep.mubr.bf16.mxu0 0
      %985 = vmatmul.mubr.bf16.gmra.mrb[0].mxu0 %v630
      %v986 = vpop.f32.mrb[0].mxu0
      %v987 = vadd.f32 0.0, %v986
      %v988 = vpop.f32.mrb[0].mxu0
      %v989 = vpop.f32.mrb[0].mxu0
      %v990 = vadd.f32 0.0, %v989
      %v991 = vpop.f32.mrb[0].mxu0
      %992 = vmatprep.mubr.bf16.mxu0 0
      %993 = vmatmul.mubr.bf16.gmra.mrb[0].mxu0 %v631
      %v994 = vpop.f32.mrb[0].mxu0
      %v995 = vadd.f32 0.0, %v994
      %v996 = vpop.f32.mrb[0].mxu0
      %v997 = vpop.f32.mrb[0].mxu0
      %v998 = vadd.f32 0.0, %v997
      %v999 = vpop.f32.mrb[0].mxu0
      %1000 = vdwg.mxu0
      %v1001 = vadd.f32 %v328, %v747
      %v1002 = vadd.f32 %v329, %v750
      %v1003 = vadd.f32 %v330, %v755
      %v1004 = vadd.f32 %v331, %v758
      %v1005 = vadd.f32 %v332, %v763
      %v1006 = vadd.f32 %v333, %v766
      %v1007 = vadd.f32 %v334, %v771
      %v1008 = vadd.f32 %v335, %v774
      %v1009 = vadd.f32 %v336, %v779
      %v1010 = vadd.f32 %v337, %v782
      %v1011 = vadd.f32 %v338, %v787
      %v1012 = vadd.f32 %v339, %v790
      %v1013 = vadd.f32 %v340, %v795
      %v1014 = vadd.f32 %v341, %v798
      %v1015 = vadd.f32 %v342, %v803
      %v1016 = vadd.f32 %v343, %v806
      %v1017 = vadd.f32 %v344, %v811
      %v1018 = vadd.f32 %v345, %v814
      %v1019 = vadd.f32 %v346, %v819
      %v1020 = vadd.f32 %v347, %v822
      %v1021 = vadd.f32 %v348, %v827
      %v1022 = vadd.f32 %v349, %v830
      %v1023 = vadd.f32 %v350, %v835
      %v1024 = vadd.f32 %v351, %v838
      %v1025 = vadd.f32 %v352, %v843
      %v1026 = vadd.f32 %v353, %v846
      %v1027 = vadd.f32 %v354, %v851
      %v1028 = vadd.f32 %v355, %v854
      %v1029 = vadd.f32 %v356, %v859
      %v1030 = vadd.f32 %v357, %v862
      %v1031 = vadd.f32 %v358, %v867
      %v1032 = vadd.f32 %v359, %v870
      %v1033 = vadd.f32 %v360, %v875
      %v1034 = vadd.f32 %v361, %v878
      %v1035 = vadd.f32 %v362, %v883
      %v1036 = vadd.f32 %v363, %v886
      %v1037 = vadd.f32 %v364, %v891
      %v1038 = vadd.f32 %v365, %v894
      %v1039 = vadd.f32 %v366, %v899
      %v1040 = vadd.f32 %v367, %v902
      %v1041 = vadd.f32 %v368, %v907
      %v1042 = vadd.f32 %v369, %v910
      %v1043 = vadd.f32 %v370, %v915
      %v1044 = vadd.f32 %v371, %v918
      %v1045 = vadd.f32 %v372, %v923
      %v1046 = vadd.f32 %v373, %v926
      %v1047 = vadd.f32 %v374, %v931
      %v1048 = vadd.f32 %v375, %v934
      %v1049 = vadd.f32 %v376, %v939
      %v1050 = vadd.f32 %v377, %v942
      %v1051 = vadd.f32 %v378, %v947
      %v1052 = vadd.f32 %v379, %v950
      %v1053 = vadd.f32 %v380, %v955
      %v1054 = vadd.f32 %v381, %v958
      %v1055 = vadd.f32 %v382, %v963
      %v1056 = vadd.f32 %v383, %v966
      %v1057 = vadd.f32 %v384, %v971
      %v1058 = vadd.f32 %v385, %v974
      %v1059 = vadd.f32 %v386, %v979
      %v1060 = vadd.f32 %v387, %v982
      %v1061 = vadd.f32 %v388, %v987
      %v1062 = vadd.f32 %v389, %v990
      %v1063 = vadd.f32 %v390, %v995
      %v1064 = vadd.f32 %v391, %v998
      %1065 = vst [vmem:[#allocation2] sm:$0xff] %v1001
      %1066 = vst [vmem:[#allocation2 + $0x8] sm:$0xff] %v1002
      %1067 = vst [vmem:[#allocation2 + $0x10] sm:$0xff] %v1003
      %1068 = vst [vmem:[#allocation2 + $0x18] sm:$0xff] %v1004
      %1069 = vst [vmem:[#allocation2 + $0x20] sm:$0xff] %v1005
      %1070 = vst [vmem:[#allocation2 + $0x28] sm:$0xff] %v1006
      %1071 = vst [vmem:[#allocation2 + $0x30] sm:$0xff] %v1007
      %1072 = vst [vmem:[#allocation2 + $0x38] sm:$0xff] %v1008
      %1073 = vst [vmem:[#allocation2 + $0x40] sm:$0xff] %v1009
      %1074 = vst [vmem:[#allocation2 + $0x48] sm:$0xff] %v1010
      %1075 = vst [vmem:[#allocation2 + $0x50] sm:$0xff] %v1011
      %1076 = vst [vmem:[#allocation2 + $0x58] sm:$0xff] %v1012
      %1077 = vst [vmem:[#allocation2 + $0x60] sm:$0xff] %v1013
      %1078 = vst [vmem:[#allocation2 + $0x68] sm:$0xff] %v1014
      %1079 = vst [vmem:[#allocation2 + $0x70] sm:$0xff] %v1015
      %1080 = vst [vmem:[#allocation2 + $0x78] sm:$0xff] %v1016
      %1081 = vst [vmem:[#allocation2 + $0x80] sm:$0xff] %v1017
      %1082 = vst [vmem:[#allocation2 + $0x88] sm:$0xff] %v1018
      %1083 = vst [vmem:[#allocation2 + $0x90] sm:$0xff] %v1019
      %1084 = vst [vmem:[#allocation2 + $0x98] sm:$0xff] %v1020
      %1085 = vst [vmem:[#allocation2 + $0xa0] sm:$0xff] %v1021
      %1086 = vst [vmem:[#allocation2 + $0xa8] sm:$0xff] %v1022
      %1087 = vst [vmem:[#allocation2 + $0xb0] sm:$0xff] %v1023
      %1088 = vst [vmem:[#allocation2 + $0xb8] sm:$0xff] %v1024
      %1089 = vst [vmem:[#allocation2 + $0xc0] sm:$0xff] %v1025
      %1090 = vst [vmem:[#allocation2 + $0xc8] sm:$0xff] %v1026
      %1091 = vst [vmem:[#allocation2 + $0xd0] sm:$0xff] %v1027
      %1092 = vst [vmem:[#allocation2 + $0xd8] sm:$0xff] %v1028
      %1093 = vst [vmem:[#allocation2 + $0xe0] sm:$0xff] %v1029
      %1094 = vst [vmem:[#allocation2 + $0xe8] sm:$0xff] %v1030
      %1095 = vst [vmem:[#allocation2 + $0xf0] sm:$0xff] %v1031
      %1096 = vst [vmem:[#allocation2 + $0xf8] sm:$0xff] %v1032
      %1097 = vst [vmem:[#allocation2 + $0x100] sm:$0xff] %v1033
      %1098 = vst [vmem:[#allocation2 + $0x108] sm:$0xff] %v1034
      %1099 = vst [vmem:[#allocation2 + $0x110] sm:$0xff] %v1035
      %1100 = vst [vmem:[#allocation2 + $0x118] sm:$0xff] %v1036
      %1101 = vst [vmem:[#allocation2 + $0x120] sm:$0xff] %v1037
      %1102 = vst [vmem:[#allocation2 + $0x128] sm:$0xff] %v1038
      %1103 = vst [vmem:[#allocation2 + $0x130] sm:$0xff] %v1039
      %1104 = vst [vmem:[#allocation2 + $0x138] sm:$0xff] %v1040
      %1105 = vst [vmem:[#allocation2 + $0x140] sm:$0xff] %v1041
      %1106 = vst [vmem:[#allocation2 + $0x148] sm:$0xff] %v1042
      %1107 = vst [vmem:[#allocation2 + $0x150] sm:$0xff] %v1043
      %1108 = vst [vmem:[#allocation2 + $0x158] sm:$0xff] %v1044
      %1109 = vst [vmem:[#allocation2 + $0x160] sm:$0xff] %v1045
      %1110 = vst [vmem:[#allocation2 + $0x168] sm:$0xff] %v1046
      %1111 = vst [vmem:[#allocation2 + $0x170] sm:$0xff] %v1047
      %1112 = vst [vmem:[#allocation2 + $0x178] sm:$0xff] %v1048
      %1113 = vst [vmem:[#allocation2 + $0x180] sm:$0xff] %v1049
      %1114 = vst [vmem:[#allocation2 + $0x188] sm:$0xff] %v1050
      %1115 = vst [vmem:[#allocation2 + $0x190] sm:$0xff] %v1051
      %1116 = vst [vmem:[#allocation2 + $0x198] sm:$0xff] %v1052
      %1117 = vst [vmem:[#allocation2 + $0x1a0] sm:$0xff] %v1053
      %1118 = vst [vmem:[#allocation2 + $0x1a8] sm:$0xff] %v1054
      %1119 = vst [vmem:[#allocation2 + $0x1b0] sm:$0xff] %v1055
      %1120 = vst [vmem:[#allocation2 + $0x1b8] sm:$0xff] %v1056
      %1121 = vst [vmem:[#allocation2 + $0x1c0] sm:$0xff] %v1057
      %1122 = vst [vmem:[#allocation2 + $0x1c8] sm:$0xff] %v1058
      %1123 = vst [vmem:[#allocation2 + $0x1d0] sm:$0xff] %v1059
      %1124 = vst [vmem:[#allocation2 + $0x1d8] sm:$0xff] %v1060
      %1125 = vst [vmem:[#allocation2 + $0x1e0] sm:$0xff] %v1061
      %1126 = vst [vmem:[#allocation2 + $0x1e8] sm:$0xff] %v1062
      %1127 = vst [vmem:[#allocation2 + $0x1f0] sm:$0xff] %v1063
      %1128 = vst [vmem:[#allocation2 + $0x1f8] sm:$0xff] %v1064
      // Predicated region
      $region37: #{resnet_feature_extractor.35} parent=31 // pred_check
        %p1129 = pneg %p260
      $region38: #{resnet_feature_extractor.35} parent=31 // pred_check_branch
        %1131 = sbr.rel (%p1129) target = $region40
      $region39: #{resnet_feature_extractor.35} parent=31 // pred_region
        %v1132 = vld [vmem:[#allocation2] sm:$0xff]
        %v1133 = vld [vmem:[#allocation2 + $0x8] sm:$0xff]
        %v1134 = vld [vmem:[#allocation2 + $0x10] sm:$0xff]
        %v1135 = vld [vmem:[#allocation2 + $0x18] sm:$0xff]
        %v1136 = vld [vmem:[#allocation2 + $0x20] sm:$0xff]
        %v1137 = vld [vmem:[#allocation2 + $0x28] sm:$0xff]
        %v1138 = vld [vmem:[#allocation2 + $0x30] sm:$0xff]
        %v1139 = vld [vmem:[#allocation2 + $0x38] sm:$0xff]
        %v1140 = vld [vmem:[#allocation2 + $0x40] sm:$0xff]
        %v1141 = vld [vmem:[#allocation2 + $0x48] sm:$0xff]
        %v1142 = vld [vmem:[#allocation2 + $0x50] sm:$0xff]
        %v1143 = vld [vmem:[#allocation2 + $0x58] sm:$0xff]
        %v1144 = vld [vmem:[#allocation2 + $0x60] sm:$0xff]
        %v1145 = vld [vmem:[#allocation2 + $0x68] sm:$0xff]
        %v1146 = vld [vmem:[#allocation2 + $0x70] sm:$0xff]
        %v1147 = vld [vmem:[#allocation2 + $0x78] sm:$0xff]
        %v1148 = vld [vmem:[#allocation2 + $0x80] sm:$0xff]
        %v1149 = vld [vmem:[#allocation2 + $0x88] sm:$0xff]
        %v1150 = vld [vmem:[#allocation2 + $0x90] sm:$0xff]
        %v1151 = vld [vmem:[#allocation2 + $0x98] sm:$0xff]
        %v1152 = vld [vmem:[#allocation2 + $0xa0] sm:$0xff]
        %v1153 = vld [vmem:[#allocation2 + $0xa8] sm:$0xff]
        %v1154 = vld [vmem:[#allocation2 + $0xb0] sm:$0xff]
        %v1155 = vld [vmem:[#allocation2 + $0xb8] sm:$0xff]
        %v1156 = vld [vmem:[#allocation2 + $0xc0] sm:$0xff]
        %v1157 = vld [vmem:[#allocation2 + $0xc8] sm:$0xff]
        %v1158 = vld [vmem:[#allocation2 + $0xd0] sm:$0xff]
        %v1159 = vld [vmem:[#allocation2 + $0xd8] sm:$0xff]
        %v1160 = vld [vmem:[#allocation2 + $0xe0] sm:$0xff]
        %v1161 = vld [vmem:[#allocation2 + $0xe8] sm:$0xff]
        %v1162 = vld [vmem:[#allocation2 + $0xf0] sm:$0xff]
        %v1163 = vld [vmem:[#allocation2 + $0xf8] sm:$0xff]
        %v1164 = vld [vmem:[#allocation2 + $0x100] sm:$0xff]
        %v1165 = vld [vmem:[#allocation2 + $0x108] sm:$0xff]
        %v1166 = vld [vmem:[#allocation2 + $0x110] sm:$0xff]
        %v1167 = vld [vmem:[#allocation2 + $0x118] sm:$0xff]
        %v1168 = vld [vmem:[#allocation2 + $0x120] sm:$0xff]
        %v1169 = vld [vmem:[#allocation2 + $0x128] sm:$0xff]
        %v1170 = vld [vmem:[#allocation2 + $0x130] sm:$0xff]
        %v1171 = vld [vmem:[#allocation2 + $0x138] sm:$0xff]
        %v1172 = vld [vmem:[#allocation2 + $0x140] sm:$0xff]
        %v1173 = vld [vmem:[#allocation2 + $0x148] sm:$0xff]
        %v1174 = vld [vmem:[#allocation2 + $0x150] sm:$0xff]
        %v1175 = vld [vmem:[#allocation2 + $0x158] sm:$0xff]
        %v1176 = vld [vmem:[#allocation2 + $0x160] sm:$0xff]
        %v1177 = vld [vmem:[#allocation2 + $0x168] sm:$0xff]
        %v1178 = vld [vmem:[#allocation2 + $0x170] sm:$0xff]
        %v1179 = vld [vmem:[#allocation2 + $0x178] sm:$0xff]
        %v1180 = vld [vmem:[#allocation2 + $0x180] sm:$0xff]
        %v1181 = vld [vmem:[#allocation2 + $0x188] sm:$0xff]
        %v1182 = vld [vmem:[#allocation2 + $0x190] sm:$0xff]
        %v1183 = vld [vmem:[#allocation2 + $0x198] sm:$0xff]
        %v1184 = vld [vmem:[#allocation2 + $0x1a0] sm:$0xff]
        %v1185 = vld [vmem:[#allocation2 + $0x1a8] sm:$0xff]
        %v1186 = vld [vmem:[#allocation2 + $0x1b0] sm:$0xff]
        %v1187 = vld [vmem:[#allocation2 + $0x1b8] sm:$0xff]
        %v1188 = vld [vmem:[#allocation2 + $0x1c0] sm:$0xff]
        %v1189 = vld [vmem:[#allocation2 + $0x1c8] sm:$0xff]
        %v1190 = vld [vmem:[#allocation2 + $0x1d0] sm:$0xff]
        %v1191 = vld [vmem:[#allocation2 + $0x1d8] sm:$0xff]
        %v1192 = vld [vmem:[#allocation2 + $0x1e0] sm:$0xff]
        %v1193 = vld [vmem:[#allocation2 + $0x1e8] sm:$0xff]
        %v1194 = vld [vmem:[#allocation2 + $0x1f0] sm:$0xff]
        %v1195 = vld [vmem:[#allocation2 + $0x1f8] sm:$0xff]
        %v1196 = vld [vmem:[%s249] sm:$0x1]
        %v1198 = vlaneseq
        %v1199 = vshrl.u32 %v1198, 7
        %v1200 = vsub.s32 0, %v1199
        %v1201 = vrot.slane %v1196, %v1200
        %v1203 = vadd.f32 %v1132, %v1201
        %v1204 = vadd.f32 %v1133, %v1201
        %v1205 = vadd.f32 %v1134, %v1201
        %v1206 = vadd.f32 %v1135, %v1201
        %v1207 = vadd.f32 %v1136, %v1201
        %v1208 = vadd.f32 %v1137, %v1201
        %v1209 = vadd.f32 %v1138, %v1201
        %v1210 = vadd.f32 %v1139, %v1201
        %v1211 = vadd.f32 %v1140, %v1201
        %v1212 = vadd.f32 %v1141, %v1201
        %v1213 = vadd.f32 %v1142, %v1201
        %v1214 = vadd.f32 %v1143, %v1201
        %v1215 = vadd.f32 %v1144, %v1201
        %v1216 = vadd.f32 %v1145, %v1201
        %v1217 = vadd.f32 %v1146, %v1201
        %v1218 = vadd.f32 %v1147, %v1201
        %v1219 = vadd.f32 %v1148, %v1201
        %v1220 = vadd.f32 %v1149, %v1201
        %v1221 = vadd.f32 %v1150, %v1201
        %v1222 = vadd.f32 %v1151, %v1201
        %v1223 = vadd.f32 %v1152, %v1201
        %v1224 = vadd.f32 %v1153, %v1201
        %v1225 = vadd.f32 %v1154, %v1201
        %v1226 = vadd.f32 %v1155, %v1201
        %v1227 = vadd.f32 %v1156, %v1201
        %v1228 = vadd.f32 %v1157, %v1201
        %v1229 = vadd.f32 %v1158, %v1201
        %v1230 = vadd.f32 %v1159, %v1201
        %v1231 = vadd.f32 %v1160, %v1201
        %v1232 = vadd.f32 %v1161, %v1201
        %v1233 = vadd.f32 %v1162, %v1201
        %v1234 = vadd.f32 %v1163, %v1201
        %v1235 = vadd.f32 %v1164, %v1201
        %v1236 = vadd.f32 %v1165, %v1201
        %v1237 = vadd.f32 %v1166, %v1201
        %v1238 = vadd.f32 %v1167, %v1201
        %v1239 = vadd.f32 %v1168, %v1201
        %v1240 = vadd.f32 %v1169, %v1201
        %v1241 = vadd.f32 %v1170, %v1201
        %v1242 = vadd.f32 %v1171, %v1201
        %v1243 = vadd.f32 %v1172, %v1201
        %v1244 = vadd.f32 %v1173, %v1201
        %v1245 = vadd.f32 %v1174, %v1201
        %v1246 = vadd.f32 %v1175, %v1201
        %v1247 = vadd.f32 %v1176, %v1201
        %v1248 = vadd.f32 %v1177, %v1201
        %v1249 = vadd.f32 %v1178, %v1201
        %v1250 = vadd.f32 %v1179, %v1201
        %v1251 = vadd.f32 %v1180, %v1201
        %v1252 = vadd.f32 %v1181, %v1201
        %v1253 = vadd.f32 %v1182, %v1201
        %v1254 = vadd.f32 %v1183, %v1201
        %v1255 = vadd.f32 %v1184, %v1201
        %v1256 = vadd.f32 %v1185, %v1201
        %v1257 = vadd.f32 %v1186, %v1201
        %v1258 = vadd.f32 %v1187, %v1201
        %v1259 = vadd.f32 %v1188, %v1201
        %v1260 = vadd.f32 %v1189, %v1201
        %v1261 = vadd.f32 %v1190, %v1201
        %v1262 = vadd.f32 %v1191, %v1201
        %v1263 = vadd.f32 %v1192, %v1201
        %v1264 = vadd.f32 %v1193, %v1201
        %v1265 = vadd.f32 %v1194, %v1201
        %v1266 = vadd.f32 %v1195, %v1201
        %v1267 = vmax.f32 %v1203, 0.0
        %v1268 = vmax.f32 %v1204, 0.0
        %v1269 = vmax.f32 %v1205, 0.0
        %v1270 = vmax.f32 %v1206, 0.0
        %v1271 = vmax.f32 %v1207, 0.0
        %v1272 = vmax.f32 %v1208, 0.0
        %v1273 = vmax.f32 %v1209, 0.0
        %v1274 = vmax.f32 %v1210, 0.0
        %v1275 = vmax.f32 %v1211, 0.0
        %v1276 = vmax.f32 %v1212, 0.0
        %v1277 = vmax.f32 %v1213, 0.0
        %v1278 = vmax.f32 %v1214, 0.0
        %v1279 = vmax.f32 %v1215, 0.0
        %v1280 = vmax.f32 %v1216, 0.0
        %v1281 = vmax.f32 %v1217, 0.0
        %v1282 = vmax.f32 %v1218, 0.0
        %v1283 = vmax.f32 %v1219, 0.0
        %v1284 = vmax.f32 %v1220, 0.0
        %v1285 = vmax.f32 %v1221, 0.0
        %v1286 = vmax.f32 %v1222, 0.0
        %v1287 = vmax.f32 %v1223, 0.0
        %v1288 = vmax.f32 %v1224, 0.0
        %v1289 = vmax.f32 %v1225, 0.0
        %v1290 = vmax.f32 %v1226, 0.0
        %v1291 = vmax.f32 %v1227, 0.0
        %v1292 = vmax.f32 %v1228, 0.0
        %v1293 = vmax.f32 %v1229, 0.0
        %v1294 = vmax.f32 %v1230, 0.0
        %v1295 = vmax.f32 %v1231, 0.0
        %v1296 = vmax.f32 %v1232, 0.0
        %v1297 = vmax.f32 %v1233, 0.0
        %v1298 = vmax.f32 %v1234, 0.0
        %v1299 = vmax.f32 %v1235, 0.0
        %v1300 = vmax.f32 %v1236, 0.0
        %v1301 = vmax.f32 %v1237, 0.0
        %v1302 = vmax.f32 %v1238, 0.0
        %v1303 = vmax.f32 %v1239, 0.0
        %v1304 = vmax.f32 %v1240, 0.0
        %v1305 = vmax.f32 %v1241, 0.0
        %v1306 = vmax.f32 %v1242, 0.0
        %v1307 = vmax.f32 %v1243, 0.0
        %v1308 = vmax.f32 %v1244, 0.0
        %v1309 = vmax.f32 %v1245, 0.0
        %v1310 = vmax.f32 %v1246, 0.0
        %v1311 = vmax.f32 %v1247, 0.0
        %v1312 = vmax.f32 %v1248, 0.0
        %v1313 = vmax.f32 %v1249, 0.0
        %v1314 = vmax.f32 %v1250, 0.0
        %v1315 = vmax.f32 %v1251, 0.0
        %v1316 = vmax.f32 %v1252, 0.0
        %v1317 = vmax.f32 %v1253, 0.0
        %v1318 = vmax.f32 %v1254, 0.0
        %v1319 = vmax.f32 %v1255, 0.0
        %v1320 = vmax.f32 %v1256, 0.0
        %v1321 = vmax.f32 %v1257, 0.0
        %v1322 = vmax.f32 %v1258, 0.0
        %v1323 = vmax.f32 %v1259, 0.0
        %v1324 = vmax.f32 %v1260, 0.0
        %v1325 = vmax.f32 %v1261, 0.0
        %v1326 = vmax.f32 %v1262, 0.0
        %v1327 = vmax.f32 %v1263, 0.0
        %v1328 = vmax.f32 %v1264, 0.0
        %v1329 = vmax.f32 %v1265, 0.0
        %v1330 = vmax.f32 %v1266, 0.0
        %v1331 = vpack.c.bf16 %v1268, %v1267
        %v1332 = vpack.c.bf16 %v1270, %v1269
        %v1333 = vpack.c.bf16 %v1272, %v1271
        %v1334 = vpack.c.bf16 %v1274, %v1273
        %v1335 = vpack.c.bf16 %v1276, %v1275
        %v1336 = vpack.c.bf16 %v1278, %v1277
        %v1337 = vpack.c.bf16 %v1280, %v1279
        %v1338 = vpack.c.bf16 %v1282, %v1281
        %v1339 = vpack.c.bf16 %v1284, %v1283
        %v1340 = vpack.c.bf16 %v1286, %v1285
        %v1341 = vpack.c.bf16 %v1288, %v1287
        %v1342 = vpack.c.bf16 %v1290, %v1289
        %v1343 = vpack.c.bf16 %v1292, %v1291
        %v1344 = vpack.c.bf16 %v1294, %v1293
        %v1345 = vpack.c.bf16 %v1296, %v1295
        %v1346 = vpack.c.bf16 %v1298, %v1297
        %v1347 = vpack.c.bf16 %v1300, %v1299
        %v1348 = vpack.c.bf16 %v1302, %v1301
        %v1349 = vpack.c.bf16 %v1304, %v1303
        %v1350 = vpack.c.bf16 %v1306, %v1305
        %v1351 = vpack.c.bf16 %v1308, %v1307
        %v1352 = vpack.c.bf16 %v1310, %v1309
        %v1353 = vpack.c.bf16 %v1312, %v1311
        %v1354 = vpack.c.bf16 %v1314, %v1313
        %v1355 = vpack.c.bf16 %v1316, %v1315
        %v1356 = vpack.c.bf16 %v1318, %v1317
        %v1357 = vpack.c.bf16 %v1320, %v1319
        %v1358 = vpack.c.bf16 %v1322, %v1321
        %v1359 = vpack.c.bf16 %v1324, %v1323
        %v1360 = vpack.c.bf16 %v1326, %v1325
        %v1361 = vpack.c.bf16 %v1328, %v1327
        %v1362 = vpack.c.bf16 %v1330, %v1329
        %v1395 = vunpack.c.l.b16 %v1331
        %v1396 = vunpack.c.h.b16 %v1331
        %v1397 = vunpack.c.l.b16 %v1332
        %v1398 = vunpack.c.h.b16 %v1332
        %v1399 = vunpack.c.l.b16 %v1333
        %v1400 = vunpack.c.h.b16 %v1333
        %v1401 = vunpack.c.l.b16 %v1334
        %v1402 = vunpack.c.h.b16 %v1334
        %v1403 = vunpack.c.l.b16 %v1335
        %v1404 = vunpack.c.h.b16 %v1335
        %v1405 = vunpack.c.l.b16 %v1336
        %v1406 = vunpack.c.h.b16 %v1336
        %v1407 = vunpack.c.l.b16 %v1337
        %v1408 = vunpack.c.h.b16 %v1337
        %v1409 = vunpack.c.l.b16 %v1338
        %v1410 = vunpack.c.h.b16 %v1338
        %v1411 = vunpack.c.l.b16 %v1339
        %v1412 = vunpack.c.h.b16 %v1339
        %v1413 = vunpack.c.l.b16 %v1340
        %v1414 = vunpack.c.h.b16 %v1340
        %v1415 = vunpack.c.l.b16 %v1341
        %v1416 = vunpack.c.h.b16 %v1341
        %v1417 = vunpack.c.l.b16 %v1342
        %v1418 = vunpack.c.h.b16 %v1342
        %v1419 = vunpack.c.l.b16 %v1343
        %v1420 = vunpack.c.h.b16 %v1343
        %v1421 = vunpack.c.l.b16 %v1344
        %v1422 = vunpack.c.h.b16 %v1344
        %v1423 = vunpack.c.l.b16 %v1345
        %v1424 = vunpack.c.h.b16 %v1345
        %v1425 = vunpack.c.l.b16 %v1346
        %v1426 = vunpack.c.h.b16 %v1346
        %v1427 = vunpack.c.l.b16 %v1347
        %v1428 = vunpack.c.h.b16 %v1347
        %v1429 = vunpack.c.l.b16 %v1348
        %v1430 = vunpack.c.h.b16 %v1348
        %v1431 = vunpack.c.l.b16 %v1349
        %v1432 = vunpack.c.h.b16 %v1349
        %v1433 = vunpack.c.l.b16 %v1350
        %v1434 = vunpack.c.h.b16 %v1350
        %v1435 = vunpack.c.l.b16 %v1351
        %v1436 = vunpack.c.h.b16 %v1351
        %v1437 = vunpack.c.l.b16 %v1352
        %v1438 = vunpack.c.h.b16 %v1352
        %v1439 = vunpack.c.l.b16 %v1353
        %v1440 = vunpack.c.h.b16 %v1353
        %v1441 = vunpack.c.l.b16 %v1354
        %v1442 = vunpack.c.h.b16 %v1354
        %v1443 = vunpack.c.l.b16 %v1355
        %v1444 = vunpack.c.h.b16 %v1355
        %v1445 = vunpack.c.l.b16 %v1356
        %v1446 = vunpack.c.h.b16 %v1356
        %v1447 = vunpack.c.l.b16 %v1357
        %v1448 = vunpack.c.h.b16 %v1357
        %v1449 = vunpack.c.l.b16 %v1358
        %v1450 = vunpack.c.h.b16 %v1358
        %v1451 = vunpack.c.l.b16 %v1359
        %v1452 = vunpack.c.h.b16 %v1359
        %v1453 = vunpack.c.l.b16 %v1360
        %v1454 = vunpack.c.h.b16 %v1360
        %v1455 = vunpack.c.l.b16 %v1361
        %v1456 = vunpack.c.h.b16 %v1361
        %v1457 = vunpack.c.l.b16 %v1362
        %v1458 = vunpack.c.h.b16 %v1362
        %v1459 = vpack.c.b16 %v1395, %v1395
        %v1460 = vpack.c.b16 %v1396, %v1396
        %v1461 = vpack.c.b16 %v1397, %v1397
        %v1462 = vpack.c.b16 %v1398, %v1398
        %v1463 = vpack.c.b16 %v1399, %v1399
        %v1464 = vpack.c.b16 %v1400, %v1400
        %v1465 = vpack.c.b16 %v1401, %v1401
        %v1466 = vpack.c.b16 %v1402, %v1402
        %v1467 = vpack.c.b16 %v1403, %v1403
        %v1468 = vpack.c.b16 %v1404, %v1404
        %v1469 = vpack.c.b16 %v1405, %v1405
        %v1470 = vpack.c.b16 %v1406, %v1406
        %v1471 = vpack.c.b16 %v1407, %v1407
        %v1472 = vpack.c.b16 %v1408, %v1408
        %v1473 = vpack.c.b16 %v1409, %v1409
        %v1474 = vpack.c.b16 %v1410, %v1410
        %v1475 = vpack.c.b16 %v1411, %v1411
        %v1476 = vpack.c.b16 %v1412, %v1412
        %v1477 = vpack.c.b16 %v1413, %v1413
        %v1478 = vpack.c.b16 %v1414, %v1414
        %v1479 = vpack.c.b16 %v1415, %v1415
        %v1480 = vpack.c.b16 %v1416, %v1416
        %v1481 = vpack.c.b16 %v1417, %v1417
        %v1482 = vpack.c.b16 %v1418, %v1418
        %v1483 = vpack.c.b16 %v1419, %v1419
        %v1484 = vpack.c.b16 %v1420, %v1420
        %v1485 = vpack.c.b16 %v1421, %v1421
        %v1486 = vpack.c.b16 %v1422, %v1422
        %v1487 = vpack.c.b16 %v1423, %v1423
        %v1488 = vpack.c.b16 %v1424, %v1424
        %v1489 = vpack.c.b16 %v1425, %v1425
        %v1490 = vpack.c.b16 %v1426, %v1426
        %v1491 = vpack.c.b16 %v1427, %v1427
        %v1492 = vpack.c.b16 %v1428, %v1428
        %v1493 = vpack.c.b16 %v1429, %v1429
        %v1494 = vpack.c.b16 %v1430, %v1430
        %v1495 = vpack.c.b16 %v1431, %v1431
        %v1496 = vpack.c.b16 %v1432, %v1432
        %v1497 = vpack.c.b16 %v1433, %v1433
        %v1498 = vpack.c.b16 %v1434, %v1434
        %v1499 = vpack.c.b16 %v1435, %v1435
        %v1500 = vpack.c.b16 %v1436, %v1436
        %v1501 = vpack.c.b16 %v1437, %v1437
        %v1502 = vpack.c.b16 %v1438, %v1438
        %v1503 = vpack.c.b16 %v1439, %v1439
        %v1504 = vpack.c.b16 %v1440, %v1440
        %v1505 = vpack.c.b16 %v1441, %v1441
        %v1506 = vpack.c.b16 %v1442, %v1442
        %v1507 = vpack.c.b16 %v1443, %v1443
        %v1508 = vpack.c.b16 %v1444, %v1444
        %v1509 = vpack.c.b16 %v1445, %v1445
        %v1510 = vpack.c.b16 %v1446, %v1446
        %v1511 = vpack.c.b16 %v1447, %v1447
        %v1512 = vpack.c.b16 %v1448, %v1448
        %v1513 = vpack.c.b16 %v1449, %v1449
        %v1514 = vpack.c.b16 %v1450, %v1450
        %v1515 = vpack.c.b16 %v1451, %v1451
        %v1516 = vpack.c.b16 %v1452, %v1452
        %v1517 = vpack.c.b16 %v1453, %v1453
        %v1518 = vpack.c.b16 %v1454, %v1454
        %v1519 = vpack.c.b16 %v1455, %v1455
        %v1520 = vpack.c.b16 %v1456, %v1456
        %v1521 = vpack.c.b16 %v1457, %v1457
        %v1522 = vpack.c.b16 %v1458, %v1458
        %1587 = vst [vmem:[%s257] sm:$0xf] %v1459
        %1588 = vst [vmem:[%s257 + $0x4] sm:$0xf] %v1460
        %1589 = vst [vmem:[%s257 + $0x8] sm:$0xf] %v1461
        %1590 = vst [vmem:[%s257 + $0xc] sm:$0xf] %v1462
        %1591 = vst [vmem:[%s257 + $0x10] sm:$0xf] %v1463
        %1592 = vst [vmem:[%s257 + $0x14] sm:$0xf] %v1464
        %1593 = vst [vmem:[%s257 + $0x18] sm:$0xf] %v1465
        %1594 = vst [vmem:[%s257 + $0x1c] sm:$0xf] %v1466
        %1595 = vst [vmem:[%s257 + $0x20] sm:$0xf] %v1467
        %1596 = vst [vmem:[%s257 + $0x24] sm:$0xf] %v1468
        %1597 = vst [vmem:[%s257 + $0x28] sm:$0xf] %v1469
        %1598 = vst [vmem:[%s257 + $0x2c] sm:$0xf] %v1470
        %1599 = vst [vmem:[%s257 + $0x30] sm:$0xf] %v1471
        %1600 = vst [vmem:[%s257 + $0x34] sm:$0xf] %v1472
        %1601 = vst [vmem:[%s257 + $0x38] sm:$0xf] %v1473
        %1602 = vst [vmem:[%s257 + $0x3c] sm:$0xf] %v1474
        %1603 = vst [vmem:[%s257 + $0x40] sm:$0xf] %v1475
        %1604 = vst [vmem:[%s257 + $0x44] sm:$0xf] %v1476
        %1605 = vst [vmem:[%s257 + $0x48] sm:$0xf] %v1477
        %1606 = vst [vmem:[%s257 + $0x4c] sm:$0xf] %v1478
        %1607 = vst [vmem:[%s257 + $0x50] sm:$0xf] %v1479
        %1608 = vst [vmem:[%s257 + $0x54] sm:$0xf] %v1480
        %1609 = vst [vmem:[%s257 + $0x58] sm:$0xf] %v1481
        %1610 = vst [vmem:[%s257 + $0x5c] sm:$0xf] %v1482
        %1611 = vst [vmem:[%s257 + $0x60] sm:$0xf] %v1483
        %1612 = vst [vmem:[%s257 + $0x64] sm:$0xf] %v1484
        %1613 = vst [vmem:[%s257 + $0x68] sm:$0xf] %v1485
        %1614 = vst [vmem:[%s257 + $0x6c] sm:$0xf] %v1486
        %1615 = vst [vmem:[%s257 + $0x70] sm:$0xf] %v1487
        %1616 = vst [vmem:[%s257 + $0x74] sm:$0xf] %v1488
        %1617 = vst [vmem:[%s257 + $0x78] sm:$0xf] %v1489
        %1618 = vst [vmem:[%s257 + $0x7c] sm:$0xf] %v1490
        %1619 = vst [vmem:[%s257 + $0x80] sm:$0xf] %v1491
        %1620 = vst [vmem:[%s257 + $0x84] sm:$0xf] %v1492
        %1621 = vst [vmem:[%s257 + $0x88] sm:$0xf] %v1493
        %1622 = vst [vmem:[%s257 + $0x8c] sm:$0xf] %v1494
        %1623 = vst [vmem:[%s257 + $0x90] sm:$0xf] %v1495
        %1624 = vst [vmem:[%s257 + $0x94] sm:$0xf] %v1496
        %1625 = vst [vmem:[%s257 + $0x98] sm:$0xf] %v1497
        %1626 = vst [vmem:[%s257 + $0x9c] sm:$0xf] %v1498
        %1627 = vst [vmem:[%s257 + $0xa0] sm:$0xf] %v1499
        %1628 = vst [vmem:[%s257 + $0xa4] sm:$0xf] %v1500
        %1629 = vst [vmem:[%s257 + $0xa8] sm:$0xf] %v1501
        %1630 = vst [vmem:[%s257 + $0xac] sm:$0xf] %v1502
        %1631 = vst [vmem:[%s257 + $0xb0] sm:$0xf] %v1503
        %1632 = vst [vmem:[%s257 + $0xb4] sm:$0xf] %v1504
        %1633 = vst [vmem:[%s257 + $0xb8] sm:$0xf] %v1505
        %1634 = vst [vmem:[%s257 + $0xbc] sm:$0xf] %v1506
        %1635 = vst [vmem:[%s257 + $0xc0] sm:$0xf] %v1507
        %1636 = vst [vmem:[%s257 + $0xc4] sm:$0xf] %v1508
        %1637 = vst [vmem:[%s257 + $0xc8] sm:$0xf] %v1509
        %1638 = vst [vmem:[%s257 + $0xcc] sm:$0xf] %v1510
        %1639 = vst [vmem:[%s257 + $0xd0] sm:$0xf] %v1511
        %1640 = vst [vmem:[%s257 + $0xd4] sm:$0xf] %v1512
        %1641 = vst [vmem:[%s257 + $0xd8] sm:$0xf] %v1513
        %1642 = vst [vmem:[%s257 + $0xdc] sm:$0xf] %v1514
        %1643 = vst [vmem:[%s257 + $0xe0] sm:$0xf] %v1515
        %1644 = vst [vmem:[%s257 + $0xe4] sm:$0xf] %v1516
        %1645 = vst [vmem:[%s257 + $0xe8] sm:$0xf] %v1517
        %1646 = vst [vmem:[%s257 + $0xec] sm:$0xf] %v1518
        %1647 = vst [vmem:[%s257 + $0xf0] sm:$0xf] %v1519
        %1648 = vst [vmem:[%s257 + $0xf4] sm:$0xf] %v1520
        %1649 = vst [vmem:[%s257 + $0xf8] sm:$0xf] %v1521
        %1650 = vst [vmem:[%s257 + $0xfc] sm:$0xf] %v1522
      $region40: #{resnet_feature_extractor.35} parent=31 // pred_fallthru
        _
      %s1651 = smul.u32 64, %s19
      %p1652 = scmp.lt.s32.totalorder %s1651, 127
      %s1653 = scalar_select %p1652, %s1651, 127
      %p1654 = scmp.lt.s32.totalorder %s20, 0
      %s1655 = scalar_select %p1654, %s20, 0
      %s1656 = sadd.s32 %s1655, %s1653
      %s1657 = smul.addr %s1656, 4
      %s1658 = scalar_lea.vmem %s3, %s1657
      // Predicated region
      $region41: #{resnet_feature_extractor.35} parent=31 // pred_check
        %p1659 = pneg %p135
      $region42: #{resnet_feature_extractor.35} parent=31 // pred_check_branch
        %1661 = sbr.rel (%p1659) target = $region44
      $region43: #{resnet_feature_extractor.35} parent=31 // pred_region
        %s1662 = smul.u32 64, %s19
      $region44: #{resnet_feature_extractor.35} parent=31 // pred_fallthru
        _
    $region32: #{resnet_feature_extractor.35} parent=5 // pred_fallthru
      _
    %p1663 = scmp.le.s32.totalorder 2, %s9
    // Predicated region
    $region45: #{resnet_feature_extractor.35} parent=5 // pred_check
      %p1664 = pneg %p1663
    $region46: #{resnet_feature_extractor.35} parent=5 // pred_check_branch
      %1666 = sbr.rel (%p1664) target = $region48
    $region47: #{resnet_feature_extractor.35} parent=5 // pred_region
      %s1667 = ssub.s32 %s9, 2
      // Predicated region
      $region49: #{resnet_feature_extractor.35} parent=47 // pred_check
        %p1668 = pneg %p141
      $region50: #{resnet_feature_extractor.35} parent=47 // pred_check_branch
        %1670 = sbr.rel (%p1668) target = $region52
      $region51: #{resnet_feature_extractor.35} parent=47 // pred_region
        %s1671 = smul.u32 64, %s22
        %p1672 = scmp.lt.s32.totalorder %s1671, 127
        %s1673 = scalar_select %p1672, %s1671, 127
        %p1674 = scmp.lt.s32.totalorder %s23, 0
        %s1675 = scalar_select %p1674, %s23, 0
        %s1676 = sadd.s32 %s1675, %s1673
        %s1677 = smul.addr %s1676, 4
        %s1678 = scalar_lea.vmem %s3, %s1677
      $region52: #{resnet_feature_extractor.35} parent=47 // pred_fallthru
        _
    $region48: #{resnet_feature_extractor.35} parent=5 // pred_fallthru
      _
  $region6: #{resnet_feature_extractor.35} parent=0 // loop_footer
    %s13 = sadd.s32 1, %s9
  $region7: #{resnet_feature_extractor.35} parent=0 // loop_footer_branch
    %8 = sbr.rel target = $region3
  $region8: #{resnet_feature_extractor.35} parent=0 // loop_exit
    _

// kernel: resnet_feature_extractor.37
$region0: #{resnet_feature_extractor.37}
  #allocation0 [shape = 'u32[]', space=smem, size = 0x4, offset = 0x4, fixed_abs, tag = 'smem constant byte address 0x4 - core index']
  #allocation1 [shape = 'u32[144,128]{1,0:T(1,128)}', space=vmem, size = 0x12000, scoped, tag = 'internal scratch']
  %s0 = inlined_call_operand.vmem [shape: bf16[32,2,8,8], index: 0, kind: input, shape index: {}]
  %s1 = inlined_call_operand.vmem [shape: bf16[32,8,4], index: 1, kind: output, shape index: {}]
  %s2 = sld [smem:[#allocation0]]
  $region14: #{resnet_feature_extractor.37} parent=0
    _
  %s4 = ssub.s32 1, %s2
  %s5 = scalar_select 0, %s4, %s2
  // Predicated region
  $region2: #{resnet_feature_extractor.37} parent=0 // pred_check
    _
  $region3: #{resnet_feature_extractor.37} parent=0 // pred_check_branch
    %7 = sbr.rel (0) target = $region5
  $region4: #{resnet_feature_extractor.37} parent=0 // pred_region
    _
  $region5: #{resnet_feature_extractor.37} parent=0 // pred_fallthru
    _
  %v8 = vld [vmem:[%s0] sm:$0xf]
  %v9 = vld [vmem:[%s0 + $0x4] sm:$0xf]
  %v10 = vld [vmem:[%s0 + $0x8] sm:$0xf]
  %v11 = vld [vmem:[%s0 + $0xc] sm:$0xf]
  %v12 = vld [vmem:[%s0 + $0x10] sm:$0xf]
  %v13 = vld [vmem:[%s0 + $0x14] sm:$0xf]
  %v14 = vld [vmem:[%s0 + $0x18] sm:$0xf]
  %v15 = vld [vmem:[%s0 + $0x1c] sm:$0xf]
  %v16 = vld [vmem:[%s0 + $0x20] sm:$0xf]
  %v17 = vld [vmem:[%s0 + $0x24] sm:$0xf]
  %v18 = vld [vmem:[%s0 + $0x28] sm:$0xf]
  %v19 = vld [vmem:[%s0 + $0x2c] sm:$0xf]
  %v20 = vld [vmem:[%s0 + $0x30] sm:$0xf]
  %v21 = vld [vmem:[%s0 + $0x34] sm:$0xf]
  %v22 = vld [vmem:[%s0 + $0x38] sm:$0xf]
  %v23 = vld [vmem:[%s0 + $0x3c] sm:$0xf]
  %v24 = vld [vmem:[%s0 + $0x40] sm:$0xf]
  %v25 = vld [vmem:[%s0 + $0x44] sm:$0xf]
  %v26 = vld [vmem:[%s0 + $0x48] sm:$0xf]
  %v27 = vld [vmem:[%s0 + $0x4c] sm:$0xf]
  %v28 = vld [vmem:[%s0 + $0x50] sm:$0xf]
  %v29 = vld [vmem:[%s0 + $0x54] sm:$0xf]
  %v30 = vld [vmem:[%s0 + $0x58] sm:$0xf]
  %v31 = vld [vmem:[%s0 + $0x5c] sm:$0xf]
  %v32 = vld [vmem:[%s0 + $0x60] sm:$0xf]
  %v33 = vld [vmem:[%s0 + $0x64] sm:$0xf]
  %v34 = vld [vmem:[%s0 + $0x68] sm:$0xf]
  %v35 = vld [vmem:[%s0 + $0x6c] sm:$0xf]
  %v36 = vld [vmem:[%s0 + $0x70] sm:$0xf]
  %v37 = vld [vmem:[%s0 + $0x74] sm:$0xf]
  %v38 = vld [vmem:[%s0 + $0x78] sm:$0xf]
  %v39 = vld [vmem:[%s0 + $0x7c] sm:$0xf]
  %v40 = vld [vmem:[%s0 + $0x80] sm:$0xf]
  %v41 = vld [vmem:[%s0 + $0x84] sm:$0xf]
  %v42 = vld [vmem:[%s0 + $0x88] sm:$0xf]
  %v43 = vld [vmem:[%s0 + $0x8c] sm:$0xf]
  %v44 = vld [vmem:[%s0 + $0x90] sm:$0xf]
  %v45 = vld [vmem:[%s0 + $0x94] sm:$0xf]
  %v46 = vld [vmem:[%s0 + $0x98] sm:$0xf]
  %v47 = vld [vmem:[%s0 + $0x9c] sm:$0xf]
  %v48 = vld [vmem:[%s0 + $0xa0] sm:$0xf]
  %v49 = vld [vmem:[%s0 + $0xa4] sm:$0xf]
  %v50 = vld [vmem:[%s0 + $0xa8] sm:$0xf]
  %v51 = vld [vmem:[%s0 + $0xac] sm:$0xf]
  %v52 = vld [vmem:[%s0 + $0xb0] sm:$0xf]
  %v53 = vld [vmem:[%s0 + $0xb4] sm:$0xf]
  %v54 = vld [vmem:[%s0 + $0xb8] sm:$0xf]
  %v55 = vld [vmem:[%s0 + $0xbc] sm:$0xf]
  %v56 = vld [vmem:[%s0 + $0xc0] sm:$0xf]
  %v57 = vld [vmem:[%s0 + $0xc4] sm:$0xf]
  %v58 = vld [vmem:[%s0 + $0xc8] sm:$0xf]
  %v59 = vld [vmem:[%s0 + $0xcc] sm:$0xf]
  %v60 = vld [vmem:[%s0 + $0xd0] sm:$0xf]
  %v61 = vld [vmem:[%s0 + $0xd4] sm:$0xf]
  %v62 = vld [vmem:[%s0 + $0xd8] sm:$0xf]
  %v63 = vld [vmem:[%s0 + $0xdc] sm:$0xf]
  %v64 = vld [vmem:[%s0 + $0xe0] sm:$0xf]
  %v65 = vld [vmem:[%s0 + $0xe4] sm:$0xf]
  %v66 = vld [vmem:[%s0 + $0xe8] sm:$0xf]
  %v67 = vld [vmem:[%s0 + $0xec] sm:$0xf]
  %v68 = vld [vmem:[%s0 + $0xf0] sm:$0xf]
  %v69 = vld [vmem:[%s0 + $0xf4] sm:$0xf]
  %v70 = vld [vmem:[%s0 + $0xf8] sm:$0xf]
  %v71 = vld [vmem:[%s0 + $0xfc] sm:$0xf]
  %v72 = vmax.bf16 %v8, %v9
  %v73 = vmax.bf16 %v10, %v11
  %v74 = vmax.bf16 %v12, %v13
  %v75 = vmax.bf16 %v14, %v15
  %v76 = vmax.bf16 %v16, %v17
  %v77 = vmax.bf16 %v18, %v19
  %v78 = vmax.bf16 %v20, %v21
  %v79 = vmax.bf16 %v22, %v23
  %v80 = vmax.bf16 %v24, %v25
  %v81 = vmax.bf16 %v26, %v27
  %v82 = vmax.bf16 %v28, %v29
  %v83 = vmax.bf16 %v30, %v31
  %v84 = vmax.bf16 %v32, %v33
  %v85 = vmax.bf16 %v34, %v35
  %v86 = vmax.bf16 %v36, %v37
  %v87 = vmax.bf16 %v38, %v39
  %v88 = vmax.bf16 %v40, %v41
  %v89 = vmax.bf16 %v42, %v43
  %v90 = vmax.bf16 %v44, %v45
  %v91 = vmax.bf16 %v46, %v47
  %v92 = vmax.bf16 %v48, %v49
  %v93 = vmax.bf16 %v50, %v51
  %v94 = vmax.bf16 %v52, %v53
  %v95 = vmax.bf16 %v54, %v55
  %v96 = vmax.bf16 %v56, %v57
  %v97 = vmax.bf16 %v58, %v59
  %v98 = vmax.bf16 %v60, %v61
  %v99 = vmax.bf16 %v62, %v63
  %v100 = vmax.bf16 %v64, %v65
  %v101 = vmax.bf16 %v66, %v67
  %v102 = vmax.bf16 %v68, %v69
  %v103 = vmax.bf16 %v70, %v71
  %136 = vrot.lane.b32.xlu0 %v72, 124
  %v137 = vpop.permute.xlu0 %136
  %138 = vrot.lane.b32.xlu0 %v73, 124
  %v139 = vpop.permute.xlu0 %138
  %140 = vrot.lane.b32.xlu0 %v74, 124
  %v141 = vpop.permute.xlu0 %140
  %142 = vrot.lane.b32.xlu0 %v75, 124
  %v143 = vpop.permute.xlu0 %142
  %144 = vrot.lane.b32.xlu0 %v76, 124
  %v145 = vpop.permute.xlu0 %144
  %146 = vrot.lane.b32.xlu0 %v77, 124
  %v147 = vpop.permute.xlu0 %146
  %148 = vrot.lane.b32.xlu0 %v78, 124
  %v149 = vpop.permute.xlu0 %148
  %150 = vrot.lane.b32.xlu0 %v79, 124
  %v151 = vpop.permute.xlu0 %150
  %152 = vrot.lane.b32.xlu0 %v80, 124
  %v153 = vpop.permute.xlu0 %152
  %154 = vrot.lane.b32.xlu0 %v81, 124
  %v155 = vpop.permute.xlu0 %154
  %156 = vrot.lane.b32.xlu0 %v82, 124
  %v157 = vpop.permute.xlu0 %156
  %158 = vrot.lane.b32.xlu0 %v83, 124
  %v159 = vpop.permute.xlu0 %158
  %160 = vrot.lane.b32.xlu0 %v84, 124
  %v161 = vpop.permute.xlu0 %160
  %162 = vrot.lane.b32.xlu0 %v85, 124
  %v163 = vpop.permute.xlu0 %162
  %164 = vrot.lane.b32.xlu0 %v86, 124
  %v165 = vpop.permute.xlu0 %164
  %166 = vrot.lane.b32.xlu0 %v87, 124
  %v167 = vpop.permute.xlu0 %166
  %168 = vrot.lane.b32.xlu0 %v88, 124
  %v169 = vpop.permute.xlu0 %168
  %170 = vrot.lane.b32.xlu0 %v89, 124
  %v171 = vpop.permute.xlu0 %170
  %172 = vrot.lane.b32.xlu0 %v90, 124
  %v173 = vpop.permute.xlu0 %172
  %174 = vrot.lane.b32.xlu0 %v91, 124
  %v175 = vpop.permute.xlu0 %174
  %176 = vrot.lane.b32.xlu0 %v92, 124
  %v177 = vpop.permute.xlu0 %176
  %178 = vrot.lane.b32.xlu0 %v93, 124
  %v179 = vpop.permute.xlu0 %178
  %180 = vrot.lane.b32.xlu0 %v94, 124
  %v181 = vpop.permute.xlu0 %180
  %182 = vrot.lane.b32.xlu0 %v95, 124
  %v183 = vpop.permute.xlu0 %182
  %184 = vrot.lane.b32.xlu0 %v96, 124
  %v185 = vpop.permute.xlu0 %184
  %186 = vrot.lane.b32.xlu0 %v97, 124
  %v187 = vpop.permute.xlu0 %186
  %188 = vrot.lane.b32.xlu0 %v98, 124
  %v189 = vpop.permute.xlu0 %188
  %190 = vrot.lane.b32.xlu0 %v99, 124
  %v191 = vpop.permute.xlu0 %190
  %192 = vrot.lane.b32.xlu0 %v100, 124
  %v193 = vpop.permute.xlu0 %192
  %194 = vrot.lane.b32.xlu0 %v101, 124
  %v195 = vpop.permute.xlu0 %194
  %196 = vrot.lane.b32.xlu0 %v102, 124
  %v197 = vpop.permute.xlu0 %196
  %198 = vrot.lane.b32.xlu0 %v103, 124
  %v199 = vpop.permute.xlu0 %198
  %v232 = vmax.bf16 %v72, %v137
  %v233 = vmax.bf16 %v73, %v139
  %v234 = vmax.bf16 %v74, %v141
  %v235 = vmax.bf16 %v75, %v143
  %v236 = vmax.bf16 %v76, %v145
  %v237 = vmax.bf16 %v77, %v147
  %v238 = vmax.bf16 %v78, %v149
  %v239 = vmax.bf16 %v79, %v151
  %v240 = vmax.bf16 %v80, %v153
  %v241 = vmax.bf16 %v81, %v155
  %v242 = vmax.bf16 %v82, %v157
  %v243 = vmax.bf16 %v83, %v159
  %v244 = vmax.bf16 %v84, %v161
  %v245 = vmax.bf16 %v85, %v163
  %v246 = vmax.bf16 %v86, %v165
  %v247 = vmax.bf16 %v87, %v167
  %v248 = vmax.bf16 %v88, %v169
  %v249 = vmax.bf16 %v89, %v171
  %v250 = vmax.bf16 %v90, %v173
  %v251 = vmax.bf16 %v91, %v175
  %v252 = vmax.bf16 %v92, %v177
  %v253 = vmax.bf16 %v93, %v179
  %v254 = vmax.bf16 %v94, %v181
  %v255 = vmax.bf16 %v95, %v183
  %v256 = vmax.bf16 %v96, %v185
  %v257 = vmax.bf16 %v97, %v187
  %v258 = vmax.bf16 %v98, %v189
  %v259 = vmax.bf16 %v99, %v191
  %v260 = vmax.bf16 %v100, %v193
  %v261 = vmax.bf16 %v101, %v195
  %v262 = vmax.bf16 %v102, %v197
  %v263 = vmax.bf16 %v103, %v199
  %vm264 = vcmask 27648
  %265 = vst.msk [vmem:[%s1] sm:$0xf] %vm264, %v232
  %266 = vst.msk [vmem:[%s1 + $0x4] sm:$0xf] %vm264, %v233
  %267 = vst.msk [vmem:[%s1 + $0x8] sm:$0xf] %vm264, %v234
  %268 = vst.msk [vmem:[%s1 + $0xc] sm:$0xf] %vm264, %v235
  %269 = vst.msk [vmem:[%s1 + $0x10] sm:$0xf] %vm264, %v236
  %270 = vst.msk [vmem:[%s1 + $0x14] sm:$0xf] %vm264, %v237
  %271 = vst.msk [vmem:[%s1 + $0x18] sm:$0xf] %vm264, %v238
  %272 = vst.msk [vmem:[%s1 + $0x1c] sm:$0xf] %vm264, %v239
  %273 = vst.msk [vmem:[%s1 + $0x20] sm:$0xf] %vm264, %v240
  %274 = vst.msk [vmem:[%s1 + $0x24] sm:$0xf] %vm264, %v241
  %275 = vst.msk [vmem:[%s1 + $0x28] sm:$0xf] %vm264, %v242
  %276 = vst.msk [vmem:[%s1 + $0x2c] sm:$0xf] %vm264, %v243
  %277 = vst.msk [vmem:[%s1 + $0x30] sm:$0xf] %vm264, %v244
  %278 = vst.msk [vmem:[%s1 + $0x34] sm:$0xf] %vm264, %v245
  %279 = vst.msk [vmem:[%s1 + $0x38] sm:$0xf] %vm264, %v246
  %280 = vst.msk [vmem:[%s1 + $0x3c] sm:$0xf] %vm264, %v247
  %281 = vst.msk [vmem:[%s1 + $0x40] sm:$0xf] %vm264, %v248
  %282 = vst.msk [vmem:[%s1 + $0x44] sm:$0xf] %vm264, %v249
  %283 = vst.msk [vmem:[%s1 + $0x48] sm:$0xf] %vm264, %v250
  %284 = vst.msk [vmem:[%s1 + $0x4c] sm:$0xf] %vm264, %v251
  %285 = vst.msk [vmem:[%s1 + $0x50] sm:$0xf] %vm264, %v252
  %286 = vst.msk [vmem:[%s1 + $0x54] sm:$0xf] %vm264, %v253
  %287 = vst.msk [vmem:[%s1 + $0x58] sm:$0xf] %vm264, %v254
  %288 = vst.msk [vmem:[%s1 + $0x5c] sm:$0xf] %vm264, %v255
  %289 = vst.msk [vmem:[%s1 + $0x60] sm:$0xf] %vm264, %v256
  %290 = vst.msk [vmem:[%s1 + $0x64] sm:$0xf] %vm264, %v257
  %291 = vst.msk [vmem:[%s1 + $0x68] sm:$0xf] %vm264, %v258
  %292 = vst.msk [vmem:[%s1 + $0x6c] sm:$0xf] %vm264, %v259
  %293 = vst.msk [vmem:[%s1 + $0x70] sm:$0xf] %vm264, %v260
  %294 = vst.msk [vmem:[%s1 + $0x74] sm:$0xf] %vm264, %v261
  %295 = vst.msk [vmem:[%s1 + $0x78] sm:$0xf] %vm264, %v262
  %296 = vst.msk [vmem:[%s1 + $0x7c] sm:$0xf] %vm264, %v263
  // Predicated region
  $region6: #{resnet_feature_extractor.37} parent=0 // pred_check
    _
  $region7: #{resnet_feature_extractor.37} parent=0 // pred_check_branch
    %298 = sbr.rel (0) target = $region9
  $region8: #{resnet_feature_extractor.37} parent=0 // pred_region
    _
  $region9: #{resnet_feature_extractor.37} parent=0 // pred_fallthru
    _
  // Predicated region
  $region10: #{resnet_feature_extractor.37} parent=0 // pred_check
    _
  $region11: #{resnet_feature_extractor.37} parent=0 // pred_check_branch
    %300 = sbr.rel (0) target = $region13
  $region12: #{resnet_feature_extractor.37} parent=0 // pred_region
    _
  $region13: #{resnet_feature_extractor.37} parent=0 // pred_fallthru
    _

// kernel: resnet_feature_extractor.39
$region0: #{resnet_feature_extractor.39}
  #allocation0 [shape = 'u32[]', space=smem, size = 0x4, offset = 0x4, fixed_abs, tag = 'smem constant byte address 0x4 - core index']
  #allocation1 [shape = 'u32[144,128]{1,0:T(1,128)}', space=vmem, size = 0x12000, scoped, tag = 'internal scratch']
  #allocation2 [shape = 'f32[256,128]{1,0:T(8,128)}', space=vmem, size = 0x20000, scoped, tag = 'scratch operand']
  %s0 = inlined_call_operand.vmem [shape: bf16[256,128], index: 0, kind: input, shape index: {}]
  %s1 = inlined_call_operand.vmem [shape: bf16[128,128], index: 1, kind: input, shape index: {}]
  %s2 = inlined_call_operand.vmem [shape: f32[1,128], index: 2, kind: input, shape index: {}]
  %s3 = inlined_call_operand.vmem [shape: bf16[256,128], index: 3, kind: output, shape index: {}]
  %s4 = sld [smem:[#allocation0]]
  $region30: #{resnet_feature_extractor.39} parent=0
    _
  %s6 = ssub.s32 1, %s4
  %s7 = scalar_select 0, %s6, %s4
  // Predicated region
  $region2: #{resnet_feature_extractor.39} parent=0 // pred_check
    _
  $region3: #{resnet_feature_extractor.39} parent=0 // pred_check_branch
    %9 = sbr.rel (0) target = $region5
  $region4: #{resnet_feature_extractor.39} parent=0 // pred_region
    _
  $region5: #{resnet_feature_extractor.39} parent=0 // pred_fallthru
    _
  // Predicated region
  $region6: #{resnet_feature_extractor.39} parent=0 // pred_check
    _
  $region7: #{resnet_feature_extractor.39} parent=0 // pred_check_branch
    %11 = sbr.rel (0) target = $region9
  $region8: #{resnet_feature_extractor.39} parent=0 // pred_region
    _
  $region9: #{resnet_feature_extractor.39} parent=0 // pred_fallthru
    _
  // Predicated region
  $region10: #{resnet_feature_extractor.39} parent=0 // pred_check
    _
  $region11: #{resnet_feature_extractor.39} parent=0 // pred_check_branch
    %13 = sbr.rel (0) target = $region13
  $region12: #{resnet_feature_extractor.39} parent=0 // pred_region
    _
  $region13: #{resnet_feature_extractor.39} parent=0 // pred_fallthru
    _
  %p15 = scmp.eq.s32.totalorder 0, 0
  // Predicated region
  $region14: #{resnet_feature_extractor.39} parent=0 // pred_check
    %p16 = pneg %p15
  $region15: #{resnet_feature_extractor.39} parent=0 // pred_check_branch
    %18 = sbr.rel (%p16) target = $region17
  $region16: #{resnet_feature_extractor.39} parent=0 // pred_region
    %19 = vst [vmem:[#allocation2] sm:$0xff] 0.0
    %20 = vst [vmem:[#allocation2 + $0x8] sm:$0xff] 0.0
    %21 = vst [vmem:[#allocation2 + $0x10] sm:$0xff] 0.0
    %22 = vst [vmem:[#allocation2 + $0x18] sm:$0xff] 0.0
    %23 = vst [vmem:[#allocation2 + $0x20] sm:$0xff] 0.0
    %24 = vst [vmem:[#allocation2 + $0x28] sm:$0xff] 0.0
    %25 = vst [vmem:[#allocation2 + $0x30] sm:$0xff] 0.0
    %26 = vst [vmem:[#allocation2 + $0x38] sm:$0xff] 0.0
    %27 = vst [vmem:[#allocation2 + $0x40] sm:$0xff] 0.0
    %28 = vst [vmem:[#allocation2 + $0x48] sm:$0xff] 0.0
    %29 = vst [vmem:[#allocation2 + $0x50] sm:$0xff] 0.0
    %30 = vst [vmem:[#allocation2 + $0x58] sm:$0xff] 0.0
    %31 = vst [vmem:[#allocation2 + $0x60] sm:$0xff] 0.0
    %32 = vst [vmem:[#allocation2 + $0x68] sm:$0xff] 0.0
    %33 = vst [vmem:[#allocation2 + $0x70] sm:$0xff] 0.0
    %34 = vst [vmem:[#allocation2 + $0x78] sm:$0xff] 0.0
    %35 = vst [vmem:[#allocation2 + $0x80] sm:$0xff] 0.0
    %36 = vst [vmem:[#allocation2 + $0x88] sm:$0xff] 0.0
    %37 = vst [vmem:[#allocation2 + $0x90] sm:$0xff] 0.0
    %38 = vst [vmem:[#allocation2 + $0x98] sm:$0xff] 0.0
    %39 = vst [vmem:[#allocation2 + $0xa0] sm:$0xff] 0.0
    %40 = vst [vmem:[#allocation2 + $0xa8] sm:$0xff] 0.0
    %41 = vst [vmem:[#allocation2 + $0xb0] sm:$0xff] 0.0
    %42 = vst [vmem:[#allocation2 + $0xb8] sm:$0xff] 0.0
    %43 = vst [vmem:[#allocation2 + $0xc0] sm:$0xff] 0.0
    %44 = vst [vmem:[#allocation2 + $0xc8] sm:$0xff] 0.0
    %45 = vst [vmem:[#allocation2 + $0xd0] sm:$0xff] 0.0
    %46 = vst [vmem:[#allocation2 + $0xd8] sm:$0xff] 0.0
    %47 = vst [vmem:[#allocation2 + $0xe0] sm:$0xff] 0.0
    %48 = vst [vmem:[#allocation2 + $0xe8] sm:$0xff] 0.0
    %49 = vst [vmem:[#allocation2 + $0xf0] sm:$0xff] 0.0
    %50 = vst [vmem:[#allocation2 + $0xf8] sm:$0xff] 0.0
  $region17: #{resnet_feature_extractor.39} parent=0 // pred_fallthru
    _
  %v51 = vld [vmem:[#allocation2] sm:$0xff]
  %v52 = vld [vmem:[#allocation2 + $0x8] sm:$0xff]
  %v53 = vld [vmem:[#allocation2 + $0x10] sm:$0xff]
  %v54 = vld [vmem:[#allocation2 + $0x18] sm:$0xff]
  %v55 = vld [vmem:[#allocation2 + $0x20] sm:$0xff]
  %v56 = vld [vmem:[#allocation2 + $0x28] sm:$0xff]
  %v57 = vld [vmem:[#allocation2 + $0x30] sm:$0xff]
  %v58 = vld [vmem:[#allocation2 + $0x38] sm:$0xff]
  %v59 = vld [vmem:[#allocation2 + $0x40] sm:$0xff]
  %v60 = vld [vmem:[#allocation2 + $0x48] sm:$0xff]
  %v61 = vld [vmem:[#allocation2 + $0x50] sm:$0xff]
  %v62 = vld [vmem:[#allocation2 + $0x58] sm:$0xff]
  %v63 = vld [vmem:[#allocation2 + $0x60] sm:$0xff]
  %v64 = vld [vmem:[#allocation2 + $0x68] sm:$0xff]
  %v65 = vld [vmem:[#allocation2 + $0x70] sm:$0xff]
  %v66 = vld [vmem:[#allocation2 + $0x78] sm:$0xff]
  %v67 = vld [vmem:[#allocation2 + $0x80] sm:$0xff]
  %v68 = vld [vmem:[#allocation2 + $0x88] sm:$0xff]
  %v69 = vld [vmem:[#allocation2 + $0x90] sm:$0xff]
  %v70 = vld [vmem:[#allocation2 + $0x98] sm:$0xff]
  %v71 = vld [vmem:[#allocation2 + $0xa0] sm:$0xff]
  %v72 = vld [vmem:[#allocation2 + $0xa8] sm:$0xff]
  %v73 = vld [vmem:[#allocation2 + $0xb0] sm:$0xff]
  %v74 = vld [vmem:[#allocation2 + $0xb8] sm:$0xff]
  %v75 = vld [vmem:[#allocation2 + $0xc0] sm:$0xff]
  %v76 = vld [vmem:[#allocation2 + $0xc8] sm:$0xff]
  %v77 = vld [vmem:[#allocation2 + $0xd0] sm:$0xff]
  %v78 = vld [vmem:[#allocation2 + $0xd8] sm:$0xff]
  %v79 = vld [vmem:[#allocation2 + $0xe0] sm:$0xff]
  %v80 = vld [vmem:[#allocation2 + $0xe8] sm:$0xff]
  %v81 = vld [vmem:[#allocation2 + $0xf0] sm:$0xff]
  %v82 = vld [vmem:[#allocation2 + $0xf8] sm:$0xff]
  %v83 = vld [vmem:[%s0] sm:$0xf]
  %v84 = vld [vmem:[%s0 + $0x4] sm:$0xf]
  %v85 = vld [vmem:[%s0 + $0x8] sm:$0xf]
  %v86 = vld [vmem:[%s0 + $0xc] sm:$0xf]
  %v87 = vld [vmem:[%s0 + $0x10] sm:$0xf]
  %v88 = vld [vmem:[%s0 + $0x14] sm:$0xf]
  %v89 = vld [vmem:[%s0 + $0x18] sm:$0xf]
  %v90 = vld [vmem:[%s0 + $0x1c] sm:$0xf]
  %v91 = vld [vmem:[%s0 + $0x20] sm:$0xf]
  %v92 = vld [vmem:[%s0 + $0x24] sm:$0xf]
  %v93 = vld [vmem:[%s0 + $0x28] sm:$0xf]
  %v94 = vld [vmem:[%s0 + $0x2c] sm:$0xf]
  %v95 = vld [vmem:[%s0 + $0x30] sm:$0xf]
  %v96 = vld [vmem:[%s0 + $0x34] sm:$0xf]
  %v97 = vld [vmem:[%s0 + $0x38] sm:$0xf]
  %v98 = vld [vmem:[%s0 + $0x3c] sm:$0xf]
  %v99 = vld [vmem:[%s0 + $0x40] sm:$0xf]
  %v100 = vld [vmem:[%s0 + $0x44] sm:$0xf]
  %v101 = vld [vmem:[%s0 + $0x48] sm:$0xf]
  %v102 = vld [vmem:[%s0 + $0x4c] sm:$0xf]
  %v103 = vld [vmem:[%s0 + $0x50] sm:$0xf]
  %v104 = vld [vmem:[%s0 + $0x54] sm:$0xf]
  %v105 = vld [vmem:[%s0 + $0x58] sm:$0xf]
  %v106 = vld [vmem:[%s0 + $0x5c] sm:$0xf]
  %v107 = vld [vmem:[%s0 + $0x60] sm:$0xf]
  %v108 = vld [vmem:[%s0 + $0x64] sm:$0xf]
  %v109 = vld [vmem:[%s0 + $0x68] sm:$0xf]
  %v110 = vld [vmem:[%s0 + $0x6c] sm:$0xf]
  %v111 = vld [vmem:[%s0 + $0x70] sm:$0xf]
  %v112 = vld [vmem:[%s0 + $0x74] sm:$0xf]
  %v113 = vld [vmem:[%s0 + $0x78] sm:$0xf]
  %v114 = vld [vmem:[%s0 + $0x7c] sm:$0xf]
  %v115 = vld [vmem:[%s1] sm:$0xf]
  %v116 = vld [vmem:[%s1 + $0x4] sm:$0xf]
  %v117 = vld [vmem:[%s1 + $0x8] sm:$0xf]
  %v118 = vld [vmem:[%s1 + $0xc] sm:$0xf]
  %v119 = vld [vmem:[%s1 + $0x10] sm:$0xf]
  %v120 = vld [vmem:[%s1 + $0x14] sm:$0xf]
  %v121 = vld [vmem:[%s1 + $0x18] sm:$0xf]
  %v122 = vld [vmem:[%s1 + $0x1c] sm:$0xf]
  %v123 = vld [vmem:[%s1 + $0x20] sm:$0xf]
  %v124 = vld [vmem:[%s1 + $0x24] sm:$0xf]
  %v125 = vld [vmem:[%s1 + $0x28] sm:$0xf]
  %v126 = vld [vmem:[%s1 + $0x2c] sm:$0xf]
  %v127 = vld [vmem:[%s1 + $0x30] sm:$0xf]
  %v128 = vld [vmem:[%s1 + $0x34] sm:$0xf]
  %v129 = vld [vmem:[%s1 + $0x38] sm:$0xf]
  %v130 = vld [vmem:[%s1 + $0x3c] sm:$0xf]
  %v163 = vunpack.c.l.b16 %v83
  %v164 = vunpack.c.l.b16 %v84
  %v165 = vunpack.c.l.b16 %v85
  %v166 = vunpack.c.l.b16 %v86
  %v167 = vunpack.c.l.b16 %v87
  %v168 = vunpack.c.l.b16 %v88
  %v169 = vunpack.c.l.b16 %v89
  %v170 = vunpack.c.l.b16 %v90
  %v171 = vunpack.c.l.b16 %v91
  %v172 = vunpack.c.l.b16 %v92
  %v173 = vunpack.c.l.b16 %v93
  %v174 = vunpack.c.l.b16 %v94
  %v175 = vunpack.c.l.b16 %v95
  %v176 = vunpack.c.l.b16 %v96
  %v177 = vunpack.c.l.b16 %v97
  %v178 = vunpack.c.l.b16 %v98
  %v179 = vunpack.c.l.b16 %v99
  %v180 = vunpack.c.l.b16 %v100
  %v181 = vunpack.c.l.b16 %v101
  %v182 = vunpack.c.l.b16 %v102
  %v183 = vunpack.c.l.b16 %v103
  %v184 = vunpack.c.l.b16 %v104
  %v185 = vunpack.c.l.b16 %v105
  %v186 = vunpack.c.l.b16 %v106
  %v187 = vunpack.c.l.b16 %v107
  %v188 = vunpack.c.l.b16 %v108
  %v189 = vunpack.c.l.b16 %v109
  %v190 = vunpack.c.l.b16 %v110
  %v191 = vunpack.c.l.b16 %v111
  %v192 = vunpack.c.l.b16 %v112
  %v193 = vunpack.c.l.b16 %v113
  %v194 = vunpack.c.l.b16 %v114
  %v195 = vpack.c.b16 %v164, %v163
  %v196 = vpack.c.b16 %v166, %v165
  %v197 = vpack.c.b16 %v168, %v167
  %v198 = vpack.c.b16 %v170, %v169
  %v199 = vpack.c.b16 %v172, %v171
  %v200 = vpack.c.b16 %v174, %v173
  %v201 = vpack.c.b16 %v176, %v175
  %v202 = vpack.c.b16 %v178, %v177
  %v203 = vpack.c.b16 %v180, %v179
  %v204 = vpack.c.b16 %v182, %v181
  %v205 = vpack.c.b16 %v184, %v183
  %v206 = vpack.c.b16 %v186, %v185
  %v207 = vpack.c.b16 %v188, %v187
  %v208 = vpack.c.b16 %v190, %v189
  %v209 = vpack.c.b16 %v192, %v191
  %v210 = vpack.c.b16 %v194, %v193
  %v243 = vunpack.c.l.b16 %v115
  %v244 = vunpack.c.l.b16 %v116
  %v245 = vunpack.c.l.b16 %v117
  %v246 = vunpack.c.l.b16 %v118
  %v247 = vunpack.c.l.b16 %v119
  %v248 = vunpack.c.l.b16 %v120
  %v249 = vunpack.c.l.b16 %v121
  %v250 = vunpack.c.l.b16 %v122
  %v251 = vunpack.c.l.b16 %v123
  %v252 = vunpack.c.l.b16 %v124
  %v253 = vunpack.c.l.b16 %v125
  %v254 = vunpack.c.l.b16 %v126
  %v255 = vunpack.c.l.b16 %v127
  %v256 = vunpack.c.l.b16 %v128
  %v257 = vunpack.c.l.b16 %v129
  %v258 = vunpack.c.l.b16 %v130
  %v259 = vpack.c.b16 %v244, %v243
  %v260 = vpack.c.b16 %v246, %v245
  %v261 = vpack.c.b16 %v248, %v247
  %v262 = vpack.c.b16 %v250, %v249
  %v263 = vpack.c.b16 %v252, %v251
  %v264 = vpack.c.b16 %v254, %v253
  %v265 = vpack.c.b16 %v256, %v255
  %v266 = vpack.c.b16 %v258, %v257
  %275 = vmatprep.subr.bf16.mxu0 0
  %276 = vmatpush1.bf16.msra.mxu0 %v259
  %277 = vmatprep.subr.bf16.mxu0 0
  %278 = vmatpush1.bf16.msra.mxu0 %v260
  %279 = vmatprep.subr.bf16.mxu0 0
  %280 = vmatpush1.bf16.msra.mxu0 %v261
  %281 = vmatprep.subr.bf16.mxu0 0
  %282 = vmatpush1.bf16.msra.mxu0 %v262
  %283 = vmatprep.subr.bf16.mxu0 0
  %284 = vmatpush1.bf16.msra.mxu0 %v263
  %285 = vmatprep.subr.bf16.mxu0 0
  %286 = vmatpush1.bf16.msra.mxu0 %v264
  %287 = vmatprep.subr.bf16.mxu0 0
  %288 = vmatpush1.bf16.msra.mxu0 %v265
  %289 = vmatprep.subr.bf16.mxu0 0
  %290 = vmatpush1.bf16.msra.mxu0 %v266
  %291 = vmatprep.subr.bf16.mxu0 0
  %292 = vmatpush1.bf16.msra.mxu0 0
  %293 = vmatprep.subr.bf16.mxu0 0
  %294 = vmatpush1.bf16.msra.mxu0 0
  %295 = vmatprep.subr.bf16.mxu0 0
  %296 = vmatpush1.bf16.msra.mxu0 0
  %297 = vmatprep.subr.bf16.mxu0 0
  %298 = vmatpush1.bf16.msra.mxu0 0
  %299 = vmatprep.subr.bf16.mxu0 0
  %300 = vmatpush1.bf16.msra.mxu0 0
  %301 = vmatprep.subr.bf16.mxu0 0
  %302 = vmatpush1.bf16.msra.mxu0 0
  %303 = vmatprep.subr.bf16.mxu0 0
  %304 = vmatpush1.bf16.msra.mxu0 0
  %305 = vmatprep.subr.bf16.mxu0 0
  %306 = vmatpush1.bf16.msra.mxu0 0
  %307 = vmatprep.mubr.bf16.mxu0 0
  %308 = vmatmul.mubr.bf16.gmra.mrb[0].mxu0 %v195
  %v309 = vpop.f32.mrb[0].mxu0
  %v310 = vadd.f32 0.0, %v309
  %v311 = vpop.f32.mrb[0].mxu0
  %v312 = vpop.f32.mrb[0].mxu0
  %v313 = vadd.f32 0.0, %v312
  %v314 = vpop.f32.mrb[0].mxu0
  %315 = vmatprep.mubr.bf16.mxu0 0
  %316 = vmatmul.mubr.bf16.gmra.mrb[0].mxu0 %v196
  %v317 = vpop.f32.mrb[0].mxu0
  %v318 = vadd.f32 0.0, %v317
  %v319 = vpop.f32.mrb[0].mxu0
  %v320 = vpop.f32.mrb[0].mxu0
  %v321 = vadd.f32 0.0, %v320
  %v322 = vpop.f32.mrb[0].mxu0
  %323 = vmatprep.mubr.bf16.mxu0 0
  %324 = vmatmul.mubr.bf16.gmra.mrb[0].mxu0 %v197
  %v325 = vpop.f32.mrb[0].mxu0
  %v326 = vadd.f32 0.0, %v325
  %v327 = vpop.f32.mrb[0].mxu0
  %v328 = vpop.f32.mrb[0].mxu0
  %v329 = vadd.f32 0.0, %v328
  %v330 = vpop.f32.mrb[0].mxu0
  %331 = vmatprep.mubr.bf16.mxu0 0
  %332 = vmatmul.mubr.bf16.gmra.mrb[0].mxu0 %v198
  %v333 = vpop.f32.mrb[0].mxu0
  %v334 = vadd.f32 0.0, %v333
  %v335 = vpop.f32.mrb[0].mxu0
  %v336 = vpop.f32.mrb[0].mxu0
  %v337 = vadd.f32 0.0, %v336
  %v338 = vpop.f32.mrb[0].mxu0
  %339 = vmatprep.mubr.bf16.mxu0 0
  %340 = vmatmul.mubr.bf16.gmra.mrb[0].mxu0 %v199
  %v341 = vpop.f32.mrb[0].mxu0
  %v342 = vadd.f32 0.0, %v341
  %v343 = vpop.f32.mrb[0].mxu0
  %v344 = vpop.f32.mrb[0].mxu0
  %v345 = vadd.f32 0.0, %v344
  %v346 = vpop.f32.mrb[0].mxu0
  %347 = vmatprep.mubr.bf16.mxu0 0
  %348 = vmatmul.mubr.bf16.gmra.mrb[0].mxu0 %v200
  %v349 = vpop.f32.mrb[0].mxu0
  %v350 = vadd.f32 0.0, %v349
  %v351 = vpop.f32.mrb[0].mxu0
  %v352 = vpop.f32.mrb[0].mxu0
  %v353 = vadd.f32 0.0, %v352
  %v354 = vpop.f32.mrb[0].mxu0
  %355 = vmatprep.mubr.bf16.mxu0 0
  %356 = vmatmul.mubr.bf16.gmra.mrb[0].mxu0 %v201
  %v357 = vpop.f32.mrb[0].mxu0
  %v358 = vadd.f32 0.0, %v357
  %v359 = vpop.f32.mrb[0].mxu0
  %v360 = vpop.f32.mrb[0].mxu0
  %v361 = vadd.f32 0.0, %v360
  %v362 = vpop.f32.mrb[0].mxu0
  %363 = vmatprep.mubr.bf16.mxu0 0
  %364 = vmatmul.mubr.bf16.gmra.mrb[0].mxu0 %v202
  %v365 = vpop.f32.mrb[0].mxu0
  %v366 = vadd.f32 0.0, %v365
  %v367 = vpop.f32.mrb[0].mxu0
  %v368 = vpop.f32.mrb[0].mxu0
  %v369 = vadd.f32 0.0, %v368
  %v370 = vpop.f32.mrb[0].mxu0
  %371 = vmatprep.mubr.bf16.mxu0 0
  %372 = vmatmul.mubr.bf16.gmra.mrb[0].mxu0 %v203
  %v373 = vpop.f32.mrb[0].mxu0
  %v374 = vadd.f32 0.0, %v373
  %v375 = vpop.f32.mrb[0].mxu0
  %v376 = vpop.f32.mrb[0].mxu0
  %v377 = vadd.f32 0.0, %v376
  %v378 = vpop.f32.mrb[0].mxu0
  %379 = vmatprep.mubr.bf16.mxu0 0
  %380 = vmatmul.mubr.bf16.gmra.mrb[0].mxu0 %v204
  %v381 = vpop.f32.mrb[0].mxu0
  %v382 = vadd.f32 0.0, %v381
  %v383 = vpop.f32.mrb[0].mxu0
  %v384 = vpop.f32.mrb[0].mxu0
  %v385 = vadd.f32 0.0, %v384
  %v386 = vpop.f32.mrb[0].mxu0
  %387 = vmatprep.mubr.bf16.mxu0 0
  %388 = vmatmul.mubr.bf16.gmra.mrb[0].mxu0 %v205
  %v389 = vpop.f32.mrb[0].mxu0
  %v390 = vadd.f32 0.0, %v389
  %v391 = vpop.f32.mrb[0].mxu0
  %v392 = vpop.f32.mrb[0].mxu0
  %v393 = vadd.f32 0.0, %v392
  %v394 = vpop.f32.mrb[0].mxu0
  %395 = vmatprep.mubr.bf16.mxu0 0
  %396 = vmatmul.mubr.bf16.gmra.mrb[0].mxu0 %v206
  %v397 = vpop.f32.mrb[0].mxu0
  %v398 = vadd.f32 0.0, %v397
  %v399 = vpop.f32.mrb[0].mxu0
  %v400 = vpop.f32.mrb[0].mxu0
  %v401 = vadd.f32 0.0, %v400
  %v402 = vpop.f32.mrb[0].mxu0
  %403 = vmatprep.mubr.bf16.mxu0 0
  %404 = vmatmul.mubr.bf16.gmra.mrb[0].mxu0 %v207
  %v405 = vpop.f32.mrb[0].mxu0
  %v406 = vadd.f32 0.0, %v405
  %v407 = vpop.f32.mrb[0].mxu0
  %v408 = vpop.f32.mrb[0].mxu0
  %v409 = vadd.f32 0.0, %v408
  %v410 = vpop.f32.mrb[0].mxu0
  %411 = vmatprep.mubr.bf16.mxu0 0
  %412 = vmatmul.mubr.bf16.gmra.mrb[0].mxu0 %v208
  %v413 = vpop.f32.mrb[0].mxu0
  %v414 = vadd.f32 0.0, %v413
  %v415 = vpop.f32.mrb[0].mxu0
  %v416 = vpop.f32.mrb[0].mxu0
  %v417 = vadd.f32 0.0, %v416
  %v418 = vpop.f32.mrb[0].mxu0
  %419 = vmatprep.mubr.bf16.mxu0 0
  %420 = vmatmul.mubr.bf16.gmra.mrb[0].mxu0 %v209
  %v421 = vpop.f32.mrb[0].mxu0
  %v422 = vadd.f32 0.0, %v421
  %v423 = vpop.f32.mrb[0].mxu0
  %v424 = vpop.f32.mrb[0].mxu0
  %v425 = vadd.f32 0.0, %v424
  %v426 = vpop.f32.mrb[0].mxu0
  %427 = vmatprep.mubr.bf16.mxu0 0
  %428 = vmatmul.mubr.bf16.gmra.mrb[0].mxu0 %v210
  %v429 = vpop.f32.mrb[0].mxu0
  %v430 = vadd.f32 0.0, %v429
  %v431 = vpop.f32.mrb[0].mxu0
  %v432 = vpop.f32.mrb[0].mxu0
  %v433 = vadd.f32 0.0, %v432
  %v434 = vpop.f32.mrb[0].mxu0
  %435 = vdwg.mxu0
  %v436 = vadd.f32 %v51, %v310
  %v437 = vadd.f32 %v52, %v313
  %v438 = vadd.f32 %v53, %v318
  %v439 = vadd.f32 %v54, %v321
  %v440 = vadd.f32 %v55, %v326
  %v441 = vadd.f32 %v56, %v329
  %v442 = vadd.f32 %v57, %v334
  %v443 = vadd.f32 %v58, %v337
  %v444 = vadd.f32 %v59, %v342
  %v445 = vadd.f32 %v60, %v345
  %v446 = vadd.f32 %v61, %v350
  %v447 = vadd.f32 %v62, %v353
  %v448 = vadd.f32 %v63, %v358
  %v449 = vadd.f32 %v64, %v361
  %v450 = vadd.f32 %v65, %v366
  %v451 = vadd.f32 %v66, %v369
  %v452 = vadd.f32 %v67, %v374
  %v453 = vadd.f32 %v68, %v377
  %v454 = vadd.f32 %v69, %v382
  %v455 = vadd.f32 %v70, %v385
  %v456 = vadd.f32 %v71, %v390
  %v457 = vadd.f32 %v72, %v393
  %v458 = vadd.f32 %v73, %v398
  %v459 = vadd.f32 %v74, %v401
  %v460 = vadd.f32 %v75, %v406
  %v461 = vadd.f32 %v76, %v409
  %v462 = vadd.f32 %v77, %v414
  %v463 = vadd.f32 %v78, %v417
  %v464 = vadd.f32 %v79, %v422
  %v465 = vadd.f32 %v80, %v425
  %v466 = vadd.f32 %v81, %v430
  %v467 = vadd.f32 %v82, %v433
  %468 = vst [vmem:[#allocation2] sm:$0xff] %v436
  %469 = vst [vmem:[#allocation2 + $0x8] sm:$0xff] %v437
  %470 = vst [vmem:[#allocation2 + $0x10] sm:$0xff] %v438
  %471 = vst [vmem:[#allocation2 + $0x18] sm:$0xff] %v439
  %472 = vst [vmem:[#allocation2 + $0x20] sm:$0xff] %v440
  %473 = vst [vmem:[#allocation2 + $0x28] sm:$0xff] %v441
  %474 = vst [vmem:[#allocation2 + $0x30] sm:$0xff] %v442
  %475 = vst [vmem:[#allocation2 + $0x38] sm:$0xff] %v443
  %476 = vst [vmem:[#allocation2 + $0x40] sm:$0xff] %v444
  %477 = vst [vmem:[#allocation2 + $0x48] sm:$0xff] %v445
  %478 = vst [vmem:[#allocation2 + $0x50] sm:$0xff] %v446
  %479 = vst [vmem:[#allocation2 + $0x58] sm:$0xff] %v447
  %480 = vst [vmem:[#allocation2 + $0x60] sm:$0xff] %v448
  %481 = vst [vmem:[#allocation2 + $0x68] sm:$0xff] %v449
  %482 = vst [vmem:[#allocation2 + $0x70] sm:$0xff] %v450
  %483 = vst [vmem:[#allocation2 + $0x78] sm:$0xff] %v451
  %484 = vst [vmem:[#allocation2 + $0x80] sm:$0xff] %v452
  %485 = vst [vmem:[#allocation2 + $0x88] sm:$0xff] %v453
  %486 = vst [vmem:[#allocation2 + $0x90] sm:$0xff] %v454
  %487 = vst [vmem:[#allocation2 + $0x98] sm:$0xff] %v455
  %488 = vst [vmem:[#allocation2 + $0xa0] sm:$0xff] %v456
  %489 = vst [vmem:[#allocation2 + $0xa8] sm:$0xff] %v457
  %490 = vst [vmem:[#allocation2 + $0xb0] sm:$0xff] %v458
  %491 = vst [vmem:[#allocation2 + $0xb8] sm:$0xff] %v459
  %492 = vst [vmem:[#allocation2 + $0xc0] sm:$0xff] %v460
  %493 = vst [vmem:[#allocation2 + $0xc8] sm:$0xff] %v461
  %494 = vst [vmem:[#allocation2 + $0xd0] sm:$0xff] %v462
  %495 = vst [vmem:[#allocation2 + $0xd8] sm:$0xff] %v463
  %496 = vst [vmem:[#allocation2 + $0xe0] sm:$0xff] %v464
  %497 = vst [vmem:[#allocation2 + $0xe8] sm:$0xff] %v465
  %498 = vst [vmem:[#allocation2 + $0xf0] sm:$0xff] %v466
  %499 = vst [vmem:[#allocation2 + $0xf8] sm:$0xff] %v467
  // Predicated region
  $region18: #{resnet_feature_extractor.39} parent=0 // pred_check
    %p500 = pneg %p15
  $region19: #{resnet_feature_extractor.39} parent=0 // pred_check_branch
    %502 = sbr.rel (%p500) target = $region21
  $region20: #{resnet_feature_extractor.39} parent=0 // pred_region
    %v503 = vld [vmem:[#allocation2] sm:$0xff]
    %v504 = vld [vmem:[#allocation2 + $0x8] sm:$0xff]
    %v505 = vld [vmem:[#allocation2 + $0x10] sm:$0xff]
    %v506 = vld [vmem:[#allocation2 + $0x18] sm:$0xff]
    %v507 = vld [vmem:[#allocation2 + $0x20] sm:$0xff]
    %v508 = vld [vmem:[#allocation2 + $0x28] sm:$0xff]
    %v509 = vld [vmem:[#allocation2 + $0x30] sm:$0xff]
    %v510 = vld [vmem:[#allocation2 + $0x38] sm:$0xff]
    %v511 = vld [vmem:[#allocation2 + $0x40] sm:$0xff]
    %v512 = vld [vmem:[#allocation2 + $0x48] sm:$0xff]
    %v513 = vld [vmem:[#allocation2 + $0x50] sm:$0xff]
    %v514 = vld [vmem:[#allocation2 + $0x58] sm:$0xff]
    %v515 = vld [vmem:[#allocation2 + $0x60] sm:$0xff]
    %v516 = vld [vmem:[#allocation2 + $0x68] sm:$0xff]
    %v517 = vld [vmem:[#allocation2 + $0x70] sm:$0xff]
    %v518 = vld [vmem:[#allocation2 + $0x78] sm:$0xff]
    %v519 = vld [vmem:[#allocation2 + $0x80] sm:$0xff]
    %v520 = vld [vmem:[#allocation2 + $0x88] sm:$0xff]
    %v521 = vld [vmem:[#allocation2 + $0x90] sm:$0xff]
    %v522 = vld [vmem:[#allocation2 + $0x98] sm:$0xff]
    %v523 = vld [vmem:[#allocation2 + $0xa0] sm:$0xff]
    %v524 = vld [vmem:[#allocation2 + $0xa8] sm:$0xff]
    %v525 = vld [vmem:[#allocation2 + $0xb0] sm:$0xff]
    %v526 = vld [vmem:[#allocation2 + $0xb8] sm:$0xff]
    %v527 = vld [vmem:[#allocation2 + $0xc0] sm:$0xff]
    %v528 = vld [vmem:[#allocation2 + $0xc8] sm:$0xff]
    %v529 = vld [vmem:[#allocation2 + $0xd0] sm:$0xff]
    %v530 = vld [vmem:[#allocation2 + $0xd8] sm:$0xff]
    %v531 = vld [vmem:[#allocation2 + $0xe0] sm:$0xff]
    %v532 = vld [vmem:[#allocation2 + $0xe8] sm:$0xff]
    %v533 = vld [vmem:[#allocation2 + $0xf0] sm:$0xff]
    %v534 = vld [vmem:[#allocation2 + $0xf8] sm:$0xff]
    %v535 = vld [vmem:[%s2] sm:$0x1]
    %v537 = vlaneseq
    %v538 = vshrl.u32 %v537, 7
    %v539 = vsub.s32 0, %v538
    %v540 = vrot.slane %v535, %v539
    %v542 = vadd.f32 %v503, %v540
    %v543 = vadd.f32 %v504, %v540
    %v544 = vadd.f32 %v505, %v540
    %v545 = vadd.f32 %v506, %v540
    %v546 = vadd.f32 %v507, %v540
    %v547 = vadd.f32 %v508, %v540
    %v548 = vadd.f32 %v509, %v540
    %v549 = vadd.f32 %v510, %v540
    %v550 = vadd.f32 %v511, %v540
    %v551 = vadd.f32 %v512, %v540
    %v552 = vadd.f32 %v513, %v540
    %v553 = vadd.f32 %v514, %v540
    %v554 = vadd.f32 %v515, %v540
    %v555 = vadd.f32 %v516, %v540
    %v556 = vadd.f32 %v517, %v540
    %v557 = vadd.f32 %v518, %v540
    %v558 = vadd.f32 %v519, %v540
    %v559 = vadd.f32 %v520, %v540
    %v560 = vadd.f32 %v521, %v540
    %v561 = vadd.f32 %v522, %v540
    %v562 = vadd.f32 %v523, %v540
    %v563 = vadd.f32 %v524, %v540
    %v564 = vadd.f32 %v525, %v540
    %v565 = vadd.f32 %v526, %v540
    %v566 = vadd.f32 %v527, %v540
    %v567 = vadd.f32 %v528, %v540
    %v568 = vadd.f32 %v529, %v540
    %v569 = vadd.f32 %v530, %v540
    %v570 = vadd.f32 %v531, %v540
    %v571 = vadd.f32 %v532, %v540
    %v572 = vadd.f32 %v533, %v540
    %v573 = vadd.f32 %v534, %v540
    %v574 = vmax.f32 %v542, 0.0
    %v575 = vmax.f32 %v543, 0.0
    %v576 = vmax.f32 %v544, 0.0
    %v577 = vmax.f32 %v545, 0.0
    %v578 = vmax.f32 %v546, 0.0
    %v579 = vmax.f32 %v547, 0.0
    %v580 = vmax.f32 %v548, 0.0
    %v581 = vmax.f32 %v549, 0.0
    %v582 = vmax.f32 %v550, 0.0
    %v583 = vmax.f32 %v551, 0.0
    %v584 = vmax.f32 %v552, 0.0
    %v585 = vmax.f32 %v553, 0.0
    %v586 = vmax.f32 %v554, 0.0
    %v587 = vmax.f32 %v555, 0.0
    %v588 = vmax.f32 %v556, 0.0
    %v589 = vmax.f32 %v557, 0.0
    %v590 = vmax.f32 %v558, 0.0
    %v591 = vmax.f32 %v559, 0.0
    %v592 = vmax.f32 %v560, 0.0
    %v593 = vmax.f32 %v561, 0.0
    %v594 = vmax.f32 %v562, 0.0
    %v595 = vmax.f32 %v563, 0.0
    %v596 = vmax.f32 %v564, 0.0
    %v597 = vmax.f32 %v565, 0.0
    %v598 = vmax.f32 %v566, 0.0
    %v599 = vmax.f32 %v567, 0.0
    %v600 = vmax.f32 %v568, 0.0
    %v601 = vmax.f32 %v569, 0.0
    %v602 = vmax.f32 %v570, 0.0
    %v603 = vmax.f32 %v571, 0.0
    %v604 = vmax.f32 %v572, 0.0
    %v605 = vmax.f32 %v573, 0.0
    %v606 = vpack.c.bf16 %v575, %v574
    %v607 = vpack.c.bf16 %v577, %v576
    %v608 = vpack.c.bf16 %v579, %v578
    %v609 = vpack.c.bf16 %v581, %v580
    %v610 = vpack.c.bf16 %v583, %v582
    %v611 = vpack.c.bf16 %v585, %v584
    %v612 = vpack.c.bf16 %v587, %v586
    %v613 = vpack.c.bf16 %v589, %v588
    %v614 = vpack.c.bf16 %v591, %v590
    %v615 = vpack.c.bf16 %v593, %v592
    %v616 = vpack.c.bf16 %v595, %v594
    %v617 = vpack.c.bf16 %v597, %v596
    %v618 = vpack.c.bf16 %v599, %v598
    %v619 = vpack.c.bf16 %v601, %v600
    %v620 = vpack.c.bf16 %v603, %v602
    %v621 = vpack.c.bf16 %v605, %v604
    %v638 = vunpack.c.l.b16 %v606
    %v639 = vunpack.c.h.b16 %v606
    %v640 = vunpack.c.l.b16 %v607
    %v641 = vunpack.c.h.b16 %v607
    %v642 = vunpack.c.l.b16 %v608
    %v643 = vunpack.c.h.b16 %v608
    %v644 = vunpack.c.l.b16 %v609
    %v645 = vunpack.c.h.b16 %v609
    %v646 = vunpack.c.l.b16 %v610
    %v647 = vunpack.c.h.b16 %v610
    %v648 = vunpack.c.l.b16 %v611
    %v649 = vunpack.c.h.b16 %v611
    %v650 = vunpack.c.l.b16 %v612
    %v651 = vunpack.c.h.b16 %v612
    %v652 = vunpack.c.l.b16 %v613
    %v653 = vunpack.c.h.b16 %v613
    %v654 = vunpack.c.l.b16 %v614
    %v655 = vunpack.c.h.b16 %v614
    %v656 = vunpack.c.l.b16 %v615
    %v657 = vunpack.c.h.b16 %v615
    %v658 = vunpack.c.l.b16 %v616
    %v659 = vunpack.c.h.b16 %v616
    %v660 = vunpack.c.l.b16 %v617
    %v661 = vunpack.c.h.b16 %v617
    %v662 = vunpack.c.l.b16 %v618
    %v663 = vunpack.c.h.b16 %v618
    %v664 = vunpack.c.l.b16 %v619
    %v665 = vunpack.c.h.b16 %v619
    %v666 = vunpack.c.l.b16 %v620
    %v667 = vunpack.c.h.b16 %v620
    %v668 = vunpack.c.l.b16 %v621
    %v669 = vunpack.c.h.b16 %v621
    %v670 = vpack.c.b16 %v638, %v638
    %v671 = vpack.c.b16 %v639, %v639
    %v672 = vpack.c.b16 %v640, %v640
    %v673 = vpack.c.b16 %v641, %v641
    %v674 = vpack.c.b16 %v642, %v642
    %v675 = vpack.c.b16 %v643, %v643
    %v676 = vpack.c.b16 %v644, %v644
    %v677 = vpack.c.b16 %v645, %v645
    %v678 = vpack.c.b16 %v646, %v646
    %v679 = vpack.c.b16 %v647, %v647
    %v680 = vpack.c.b16 %v648, %v648
    %v681 = vpack.c.b16 %v649, %v649
    %v682 = vpack.c.b16 %v650, %v650
    %v683 = vpack.c.b16 %v651, %v651
    %v684 = vpack.c.b16 %v652, %v652
    %v685 = vpack.c.b16 %v653, %v653
    %v686 = vpack.c.b16 %v654, %v654
    %v687 = vpack.c.b16 %v655, %v655
    %v688 = vpack.c.b16 %v656, %v656
    %v689 = vpack.c.b16 %v657, %v657
    %v690 = vpack.c.b16 %v658, %v658
    %v691 = vpack.c.b16 %v659, %v659
    %v692 = vpack.c.b16 %v660, %v660
    %v693 = vpack.c.b16 %v661, %v661
    %v694 = vpack.c.b16 %v662, %v662
    %v695 = vpack.c.b16 %v663, %v663
    %v696 = vpack.c.b16 %v664, %v664
    %v697 = vpack.c.b16 %v665, %v665
    %v698 = vpack.c.b16 %v666, %v666
    %v699 = vpack.c.b16 %v667, %v667
    %v700 = vpack.c.b16 %v668, %v668
    %v701 = vpack.c.b16 %v669, %v669
    %734 = vst [vmem:[%s3] sm:$0xf] %v670
    %735 = vst [vmem:[%s3 + $0x4] sm:$0xf] %v671
    %736 = vst [vmem:[%s3 + $0x8] sm:$0xf] %v672
    %737 = vst [vmem:[%s3 + $0xc] sm:$0xf] %v673
    %738 = vst [vmem:[%s3 + $0x10] sm:$0xf] %v674
    %739 = vst [vmem:[%s3 + $0x14] sm:$0xf] %v675
    %740 = vst [vmem:[%s3 + $0x18] sm:$0xf] %v676
    %741 = vst [vmem:[%s3 + $0x1c] sm:$0xf] %v677
    %742 = vst [vmem:[%s3 + $0x20] sm:$0xf] %v678
    %743 = vst [vmem:[%s3 + $0x24] sm:$0xf] %v679
    %744 = vst [vmem:[%s3 + $0x28] sm:$0xf] %v680
    %745 = vst [vmem:[%s3 + $0x2c] sm:$0xf] %v681
    %746 = vst [vmem:[%s3 + $0x30] sm:$0xf] %v682
    %747 = vst [vmem:[%s3 + $0x34] sm:$0xf] %v683
    %748 = vst [vmem:[%s3 + $0x38] sm:$0xf] %v684
    %749 = vst [vmem:[%s3 + $0x3c] sm:$0xf] %v685
    %750 = vst [vmem:[%s3 + $0x40] sm:$0xf] %v686
    %751 = vst [vmem:[%s3 + $0x44] sm:$0xf] %v687
    %752 = vst [vmem:[%s3 + $0x48] sm:$0xf] %v688
    %753 = vst [vmem:[%s3 + $0x4c] sm:$0xf] %v689
    %754 = vst [vmem:[%s3 + $0x50] sm:$0xf] %v690
    %755 = vst [vmem:[%s3 + $0x54] sm:$0xf] %v691
    %756 = vst [vmem:[%s3 + $0x58] sm:$0xf] %v692
    %757 = vst [vmem:[%s3 + $0x5c] sm:$0xf] %v693
    %758 = vst [vmem:[%s3 + $0x60] sm:$0xf] %v694
    %759 = vst [vmem:[%s3 + $0x64] sm:$0xf] %v695
    %760 = vst [vmem:[%s3 + $0x68] sm:$0xf] %v696
    %761 = vst [vmem:[%s3 + $0x6c] sm:$0xf] %v697
    %762 = vst [vmem:[%s3 + $0x70] sm:$0xf] %v698
    %763 = vst [vmem:[%s3 + $0x74] sm:$0xf] %v699
    %764 = vst [vmem:[%s3 + $0x78] sm:$0xf] %v700
    %765 = vst [vmem:[%s3 + $0x7c] sm:$0xf] %v701
  $region21: #{resnet_feature_extractor.39} parent=0 // pred_fallthru
    _
  // Predicated region
  $region22: #{resnet_feature_extractor.39} parent=0 // pred_check
    _
  $region23: #{resnet_feature_extractor.39} parent=0 // pred_check_branch
    %767 = sbr.rel (0) target = $region25
  $region24: #{resnet_feature_extractor.39} parent=0 // pred_region
    _
  $region25: #{resnet_feature_extractor.39} parent=0 // pred_fallthru
    _
  // Predicated region
  $region26: #{resnet_feature_extractor.39} parent=0 // pred_check
    _
  $region27: #{resnet_feature_extractor.39} parent=0 // pred_check_branch
    %769 = sbr.rel (0) target = $region29
  $region28: #{resnet_feature_extractor.39} parent=0 // pred_region
    _
  $region29: #{resnet_feature_extractor.39} parent=0 // pred_fallthru
    _

// kernel: resnet_feature_extractor.38
$region0: #{resnet_feature_extractor.38}
  #allocation0 [shape = 'u32[]', space=smem, size = 0x4, offset = 0x4, fixed_abs, tag = 'smem constant byte address 0x4 - core index']
  #allocation1 [shape = 'u32[144,128]{1,0:T(1,128)}', space=vmem, size = 0x12000, scoped, tag = 'internal scratch']
  #allocation2 [shape = 'f32[256,128]{1,0:T(8,128)}', space=vmem, size = 0x20000, scoped, tag = 'scratch operand']
  %s0 = inlined_call_operand.vmem [shape: bf16[256,128], index: 0, kind: input, shape index: {}]
  %s1 = inlined_call_operand.vmem [shape: bf16[128,128], index: 1, kind: input, shape index: {}]
  %s2 = inlined_call_operand.vmem [shape: f32[1,128], index: 2, kind: input, shape index: {}]
  %s3 = inlined_call_operand.vmem [shape: bf16[256,128], index: 3, kind: output, shape index: {}]
  %s4 = sld [smem:[#allocation0]]
  $region30: #{resnet_feature_extractor.38} parent=0
    _
  %s6 = ssub.s32 1, %s4
  %s7 = scalar_select 0, %s6, %s4
  // Predicated region
  $region2: #{resnet_feature_extractor.38} parent=0 // pred_check
    _
  $region3: #{resnet_feature_extractor.38} parent=0 // pred_check_branch
    %9 = sbr.rel (0) target = $region5
  $region4: #{resnet_feature_extractor.38} parent=0 // pred_region
    _
  $region5: #{resnet_feature_extractor.38} parent=0 // pred_fallthru
    _
  // Predicated region
  $region6: #{resnet_feature_extractor.38} parent=0 // pred_check
    _
  $region7: #{resnet_feature_extractor.38} parent=0 // pred_check_branch
    %11 = sbr.rel (0) target = $region9
  $region8: #{resnet_feature_extractor.38} parent=0 // pred_region
    _
  $region9: #{resnet_feature_extractor.38} parent=0 // pred_fallthru
    _
  // Predicated region
  $region10: #{resnet_feature_extractor.38} parent=0 // pred_check
    _
  $region11: #{resnet_feature_extractor.38} parent=0 // pred_check_branch
    %13 = sbr.rel (0) target = $region13
  $region12: #{resnet_feature_extractor.38} parent=0 // pred_region
    _
  $region13: #{resnet_feature_extractor.38} parent=0 // pred_fallthru
    _
  %p15 = scmp.eq.s32.totalorder 0, 0
  // Predicated region
  $region14: #{resnet_feature_extractor.38} parent=0 // pred_check
    %p16 = pneg %p15
  $region15: #{resnet_feature_extractor.38} parent=0 // pred_check_branch
    %18 = sbr.rel (%p16) target = $region17
  $region16: #{resnet_feature_extractor.38} parent=0 // pred_region
    %19 = vst [vmem:[#allocation2] sm:$0xff] 0.0
    %20 = vst [vmem:[#allocation2 + $0x8] sm:$0xff] 0.0
    %21 = vst [vmem:[#allocation2 + $0x10] sm:$0xff] 0.0
    %22 = vst [vmem:[#allocation2 + $0x18] sm:$0xff] 0.0
    %23 = vst [vmem:[#allocation2 + $0x20] sm:$0xff] 0.0
    %24 = vst [vmem:[#allocation2 + $0x28] sm:$0xff] 0.0
    %25 = vst [vmem:[#allocation2 + $0x30] sm:$0xff] 0.0
    %26 = vst [vmem:[#allocation2 + $0x38] sm:$0xff] 0.0
    %27 = vst [vmem:[#allocation2 + $0x40] sm:$0xff] 0.0
    %28 = vst [vmem:[#allocation2 + $0x48] sm:$0xff] 0.0
    %29 = vst [vmem:[#allocation2 + $0x50] sm:$0xff] 0.0
    %30 = vst [vmem:[#allocation2 + $0x58] sm:$0xff] 0.0
    %31 = vst [vmem:[#allocation2 + $0x60] sm:$0xff] 0.0
    %32 = vst [vmem:[#allocation2 + $0x68] sm:$0xff] 0.0
    %33 = vst [vmem:[#allocation2 + $0x70] sm:$0xff] 0.0
    %34 = vst [vmem:[#allocation2 + $0x78] sm:$0xff] 0.0
    %35 = vst [vmem:[#allocation2 + $0x80] sm:$0xff] 0.0
    %36 = vst [vmem:[#allocation2 + $0x88] sm:$0xff] 0.0
    %37 = vst [vmem:[#allocation2 + $0x90] sm:$0xff] 0.0
    %38 = vst [vmem:[#allocation2 + $0x98] sm:$0xff] 0.0
    %39 = vst [vmem:[#allocation2 + $0xa0] sm:$0xff] 0.0
    %40 = vst [vmem:[#allocation2 + $0xa8] sm:$0xff] 0.0
    %41 = vst [vmem:[#allocation2 + $0xb0] sm:$0xff] 0.0
    %42 = vst [vmem:[#allocation2 + $0xb8] sm:$0xff] 0.0
    %43 = vst [vmem:[#allocation2 + $0xc0] sm:$0xff] 0.0
    %44 = vst [vmem:[#allocation2 + $0xc8] sm:$0xff] 0.0
    %45 = vst [vmem:[#allocation2 + $0xd0] sm:$0xff] 0.0
    %46 = vst [vmem:[#allocation2 + $0xd8] sm:$0xff] 0.0
    %47 = vst [vmem:[#allocation2 + $0xe0] sm:$0xff] 0.0
    %48 = vst [vmem:[#allocation2 + $0xe8] sm:$0xff] 0.0
    %49 = vst [vmem:[#allocation2 + $0xf0] sm:$0xff] 0.0
    %50 = vst [vmem:[#allocation2 + $0xf8] sm:$0xff] 0.0
  $region17: #{resnet_feature_extractor.38} parent=0 // pred_fallthru
    _
  %v51 = vld [vmem:[#allocation2] sm:$0xff]
  %v52 = vld [vmem:[#allocation2 + $0x8] sm:$0xff]
  %v53 = vld [vmem:[#allocation2 + $0x10] sm:$0xff]
  %v54 = vld [vmem:[#allocation2 + $0x18] sm:$0xff]
  %v55 = vld [vmem:[#allocation2 + $0x20] sm:$0xff]
  %v56 = vld [vmem:[#allocation2 + $0x28] sm:$0xff]
  %v57 = vld [vmem:[#allocation2 + $0x30] sm:$0xff]
  %v58 = vld [vmem:[#allocation2 + $0x38] sm:$0xff]
  %v59 = vld [vmem:[#allocation2 + $0x40] sm:$0xff]
  %v60 = vld [vmem:[#allocation2 + $0x48] sm:$0xff]
  %v61 = vld [vmem:[#allocation2 + $0x50] sm:$0xff]
  %v62 = vld [vmem:[#allocation2 + $0x58] sm:$0xff]
  %v63 = vld [vmem:[#allocation2 + $0x60] sm:$0xff]
  %v64 = vld [vmem:[#allocation2 + $0x68] sm:$0xff]
  %v65 = vld [vmem:[#allocation2 + $0x70] sm:$0xff]
  %v66 = vld [vmem:[#allocation2 + $0x78] sm:$0xff]
  %v67 = vld [vmem:[#allocation2 + $0x80] sm:$0xff]
  %v68 = vld [vmem:[#allocation2 + $0x88] sm:$0xff]
  %v69 = vld [vmem:[#allocation2 + $0x90] sm:$0xff]
  %v70 = vld [vmem:[#allocation2 + $0x98] sm:$0xff]
  %v71 = vld [vmem:[#allocation2 + $0xa0] sm:$0xff]
  %v72 = vld [vmem:[#allocation2 + $0xa8] sm:$0xff]
  %v73 = vld [vmem:[#allocation2 + $0xb0] sm:$0xff]
  %v74 = vld [vmem:[#allocation2 + $0xb8] sm:$0xff]
  %v75 = vld [vmem:[#allocation2 + $0xc0] sm:$0xff]
  %v76 = vld [vmem:[#allocation2 + $0xc8] sm:$0xff]
  %v77 = vld [vmem:[#allocation2 + $0xd0] sm:$0xff]
  %v78 = vld [vmem:[#allocation2 + $0xd8] sm:$0xff]
  %v79 = vld [vmem:[#allocation2 + $0xe0] sm:$0xff]
  %v80 = vld [vmem:[#allocation2 + $0xe8] sm:$0xff]
  %v81 = vld [vmem:[#allocation2 + $0xf0] sm:$0xff]
  %v82 = vld [vmem:[#allocation2 + $0xf8] sm:$0xff]
  %v83 = vld [vmem:[%s0] sm:$0xf]
  %v84 = vld [vmem:[%s0 + $0x4] sm:$0xf]
  %v85 = vld [vmem:[%s0 + $0x8] sm:$0xf]
  %v86 = vld [vmem:[%s0 + $0xc] sm:$0xf]
  %v87 = vld [vmem:[%s0 + $0x10] sm:$0xf]
  %v88 = vld [vmem:[%s0 + $0x14] sm:$0xf]
  %v89 = vld [vmem:[%s0 + $0x18] sm:$0xf]
  %v90 = vld [vmem:[%s0 + $0x1c] sm:$0xf]
  %v91 = vld [vmem:[%s0 + $0x20] sm:$0xf]
  %v92 = vld [vmem:[%s0 + $0x24] sm:$0xf]
  %v93 = vld [vmem:[%s0 + $0x28] sm:$0xf]
  %v94 = vld [vmem:[%s0 + $0x2c] sm:$0xf]
  %v95 = vld [vmem:[%s0 + $0x30] sm:$0xf]
  %v96 = vld [vmem:[%s0 + $0x34] sm:$0xf]
  %v97 = vld [vmem:[%s0 + $0x38] sm:$0xf]
  %v98 = vld [vmem:[%s0 + $0x3c] sm:$0xf]
  %v99 = vld [vmem:[%s0 + $0x40] sm:$0xf]
  %v100 = vld [vmem:[%s0 + $0x44] sm:$0xf]
  %v101 = vld [vmem:[%s0 + $0x48] sm:$0xf]
  %v102 = vld [vmem:[%s0 + $0x4c] sm:$0xf]
  %v103 = vld [vmem:[%s0 + $0x50] sm:$0xf]
  %v104 = vld [vmem:[%s0 + $0x54] sm:$0xf]
  %v105 = vld [vmem:[%s0 + $0x58] sm:$0xf]
  %v106 = vld [vmem:[%s0 + $0x5c] sm:$0xf]
  %v107 = vld [vmem:[%s0 + $0x60] sm:$0xf]
  %v108 = vld [vmem:[%s0 + $0x64] sm:$0xf]
  %v109 = vld [vmem:[%s0 + $0x68] sm:$0xf]
  %v110 = vld [vmem:[%s0 + $0x6c] sm:$0xf]
  %v111 = vld [vmem:[%s0 + $0x70] sm:$0xf]
  %v112 = vld [vmem:[%s0 + $0x74] sm:$0xf]
  %v113 = vld [vmem:[%s0 + $0x78] sm:$0xf]
  %v114 = vld [vmem:[%s0 + $0x7c] sm:$0xf]
  %v115 = vld [vmem:[%s1] sm:$0xf]
  %v116 = vld [vmem:[%s1 + $0x4] sm:$0xf]
  %v117 = vld [vmem:[%s1 + $0x8] sm:$0xf]
  %v118 = vld [vmem:[%s1 + $0xc] sm:$0xf]
  %v119 = vld [vmem:[%s1 + $0x10] sm:$0xf]
  %v120 = vld [vmem:[%s1 + $0x14] sm:$0xf]
  %v121 = vld [vmem:[%s1 + $0x18] sm:$0xf]
  %v122 = vld [vmem:[%s1 + $0x1c] sm:$0xf]
  %v123 = vld [vmem:[%s1 + $0x20] sm:$0xf]
  %v124 = vld [vmem:[%s1 + $0x24] sm:$0xf]
  %v125 = vld [vmem:[%s1 + $0x28] sm:$0xf]
  %v126 = vld [vmem:[%s1 + $0x2c] sm:$0xf]
  %v127 = vld [vmem:[%s1 + $0x30] sm:$0xf]
  %v128 = vld [vmem:[%s1 + $0x34] sm:$0xf]
  %v129 = vld [vmem:[%s1 + $0x38] sm:$0xf]
  %v130 = vld [vmem:[%s1 + $0x3c] sm:$0xf]
  %v163 = vunpack.c.l.b16 %v83
  %v164 = vunpack.c.l.b16 %v84
  %v165 = vunpack.c.l.b16 %v85
  %v166 = vunpack.c.l.b16 %v86
  %v167 = vunpack.c.l.b16 %v87
  %v168 = vunpack.c.l.b16 %v88
  %v169 = vunpack.c.l.b16 %v89
  %v170 = vunpack.c.l.b16 %v90
  %v171 = vunpack.c.l.b16 %v91
  %v172 = vunpack.c.l.b16 %v92
  %v173 = vunpack.c.l.b16 %v93
  %v174 = vunpack.c.l.b16 %v94
  %v175 = vunpack.c.l.b16 %v95
  %v176 = vunpack.c.l.b16 %v96
  %v177 = vunpack.c.l.b16 %v97
  %v178 = vunpack.c.l.b16 %v98
  %v179 = vunpack.c.l.b16 %v99
  %v180 = vunpack.c.l.b16 %v100
  %v181 = vunpack.c.l.b16 %v101
  %v182 = vunpack.c.l.b16 %v102
  %v183 = vunpack.c.l.b16 %v103
  %v184 = vunpack.c.l.b16 %v104
  %v185 = vunpack.c.l.b16 %v105
  %v186 = vunpack.c.l.b16 %v106
  %v187 = vunpack.c.l.b16 %v107
  %v188 = vunpack.c.l.b16 %v108
  %v189 = vunpack.c.l.b16 %v109
  %v190 = vunpack.c.l.b16 %v110
  %v191 = vunpack.c.l.b16 %v111
  %v192 = vunpack.c.l.b16 %v112
  %v193 = vunpack.c.l.b16 %v113
  %v194 = vunpack.c.l.b16 %v114
  %v195 = vpack.c.b16 %v164, %v163
  %v196 = vpack.c.b16 %v166, %v165
  %v197 = vpack.c.b16 %v168, %v167
  %v198 = vpack.c.b16 %v170, %v169
  %v199 = vpack.c.b16 %v172, %v171
  %v200 = vpack.c.b16 %v174, %v173
  %v201 = vpack.c.b16 %v176, %v175
  %v202 = vpack.c.b16 %v178, %v177
  %v203 = vpack.c.b16 %v180, %v179
  %v204 = vpack.c.b16 %v182, %v181
  %v205 = vpack.c.b16 %v184, %v183
  %v206 = vpack.c.b16 %v186, %v185
  %v207 = vpack.c.b16 %v188, %v187
  %v208 = vpack.c.b16 %v190, %v189
  %v209 = vpack.c.b16 %v192, %v191
  %v210 = vpack.c.b16 %v194, %v193
  %v243 = vunpack.c.l.b16 %v115
  %v244 = vunpack.c.l.b16 %v116
  %v245 = vunpack.c.l.b16 %v117
  %v246 = vunpack.c.l.b16 %v118
  %v247 = vunpack.c.l.b16 %v119
  %v248 = vunpack.c.l.b16 %v120
  %v249 = vunpack.c.l.b16 %v121
  %v250 = vunpack.c.l.b16 %v122
  %v251 = vunpack.c.l.b16 %v123
  %v252 = vunpack.c.l.b16 %v124
  %v253 = vunpack.c.l.b16 %v125
  %v254 = vunpack.c.l.b16 %v126
  %v255 = vunpack.c.l.b16 %v127
  %v256 = vunpack.c.l.b16 %v128
  %v257 = vunpack.c.l.b16 %v129
  %v258 = vunpack.c.l.b16 %v130
  %v259 = vpack.c.b16 %v244, %v243
  %v260 = vpack.c.b16 %v246, %v245
  %v261 = vpack.c.b16 %v248, %v247
  %v262 = vpack.c.b16 %v250, %v249
  %v263 = vpack.c.b16 %v252, %v251
  %v264 = vpack.c.b16 %v254, %v253
  %v265 = vpack.c.b16 %v256, %v255
  %v266 = vpack.c.b16 %v258, %v257
  %275 = vmatprep.subr.bf16.mxu0 0
  %276 = vmatpush1.bf16.msra.mxu0 %v259
  %277 = vmatprep.subr.bf16.mxu0 0
  %278 = vmatpush1.bf16.msra.mxu0 %v260
  %279 = vmatprep.subr.bf16.mxu0 0
  %280 = vmatpush1.bf16.msra.mxu0 %v261
  %281 = vmatprep.subr.bf16.mxu0 0
  %282 = vmatpush1.bf16.msra.mxu0 %v262
  %283 = vmatprep.subr.bf16.mxu0 0
  %284 = vmatpush1.bf16.msra.mxu0 %v263
  %285 = vmatprep.subr.bf16.mxu0 0
  %286 = vmatpush1.bf16.msra.mxu0 %v264
  %287 = vmatprep.subr.bf16.mxu0 0
  %288 = vmatpush1.bf16.msra.mxu0 %v265
  %289 = vmatprep.subr.bf16.mxu0 0
  %290 = vmatpush1.bf16.msra.mxu0 %v266
  %291 = vmatprep.subr.bf16.mxu0 0
  %292 = vmatpush1.bf16.msra.mxu0 0
  %293 = vmatprep.subr.bf16.mxu0 0
  %294 = vmatpush1.bf16.msra.mxu0 0
  %295 = vmatprep.subr.bf16.mxu0 0
  %296 = vmatpush1.bf16.msra.mxu0 0
  %297 = vmatprep.subr.bf16.mxu0 0
  %298 = vmatpush1.bf16.msra.mxu0 0
  %299 = vmatprep.subr.bf16.mxu0 0
  %300 = vmatpush1.bf16.msra.mxu0 0
  %301 = vmatprep.subr.bf16.mxu0 0
  %302 = vmatpush1.bf16.msra.mxu0 0
  %303 = vmatprep.subr.bf16.mxu0 0
  %304 = vmatpush1.bf16.msra.mxu0 0
  %305 = vmatprep.subr.bf16.mxu0 0
  %306 = vmatpush1.bf16.msra.mxu0 0
  %307 = vmatprep.mubr.bf16.mxu0 0
  %308 = vmatmul.mubr.bf16.gmra.mrb[0].mxu0 %v195
  %v309 = vpop.f32.mrb[0].mxu0
  %v310 = vadd.f32 0.0, %v309
  %v311 = vpop.f32.mrb[0].mxu0
  %v312 = vpop.f32.mrb[0].mxu0
  %v313 = vadd.f32 0.0, %v312
  %v314 = vpop.f32.mrb[0].mxu0
  %315 = vmatprep.mubr.bf16.mxu0 0
  %316 = vmatmul.mubr.bf16.gmra.mrb[0].mxu0 %v196
  %v317 = vpop.f32.mrb[0].mxu0
  %v318 = vadd.f32 0.0, %v317
  %v319 = vpop.f32.mrb[0].mxu0
  %v320 = vpop.f32.mrb[0].mxu0
  %v321 = vadd.f32 0.0, %v320
  %v322 = vpop.f32.mrb[0].mxu0
  %323 = vmatprep.mubr.bf16.mxu0 0
  %324 = vmatmul.mubr.bf16.gmra.mrb[0].mxu0 %v197
  %v325 = vpop.f32.mrb[0].mxu0
  %v326 = vadd.f32 0.0, %v325
  %v327 = vpop.f32.mrb[0].mxu0
  %v328 = vpop.f32.mrb[0].mxu0
  %v329 = vadd.f32 0.0, %v328
  %v330 = vpop.f32.mrb[0].mxu0
  %331 = vmatprep.mubr.bf16.mxu0 0
  %332 = vmatmul.mubr.bf16.gmra.mrb[0].mxu0 %v198
  %v333 = vpop.f32.mrb[0].mxu0
  %v334 = vadd.f32 0.0, %v333
  %v335 = vpop.f32.mrb[0].mxu0
  %v336 = vpop.f32.mrb[0].mxu0
  %v337 = vadd.f32 0.0, %v336
  %v338 = vpop.f32.mrb[0].mxu0
  %339 = vmatprep.mubr.bf16.mxu0 0
  %340 = vmatmul.mubr.bf16.gmra.mrb[0].mxu0 %v199
  %v341 = vpop.f32.mrb[0].mxu0
  %v342 = vadd.f32 0.0, %v341
  %v343 = vpop.f32.mrb[0].mxu0
  %v344 = vpop.f32.mrb[0].mxu0
  %v345 = vadd.f32 0.0, %v344
  %v346 = vpop.f32.mrb[0].mxu0
  %347 = vmatprep.mubr.bf16.mxu0 0
  %348 = vmatmul.mubr.bf16.gmra.mrb[0].mxu0 %v200
  %v349 = vpop.f32.mrb[0].mxu0
  %v350 = vadd.f32 0.0, %v349
  %v351 = vpop.f32.mrb[0].mxu0
  %v352 = vpop.f32.mrb[0].mxu0
  %v353 = vadd.f32 0.0, %v352
  %v354 = vpop.f32.mrb[0].mxu0
  %355 = vmatprep.mubr.bf16.mxu0 0
  %356 = vmatmul.mubr.bf16.gmra.mrb[0].mxu0 %v201
  %v357 = vpop.f32.mrb[0].mxu0
  %v358 = vadd.f32 0.0, %v357
  %v359 = vpop.f32.mrb[0].mxu0
  %v360 = vpop.f32.mrb[0].mxu0
  %v361 = vadd.f32 0.0, %v360
  %v362 = vpop.f32.mrb[0].mxu0
  %363 = vmatprep.mubr.bf16.mxu0 0
  %364 = vmatmul.mubr.bf16.gmra.mrb[0].mxu0 %v202
  %v365 = vpop.f32.mrb[0].mxu0
  %v366 = vadd.f32 0.0, %v365
  %v367 = vpop.f32.mrb[0].mxu0
  %v368 = vpop.f32.mrb[0].mxu0
  %v369 = vadd.f32 0.0, %v368
  %v370 = vpop.f32.mrb[0].mxu0
  %371 = vmatprep.mubr.bf16.mxu0 0
  %372 = vmatmul.mubr.bf16.gmra.mrb[0].mxu0 %v203
  %v373 = vpop.f32.mrb[0].mxu0
  %v374 = vadd.f32 0.0, %v373
  %v375 = vpop.f32.mrb[0].mxu0
  %v376 = vpop.f32.mrb[0].mxu0
  %v377 = vadd.f32 0.0, %v376
  %v378 = vpop.f32.mrb[0].mxu0
  %379 = vmatprep.mubr.bf16.mxu0 0
  %380 = vmatmul.mubr.bf16.gmra.mrb[0].mxu0 %v204
  %v381 = vpop.f32.mrb[0].mxu0
  %v382 = vadd.f32 0.0, %v381
  %v383 = vpop.f32.mrb[0].mxu0
  %v384 = vpop.f32.mrb[0].mxu0
  %v385 = vadd.f32 0.0, %v384
  %v386 = vpop.f32.mrb[0].mxu0
  %387 = vmatprep.mubr.bf16.mxu0 0
  %388 = vmatmul.mubr.bf16.gmra.mrb[0].mxu0 %v205
  %v389 = vpop.f32.mrb[0].mxu0
  %v390 = vadd.f32 0.0, %v389
  %v391 = vpop.f32.mrb[0].mxu0
  %v392 = vpop.f32.mrb[0].mxu0
  %v393 = vadd.f32 0.0, %v392
  %v394 = vpop.f32.mrb[0].mxu0
  %395 = vmatprep.mubr.bf16.mxu0 0
  %396 = vmatmul.mubr.bf16.gmra.mrb[0].mxu0 %v206
  %v397 = vpop.f32.mrb[0].mxu0
  %v398 = vadd.f32 0.0, %v397
  %v399 = vpop.f32.mrb[0].mxu0
  %v400 = vpop.f32.mrb[0].mxu0
  %v401 = vadd.f32 0.0, %v400
  %v402 = vpop.f32.mrb[0].mxu0
  %403 = vmatprep.mubr.bf16.mxu0 0
  %404 = vmatmul.mubr.bf16.gmra.mrb[0].mxu0 %v207
  %v405 = vpop.f32.mrb[0].mxu0
  %v406 = vadd.f32 0.0, %v405
  %v407 = vpop.f32.mrb[0].mxu0
  %v408 = vpop.f32.mrb[0].mxu0
  %v409 = vadd.f32 0.0, %v408
  %v410 = vpop.f32.mrb[0].mxu0
  %411 = vmatprep.mubr.bf16.mxu0 0
  %412 = vmatmul.mubr.bf16.gmra.mrb[0].mxu0 %v208
  %v413 = vpop.f32.mrb[0].mxu0
  %v414 = vadd.f32 0.0, %v413
  %v415 = vpop.f32.mrb[0].mxu0
  %v416 = vpop.f32.mrb[0].mxu0
  %v417 = vadd.f32 0.0, %v416
  %v418 = vpop.f32.mrb[0].mxu0
  %419 = vmatprep.mubr.bf16.mxu0 0
  %420 = vmatmul.mubr.bf16.gmra.mrb[0].mxu0 %v209
  %v421 = vpop.f32.mrb[0].mxu0
  %v422 = vadd.f32 0.0, %v421
  %v423 = vpop.f32.mrb[0].mxu0
  %v424 = vpop.f32.mrb[0].mxu0
  %v425 = vadd.f32 0.0, %v424
  %v426 = vpop.f32.mrb[0].mxu0
  %427 = vmatprep.mubr.bf16.mxu0 0
  %428 = vmatmul.mubr.bf16.gmra.mrb[0].mxu0 %v210
  %v429 = vpop.f32.mrb[0].mxu0
  %v430 = vadd.f32 0.0, %v429
  %v431 = vpop.f32.mrb[0].mxu0
  %v432 = vpop.f32.mrb[0].mxu0
  %v433 = vadd.f32 0.0, %v432
  %v434 = vpop.f32.mrb[0].mxu0
  %435 = vdwg.mxu0
  %v436 = vadd.f32 %v51, %v310
  %v437 = vadd.f32 %v52, %v313
  %v438 = vadd.f32 %v53, %v318
  %v439 = vadd.f32 %v54, %v321
  %v440 = vadd.f32 %v55, %v326
  %v441 = vadd.f32 %v56, %v329
  %v442 = vadd.f32 %v57, %v334
  %v443 = vadd.f32 %v58, %v337
  %v444 = vadd.f32 %v59, %v342
  %v445 = vadd.f32 %v60, %v345
  %v446 = vadd.f32 %v61, %v350
  %v447 = vadd.f32 %v62, %v353
  %v448 = vadd.f32 %v63, %v358
  %v449 = vadd.f32 %v64, %v361
  %v450 = vadd.f32 %v65, %v366
  %v451 = vadd.f32 %v66, %v369
  %v452 = vadd.f32 %v67, %v374
  %v453 = vadd.f32 %v68, %v377
  %v454 = vadd.f32 %v69, %v382
  %v455 = vadd.f32 %v70, %v385
  %v456 = vadd.f32 %v71, %v390
  %v457 = vadd.f32 %v72, %v393
  %v458 = vadd.f32 %v73, %v398
  %v459 = vadd.f32 %v74, %v401
  %v460 = vadd.f32 %v75, %v406
  %v461 = vadd.f32 %v76, %v409
  %v462 = vadd.f32 %v77, %v414
  %v463 = vadd.f32 %v78, %v417
  %v464 = vadd.f32 %v79, %v422
  %v465 = vadd.f32 %v80, %v425
  %v466 = vadd.f32 %v81, %v430
  %v467 = vadd.f32 %v82, %v433
  %468 = vst [vmem:[#allocation2] sm:$0xff] %v436
  %469 = vst [vmem:[#allocation2 + $0x8] sm:$0xff] %v437
  %470 = vst [vmem:[#allocation2 + $0x10] sm:$0xff] %v438
  %471 = vst [vmem:[#allocation2 + $0x18] sm:$0xff] %v439
  %472 = vst [vmem:[#allocation2 + $0x20] sm:$0xff] %v440
  %473 = vst [vmem:[#allocation2 + $0x28] sm:$0xff] %v441
  %474 = vst [vmem:[#allocation2 + $0x30] sm:$0xff] %v442
  %475 = vst [vmem:[#allocation2 + $0x38] sm:$0xff] %v443
  %476 = vst [vmem:[#allocation2 + $0x40] sm:$0xff] %v444
  %477 = vst [vmem:[#allocation2 + $0x48] sm:$0xff] %v445
  %478 = vst [vmem:[#allocation2 + $0x50] sm:$0xff] %v446
  %479 = vst [vmem:[#allocation2 + $0x58] sm:$0xff] %v447
  %480 = vst [vmem:[#allocation2 + $0x60] sm:$0xff] %v448
  %481 = vst [vmem:[#allocation2 + $0x68] sm:$0xff] %v449
  %482 = vst [vmem:[#allocation2 + $0x70] sm:$0xff] %v450
  %483 = vst [vmem:[#allocation2 + $0x78] sm:$0xff] %v451
  %484 = vst [vmem:[#allocation2 + $0x80] sm:$0xff] %v452
  %485 = vst [vmem:[#allocation2 + $0x88] sm:$0xff] %v453
  %486 = vst [vmem:[#allocation2 + $0x90] sm:$0xff] %v454
  %487 = vst [vmem:[#allocation2 + $0x98] sm:$0xff] %v455
  %488 = vst [vmem:[#allocation2 + $0xa0] sm:$0xff] %v456
  %489 = vst [vmem:[#allocation2 + $0xa8] sm:$0xff] %v457
  %490 = vst [vmem:[#allocation2 + $0xb0] sm:$0xff] %v458
  %491 = vst [vmem:[#allocation2 + $0xb8] sm:$0xff] %v459
  %492 = vst [vmem:[#allocation2 + $0xc0] sm:$0xff] %v460
  %493 = vst [vmem:[#allocation2 + $0xc8] sm:$0xff] %v461
  %494 = vst [vmem:[#allocation2 + $0xd0] sm:$0xff] %v462
  %495 = vst [vmem:[#allocation2 + $0xd8] sm:$0xff] %v463
  %496 = vst [vmem:[#allocation2 + $0xe0] sm:$0xff] %v464
  %497 = vst [vmem:[#allocation2 + $0xe8] sm:$0xff] %v465
  %498 = vst [vmem:[#allocation2 + $0xf0] sm:$0xff] %v466
  %499 = vst [vmem:[#allocation2 + $0xf8] sm:$0xff] %v467
  // Predicated region
  $region18: #{resnet_feature_extractor.38} parent=0 // pred_check
    %p500 = pneg %p15
  $region19: #{resnet_feature_extractor.38} parent=0 // pred_check_branch
    %502 = sbr.rel (%p500) target = $region21
  $region20: #{resnet_feature_extractor.38} parent=0 // pred_region
    %v503 = vld [vmem:[#allocation2] sm:$0xff]
    %v504 = vld [vmem:[#allocation2 + $0x8] sm:$0xff]
    %v505 = vld [vmem:[#allocation2 + $0x10] sm:$0xff]
    %v506 = vld [vmem:[#allocation2 + $0x18] sm:$0xff]
    %v507 = vld [vmem:[#allocation2 + $0x20] sm:$0xff]
    %v508 = vld [vmem:[#allocation2 + $0x28] sm:$0xff]
    %v509 = vld [vmem:[#allocation2 + $0x30] sm:$0xff]
    %v510 = vld [vmem:[#allocation2 + $0x38] sm:$0xff]
    %v511 = vld [vmem:[#allocation2 + $0x40] sm:$0xff]
    %v512 = vld [vmem:[#allocation2 + $0x48] sm:$0xff]
    %v513 = vld [vmem:[#allocation2 + $0x50] sm:$0xff]
    %v514 = vld [vmem:[#allocation2 + $0x58] sm:$0xff]
    %v515 = vld [vmem:[#allocation2 + $0x60] sm:$0xff]
    %v516 = vld [vmem:[#allocation2 + $0x68] sm:$0xff]
    %v517 = vld [vmem:[#allocation2 + $0x70] sm:$0xff]
    %v518 = vld [vmem:[#allocation2 + $0x78] sm:$0xff]
    %v519 = vld [vmem:[#allocation2 + $0x80] sm:$0xff]
    %v520 = vld [vmem:[#allocation2 + $0x88] sm:$0xff]
    %v521 = vld [vmem:[#allocation2 + $0x90] sm:$0xff]
    %v522 = vld [vmem:[#allocation2 + $0x98] sm:$0xff]
    %v523 = vld [vmem:[#allocation2 + $0xa0] sm:$0xff]
    %v524 = vld [vmem:[#allocation2 + $0xa8] sm:$0xff]
    %v525 = vld [vmem:[#allocation2 + $0xb0] sm:$0xff]
    %v526 = vld [vmem:[#allocation2 + $0xb8] sm:$0xff]
    %v527 = vld [vmem:[#allocation2 + $0xc0] sm:$0xff]
    %v528 = vld [vmem:[#allocation2 + $0xc8] sm:$0xff]
    %v529 = vld [vmem:[#allocation2 + $0xd0] sm:$0xff]
    %v530 = vld [vmem:[#allocation2 + $0xd8] sm:$0xff]
    %v531 = vld [vmem:[#allocation2 + $0xe0] sm:$0xff]
    %v532 = vld [vmem:[#allocation2 + $0xe8] sm:$0xff]
    %v533 = vld [vmem:[#allocation2 + $0xf0] sm:$0xff]
    %v534 = vld [vmem:[#allocation2 + $0xf8] sm:$0xff]
    %v535 = vld [vmem:[%s2] sm:$0x1]
    %v537 = vlaneseq
    %v538 = vshrl.u32 %v537, 7
    %v539 = vsub.s32 0, %v538
    %v540 = vrot.slane %v535, %v539
    %v542 = vadd.f32 %v503, %v540
    %v543 = vadd.f32 %v504, %v540
    %v544 = vadd.f32 %v505, %v540
    %v545 = vadd.f32 %v506, %v540
    %v546 = vadd.f32 %v507, %v540
    %v547 = vadd.f32 %v508, %v540
    %v548 = vadd.f32 %v509, %v540
    %v549 = vadd.f32 %v510, %v540
    %v550 = vadd.f32 %v511, %v540
    %v551 = vadd.f32 %v512, %v540
    %v552 = vadd.f32 %v513, %v540
    %v553 = vadd.f32 %v514, %v540
    %v554 = vadd.f32 %v515, %v540
    %v555 = vadd.f32 %v516, %v540
    %v556 = vadd.f32 %v517, %v540
    %v557 = vadd.f32 %v518, %v540
    %v558 = vadd.f32 %v519, %v540
    %v559 = vadd.f32 %v520, %v540
    %v560 = vadd.f32 %v521, %v540
    %v561 = vadd.f32 %v522, %v540
    %v562 = vadd.f32 %v523, %v540
    %v563 = vadd.f32 %v524, %v540
    %v564 = vadd.f32 %v525, %v540
    %v565 = vadd.f32 %v526, %v540
    %v566 = vadd.f32 %v527, %v540
    %v567 = vadd.f32 %v528, %v540
    %v568 = vadd.f32 %v529, %v540
    %v569 = vadd.f32 %v530, %v540
    %v570 = vadd.f32 %v531, %v540
    %v571 = vadd.f32 %v532, %v540
    %v572 = vadd.f32 %v533, %v540
    %v573 = vadd.f32 %v534, %v540
    %v574 = vpack.c.bf16 %v543, %v542
    %v575 = vpack.c.bf16 %v545, %v544
    %v576 = vpack.c.bf16 %v547, %v546
    %v577 = vpack.c.bf16 %v549, %v548
    %v578 = vpack.c.bf16 %v551, %v550
    %v579 = vpack.c.bf16 %v553, %v552
    %v580 = vpack.c.bf16 %v555, %v554
    %v581 = vpack.c.bf16 %v557, %v556
    %v582 = vpack.c.bf16 %v559, %v558
    %v583 = vpack.c.bf16 %v561, %v560
    %v584 = vpack.c.bf16 %v563, %v562
    %v585 = vpack.c.bf16 %v565, %v564
    %v586 = vpack.c.bf16 %v567, %v566
    %v587 = vpack.c.bf16 %v569, %v568
    %v588 = vpack.c.bf16 %v571, %v570
    %v589 = vpack.c.bf16 %v573, %v572
    %v606 = vunpack.c.l.b16 %v574
    %v607 = vunpack.c.h.b16 %v574
    %v608 = vunpack.c.l.b16 %v575
    %v609 = vunpack.c.h.b16 %v575
    %v610 = vunpack.c.l.b16 %v576
    %v611 = vunpack.c.h.b16 %v576
    %v612 = vunpack.c.l.b16 %v577
    %v613 = vunpack.c.h.b16 %v577
    %v614 = vunpack.c.l.b16 %v578
    %v615 = vunpack.c.h.b16 %v578
    %v616 = vunpack.c.l.b16 %v579
    %v617 = vunpack.c.h.b16 %v579
    %v618 = vunpack.c.l.b16 %v580
    %v619 = vunpack.c.h.b16 %v580
    %v620 = vunpack.c.l.b16 %v581
    %v621 = vunpack.c.h.b16 %v581
    %v622 = vunpack.c.l.b16 %v582
    %v623 = vunpack.c.h.b16 %v582
    %v624 = vunpack.c.l.b16 %v583
    %v625 = vunpack.c.h.b16 %v583
    %v626 = vunpack.c.l.b16 %v584
    %v627 = vunpack.c.h.b16 %v584
    %v628 = vunpack.c.l.b16 %v585
    %v629 = vunpack.c.h.b16 %v585
    %v630 = vunpack.c.l.b16 %v586
    %v631 = vunpack.c.h.b16 %v586
    %v632 = vunpack.c.l.b16 %v587
    %v633 = vunpack.c.h.b16 %v587
    %v634 = vunpack.c.l.b16 %v588
    %v635 = vunpack.c.h.b16 %v588
    %v636 = vunpack.c.l.b16 %v589
    %v637 = vunpack.c.h.b16 %v589
    %v638 = vpack.c.b16 %v606, %v606
    %v639 = vpack.c.b16 %v607, %v607
    %v640 = vpack.c.b16 %v608, %v608
    %v641 = vpack.c.b16 %v609, %v609
    %v642 = vpack.c.b16 %v610, %v610
    %v643 = vpack.c.b16 %v611, %v611
    %v644 = vpack.c.b16 %v612, %v612
    %v645 = vpack.c.b16 %v613, %v613
    %v646 = vpack.c.b16 %v614, %v614
    %v647 = vpack.c.b16 %v615, %v615
    %v648 = vpack.c.b16 %v616, %v616
    %v649 = vpack.c.b16 %v617, %v617
    %v650 = vpack.c.b16 %v618, %v618
    %v651 = vpack.c.b16 %v619, %v619
    %v652 = vpack.c.b16 %v620, %v620
    %v653 = vpack.c.b16 %v621, %v621
    %v654 = vpack.c.b16 %v622, %v622
    %v655 = vpack.c.b16 %v623, %v623
    %v656 = vpack.c.b16 %v624, %v624
    %v657 = vpack.c.b16 %v625, %v625
    %v658 = vpack.c.b16 %v626, %v626
    %v659 = vpack.c.b16 %v627, %v627
    %v660 = vpack.c.b16 %v628, %v628
    %v661 = vpack.c.b16 %v629, %v629
    %v662 = vpack.c.b16 %v630, %v630
    %v663 = vpack.c.b16 %v631, %v631
    %v664 = vpack.c.b16 %v632, %v632
    %v665 = vpack.c.b16 %v633, %v633
    %v666 = vpack.c.b16 %v634, %v634
    %v667 = vpack.c.b16 %v635, %v635
    %v668 = vpack.c.b16 %v636, %v636
    %v669 = vpack.c.b16 %v637, %v637
    %702 = vst [vmem:[%s3] sm:$0xf] %v638
    %703 = vst [vmem:[%s3 + $0x4] sm:$0xf] %v639
    %704 = vst [vmem:[%s3 + $0x8] sm:$0xf] %v640
    %705 = vst [vmem:[%s3 + $0xc] sm:$0xf] %v641
    %706 = vst [vmem:[%s3 + $0x10] sm:$0xf] %v642
    %707 = vst [vmem:[%s3 + $0x14] sm:$0xf] %v643
    %708 = vst [vmem:[%s3 + $0x18] sm:$0xf] %v644
    %709 = vst [vmem:[%s3 + $0x1c] sm:$0xf] %v645
    %710 = vst [vmem:[%s3 + $0x20] sm:$0xf] %v646
    %711 = vst [vmem:[%s3 + $0x24] sm:$0xf] %v647
    %712 = vst [vmem:[%s3 + $0x28] sm:$0xf] %v648
    %713 = vst [vmem:[%s3 + $0x2c] sm:$0xf] %v649
    %714 = vst [vmem:[%s3 + $0x30] sm:$0xf] %v650
    %715 = vst [vmem:[%s3 + $0x34] sm:$0xf] %v651
    %716 = vst [vmem:[%s3 + $0x38] sm:$0xf] %v652
    %717 = vst [vmem:[%s3 + $0x3c] sm:$0xf] %v653
    %718 = vst [vmem:[%s3 + $0x40] sm:$0xf] %v654
    %719 = vst [vmem:[%s3 + $0x44] sm:$0xf] %v655
    %720 = vst [vmem:[%s3 + $0x48] sm:$0xf] %v656
    %721 = vst [vmem:[%s3 + $0x4c] sm:$0xf] %v657
    %722 = vst [vmem:[%s3 + $0x50] sm:$0xf] %v658
    %723 = vst [vmem:[%s3 + $0x54] sm:$0xf] %v659
    %724 = vst [vmem:[%s3 + $0x58] sm:$0xf] %v660
    %725 = vst [vmem:[%s3 + $0x5c] sm:$0xf] %v661
    %726 = vst [vmem:[%s3 + $0x60] sm:$0xf] %v662
    %727 = vst [vmem:[%s3 + $0x64] sm:$0xf] %v663
    %728 = vst [vmem:[%s3 + $0x68] sm:$0xf] %v664
    %729 = vst [vmem:[%s3 + $0x6c] sm:$0xf] %v665
    %730 = vst [vmem:[%s3 + $0x70] sm:$0xf] %v666
    %731 = vst [vmem:[%s3 + $0x74] sm:$0xf] %v667
    %732 = vst [vmem:[%s3 + $0x78] sm:$0xf] %v668
    %733 = vst [vmem:[%s3 + $0x7c] sm:$0xf] %v669
  $region21: #{resnet_feature_extractor.38} parent=0 // pred_fallthru
    _
  // Predicated region
  $region22: #{resnet_feature_extractor.38} parent=0 // pred_check
    _
  $region23: #{resnet_feature_extractor.38} parent=0 // pred_check_branch
    %735 = sbr.rel (0) target = $region25
  $region24: #{resnet_feature_extractor.38} parent=0 // pred_region
    _
  $region25: #{resnet_feature_extractor.38} parent=0 // pred_fallthru
    _
  // Predicated region
  $region26: #{resnet_feature_extractor.38} parent=0 // pred_check
    _
  $region27: #{resnet_feature_extractor.38} parent=0 // pred_check_branch
    %737 = sbr.rel (0) target = $region29
  $region28: #{resnet_feature_extractor.38} parent=0 // pred_region
    _
  $region29: #{resnet_feature_extractor.38} parent=0 // pred_fallthru
    _

// kernel: resnet_feature_extractor.42
$region0: #{resnet_feature_extractor.42}
  #allocation0 [shape = 'u32[]', space=smem, size = 0x4, offset = 0x4, fixed_abs, tag = 'smem constant byte address 0x4 - core index']
  #allocation1 [shape = 'u32[144,128]{1,0:T(1,128)}', space=vmem, size = 0x12000, scoped, tag = 'internal scratch']
  %s0 = inlined_call_operand.vmem [shape: bf16[16,2,4,16], index: 0, kind: input, shape index: {}]
  %s1 = inlined_call_operand.vmem [shape: bf16[16,4,8], index: 1, kind: output, shape index: {}]
  %s2 = sld [smem:[#allocation0]]
  $region14: #{resnet_feature_extractor.42} parent=0
    _
  %s4 = ssub.s32 1, %s2
  %s5 = scalar_select 0, %s4, %s2
  // Predicated region
  $region2: #{resnet_feature_extractor.42} parent=0 // pred_check
    _
  $region3: #{resnet_feature_extractor.42} parent=0 // pred_check_branch
    %7 = sbr.rel (0) target = $region5
  $region4: #{resnet_feature_extractor.42} parent=0 // pred_region
    _
  $region5: #{resnet_feature_extractor.42} parent=0 // pred_fallthru
    _
  %v8 = vld [vmem:[%s0] sm:$0x3]
  %v9 = vld [vmem:[%s0 + $0x2] sm:$0x3]
  %v10 = vld [vmem:[%s0 + $0x4] sm:$0x3]
  %v11 = vld [vmem:[%s0 + $0x6] sm:$0x3]
  %v12 = vld [vmem:[%s0 + $0x8] sm:$0x3]
  %v13 = vld [vmem:[%s0 + $0xa] sm:$0x3]
  %v14 = vld [vmem:[%s0 + $0xc] sm:$0x3]
  %v15 = vld [vmem:[%s0 + $0xe] sm:$0x3]
  %v16 = vld [vmem:[%s0 + $0x10] sm:$0x3]
  %v17 = vld [vmem:[%s0 + $0x12] sm:$0x3]
  %v18 = vld [vmem:[%s0 + $0x14] sm:$0x3]
  %v19 = vld [vmem:[%s0 + $0x16] sm:$0x3]
  %v20 = vld [vmem:[%s0 + $0x18] sm:$0x3]
  %v21 = vld [vmem:[%s0 + $0x1a] sm:$0x3]
  %v22 = vld [vmem:[%s0 + $0x1c] sm:$0x3]
  %v23 = vld [vmem:[%s0 + $0x1e] sm:$0x3]
  %v24 = vld [vmem:[%s0 + $0x20] sm:$0x3]
  %v25 = vld [vmem:[%s0 + $0x22] sm:$0x3]
  %v26 = vld [vmem:[%s0 + $0x24] sm:$0x3]
  %v27 = vld [vmem:[%s0 + $0x26] sm:$0x3]
  %v28 = vld [vmem:[%s0 + $0x28] sm:$0x3]
  %v29 = vld [vmem:[%s0 + $0x2a] sm:$0x3]
  %v30 = vld [vmem:[%s0 + $0x2c] sm:$0x3]
  %v31 = vld [vmem:[%s0 + $0x2e] sm:$0x3]
  %v32 = vld [vmem:[%s0 + $0x30] sm:$0x3]
  %v33 = vld [vmem:[%s0 + $0x32] sm:$0x3]
  %v34 = vld [vmem:[%s0 + $0x34] sm:$0x3]
  %v35 = vld [vmem:[%s0 + $0x36] sm:$0x3]
  %v36 = vld [vmem:[%s0 + $0x38] sm:$0x3]
  %v37 = vld [vmem:[%s0 + $0x3a] sm:$0x3]
  %v38 = vld [vmem:[%s0 + $0x3c] sm:$0x3]
  %v39 = vld [vmem:[%s0 + $0x3e] sm:$0x3]
  %v40 = vmax.bf16 %v8, %v9
  %v41 = vmax.bf16 %v10, %v11
  %v42 = vmax.bf16 %v12, %v13
  %v43 = vmax.bf16 %v14, %v15
  %v44 = vmax.bf16 %v16, %v17
  %v45 = vmax.bf16 %v18, %v19
  %v46 = vmax.bf16 %v20, %v21
  %v47 = vmax.bf16 %v22, %v23
  %v48 = vmax.bf16 %v24, %v25
  %v49 = vmax.bf16 %v26, %v27
  %v50 = vmax.bf16 %v28, %v29
  %v51 = vmax.bf16 %v30, %v31
  %v52 = vmax.bf16 %v32, %v33
  %v53 = vmax.bf16 %v34, %v35
  %v54 = vmax.bf16 %v36, %v37
  %v55 = vmax.bf16 %v38, %v39
  %72 = vrot.lane.b32.xlu0 %v40, 120
  %v73 = vpop.permute.xlu0 %72
  %74 = vrot.lane.b32.xlu0 %v41, 120
  %v75 = vpop.permute.xlu0 %74
  %76 = vrot.lane.b32.xlu0 %v42, 120
  %v77 = vpop.permute.xlu0 %76
  %78 = vrot.lane.b32.xlu0 %v43, 120
  %v79 = vpop.permute.xlu0 %78
  %80 = vrot.lane.b32.xlu0 %v44, 120
  %v81 = vpop.permute.xlu0 %80
  %82 = vrot.lane.b32.xlu0 %v45, 120
  %v83 = vpop.permute.xlu0 %82
  %84 = vrot.lane.b32.xlu0 %v46, 120
  %v85 = vpop.permute.xlu0 %84
  %86 = vrot.lane.b32.xlu0 %v47, 120
  %v87 = vpop.permute.xlu0 %86
  %88 = vrot.lane.b32.xlu0 %v48, 120
  %v89 = vpop.permute.xlu0 %88
  %90 = vrot.lane.b32.xlu0 %v49, 120
  %v91 = vpop.permute.xlu0 %90
  %92 = vrot.lane.b32.xlu0 %v50, 120
  %v93 = vpop.permute.xlu0 %92
  %94 = vrot.lane.b32.xlu0 %v51, 120
  %v95 = vpop.permute.xlu0 %94
  %96 = vrot.lane.b32.xlu0 %v52, 120
  %v97 = vpop.permute.xlu0 %96
  %98 = vrot.lane.b32.xlu0 %v53, 120
  %v99 = vpop.permute.xlu0 %98
  %100 = vrot.lane.b32.xlu0 %v54, 120
  %v101 = vpop.permute.xlu0 %100
  %102 = vrot.lane.b32.xlu0 %v55, 120
  %v103 = vpop.permute.xlu0 %102
  %v120 = vmax.bf16 %v40, %v73
  %v121 = vmax.bf16 %v41, %v75
  %v122 = vmax.bf16 %v42, %v77
  %v123 = vmax.bf16 %v43, %v79
  %v124 = vmax.bf16 %v44, %v81
  %v125 = vmax.bf16 %v45, %v83
  %v126 = vmax.bf16 %v46, %v85
  %v127 = vmax.bf16 %v47, %v87
  %v128 = vmax.bf16 %v48, %v89
  %v129 = vmax.bf16 %v49, %v91
  %v130 = vmax.bf16 %v50, %v93
  %v131 = vmax.bf16 %v51, %v95
  %v132 = vmax.bf16 %v52, %v97
  %v133 = vmax.bf16 %v53, %v99
  %v134 = vmax.bf16 %v54, %v101
  %v135 = vmax.bf16 %v55, %v103
  %vm136 = vcmask 58368
  %137 = vst.msk [vmem:[%s1] sm:$0x3] %vm136, %v120
  %138 = vst.msk [vmem:[%s1 + $0x2] sm:$0x3] %vm136, %v121
  %139 = vst.msk [vmem:[%s1 + $0x4] sm:$0x3] %vm136, %v122
  %140 = vst.msk [vmem:[%s1 + $0x6] sm:$0x3] %vm136, %v123
  %141 = vst.msk [vmem:[%s1 + $0x8] sm:$0x3] %vm136, %v124
  %142 = vst.msk [vmem:[%s1 + $0xa] sm:$0x3] %vm136, %v125
  %143 = vst.msk [vmem:[%s1 + $0xc] sm:$0x3] %vm136, %v126
  %144 = vst.msk [vmem:[%s1 + $0xe] sm:$0x3] %vm136, %v127
  %145 = vst.msk [vmem:[%s1 + $0x10] sm:$0x3] %vm136, %v128
  %146 = vst.msk [vmem:[%s1 + $0x12] sm:$0x3] %vm136, %v129
  %147 = vst.msk [vmem:[%s1 + $0x14] sm:$0x3] %vm136, %v130
  %148 = vst.msk [vmem:[%s1 + $0x16] sm:$0x3] %vm136, %v131
  %149 = vst.msk [vmem:[%s1 + $0x18] sm:$0x3] %vm136, %v132
  %150 = vst.msk [vmem:[%s1 + $0x1a] sm:$0x3] %vm136, %v133
  %151 = vst.msk [vmem:[%s1 + $0x1c] sm:$0x3] %vm136, %v134
  %152 = vst.msk [vmem:[%s1 + $0x1e] sm:$0x3] %vm136, %v135
  // Predicated region
  $region6: #{resnet_feature_extractor.42} parent=0 // pred_check
    _
  $region7: #{resnet_feature_extractor.42} parent=0 // pred_check_branch
    %154 = sbr.rel (0) target = $region9
  $region8: #{resnet_feature_extractor.42} parent=0 // pred_region
    _
  $region9: #{resnet_feature_extractor.42} parent=0 // pred_fallthru
    _
  // Predicated region
  $region10: #{resnet_feature_extractor.42} parent=0 // pred_check
    _
  $region11: #{resnet_feature_extractor.42} parent=0 // pred_check_branch
    %156 = sbr.rel (0) target = $region13
  $region12: #{resnet_feature_extractor.42} parent=0 // pred_region
    _
  $region13: #{resnet_feature_extractor.42} parent=0 // pred_fallthru
    _

// kernel: resnet_feature_extractor.40
$region0: #{resnet_feature_extractor.40}
  #allocation0 [shape = 'u32[]', space=smem, size = 0x4, offset = 0x4, fixed_abs, tag = 'smem constant byte address 0x4 - core index']
  #allocation1 [shape = 'u32[144,128]{1,0:T(1,128)}', space=vmem, size = 0x12000, scoped, tag = 'internal scratch']
  #allocation2 [shape = 'f32[256,128]{1,0:T(8,128)}', space=vmem, size = 0x20000, scoped, tag = 'scratch operand']
  %s0 = inlined_call_operand.vmem [shape: bf16[256,128], index: 0, kind: input, shape index: {}]
  %s1 = inlined_call_operand.vmem [shape: bf16[128,128], index: 1, kind: input, shape index: {}]
  %s2 = inlined_call_operand.vmem [shape: f32[1,128], index: 2, kind: input, shape index: {}]
  %s3 = inlined_call_operand.vmem [shape: bf16[256,128], index: 3, kind: input, shape index: {}]
  %s4 = inlined_call_operand.vmem [shape: bf16[256,128], index: 4, kind: output, shape index: {}]
  %s5 = sld [smem:[#allocation0]]
  $region34: #{resnet_feature_extractor.40} parent=0
    _
  %s7 = ssub.s32 1, %s5
  %s8 = scalar_select 0, %s7, %s5
  // Predicated region
  $region2: #{resnet_feature_extractor.40} parent=0 // pred_check
    _
  $region3: #{resnet_feature_extractor.40} parent=0 // pred_check_branch
    %10 = sbr.rel (0) target = $region5
  $region4: #{resnet_feature_extractor.40} parent=0 // pred_region
    _
  $region5: #{resnet_feature_extractor.40} parent=0 // pred_fallthru
    _
  // Predicated region
  $region6: #{resnet_feature_extractor.40} parent=0 // pred_check
    _
  $region7: #{resnet_feature_extractor.40} parent=0 // pred_check_branch
    %12 = sbr.rel (0) target = $region9
  $region8: #{resnet_feature_extractor.40} parent=0 // pred_region
    _
  $region9: #{resnet_feature_extractor.40} parent=0 // pred_fallthru
    _
  // Predicated region
  $region10: #{resnet_feature_extractor.40} parent=0 // pred_check
    _
  $region11: #{resnet_feature_extractor.40} parent=0 // pred_check_branch
    %14 = sbr.rel (0) target = $region13
  $region12: #{resnet_feature_extractor.40} parent=0 // pred_region
    _
  $region13: #{resnet_feature_extractor.40} parent=0 // pred_fallthru
    _
  // Predicated region
  $region14: #{resnet_feature_extractor.40} parent=0 // pred_check
    _
  $region15: #{resnet_feature_extractor.40} parent=0 // pred_check_branch
    %16 = sbr.rel (0) target = $region17
  $region16: #{resnet_feature_extractor.40} parent=0 // pred_region
    _
  $region17: #{resnet_feature_extractor.40} parent=0 // pred_fallthru
    _
  %p18 = scmp.eq.s32.totalorder 0, 0
  // Predicated region
  $region18: #{resnet_feature_extractor.40} parent=0 // pred_check
    %p19 = pneg %p18
  $region19: #{resnet_feature_extractor.40} parent=0 // pred_check_branch
    %21 = sbr.rel (%p19) target = $region21
  $region20: #{resnet_feature_extractor.40} parent=0 // pred_region
    %22 = vst [vmem:[#allocation2] sm:$0xff] 0.0
    %23 = vst [vmem:[#allocation2 + $0x8] sm:$0xff] 0.0
    %24 = vst [vmem:[#allocation2 + $0x10] sm:$0xff] 0.0
    %25 = vst [vmem:[#allocation2 + $0x18] sm:$0xff] 0.0
    %26 = vst [vmem:[#allocation2 + $0x20] sm:$0xff] 0.0
    %27 = vst [vmem:[#allocation2 + $0x28] sm:$0xff] 0.0
    %28 = vst [vmem:[#allocation2 + $0x30] sm:$0xff] 0.0
    %29 = vst [vmem:[#allocation2 + $0x38] sm:$0xff] 0.0
    %30 = vst [vmem:[#allocation2 + $0x40] sm:$0xff] 0.0
    %31 = vst [vmem:[#allocation2 + $0x48] sm:$0xff] 0.0
    %32 = vst [vmem:[#allocation2 + $0x50] sm:$0xff] 0.0
    %33 = vst [vmem:[#allocation2 + $0x58] sm:$0xff] 0.0
    %34 = vst [vmem:[#allocation2 + $0x60] sm:$0xff] 0.0
    %35 = vst [vmem:[#allocation2 + $0x68] sm:$0xff] 0.0
    %36 = vst [vmem:[#allocation2 + $0x70] sm:$0xff] 0.0
    %37 = vst [vmem:[#allocation2 + $0x78] sm:$0xff] 0.0
    %38 = vst [vmem:[#allocation2 + $0x80] sm:$0xff] 0.0
    %39 = vst [vmem:[#allocation2 + $0x88] sm:$0xff] 0.0
    %40 = vst [vmem:[#allocation2 + $0x90] sm:$0xff] 0.0
    %41 = vst [vmem:[#allocation2 + $0x98] sm:$0xff] 0.0
    %42 = vst [vmem:[#allocation2 + $0xa0] sm:$0xff] 0.0
    %43 = vst [vmem:[#allocation2 + $0xa8] sm:$0xff] 0.0
    %44 = vst [vmem:[#allocation2 + $0xb0] sm:$0xff] 0.0
    %45 = vst [vmem:[#allocation2 + $0xb8] sm:$0xff] 0.0
    %46 = vst [vmem:[#allocation2 + $0xc0] sm:$0xff] 0.0
    %47 = vst [vmem:[#allocation2 + $0xc8] sm:$0xff] 0.0
    %48 = vst [vmem:[#allocation2 + $0xd0] sm:$0xff] 0.0
    %49 = vst [vmem:[#allocation2 + $0xd8] sm:$0xff] 0.0
    %50 = vst [vmem:[#allocation2 + $0xe0] sm:$0xff] 0.0
    %51 = vst [vmem:[#allocation2 + $0xe8] sm:$0xff] 0.0
    %52 = vst [vmem:[#allocation2 + $0xf0] sm:$0xff] 0.0
    %53 = vst [vmem:[#allocation2 + $0xf8] sm:$0xff] 0.0
  $region21: #{resnet_feature_extractor.40} parent=0 // pred_fallthru
    _
  %v54 = vld [vmem:[#allocation2] sm:$0xff]
  %v55 = vld [vmem:[#allocation2 + $0x8] sm:$0xff]
  %v56 = vld [vmem:[#allocation2 + $0x10] sm:$0xff]
  %v57 = vld [vmem:[#allocation2 + $0x18] sm:$0xff]
  %v58 = vld [vmem:[#allocation2 + $0x20] sm:$0xff]
  %v59 = vld [vmem:[#allocation2 + $0x28] sm:$0xff]
  %v60 = vld [vmem:[#allocation2 + $0x30] sm:$0xff]
  %v61 = vld [vmem:[#allocation2 + $0x38] sm:$0xff]
  %v62 = vld [vmem:[#allocation2 + $0x40] sm:$0xff]
  %v63 = vld [vmem:[#allocation2 + $0x48] sm:$0xff]
  %v64 = vld [vmem:[#allocation2 + $0x50] sm:$0xff]
  %v65 = vld [vmem:[#allocation2 + $0x58] sm:$0xff]
  %v66 = vld [vmem:[#allocation2 + $0x60] sm:$0xff]
  %v67 = vld [vmem:[#allocation2 + $0x68] sm:$0xff]
  %v68 = vld [vmem:[#allocation2 + $0x70] sm:$0xff]
  %v69 = vld [vmem:[#allocation2 + $0x78] sm:$0xff]
  %v70 = vld [vmem:[#allocation2 + $0x80] sm:$0xff]
  %v71 = vld [vmem:[#allocation2 + $0x88] sm:$0xff]
  %v72 = vld [vmem:[#allocation2 + $0x90] sm:$0xff]
  %v73 = vld [vmem:[#allocation2 + $0x98] sm:$0xff]
  %v74 = vld [vmem:[#allocation2 + $0xa0] sm:$0xff]
  %v75 = vld [vmem:[#allocation2 + $0xa8] sm:$0xff]
  %v76 = vld [vmem:[#allocation2 + $0xb0] sm:$0xff]
  %v77 = vld [vmem:[#allocation2 + $0xb8] sm:$0xff]
  %v78 = vld [vmem:[#allocation2 + $0xc0] sm:$0xff]
  %v79 = vld [vmem:[#allocation2 + $0xc8] sm:$0xff]
  %v80 = vld [vmem:[#allocation2 + $0xd0] sm:$0xff]
  %v81 = vld [vmem:[#allocation2 + $0xd8] sm:$0xff]
  %v82 = vld [vmem:[#allocation2 + $0xe0] sm:$0xff]
  %v83 = vld [vmem:[#allocation2 + $0xe8] sm:$0xff]
  %v84 = vld [vmem:[#allocation2 + $0xf0] sm:$0xff]
  %v85 = vld [vmem:[#allocation2 + $0xf8] sm:$0xff]
  %v86 = vld [vmem:[%s0] sm:$0xf]
  %v87 = vld [vmem:[%s0 + $0x4] sm:$0xf]
  %v88 = vld [vmem:[%s0 + $0x8] sm:$0xf]
  %v89 = vld [vmem:[%s0 + $0xc] sm:$0xf]
  %v90 = vld [vmem:[%s0 + $0x10] sm:$0xf]
  %v91 = vld [vmem:[%s0 + $0x14] sm:$0xf]
  %v92 = vld [vmem:[%s0 + $0x18] sm:$0xf]
  %v93 = vld [vmem:[%s0 + $0x1c] sm:$0xf]
  %v94 = vld [vmem:[%s0 + $0x20] sm:$0xf]
  %v95 = vld [vmem:[%s0 + $0x24] sm:$0xf]
  %v96 = vld [vmem:[%s0 + $0x28] sm:$0xf]
  %v97 = vld [vmem:[%s0 + $0x2c] sm:$0xf]
  %v98 = vld [vmem:[%s0 + $0x30] sm:$0xf]
  %v99 = vld [vmem:[%s0 + $0x34] sm:$0xf]
  %v100 = vld [vmem:[%s0 + $0x38] sm:$0xf]
  %v101 = vld [vmem:[%s0 + $0x3c] sm:$0xf]
  %v102 = vld [vmem:[%s0 + $0x40] sm:$0xf]
  %v103 = vld [vmem:[%s0 + $0x44] sm:$0xf]
  %v104 = vld [vmem:[%s0 + $0x48] sm:$0xf]
  %v105 = vld [vmem:[%s0 + $0x4c] sm:$0xf]
  %v106 = vld [vmem:[%s0 + $0x50] sm:$0xf]
  %v107 = vld [vmem:[%s0 + $0x54] sm:$0xf]
  %v108 = vld [vmem:[%s0 + $0x58] sm:$0xf]
  %v109 = vld [vmem:[%s0 + $0x5c] sm:$0xf]
  %v110 = vld [vmem:[%s0 + $0x60] sm:$0xf]
  %v111 = vld [vmem:[%s0 + $0x64] sm:$0xf]
  %v112 = vld [vmem:[%s0 + $0x68] sm:$0xf]
  %v113 = vld [vmem:[%s0 + $0x6c] sm:$0xf]
  %v114 = vld [vmem:[%s0 + $0x70] sm:$0xf]
  %v115 = vld [vmem:[%s0 + $0x74] sm:$0xf]
  %v116 = vld [vmem:[%s0 + $0x78] sm:$0xf]
  %v117 = vld [vmem:[%s0 + $0x7c] sm:$0xf]
  %v118 = vld [vmem:[%s1] sm:$0xf]
  %v119 = vld [vmem:[%s1 + $0x4] sm:$0xf]
  %v120 = vld [vmem:[%s1 + $0x8] sm:$0xf]
  %v121 = vld [vmem:[%s1 + $0xc] sm:$0xf]
  %v122 = vld [vmem:[%s1 + $0x10] sm:$0xf]
  %v123 = vld [vmem:[%s1 + $0x14] sm:$0xf]
  %v124 = vld [vmem:[%s1 + $0x18] sm:$0xf]
  %v125 = vld [vmem:[%s1 + $0x1c] sm:$0xf]
  %v126 = vld [vmem:[%s1 + $0x20] sm:$0xf]
  %v127 = vld [vmem:[%s1 + $0x24] sm:$0xf]
  %v128 = vld [vmem:[%s1 + $0x28] sm:$0xf]
  %v129 = vld [vmem:[%s1 + $0x2c] sm:$0xf]
  %v130 = vld [vmem:[%s1 + $0x30] sm:$0xf]
  %v131 = vld [vmem:[%s1 + $0x34] sm:$0xf]
  %v132 = vld [vmem:[%s1 + $0x38] sm:$0xf]
  %v133 = vld [vmem:[%s1 + $0x3c] sm:$0xf]
  %v166 = vunpack.c.l.b16 %v86
  %v167 = vunpack.c.l.b16 %v87
  %v168 = vunpack.c.l.b16 %v88
  %v169 = vunpack.c.l.b16 %v89
  %v170 = vunpack.c.l.b16 %v90
  %v171 = vunpack.c.l.b16 %v91
  %v172 = vunpack.c.l.b16 %v92
  %v173 = vunpack.c.l.b16 %v93
  %v174 = vunpack.c.l.b16 %v94
  %v175 = vunpack.c.l.b16 %v95
  %v176 = vunpack.c.l.b16 %v96
  %v177 = vunpack.c.l.b16 %v97
  %v178 = vunpack.c.l.b16 %v98
  %v179 = vunpack.c.l.b16 %v99
  %v180 = vunpack.c.l.b16 %v100
  %v181 = vunpack.c.l.b16 %v101
  %v182 = vunpack.c.l.b16 %v102
  %v183 = vunpack.c.l.b16 %v103
  %v184 = vunpack.c.l.b16 %v104
  %v185 = vunpack.c.l.b16 %v105
  %v186 = vunpack.c.l.b16 %v106
  %v187 = vunpack.c.l.b16 %v107
  %v188 = vunpack.c.l.b16 %v108
  %v189 = vunpack.c.l.b16 %v109
  %v190 = vunpack.c.l.b16 %v110
  %v191 = vunpack.c.l.b16 %v111
  %v192 = vunpack.c.l.b16 %v112
  %v193 = vunpack.c.l.b16 %v113
  %v194 = vunpack.c.l.b16 %v114
  %v195 = vunpack.c.l.b16 %v115
  %v196 = vunpack.c.l.b16 %v116
  %v197 = vunpack.c.l.b16 %v117
  %v198 = vpack.c.b16 %v167, %v166
  %v199 = vpack.c.b16 %v169, %v168
  %v200 = vpack.c.b16 %v171, %v170
  %v201 = vpack.c.b16 %v173, %v172
  %v202 = vpack.c.b16 %v175, %v174
  %v203 = vpack.c.b16 %v177, %v176
  %v204 = vpack.c.b16 %v179, %v178
  %v205 = vpack.c.b16 %v181, %v180
  %v206 = vpack.c.b16 %v183, %v182
  %v207 = vpack.c.b16 %v185, %v184
  %v208 = vpack.c.b16 %v187, %v186
  %v209 = vpack.c.b16 %v189, %v188
  %v210 = vpack.c.b16 %v191, %v190
  %v211 = vpack.c.b16 %v193, %v192
  %v212 = vpack.c.b16 %v195, %v194
  %v213 = vpack.c.b16 %v197, %v196
  %v246 = vunpack.c.l.b16 %v118
  %v247 = vunpack.c.l.b16 %v119
  %v248 = vunpack.c.l.b16 %v120
  %v249 = vunpack.c.l.b16 %v121
  %v250 = vunpack.c.l.b16 %v122
  %v251 = vunpack.c.l.b16 %v123
  %v252 = vunpack.c.l.b16 %v124
  %v253 = vunpack.c.l.b16 %v125
  %v254 = vunpack.c.l.b16 %v126
  %v255 = vunpack.c.l.b16 %v127
  %v256 = vunpack.c.l.b16 %v128
  %v257 = vunpack.c.l.b16 %v129
  %v258 = vunpack.c.l.b16 %v130
  %v259 = vunpack.c.l.b16 %v131
  %v260 = vunpack.c.l.b16 %v132
  %v261 = vunpack.c.l.b16 %v133
  %v262 = vpack.c.b16 %v247, %v246
  %v263 = vpack.c.b16 %v249, %v248
  %v264 = vpack.c.b16 %v251, %v250
  %v265 = vpack.c.b16 %v253, %v252
  %v266 = vpack.c.b16 %v255, %v254
  %v267 = vpack.c.b16 %v257, %v256
  %v268 = vpack.c.b16 %v259, %v258
  %v269 = vpack.c.b16 %v261, %v260
  %278 = vmatprep.subr.bf16.mxu0 0
  %279 = vmatpush1.bf16.msra.mxu0 %v262
  %280 = vmatprep.subr.bf16.mxu0 0
  %281 = vmatpush1.bf16.msra.mxu0 %v263
  %282 = vmatprep.subr.bf16.mxu0 0
  %283 = vmatpush1.bf16.msra.mxu0 %v264
  %284 = vmatprep.subr.bf16.mxu0 0
  %285 = vmatpush1.bf16.msra.mxu0 %v265
  %286 = vmatprep.subr.bf16.mxu0 0
  %287 = vmatpush1.bf16.msra.mxu0 %v266
  %288 = vmatprep.subr.bf16.mxu0 0
  %289 = vmatpush1.bf16.msra.mxu0 %v267
  %290 = vmatprep.subr.bf16.mxu0 0
  %291 = vmatpush1.bf16.msra.mxu0 %v268
  %292 = vmatprep.subr.bf16.mxu0 0
  %293 = vmatpush1.bf16.msra.mxu0 %v269
  %294 = vmatprep.subr.bf16.mxu0 0
  %295 = vmatpush1.bf16.msra.mxu0 0
  %296 = vmatprep.subr.bf16.mxu0 0
  %297 = vmatpush1.bf16.msra.mxu0 0
  %298 = vmatprep.subr.bf16.mxu0 0
  %299 = vmatpush1.bf16.msra.mxu0 0
  %300 = vmatprep.subr.bf16.mxu0 0
  %301 = vmatpush1.bf16.msra.mxu0 0
  %302 = vmatprep.subr.bf16.mxu0 0
  %303 = vmatpush1.bf16.msra.mxu0 0
  %304 = vmatprep.subr.bf16.mxu0 0
  %305 = vmatpush1.bf16.msra.mxu0 0
  %306 = vmatprep.subr.bf16.mxu0 0
  %307 = vmatpush1.bf16.msra.mxu0 0
  %308 = vmatprep.subr.bf16.mxu0 0
  %309 = vmatpush1.bf16.msra.mxu0 0
  %310 = vmatprep.mubr.bf16.mxu0 0
  %311 = vmatmul.mubr.bf16.gmra.mrb[0].mxu0 %v198
  %v312 = vpop.f32.mrb[0].mxu0
  %v313 = vadd.f32 0.0, %v312
  %v314 = vpop.f32.mrb[0].mxu0
  %v315 = vpop.f32.mrb[0].mxu0
  %v316 = vadd.f32 0.0, %v315
  %v317 = vpop.f32.mrb[0].mxu0
  %318 = vmatprep.mubr.bf16.mxu0 0
  %319 = vmatmul.mubr.bf16.gmra.mrb[0].mxu0 %v199
  %v320 = vpop.f32.mrb[0].mxu0
  %v321 = vadd.f32 0.0, %v320
  %v322 = vpop.f32.mrb[0].mxu0
  %v323 = vpop.f32.mrb[0].mxu0
  %v324 = vadd.f32 0.0, %v323
  %v325 = vpop.f32.mrb[0].mxu0
  %326 = vmatprep.mubr.bf16.mxu0 0
  %327 = vmatmul.mubr.bf16.gmra.mrb[0].mxu0 %v200
  %v328 = vpop.f32.mrb[0].mxu0
  %v329 = vadd.f32 0.0, %v328
  %v330 = vpop.f32.mrb[0].mxu0
  %v331 = vpop.f32.mrb[0].mxu0
  %v332 = vadd.f32 0.0, %v331
  %v333 = vpop.f32.mrb[0].mxu0
  %334 = vmatprep.mubr.bf16.mxu0 0
  %335 = vmatmul.mubr.bf16.gmra.mrb[0].mxu0 %v201
  %v336 = vpop.f32.mrb[0].mxu0
  %v337 = vadd.f32 0.0, %v336
  %v338 = vpop.f32.mrb[0].mxu0
  %v339 = vpop.f32.mrb[0].mxu0
  %v340 = vadd.f32 0.0, %v339
  %v341 = vpop.f32.mrb[0].mxu0
  %342 = vmatprep.mubr.bf16.mxu0 0
  %343 = vmatmul.mubr.bf16.gmra.mrb[0].mxu0 %v202
  %v344 = vpop.f32.mrb[0].mxu0
  %v345 = vadd.f32 0.0, %v344
  %v346 = vpop.f32.mrb[0].mxu0
  %v347 = vpop.f32.mrb[0].mxu0
  %v348 = vadd.f32 0.0, %v347
  %v349 = vpop.f32.mrb[0].mxu0
  %350 = vmatprep.mubr.bf16.mxu0 0
  %351 = vmatmul.mubr.bf16.gmra.mrb[0].mxu0 %v203
  %v352 = vpop.f32.mrb[0].mxu0
  %v353 = vadd.f32 0.0, %v352
  %v354 = vpop.f32.mrb[0].mxu0
  %v355 = vpop.f32.mrb[0].mxu0
  %v356 = vadd.f32 0.0, %v355
  %v357 = vpop.f32.mrb[0].mxu0
  %358 = vmatprep.mubr.bf16.mxu0 0
  %359 = vmatmul.mubr.bf16.gmra.mrb[0].mxu0 %v204
  %v360 = vpop.f32.mrb[0].mxu0
  %v361 = vadd.f32 0.0, %v360
  %v362 = vpop.f32.mrb[0].mxu0
  %v363 = vpop.f32.mrb[0].mxu0
  %v364 = vadd.f32 0.0, %v363
  %v365 = vpop.f32.mrb[0].mxu0
  %366 = vmatprep.mubr.bf16.mxu0 0
  %367 = vmatmul.mubr.bf16.gmra.mrb[0].mxu0 %v205
  %v368 = vpop.f32.mrb[0].mxu0
  %v369 = vadd.f32 0.0, %v368
  %v370 = vpop.f32.mrb[0].mxu0
  %v371 = vpop.f32.mrb[0].mxu0
  %v372 = vadd.f32 0.0, %v371
  %v373 = vpop.f32.mrb[0].mxu0
  %374 = vmatprep.mubr.bf16.mxu0 0
  %375 = vmatmul.mubr.bf16.gmra.mrb[0].mxu0 %v206
  %v376 = vpop.f32.mrb[0].mxu0
  %v377 = vadd.f32 0.0, %v376
  %v378 = vpop.f32.mrb[0].mxu0
  %v379 = vpop.f32.mrb[0].mxu0
  %v380 = vadd.f32 0.0, %v379
  %v381 = vpop.f32.mrb[0].mxu0
  %382 = vmatprep.mubr.bf16.mxu0 0
  %383 = vmatmul.mubr.bf16.gmra.mrb[0].mxu0 %v207
  %v384 = vpop.f32.mrb[0].mxu0
  %v385 = vadd.f32 0.0, %v384
  %v386 = vpop.f32.mrb[0].mxu0
  %v387 = vpop.f32.mrb[0].mxu0
  %v388 = vadd.f32 0.0, %v387
  %v389 = vpop.f32.mrb[0].mxu0
  %390 = vmatprep.mubr.bf16.mxu0 0
  %391 = vmatmul.mubr.bf16.gmra.mrb[0].mxu0 %v208
  %v392 = vpop.f32.mrb[0].mxu0
  %v393 = vadd.f32 0.0, %v392
  %v394 = vpop.f32.mrb[0].mxu0
  %v395 = vpop.f32.mrb[0].mxu0
  %v396 = vadd.f32 0.0, %v395
  %v397 = vpop.f32.mrb[0].mxu0
  %398 = vmatprep.mubr.bf16.mxu0 0
  %399 = vmatmul.mubr.bf16.gmra.mrb[0].mxu0 %v209
  %v400 = vpop.f32.mrb[0].mxu0
  %v401 = vadd.f32 0.0, %v400
  %v402 = vpop.f32.mrb[0].mxu0
  %v403 = vpop.f32.mrb[0].mxu0
  %v404 = vadd.f32 0.0, %v403
  %v405 = vpop.f32.mrb[0].mxu0
  %406 = vmatprep.mubr.bf16.mxu0 0
  %407 = vmatmul.mubr.bf16.gmra.mrb[0].mxu0 %v210
  %v408 = vpop.f32.mrb[0].mxu0
  %v409 = vadd.f32 0.0, %v408
  %v410 = vpop.f32.mrb[0].mxu0
  %v411 = vpop.f32.mrb[0].mxu0
  %v412 = vadd.f32 0.0, %v411
  %v413 = vpop.f32.mrb[0].mxu0
  %414 = vmatprep.mubr.bf16.mxu0 0
  %415 = vmatmul.mubr.bf16.gmra.mrb[0].mxu0 %v211
  %v416 = vpop.f32.mrb[0].mxu0
  %v417 = vadd.f32 0.0, %v416
  %v418 = vpop.f32.mrb[0].mxu0
  %v419 = vpop.f32.mrb[0].mxu0
  %v420 = vadd.f32 0.0, %v419
  %v421 = vpop.f32.mrb[0].mxu0
  %422 = vmatprep.mubr.bf16.mxu0 0
  %423 = vmatmul.mubr.bf16.gmra.mrb[0].mxu0 %v212
  %v424 = vpop.f32.mrb[0].mxu0
  %v425 = vadd.f32 0.0, %v424
  %v426 = vpop.f32.mrb[0].mxu0
  %v427 = vpop.f32.mrb[0].mxu0
  %v428 = vadd.f32 0.0, %v427
  %v429 = vpop.f32.mrb[0].mxu0
  %430 = vmatprep.mubr.bf16.mxu0 0
  %431 = vmatmul.mubr.bf16.gmra.mrb[0].mxu0 %v213
  %v432 = vpop.f32.mrb[0].mxu0
  %v433 = vadd.f32 0.0, %v432
  %v434 = vpop.f32.mrb[0].mxu0
  %v435 = vpop.f32.mrb[0].mxu0
  %v436 = vadd.f32 0.0, %v435
  %v437 = vpop.f32.mrb[0].mxu0
  %438 = vdwg.mxu0
  %v439 = vadd.f32 %v54, %v313
  %v440 = vadd.f32 %v55, %v316
  %v441 = vadd.f32 %v56, %v321
  %v442 = vadd.f32 %v57, %v324
  %v443 = vadd.f32 %v58, %v329
  %v444 = vadd.f32 %v59, %v332
  %v445 = vadd.f32 %v60, %v337
  %v446 = vadd.f32 %v61, %v340
  %v447 = vadd.f32 %v62, %v345
  %v448 = vadd.f32 %v63, %v348
  %v449 = vadd.f32 %v64, %v353
  %v450 = vadd.f32 %v65, %v356
  %v451 = vadd.f32 %v66, %v361
  %v452 = vadd.f32 %v67, %v364
  %v453 = vadd.f32 %v68, %v369
  %v454 = vadd.f32 %v69, %v372
  %v455 = vadd.f32 %v70, %v377
  %v456 = vadd.f32 %v71, %v380
  %v457 = vadd.f32 %v72, %v385
  %v458 = vadd.f32 %v73, %v388
  %v459 = vadd.f32 %v74, %v393
  %v460 = vadd.f32 %v75, %v396
  %v461 = vadd.f32 %v76, %v401
  %v462 = vadd.f32 %v77, %v404
  %v463 = vadd.f32 %v78, %v409
  %v464 = vadd.f32 %v79, %v412
  %v465 = vadd.f32 %v80, %v417
  %v466 = vadd.f32 %v81, %v420
  %v467 = vadd.f32 %v82, %v425
  %v468 = vadd.f32 %v83, %v428
  %v469 = vadd.f32 %v84, %v433
  %v470 = vadd.f32 %v85, %v436
  %471 = vst [vmem:[#allocation2] sm:$0xff] %v439
  %472 = vst [vmem:[#allocation2 + $0x8] sm:$0xff] %v440
  %473 = vst [vmem:[#allocation2 + $0x10] sm:$0xff] %v441
  %474 = vst [vmem:[#allocation2 + $0x18] sm:$0xff] %v442
  %475 = vst [vmem:[#allocation2 + $0x20] sm:$0xff] %v443
  %476 = vst [vmem:[#allocation2 + $0x28] sm:$0xff] %v444
  %477 = vst [vmem:[#allocation2 + $0x30] sm:$0xff] %v445
  %478 = vst [vmem:[#allocation2 + $0x38] sm:$0xff] %v446
  %479 = vst [vmem:[#allocation2 + $0x40] sm:$0xff] %v447
  %480 = vst [vmem:[#allocation2 + $0x48] sm:$0xff] %v448
  %481 = vst [vmem:[#allocation2 + $0x50] sm:$0xff] %v449
  %482 = vst [vmem:[#allocation2 + $0x58] sm:$0xff] %v450
  %483 = vst [vmem:[#allocation2 + $0x60] sm:$0xff] %v451
  %484 = vst [vmem:[#allocation2 + $0x68] sm:$0xff] %v452
  %485 = vst [vmem:[#allocation2 + $0x70] sm:$0xff] %v453
  %486 = vst [vmem:[#allocation2 + $0x78] sm:$0xff] %v454
  %487 = vst [vmem:[#allocation2 + $0x80] sm:$0xff] %v455
  %488 = vst [vmem:[#allocation2 + $0x88] sm:$0xff] %v456
  %489 = vst [vmem:[#allocation2 + $0x90] sm:$0xff] %v457
  %490 = vst [vmem:[#allocation2 + $0x98] sm:$0xff] %v458
  %491 = vst [vmem:[#allocation2 + $0xa0] sm:$0xff] %v459
  %492 = vst [vmem:[#allocation2 + $0xa8] sm:$0xff] %v460
  %493 = vst [vmem:[#allocation2 + $0xb0] sm:$0xff] %v461
  %494 = vst [vmem:[#allocation2 + $0xb8] sm:$0xff] %v462
  %495 = vst [vmem:[#allocation2 + $0xc0] sm:$0xff] %v463
  %496 = vst [vmem:[#allocation2 + $0xc8] sm:$0xff] %v464
  %497 = vst [vmem:[#allocation2 + $0xd0] sm:$0xff] %v465
  %498 = vst [vmem:[#allocation2 + $0xd8] sm:$0xff] %v466
  %499 = vst [vmem:[#allocation2 + $0xe0] sm:$0xff] %v467
  %500 = vst [vmem:[#allocation2 + $0xe8] sm:$0xff] %v468
  %501 = vst [vmem:[#allocation2 + $0xf0] sm:$0xff] %v469
  %502 = vst [vmem:[#allocation2 + $0xf8] sm:$0xff] %v470
  // Predicated region
  $region22: #{resnet_feature_extractor.40} parent=0 // pred_check
    %p503 = pneg %p18
  $region23: #{resnet_feature_extractor.40} parent=0 // pred_check_branch
    %505 = sbr.rel (%p503) target = $region25
  $region24: #{resnet_feature_extractor.40} parent=0 // pred_region
    %v506 = vld [vmem:[#allocation2] sm:$0xff]
    %v507 = vld [vmem:[#allocation2 + $0x8] sm:$0xff]
    %v508 = vld [vmem:[#allocation2 + $0x10] sm:$0xff]
    %v509 = vld [vmem:[#allocation2 + $0x18] sm:$0xff]
    %v510 = vld [vmem:[#allocation2 + $0x20] sm:$0xff]
    %v511 = vld [vmem:[#allocation2 + $0x28] sm:$0xff]
    %v512 = vld [vmem:[#allocation2 + $0x30] sm:$0xff]
    %v513 = vld [vmem:[#allocation2 + $0x38] sm:$0xff]
    %v514 = vld [vmem:[#allocation2 + $0x40] sm:$0xff]
    %v515 = vld [vmem:[#allocation2 + $0x48] sm:$0xff]
    %v516 = vld [vmem:[#allocation2 + $0x50] sm:$0xff]
    %v517 = vld [vmem:[#allocation2 + $0x58] sm:$0xff]
    %v518 = vld [vmem:[#allocation2 + $0x60] sm:$0xff]
    %v519 = vld [vmem:[#allocation2 + $0x68] sm:$0xff]
    %v520 = vld [vmem:[#allocation2 + $0x70] sm:$0xff]
    %v521 = vld [vmem:[#allocation2 + $0x78] sm:$0xff]
    %v522 = vld [vmem:[#allocation2 + $0x80] sm:$0xff]
    %v523 = vld [vmem:[#allocation2 + $0x88] sm:$0xff]
    %v524 = vld [vmem:[#allocation2 + $0x90] sm:$0xff]
    %v525 = vld [vmem:[#allocation2 + $0x98] sm:$0xff]
    %v526 = vld [vmem:[#allocation2 + $0xa0] sm:$0xff]
    %v527 = vld [vmem:[#allocation2 + $0xa8] sm:$0xff]
    %v528 = vld [vmem:[#allocation2 + $0xb0] sm:$0xff]
    %v529 = vld [vmem:[#allocation2 + $0xb8] sm:$0xff]
    %v530 = vld [vmem:[#allocation2 + $0xc0] sm:$0xff]
    %v531 = vld [vmem:[#allocation2 + $0xc8] sm:$0xff]
    %v532 = vld [vmem:[#allocation2 + $0xd0] sm:$0xff]
    %v533 = vld [vmem:[#allocation2 + $0xd8] sm:$0xff]
    %v534 = vld [vmem:[#allocation2 + $0xe0] sm:$0xff]
    %v535 = vld [vmem:[#allocation2 + $0xe8] sm:$0xff]
    %v536 = vld [vmem:[#allocation2 + $0xf0] sm:$0xff]
    %v537 = vld [vmem:[#allocation2 + $0xf8] sm:$0xff]
    %v538 = vld [vmem:[%s2] sm:$0x1]
    %v540 = vlaneseq
    %v541 = vshrl.u32 %v540, 7
    %v542 = vsub.s32 0, %v541
    %v543 = vrot.slane %v538, %v542
    %v545 = vadd.f32 %v506, %v543
    %v546 = vadd.f32 %v507, %v543
    %v547 = vadd.f32 %v508, %v543
    %v548 = vadd.f32 %v509, %v543
    %v549 = vadd.f32 %v510, %v543
    %v550 = vadd.f32 %v511, %v543
    %v551 = vadd.f32 %v512, %v543
    %v552 = vadd.f32 %v513, %v543
    %v553 = vadd.f32 %v514, %v543
    %v554 = vadd.f32 %v515, %v543
    %v555 = vadd.f32 %v516, %v543
    %v556 = vadd.f32 %v517, %v543
    %v557 = vadd.f32 %v518, %v543
    %v558 = vadd.f32 %v519, %v543
    %v559 = vadd.f32 %v520, %v543
    %v560 = vadd.f32 %v521, %v543
    %v561 = vadd.f32 %v522, %v543
    %v562 = vadd.f32 %v523, %v543
    %v563 = vadd.f32 %v524, %v543
    %v564 = vadd.f32 %v525, %v543
    %v565 = vadd.f32 %v526, %v543
    %v566 = vadd.f32 %v527, %v543
    %v567 = vadd.f32 %v528, %v543
    %v568 = vadd.f32 %v529, %v543
    %v569 = vadd.f32 %v530, %v543
    %v570 = vadd.f32 %v531, %v543
    %v571 = vadd.f32 %v532, %v543
    %v572 = vadd.f32 %v533, %v543
    %v573 = vadd.f32 %v534, %v543
    %v574 = vadd.f32 %v535, %v543
    %v575 = vadd.f32 %v536, %v543
    %v576 = vadd.f32 %v537, %v543
    %v577 = vld [vmem:[%s3] sm:$0xf]
    %v578 = vld [vmem:[%s3 + $0x4] sm:$0xf]
    %v579 = vld [vmem:[%s3 + $0x8] sm:$0xf]
    %v580 = vld [vmem:[%s3 + $0xc] sm:$0xf]
    %v581 = vld [vmem:[%s3 + $0x10] sm:$0xf]
    %v582 = vld [vmem:[%s3 + $0x14] sm:$0xf]
    %v583 = vld [vmem:[%s3 + $0x18] sm:$0xf]
    %v584 = vld [vmem:[%s3 + $0x1c] sm:$0xf]
    %v585 = vld [vmem:[%s3 + $0x20] sm:$0xf]
    %v586 = vld [vmem:[%s3 + $0x24] sm:$0xf]
    %v587 = vld [vmem:[%s3 + $0x28] sm:$0xf]
    %v588 = vld [vmem:[%s3 + $0x2c] sm:$0xf]
    %v589 = vld [vmem:[%s3 + $0x30] sm:$0xf]
    %v590 = vld [vmem:[%s3 + $0x34] sm:$0xf]
    %v591 = vld [vmem:[%s3 + $0x38] sm:$0xf]
    %v592 = vld [vmem:[%s3 + $0x3c] sm:$0xf]
    %v593 = vld [vmem:[%s3 + $0x40] sm:$0xf]
    %v594 = vld [vmem:[%s3 + $0x44] sm:$0xf]
    %v595 = vld [vmem:[%s3 + $0x48] sm:$0xf]
    %v596 = vld [vmem:[%s3 + $0x4c] sm:$0xf]
    %v597 = vld [vmem:[%s3 + $0x50] sm:$0xf]
    %v598 = vld [vmem:[%s3 + $0x54] sm:$0xf]
    %v599 = vld [vmem:[%s3 + $0x58] sm:$0xf]
    %v600 = vld [vmem:[%s3 + $0x5c] sm:$0xf]
    %v601 = vld [vmem:[%s3 + $0x60] sm:$0xf]
    %v602 = vld [vmem:[%s3 + $0x64] sm:$0xf]
    %v603 = vld [vmem:[%s3 + $0x68] sm:$0xf]
    %v604 = vld [vmem:[%s3 + $0x6c] sm:$0xf]
    %v605 = vld [vmem:[%s3 + $0x70] sm:$0xf]
    %v606 = vld [vmem:[%s3 + $0x74] sm:$0xf]
    %v607 = vld [vmem:[%s3 + $0x78] sm:$0xf]
    %v608 = vld [vmem:[%s3 + $0x7c] sm:$0xf]
    %v609 = vunpack.c.l.bf16 %v577
    %v610 = vunpack.c.l.bf16 %v578
    %v611 = vunpack.c.l.bf16 %v579
    %v612 = vunpack.c.l.bf16 %v580
    %v613 = vunpack.c.l.bf16 %v581
    %v614 = vunpack.c.l.bf16 %v582
    %v615 = vunpack.c.l.bf16 %v583
    %v616 = vunpack.c.l.bf16 %v584
    %v617 = vunpack.c.l.bf16 %v585
    %v618 = vunpack.c.l.bf16 %v586
    %v619 = vunpack.c.l.bf16 %v587
    %v620 = vunpack.c.l.bf16 %v588
    %v621 = vunpack.c.l.bf16 %v589
    %v622 = vunpack.c.l.bf16 %v590
    %v623 = vunpack.c.l.bf16 %v591
    %v624 = vunpack.c.l.bf16 %v592
    %v625 = vunpack.c.l.bf16 %v593
    %v626 = vunpack.c.l.bf16 %v594
    %v627 = vunpack.c.l.bf16 %v595
    %v628 = vunpack.c.l.bf16 %v596
    %v629 = vunpack.c.l.bf16 %v597
    %v630 = vunpack.c.l.bf16 %v598
    %v631 = vunpack.c.l.bf16 %v599
    %v632 = vunpack.c.l.bf16 %v600
    %v633 = vunpack.c.l.bf16 %v601
    %v634 = vunpack.c.l.bf16 %v602
    %v635 = vunpack.c.l.bf16 %v603
    %v636 = vunpack.c.l.bf16 %v604
    %v637 = vunpack.c.l.bf16 %v605
    %v638 = vunpack.c.l.bf16 %v606
    %v639 = vunpack.c.l.bf16 %v607
    %v640 = vunpack.c.l.bf16 %v608
    %v641 = vadd.f32 %v545, %v609
    %v642 = vadd.f32 %v546, %v610
    %v643 = vadd.f32 %v547, %v611
    %v644 = vadd.f32 %v548, %v612
    %v645 = vadd.f32 %v549, %v613
    %v646 = vadd.f32 %v550, %v614
    %v647 = vadd.f32 %v551, %v615
    %v648 = vadd.f32 %v552, %v616
    %v649 = vadd.f32 %v553, %v617
    %v650 = vadd.f32 %v554, %v618
    %v651 = vadd.f32 %v555, %v619
    %v652 = vadd.f32 %v556, %v620
    %v653 = vadd.f32 %v557, %v621
    %v654 = vadd.f32 %v558, %v622
    %v655 = vadd.f32 %v559, %v623
    %v656 = vadd.f32 %v560, %v624
    %v657 = vadd.f32 %v561, %v625
    %v658 = vadd.f32 %v562, %v626
    %v659 = vadd.f32 %v563, %v627
    %v660 = vadd.f32 %v564, %v628
    %v661 = vadd.f32 %v565, %v629
    %v662 = vadd.f32 %v566, %v630
    %v663 = vadd.f32 %v567, %v631
    %v664 = vadd.f32 %v568, %v632
    %v665 = vadd.f32 %v569, %v633
    %v666 = vadd.f32 %v570, %v634
    %v667 = vadd.f32 %v571, %v635
    %v668 = vadd.f32 %v572, %v636
    %v669 = vadd.f32 %v573, %v637
    %v670 = vadd.f32 %v574, %v638
    %v671 = vadd.f32 %v575, %v639
    %v672 = vadd.f32 %v576, %v640
    %v673 = vmax.f32 %v641, 0.0
    %v674 = vmax.f32 %v642, 0.0
    %v675 = vmax.f32 %v643, 0.0
    %v676 = vmax.f32 %v644, 0.0
    %v677 = vmax.f32 %v645, 0.0
    %v678 = vmax.f32 %v646, 0.0
    %v679 = vmax.f32 %v647, 0.0
    %v680 = vmax.f32 %v648, 0.0
    %v681 = vmax.f32 %v649, 0.0
    %v682 = vmax.f32 %v650, 0.0
    %v683 = vmax.f32 %v651, 0.0
    %v684 = vmax.f32 %v652, 0.0
    %v685 = vmax.f32 %v653, 0.0
    %v686 = vmax.f32 %v654, 0.0
    %v687 = vmax.f32 %v655, 0.0
    %v688 = vmax.f32 %v656, 0.0
    %v689 = vmax.f32 %v657, 0.0
    %v690 = vmax.f32 %v658, 0.0
    %v691 = vmax.f32 %v659, 0.0
    %v692 = vmax.f32 %v660, 0.0
    %v693 = vmax.f32 %v661, 0.0
    %v694 = vmax.f32 %v662, 0.0
    %v695 = vmax.f32 %v663, 0.0
    %v696 = vmax.f32 %v664, 0.0
    %v697 = vmax.f32 %v665, 0.0
    %v698 = vmax.f32 %v666, 0.0
    %v699 = vmax.f32 %v667, 0.0
    %v700 = vmax.f32 %v668, 0.0
    %v701 = vmax.f32 %v669, 0.0
    %v702 = vmax.f32 %v670, 0.0
    %v703 = vmax.f32 %v671, 0.0
    %v704 = vmax.f32 %v672, 0.0
    %v705 = vpack.c.bf16 %v674, %v673
    %v706 = vpack.c.bf16 %v676, %v675
    %v707 = vpack.c.bf16 %v678, %v677
    %v708 = vpack.c.bf16 %v680, %v679
    %v709 = vpack.c.bf16 %v682, %v681
    %v710 = vpack.c.bf16 %v684, %v683
    %v711 = vpack.c.bf16 %v686, %v685
    %v712 = vpack.c.bf16 %v688, %v687
    %v713 = vpack.c.bf16 %v690, %v689
    %v714 = vpack.c.bf16 %v692, %v691
    %v715 = vpack.c.bf16 %v694, %v693
    %v716 = vpack.c.bf16 %v696, %v695
    %v717 = vpack.c.bf16 %v698, %v697
    %v718 = vpack.c.bf16 %v700, %v699
    %v719 = vpack.c.bf16 %v702, %v701
    %v720 = vpack.c.bf16 %v704, %v703
    %v737 = vunpack.c.l.b16 %v705
    %v738 = vunpack.c.h.b16 %v705
    %v739 = vunpack.c.l.b16 %v706
    %v740 = vunpack.c.h.b16 %v706
    %v741 = vunpack.c.l.b16 %v707
    %v742 = vunpack.c.h.b16 %v707
    %v743 = vunpack.c.l.b16 %v708
    %v744 = vunpack.c.h.b16 %v708
    %v745 = vunpack.c.l.b16 %v709
    %v746 = vunpack.c.h.b16 %v709
    %v747 = vunpack.c.l.b16 %v710
    %v748 = vunpack.c.h.b16 %v710
    %v749 = vunpack.c.l.b16 %v711
    %v750 = vunpack.c.h.b16 %v711
    %v751 = vunpack.c.l.b16 %v712
    %v752 = vunpack.c.h.b16 %v712
    %v753 = vunpack.c.l.b16 %v713
    %v754 = vunpack.c.h.b16 %v713
    %v755 = vunpack.c.l.b16 %v714
    %v756 = vunpack.c.h.b16 %v714
    %v757 = vunpack.c.l.b16 %v715
    %v758 = vunpack.c.h.b16 %v715
    %v759 = vunpack.c.l.b16 %v716
    %v760 = vunpack.c.h.b16 %v716
    %v761 = vunpack.c.l.b16 %v717
    %v762 = vunpack.c.h.b16 %v717
    %v763 = vunpack.c.l.b16 %v718
    %v764 = vunpack.c.h.b16 %v718
    %v765 = vunpack.c.l.b16 %v719
    %v766 = vunpack.c.h.b16 %v719
    %v767 = vunpack.c.l.b16 %v720
    %v768 = vunpack.c.h.b16 %v720
    %v769 = vpack.c.b16 %v737, %v737
    %v770 = vpack.c.b16 %v738, %v738
    %v771 = vpack.c.b16 %v739, %v739
    %v772 = vpack.c.b16 %v740, %v740
    %v773 = vpack.c.b16 %v741, %v741
    %v774 = vpack.c.b16 %v742, %v742
    %v775 = vpack.c.b16 %v743, %v743
    %v776 = vpack.c.b16 %v744, %v744
    %v777 = vpack.c.b16 %v745, %v745
    %v778 = vpack.c.b16 %v746, %v746
    %v779 = vpack.c.b16 %v747, %v747
    %v780 = vpack.c.b16 %v748, %v748
    %v781 = vpack.c.b16 %v749, %v749
    %v782 = vpack.c.b16 %v750, %v750
    %v783 = vpack.c.b16 %v751, %v751
    %v784 = vpack.c.b16 %v752, %v752
    %v785 = vpack.c.b16 %v753, %v753
    %v786 = vpack.c.b16 %v754, %v754
    %v787 = vpack.c.b16 %v755, %v755
    %v788 = vpack.c.b16 %v756, %v756
    %v789 = vpack.c.b16 %v757, %v757
    %v790 = vpack.c.b16 %v758, %v758
    %v791 = vpack.c.b16 %v759, %v759
    %v792 = vpack.c.b16 %v760, %v760
    %v793 = vpack.c.b16 %v761, %v761
    %v794 = vpack.c.b16 %v762, %v762
    %v795 = vpack.c.b16 %v763, %v763
    %v796 = vpack.c.b16 %v764, %v764
    %v797 = vpack.c.b16 %v765, %v765
    %v798 = vpack.c.b16 %v766, %v766
    %v799 = vpack.c.b16 %v767, %v767
    %v800 = vpack.c.b16 %v768, %v768
    %833 = vst [vmem:[%s4] sm:$0xf] %v769
    %834 = vst [vmem:[%s4 + $0x4] sm:$0xf] %v770
    %835 = vst [vmem:[%s4 + $0x8] sm:$0xf] %v771
    %836 = vst [vmem:[%s4 + $0xc] sm:$0xf] %v772
    %837 = vst [vmem:[%s4 + $0x10] sm:$0xf] %v773
    %838 = vst [vmem:[%s4 + $0x14] sm:$0xf] %v774
    %839 = vst [vmem:[%s4 + $0x18] sm:$0xf] %v775
    %840 = vst [vmem:[%s4 + $0x1c] sm:$0xf] %v776
    %841 = vst [vmem:[%s4 + $0x20] sm:$0xf] %v777
    %842 = vst [vmem:[%s4 + $0x24] sm:$0xf] %v778
    %843 = vst [vmem:[%s4 + $0x28] sm:$0xf] %v779
    %844 = vst [vmem:[%s4 + $0x2c] sm:$0xf] %v780
    %845 = vst [vmem:[%s4 + $0x30] sm:$0xf] %v781
    %846 = vst [vmem:[%s4 + $0x34] sm:$0xf] %v782
    %847 = vst [vmem:[%s4 + $0x38] sm:$0xf] %v783
    %848 = vst [vmem:[%s4 + $0x3c] sm:$0xf] %v784
    %849 = vst [vmem:[%s4 + $0x40] sm:$0xf] %v785
    %850 = vst [vmem:[%s4 + $0x44] sm:$0xf] %v786
    %851 = vst [vmem:[%s4 + $0x48] sm:$0xf] %v787
    %852 = vst [vmem:[%s4 + $0x4c] sm:$0xf] %v788
    %853 = vst [vmem:[%s4 + $0x50] sm:$0xf] %v789
    %854 = vst [vmem:[%s4 + $0x54] sm:$0xf] %v790
    %855 = vst [vmem:[%s4 + $0x58] sm:$0xf] %v791
    %856 = vst [vmem:[%s4 + $0x5c] sm:$0xf] %v792
    %857 = vst [vmem:[%s4 + $0x60] sm:$0xf] %v793
    %858 = vst [vmem:[%s4 + $0x64] sm:$0xf] %v794
    %859 = vst [vmem:[%s4 + $0x68] sm:$0xf] %v795
    %860 = vst [vmem:[%s4 + $0x6c] sm:$0xf] %v796
    %861 = vst [vmem:[%s4 + $0x70] sm:$0xf] %v797
    %862 = vst [vmem:[%s4 + $0x74] sm:$0xf] %v798
    %863 = vst [vmem:[%s4 + $0x78] sm:$0xf] %v799
    %864 = vst [vmem:[%s4 + $0x7c] sm:$0xf] %v800
  $region25: #{resnet_feature_extractor.40} parent=0 // pred_fallthru
    _
  // Predicated region
  $region26: #{resnet_feature_extractor.40} parent=0 // pred_check
    _
  $region27: #{resnet_feature_extractor.40} parent=0 // pred_check_branch
    %866 = sbr.rel (0) target = $region29
  $region28: #{resnet_feature_extractor.40} parent=0 // pred_region
    _
  $region29: #{resnet_feature_extractor.40} parent=0 // pred_fallthru
    _
  // Predicated region
  $region30: #{resnet_feature_extractor.40} parent=0 // pred_check
    _
  $region31: #{resnet_feature_extractor.40} parent=0 // pred_check_branch
    %868 = sbr.rel (0) target = $region33
  $region32: #{resnet_feature_extractor.40} parent=0 // pred_region
    _
  $region33: #{resnet_feature_extractor.40} parent=0 // pred_fallthru
    _

// kernel: resnet_feature_extractor.44
$region0: #{resnet_feature_extractor.44}
  #allocation0 [shape = 'u32[]', space=smem, size = 0x4, offset = 0x4, fixed_abs, tag = 'smem constant byte address 0x4 - core index']
  #allocation1 [shape = 'u32[144,128]{1,0:T(1,128)}', space=vmem, size = 0x12000, scoped, tag = 'internal scratch']
  #allocation2 [shape = 'f32[64,128]{1,0:T(8,128)}', space=vmem, size = 0x8000, scoped, tag = 'scratch operand']
  %s0 = inlined_call_operand.vmem [shape: bf16[64,128], index: 0, kind: input, shape index: {}]
  %s1 = inlined_call_operand.vmem [shape: bf16[128,128], index: 1, kind: input, shape index: {}]
  %s2 = inlined_call_operand.vmem [shape: f32[1,128], index: 2, kind: input, shape index: {}]
  %s3 = inlined_call_operand.vmem [shape: bf16[64,128], index: 3, kind: output, shape index: {}]
  %s4 = sld [smem:[#allocation0]]
  $region30: #{resnet_feature_extractor.44} parent=0
    _
  %s6 = ssub.s32 1, %s4
  %s7 = scalar_select 0, %s6, %s4
  // Predicated region
  $region2: #{resnet_feature_extractor.44} parent=0 // pred_check
    _
  $region3: #{resnet_feature_extractor.44} parent=0 // pred_check_branch
    %9 = sbr.rel (0) target = $region5
  $region4: #{resnet_feature_extractor.44} parent=0 // pred_region
    _
  $region5: #{resnet_feature_extractor.44} parent=0 // pred_fallthru
    _
  // Predicated region
  $region6: #{resnet_feature_extractor.44} parent=0 // pred_check
    _
  $region7: #{resnet_feature_extractor.44} parent=0 // pred_check_branch
    %11 = sbr.rel (0) target = $region9
  $region8: #{resnet_feature_extractor.44} parent=0 // pred_region
    _
  $region9: #{resnet_feature_extractor.44} parent=0 // pred_fallthru
    _
  // Predicated region
  $region10: #{resnet_feature_extractor.44} parent=0 // pred_check
    _
  $region11: #{resnet_feature_extractor.44} parent=0 // pred_check_branch
    %13 = sbr.rel (0) target = $region13
  $region12: #{resnet_feature_extractor.44} parent=0 // pred_region
    _
  $region13: #{resnet_feature_extractor.44} parent=0 // pred_fallthru
    _
  %p15 = scmp.eq.s32.totalorder 0, 0
  // Predicated region
  $region14: #{resnet_feature_extractor.44} parent=0 // pred_check
    %p16 = pneg %p15
  $region15: #{resnet_feature_extractor.44} parent=0 // pred_check_branch
    %18 = sbr.rel (%p16) target = $region17
  $region16: #{resnet_feature_extractor.44} parent=0 // pred_region
    %19 = vst [vmem:[#allocation2] sm:$0xff] 0.0
    %20 = vst [vmem:[#allocation2 + $0x8] sm:$0xff] 0.0
    %21 = vst [vmem:[#allocation2 + $0x10] sm:$0xff] 0.0
    %22 = vst [vmem:[#allocation2 + $0x18] sm:$0xff] 0.0
    %23 = vst [vmem:[#allocation2 + $0x20] sm:$0xff] 0.0
    %24 = vst [vmem:[#allocation2 + $0x28] sm:$0xff] 0.0
    %25 = vst [vmem:[#allocation2 + $0x30] sm:$0xff] 0.0
    %26 = vst [vmem:[#allocation2 + $0x38] sm:$0xff] 0.0
  $region17: #{resnet_feature_extractor.44} parent=0 // pred_fallthru
    _
  %v27 = vld [vmem:[#allocation2] sm:$0xff]
  %v28 = vld [vmem:[#allocation2 + $0x8] sm:$0xff]
  %v29 = vld [vmem:[#allocation2 + $0x10] sm:$0xff]
  %v30 = vld [vmem:[#allocation2 + $0x18] sm:$0xff]
  %v31 = vld [vmem:[#allocation2 + $0x20] sm:$0xff]
  %v32 = vld [vmem:[#allocation2 + $0x28] sm:$0xff]
  %v33 = vld [vmem:[#allocation2 + $0x30] sm:$0xff]
  %v34 = vld [vmem:[#allocation2 + $0x38] sm:$0xff]
  %v35 = vld [vmem:[%s0] sm:$0xf]
  %v36 = vld [vmem:[%s0 + $0x4] sm:$0xf]
  %v37 = vld [vmem:[%s0 + $0x8] sm:$0xf]
  %v38 = vld [vmem:[%s0 + $0xc] sm:$0xf]
  %v39 = vld [vmem:[%s0 + $0x10] sm:$0xf]
  %v40 = vld [vmem:[%s0 + $0x14] sm:$0xf]
  %v41 = vld [vmem:[%s0 + $0x18] sm:$0xf]
  %v42 = vld [vmem:[%s0 + $0x1c] sm:$0xf]
  %v43 = vld [vmem:[%s1] sm:$0xf]
  %v44 = vld [vmem:[%s1 + $0x4] sm:$0xf]
  %v45 = vld [vmem:[%s1 + $0x8] sm:$0xf]
  %v46 = vld [vmem:[%s1 + $0xc] sm:$0xf]
  %v47 = vld [vmem:[%s1 + $0x10] sm:$0xf]
  %v48 = vld [vmem:[%s1 + $0x14] sm:$0xf]
  %v49 = vld [vmem:[%s1 + $0x18] sm:$0xf]
  %v50 = vld [vmem:[%s1 + $0x1c] sm:$0xf]
  %v51 = vld [vmem:[%s1 + $0x20] sm:$0xf]
  %v52 = vld [vmem:[%s1 + $0x24] sm:$0xf]
  %v53 = vld [vmem:[%s1 + $0x28] sm:$0xf]
  %v54 = vld [vmem:[%s1 + $0x2c] sm:$0xf]
  %v55 = vld [vmem:[%s1 + $0x30] sm:$0xf]
  %v56 = vld [vmem:[%s1 + $0x34] sm:$0xf]
  %v57 = vld [vmem:[%s1 + $0x38] sm:$0xf]
  %v58 = vld [vmem:[%s1 + $0x3c] sm:$0xf]
  %v67 = vunpack.c.l.b16 %v35
  %v68 = vunpack.c.l.b16 %v36
  %v69 = vunpack.c.l.b16 %v37
  %v70 = vunpack.c.l.b16 %v38
  %v71 = vunpack.c.l.b16 %v39
  %v72 = vunpack.c.l.b16 %v40
  %v73 = vunpack.c.l.b16 %v41
  %v74 = vunpack.c.l.b16 %v42
  %v75 = vpack.c.b16 %v68, %v67
  %v76 = vpack.c.b16 %v70, %v69
  %v77 = vpack.c.b16 %v72, %v71
  %v78 = vpack.c.b16 %v74, %v73
  %v99 = vunpack.c.l.b16 %v43
  %v100 = vunpack.c.l.b16 %v44
  %v101 = vunpack.c.l.b16 %v45
  %v102 = vunpack.c.l.b16 %v46
  %v103 = vunpack.c.l.b16 %v47
  %v104 = vunpack.c.l.b16 %v48
  %v105 = vunpack.c.l.b16 %v49
  %v106 = vunpack.c.l.b16 %v50
  %v107 = vunpack.c.l.b16 %v51
  %v108 = vunpack.c.l.b16 %v52
  %v109 = vunpack.c.l.b16 %v53
  %v110 = vunpack.c.l.b16 %v54
  %v111 = vunpack.c.l.b16 %v55
  %v112 = vunpack.c.l.b16 %v56
  %v113 = vunpack.c.l.b16 %v57
  %v114 = vunpack.c.l.b16 %v58
  %v115 = vpack.c.b16 %v100, %v99
  %v116 = vpack.c.b16 %v102, %v101
  %v117 = vpack.c.b16 %v104, %v103
  %v118 = vpack.c.b16 %v106, %v105
  %v119 = vpack.c.b16 %v108, %v107
  %v120 = vpack.c.b16 %v110, %v109
  %v121 = vpack.c.b16 %v112, %v111
  %v122 = vpack.c.b16 %v114, %v113
  %131 = vmatprep.subr.bf16.mxu0 0
  %132 = vmatpush1.bf16.msra.mxu0 %v115
  %133 = vmatprep.subr.bf16.mxu0 0
  %134 = vmatpush1.bf16.msra.mxu0 %v116
  %135 = vmatprep.subr.bf16.mxu0 0
  %136 = vmatpush1.bf16.msra.mxu0 %v117
  %137 = vmatprep.subr.bf16.mxu0 0
  %138 = vmatpush1.bf16.msra.mxu0 %v118
  %139 = vmatprep.subr.bf16.mxu0 0
  %140 = vmatpush1.bf16.msra.mxu0 %v119
  %141 = vmatprep.subr.bf16.mxu0 0
  %142 = vmatpush1.bf16.msra.mxu0 %v120
  %143 = vmatprep.subr.bf16.mxu0 0
  %144 = vmatpush1.bf16.msra.mxu0 %v121
  %145 = vmatprep.subr.bf16.mxu0 0
  %146 = vmatpush1.bf16.msra.mxu0 %v122
  %147 = vmatprep.subr.bf16.mxu0 0
  %148 = vmatpush1.bf16.msra.mxu0 0
  %149 = vmatprep.subr.bf16.mxu0 0
  %150 = vmatpush1.bf16.msra.mxu0 0
  %151 = vmatprep.subr.bf16.mxu0 0
  %152 = vmatpush1.bf16.msra.mxu0 0
  %153 = vmatprep.subr.bf16.mxu0 0
  %154 = vmatpush1.bf16.msra.mxu0 0
  %155 = vmatprep.subr.bf16.mxu0 0
  %156 = vmatpush1.bf16.msra.mxu0 0
  %157 = vmatprep.subr.bf16.mxu0 0
  %158 = vmatpush1.bf16.msra.mxu0 0
  %159 = vmatprep.subr.bf16.mxu0 0
  %160 = vmatpush1.bf16.msra.mxu0 0
  %161 = vmatprep.subr.bf16.mxu0 0
  %162 = vmatpush1.bf16.msra.mxu0 0
  %163 = vmatprep.mubr.bf16.mxu0 0
  %164 = vmatmul.mubr.bf16.gmra.mrb[0].mxu0 %v75
  %v165 = vpop.f32.mrb[0].mxu0
  %v166 = vadd.f32 0.0, %v165
  %v167 = vpop.f32.mrb[0].mxu0
  %v168 = vpop.f32.mrb[0].mxu0
  %v169 = vadd.f32 0.0, %v168
  %v170 = vpop.f32.mrb[0].mxu0
  %171 = vmatprep.mubr.bf16.mxu0 0
  %172 = vmatmul.mubr.bf16.gmra.mrb[0].mxu0 %v76
  %v173 = vpop.f32.mrb[0].mxu0
  %v174 = vadd.f32 0.0, %v173
  %v175 = vpop.f32.mrb[0].mxu0
  %v176 = vpop.f32.mrb[0].mxu0
  %v177 = vadd.f32 0.0, %v176
  %v178 = vpop.f32.mrb[0].mxu0
  %179 = vmatprep.mubr.bf16.mxu0 0
  %180 = vmatmul.mubr.bf16.gmra.mrb[0].mxu0 %v77
  %v181 = vpop.f32.mrb[0].mxu0
  %v182 = vadd.f32 0.0, %v181
  %v183 = vpop.f32.mrb[0].mxu0
  %v184 = vpop.f32.mrb[0].mxu0
  %v185 = vadd.f32 0.0, %v184
  %v186 = vpop.f32.mrb[0].mxu0
  %187 = vmatprep.mubr.bf16.mxu0 0
  %188 = vmatmul.mubr.bf16.gmra.mrb[0].mxu0 %v78
  %v189 = vpop.f32.mrb[0].mxu0
  %v190 = vadd.f32 0.0, %v189
  %v191 = vpop.f32.mrb[0].mxu0
  %v192 = vpop.f32.mrb[0].mxu0
  %v193 = vadd.f32 0.0, %v192
  %v194 = vpop.f32.mrb[0].mxu0
  %195 = vdwg.mxu0
  %v196 = vadd.f32 %v27, %v166
  %v197 = vadd.f32 %v28, %v169
  %v198 = vadd.f32 %v29, %v174
  %v199 = vadd.f32 %v30, %v177
  %v200 = vadd.f32 %v31, %v182
  %v201 = vadd.f32 %v32, %v185
  %v202 = vadd.f32 %v33, %v190
  %v203 = vadd.f32 %v34, %v193
  %204 = vst [vmem:[#allocation2] sm:$0xff] %v196
  %205 = vst [vmem:[#allocation2 + $0x8] sm:$0xff] %v197
  %206 = vst [vmem:[#allocation2 + $0x10] sm:$0xff] %v198
  %207 = vst [vmem:[#allocation2 + $0x18] sm:$0xff] %v199
  %208 = vst [vmem:[#allocation2 + $0x20] sm:$0xff] %v200
  %209 = vst [vmem:[#allocation2 + $0x28] sm:$0xff] %v201
  %210 = vst [vmem:[#allocation2 + $0x30] sm:$0xff] %v202
  %211 = vst [vmem:[#allocation2 + $0x38] sm:$0xff] %v203
  // Predicated region
  $region18: #{resnet_feature_extractor.44} parent=0 // pred_check
    %p212 = pneg %p15
  $region19: #{resnet_feature_extractor.44} parent=0 // pred_check_branch
    %214 = sbr.rel (%p212) target = $region21
  $region20: #{resnet_feature_extractor.44} parent=0 // pred_region
    %v215 = vld [vmem:[#allocation2] sm:$0xff]
    %v216 = vld [vmem:[#allocation2 + $0x8] sm:$0xff]
    %v217 = vld [vmem:[#allocation2 + $0x10] sm:$0xff]
    %v218 = vld [vmem:[#allocation2 + $0x18] sm:$0xff]
    %v219 = vld [vmem:[#allocation2 + $0x20] sm:$0xff]
    %v220 = vld [vmem:[#allocation2 + $0x28] sm:$0xff]
    %v221 = vld [vmem:[#allocation2 + $0x30] sm:$0xff]
    %v222 = vld [vmem:[#allocation2 + $0x38] sm:$0xff]
    %v223 = vld [vmem:[%s2] sm:$0x1]
    %v225 = vlaneseq
    %v226 = vshrl.u32 %v225, 7
    %v227 = vsub.s32 0, %v226
    %v228 = vrot.slane %v223, %v227
    %v230 = vadd.f32 %v215, %v228
    %v231 = vadd.f32 %v216, %v228
    %v232 = vadd.f32 %v217, %v228
    %v233 = vadd.f32 %v218, %v228
    %v234 = vadd.f32 %v219, %v228
    %v235 = vadd.f32 %v220, %v228
    %v236 = vadd.f32 %v221, %v228
    %v237 = vadd.f32 %v222, %v228
    %v238 = vmax.f32 %v230, 0.0
    %v239 = vmax.f32 %v231, 0.0
    %v240 = vmax.f32 %v232, 0.0
    %v241 = vmax.f32 %v233, 0.0
    %v242 = vmax.f32 %v234, 0.0
    %v243 = vmax.f32 %v235, 0.0
    %v244 = vmax.f32 %v236, 0.0
    %v245 = vmax.f32 %v237, 0.0
    %v246 = vpack.c.bf16 %v239, %v238
    %v247 = vpack.c.bf16 %v241, %v240
    %v248 = vpack.c.bf16 %v243, %v242
    %v249 = vpack.c.bf16 %v245, %v244
    %v254 = vunpack.c.l.b16 %v246
    %v255 = vunpack.c.h.b16 %v246
    %v256 = vunpack.c.l.b16 %v247
    %v257 = vunpack.c.h.b16 %v247
    %v258 = vunpack.c.l.b16 %v248
    %v259 = vunpack.c.h.b16 %v248
    %v260 = vunpack.c.l.b16 %v249
    %v261 = vunpack.c.h.b16 %v249
    %v262 = vpack.c.b16 %v254, %v254
    %v263 = vpack.c.b16 %v255, %v255
    %v264 = vpack.c.b16 %v256, %v256
    %v265 = vpack.c.b16 %v257, %v257
    %v266 = vpack.c.b16 %v258, %v258
    %v267 = vpack.c.b16 %v259, %v259
    %v268 = vpack.c.b16 %v260, %v260
    %v269 = vpack.c.b16 %v261, %v261
    %278 = vst [vmem:[%s3] sm:$0xf] %v262
    %279 = vst [vmem:[%s3 + $0x4] sm:$0xf] %v263
    %280 = vst [vmem:[%s3 + $0x8] sm:$0xf] %v264
    %281 = vst [vmem:[%s3 + $0xc] sm:$0xf] %v265
    %282 = vst [vmem:[%s3 + $0x10] sm:$0xf] %v266
    %283 = vst [vmem:[%s3 + $0x14] sm:$0xf] %v267
    %284 = vst [vmem:[%s3 + $0x18] sm:$0xf] %v268
    %285 = vst [vmem:[%s3 + $0x1c] sm:$0xf] %v269
  $region21: #{resnet_feature_extractor.44} parent=0 // pred_fallthru
    _
  // Predicated region
  $region22: #{resnet_feature_extractor.44} parent=0 // pred_check
    _
  $region23: #{resnet_feature_extractor.44} parent=0 // pred_check_branch
    %287 = sbr.rel (0) target = $region25
  $region24: #{resnet_feature_extractor.44} parent=0 // pred_region
    _
  $region25: #{resnet_feature_extractor.44} parent=0 // pred_fallthru
    _
  // Predicated region
  $region26: #{resnet_feature_extractor.44} parent=0 // pred_check
    _
  $region27: #{resnet_feature_extractor.44} parent=0 // pred_check_branch
    %289 = sbr.rel (0) target = $region29
  $region28: #{resnet_feature_extractor.44} parent=0 // pred_region
    _
  $region29: #{resnet_feature_extractor.44} parent=0 // pred_fallthru
    _

// kernel: resnet_feature_extractor.43
$region0: #{resnet_feature_extractor.43}
  #allocation0 [shape = 'u32[]', space=smem, size = 0x4, offset = 0x4, fixed_abs, tag = 'smem constant byte address 0x4 - core index']
  #allocation1 [shape = 'u32[144,128]{1,0:T(1,128)}', space=vmem, size = 0x12000, scoped, tag = 'internal scratch']
  #allocation2 [shape = 'f32[64,128]{1,0:T(8,128)}', space=vmem, size = 0x8000, scoped, tag = 'scratch operand']
  %s0 = inlined_call_operand.vmem [shape: bf16[64,128], index: 0, kind: input, shape index: {}]
  %s1 = inlined_call_operand.vmem [shape: bf16[128,128], index: 1, kind: input, shape index: {}]
  %s2 = inlined_call_operand.vmem [shape: f32[1,128], index: 2, kind: input, shape index: {}]
  %s3 = inlined_call_operand.vmem [shape: bf16[64,128], index: 3, kind: output, shape index: {}]
  %s4 = sld [smem:[#allocation0]]
  $region30: #{resnet_feature_extractor.43} parent=0
    _
  %s6 = ssub.s32 1, %s4
  %s7 = scalar_select 0, %s6, %s4
  // Predicated region
  $region2: #{resnet_feature_extractor.43} parent=0 // pred_check
    _
  $region3: #{resnet_feature_extractor.43} parent=0 // pred_check_branch
    %9 = sbr.rel (0) target = $region5
  $region4: #{resnet_feature_extractor.43} parent=0 // pred_region
    _
  $region5: #{resnet_feature_extractor.43} parent=0 // pred_fallthru
    _
  // Predicated region
  $region6: #{resnet_feature_extractor.43} parent=0 // pred_check
    _
  $region7: #{resnet_feature_extractor.43} parent=0 // pred_check_branch
    %11 = sbr.rel (0) target = $region9
  $region8: #{resnet_feature_extractor.43} parent=0 // pred_region
    _
  $region9: #{resnet_feature_extractor.43} parent=0 // pred_fallthru
    _
  // Predicated region
  $region10: #{resnet_feature_extractor.43} parent=0 // pred_check
    _
  $region11: #{resnet_feature_extractor.43} parent=0 // pred_check_branch
    %13 = sbr.rel (0) target = $region13
  $region12: #{resnet_feature_extractor.43} parent=0 // pred_region
    _
  $region13: #{resnet_feature_extractor.43} parent=0 // pred_fallthru
    _
  %p15 = scmp.eq.s32.totalorder 0, 0
  // Predicated region
  $region14: #{resnet_feature_extractor.43} parent=0 // pred_check
    %p16 = pneg %p15
  $region15: #{resnet_feature_extractor.43} parent=0 // pred_check_branch
    %18 = sbr.rel (%p16) target = $region17
  $region16: #{resnet_feature_extractor.43} parent=0 // pred_region
    %19 = vst [vmem:[#allocation2] sm:$0xff] 0.0
    %20 = vst [vmem:[#allocation2 + $0x8] sm:$0xff] 0.0
    %21 = vst [vmem:[#allocation2 + $0x10] sm:$0xff] 0.0
    %22 = vst [vmem:[#allocation2 + $0x18] sm:$0xff] 0.0
    %23 = vst [vmem:[#allocation2 + $0x20] sm:$0xff] 0.0
    %24 = vst [vmem:[#allocation2 + $0x28] sm:$0xff] 0.0
    %25 = vst [vmem:[#allocation2 + $0x30] sm:$0xff] 0.0
    %26 = vst [vmem:[#allocation2 + $0x38] sm:$0xff] 0.0
  $region17: #{resnet_feature_extractor.43} parent=0 // pred_fallthru
    _
  %v27 = vld [vmem:[#allocation2] sm:$0xff]
  %v28 = vld [vmem:[#allocation2 + $0x8] sm:$0xff]
  %v29 = vld [vmem:[#allocation2 + $0x10] sm:$0xff]
  %v30 = vld [vmem:[#allocation2 + $0x18] sm:$0xff]
  %v31 = vld [vmem:[#allocation2 + $0x20] sm:$0xff]
  %v32 = vld [vmem:[#allocation2 + $0x28] sm:$0xff]
  %v33 = vld [vmem:[#allocation2 + $0x30] sm:$0xff]
  %v34 = vld [vmem:[#allocation2 + $0x38] sm:$0xff]
  %v35 = vld [vmem:[%s0] sm:$0xf]
  %v36 = vld [vmem:[%s0 + $0x4] sm:$0xf]
  %v37 = vld [vmem:[%s0 + $0x8] sm:$0xf]
  %v38 = vld [vmem:[%s0 + $0xc] sm:$0xf]
  %v39 = vld [vmem:[%s0 + $0x10] sm:$0xf]
  %v40 = vld [vmem:[%s0 + $0x14] sm:$0xf]
  %v41 = vld [vmem:[%s0 + $0x18] sm:$0xf]
  %v42 = vld [vmem:[%s0 + $0x1c] sm:$0xf]
  %v43 = vld [vmem:[%s1] sm:$0xf]
  %v44 = vld [vmem:[%s1 + $0x4] sm:$0xf]
  %v45 = vld [vmem:[%s1 + $0x8] sm:$0xf]
  %v46 = vld [vmem:[%s1 + $0xc] sm:$0xf]
  %v47 = vld [vmem:[%s1 + $0x10] sm:$0xf]
  %v48 = vld [vmem:[%s1 + $0x14] sm:$0xf]
  %v49 = vld [vmem:[%s1 + $0x18] sm:$0xf]
  %v50 = vld [vmem:[%s1 + $0x1c] sm:$0xf]
  %v51 = vld [vmem:[%s1 + $0x20] sm:$0xf]
  %v52 = vld [vmem:[%s1 + $0x24] sm:$0xf]
  %v53 = vld [vmem:[%s1 + $0x28] sm:$0xf]
  %v54 = vld [vmem:[%s1 + $0x2c] sm:$0xf]
  %v55 = vld [vmem:[%s1 + $0x30] sm:$0xf]
  %v56 = vld [vmem:[%s1 + $0x34] sm:$0xf]
  %v57 = vld [vmem:[%s1 + $0x38] sm:$0xf]
  %v58 = vld [vmem:[%s1 + $0x3c] sm:$0xf]
  %v67 = vunpack.c.l.b16 %v35
  %v68 = vunpack.c.l.b16 %v36
  %v69 = vunpack.c.l.b16 %v37
  %v70 = vunpack.c.l.b16 %v38
  %v71 = vunpack.c.l.b16 %v39
  %v72 = vunpack.c.l.b16 %v40
  %v73 = vunpack.c.l.b16 %v41
  %v74 = vunpack.c.l.b16 %v42
  %v75 = vpack.c.b16 %v68, %v67
  %v76 = vpack.c.b16 %v70, %v69
  %v77 = vpack.c.b16 %v72, %v71
  %v78 = vpack.c.b16 %v74, %v73
  %v99 = vunpack.c.l.b16 %v43
  %v100 = vunpack.c.l.b16 %v44
  %v101 = vunpack.c.l.b16 %v45
  %v102 = vunpack.c.l.b16 %v46
  %v103 = vunpack.c.l.b16 %v47
  %v104 = vunpack.c.l.b16 %v48
  %v105 = vunpack.c.l.b16 %v49
  %v106 = vunpack.c.l.b16 %v50
  %v107 = vunpack.c.l.b16 %v51
  %v108 = vunpack.c.l.b16 %v52
  %v109 = vunpack.c.l.b16 %v53
  %v110 = vunpack.c.l.b16 %v54
  %v111 = vunpack.c.l.b16 %v55
  %v112 = vunpack.c.l.b16 %v56
  %v113 = vunpack.c.l.b16 %v57
  %v114 = vunpack.c.l.b16 %v58
  %v115 = vpack.c.b16 %v100, %v99
  %v116 = vpack.c.b16 %v102, %v101
  %v117 = vpack.c.b16 %v104, %v103
  %v118 = vpack.c.b16 %v106, %v105
  %v119 = vpack.c.b16 %v108, %v107
  %v120 = vpack.c.b16 %v110, %v109
  %v121 = vpack.c.b16 %v112, %v111
  %v122 = vpack.c.b16 %v114, %v113
  %131 = vmatprep.subr.bf16.mxu0 0
  %132 = vmatpush1.bf16.msra.mxu0 %v115
  %133 = vmatprep.subr.bf16.mxu0 0
  %134 = vmatpush1.bf16.msra.mxu0 %v116
  %135 = vmatprep.subr.bf16.mxu0 0
  %136 = vmatpush1.bf16.msra.mxu0 %v117
  %137 = vmatprep.subr.bf16.mxu0 0
  %138 = vmatpush1.bf16.msra.mxu0 %v118
  %139 = vmatprep.subr.bf16.mxu0 0
  %140 = vmatpush1.bf16.msra.mxu0 %v119
  %141 = vmatprep.subr.bf16.mxu0 0
  %142 = vmatpush1.bf16.msra.mxu0 %v120
  %143 = vmatprep.subr.bf16.mxu0 0
  %144 = vmatpush1.bf16.msra.mxu0 %v121
  %145 = vmatprep.subr.bf16.mxu0 0
  %146 = vmatpush1.bf16.msra.mxu0 %v122
  %147 = vmatprep.subr.bf16.mxu0 0
  %148 = vmatpush1.bf16.msra.mxu0 0
  %149 = vmatprep.subr.bf16.mxu0 0
  %150 = vmatpush1.bf16.msra.mxu0 0
  %151 = vmatprep.subr.bf16.mxu0 0
  %152 = vmatpush1.bf16.msra.mxu0 0
  %153 = vmatprep.subr.bf16.mxu0 0
  %154 = vmatpush1.bf16.msra.mxu0 0
  %155 = vmatprep.subr.bf16.mxu0 0
  %156 = vmatpush1.bf16.msra.mxu0 0
  %157 = vmatprep.subr.bf16.mxu0 0
  %158 = vmatpush1.bf16.msra.mxu0 0
  %159 = vmatprep.subr.bf16.mxu0 0
  %160 = vmatpush1.bf16.msra.mxu0 0
  %161 = vmatprep.subr.bf16.mxu0 0
  %162 = vmatpush1.bf16.msra.mxu0 0
  %163 = vmatprep.mubr.bf16.mxu0 0
  %164 = vmatmul.mubr.bf16.gmra.mrb[0].mxu0 %v75
  %v165 = vpop.f32.mrb[0].mxu0
  %v166 = vadd.f32 0.0, %v165
  %v167 = vpop.f32.mrb[0].mxu0
  %v168 = vpop.f32.mrb[0].mxu0
  %v169 = vadd.f32 0.0, %v168
  %v170 = vpop.f32.mrb[0].mxu0
  %171 = vmatprep.mubr.bf16.mxu0 0
  %172 = vmatmul.mubr.bf16.gmra.mrb[0].mxu0 %v76
  %v173 = vpop.f32.mrb[0].mxu0
  %v174 = vadd.f32 0.0, %v173
  %v175 = vpop.f32.mrb[0].mxu0
  %v176 = vpop.f32.mrb[0].mxu0
  %v177 = vadd.f32 0.0, %v176
  %v178 = vpop.f32.mrb[0].mxu0
  %179 = vmatprep.mubr.bf16.mxu0 0
  %180 = vmatmul.mubr.bf16.gmra.mrb[0].mxu0 %v77
  %v181 = vpop.f32.mrb[0].mxu0
  %v182 = vadd.f32 0.0, %v181
  %v183 = vpop.f32.mrb[0].mxu0
  %v184 = vpop.f32.mrb[0].mxu0
  %v185 = vadd.f32 0.0, %v184
  %v186 = vpop.f32.mrb[0].mxu0
  %187 = vmatprep.mubr.bf16.mxu0 0
  %188 = vmatmul.mubr.bf16.gmra.mrb[0].mxu0 %v78
  %v189 = vpop.f32.mrb[0].mxu0
  %v190 = vadd.f32 0.0, %v189
  %v191 = vpop.f32.mrb[0].mxu0
  %v192 = vpop.f32.mrb[0].mxu0
  %v193 = vadd.f32 0.0, %v192
  %v194 = vpop.f32.mrb[0].mxu0
  %195 = vdwg.mxu0
  %v196 = vadd.f32 %v27, %v166
  %v197 = vadd.f32 %v28, %v169
  %v198 = vadd.f32 %v29, %v174
  %v199 = vadd.f32 %v30, %v177
  %v200 = vadd.f32 %v31, %v182
  %v201 = vadd.f32 %v32, %v185
  %v202 = vadd.f32 %v33, %v190
  %v203 = vadd.f32 %v34, %v193
  %204 = vst [vmem:[#allocation2] sm:$0xff] %v196
  %205 = vst [vmem:[#allocation2 + $0x8] sm:$0xff] %v197
  %206 = vst [vmem:[#allocation2 + $0x10] sm:$0xff] %v198
  %207 = vst [vmem:[#allocation2 + $0x18] sm:$0xff] %v199
  %208 = vst [vmem:[#allocation2 + $0x20] sm:$0xff] %v200
  %209 = vst [vmem:[#allocation2 + $0x28] sm:$0xff] %v201
  %210 = vst [vmem:[#allocation2 + $0x30] sm:$0xff] %v202
  %211 = vst [vmem:[#allocation2 + $0x38] sm:$0xff] %v203
  // Predicated region
  $region18: #{resnet_feature_extractor.43} parent=0 // pred_check
    %p212 = pneg %p15
  $region19: #{resnet_feature_extractor.43} parent=0 // pred_check_branch
    %214 = sbr.rel (%p212) target = $region21
  $region20: #{resnet_feature_extractor.43} parent=0 // pred_region
    %v215 = vld [vmem:[#allocation2] sm:$0xff]
    %v216 = vld [vmem:[#allocation2 + $0x8] sm:$0xff]
    %v217 = vld [vmem:[#allocation2 + $0x10] sm:$0xff]
    %v218 = vld [vmem:[#allocation2 + $0x18] sm:$0xff]
    %v219 = vld [vmem:[#allocation2 + $0x20] sm:$0xff]
    %v220 = vld [vmem:[#allocation2 + $0x28] sm:$0xff]
    %v221 = vld [vmem:[#allocation2 + $0x30] sm:$0xff]
    %v222 = vld [vmem:[#allocation2 + $0x38] sm:$0xff]
    %v223 = vld [vmem:[%s2] sm:$0x1]
    %v225 = vlaneseq
    %v226 = vshrl.u32 %v225, 7
    %v227 = vsub.s32 0, %v226
    %v228 = vrot.slane %v223, %v227
    %v230 = vadd.f32 %v215, %v228
    %v231 = vadd.f32 %v216, %v228
    %v232 = vadd.f32 %v217, %v228
    %v233 = vadd.f32 %v218, %v228
    %v234 = vadd.f32 %v219, %v228
    %v235 = vadd.f32 %v220, %v228
    %v236 = vadd.f32 %v221, %v228
    %v237 = vadd.f32 %v222, %v228
    %v238 = vpack.c.bf16 %v231, %v230
    %v239 = vpack.c.bf16 %v233, %v232
    %v240 = vpack.c.bf16 %v235, %v234
    %v241 = vpack.c.bf16 %v237, %v236
    %v246 = vunpack.c.l.b16 %v238
    %v247 = vunpack.c.h.b16 %v238
    %v248 = vunpack.c.l.b16 %v239
    %v249 = vunpack.c.h.b16 %v239
    %v250 = vunpack.c.l.b16 %v240
    %v251 = vunpack.c.h.b16 %v240
    %v252 = vunpack.c.l.b16 %v241
    %v253 = vunpack.c.h.b16 %v241
    %v254 = vpack.c.b16 %v246, %v246
    %v255 = vpack.c.b16 %v247, %v247
    %v256 = vpack.c.b16 %v248, %v248
    %v257 = vpack.c.b16 %v249, %v249
    %v258 = vpack.c.b16 %v250, %v250
    %v259 = vpack.c.b16 %v251, %v251
    %v260 = vpack.c.b16 %v252, %v252
    %v261 = vpack.c.b16 %v253, %v253
    %270 = vst [vmem:[%s3] sm:$0xf] %v254
    %271 = vst [vmem:[%s3 + $0x4] sm:$0xf] %v255
    %272 = vst [vmem:[%s3 + $0x8] sm:$0xf] %v256
    %273 = vst [vmem:[%s3 + $0xc] sm:$0xf] %v257
    %274 = vst [vmem:[%s3 + $0x10] sm:$0xf] %v258
    %275 = vst [vmem:[%s3 + $0x14] sm:$0xf] %v259
    %276 = vst [vmem:[%s3 + $0x18] sm:$0xf] %v260
    %277 = vst [vmem:[%s3 + $0x1c] sm:$0xf] %v261
  $region21: #{resnet_feature_extractor.43} parent=0 // pred_fallthru
    _
  // Predicated region
  $region22: #{resnet_feature_extractor.43} parent=0 // pred_check
    _
  $region23: #{resnet_feature_extractor.43} parent=0 // pred_check_branch
    %279 = sbr.rel (0) target = $region25
  $region24: #{resnet_feature_extractor.43} parent=0 // pred_region
    _
  $region25: #{resnet_feature_extractor.43} parent=0 // pred_fallthru
    _
  // Predicated region
  $region26: #{resnet_feature_extractor.43} parent=0 // pred_check
    _
  $region27: #{resnet_feature_extractor.43} parent=0 // pred_check_branch
    %281 = sbr.rel (0) target = $region29
  $region28: #{resnet_feature_extractor.43} parent=0 // pred_region
    _
  $region29: #{resnet_feature_extractor.43} parent=0 // pred_fallthru
    _

// kernel: resnet_feature_extractor.49
$region0: #{resnet_feature_extractor.49}
  #allocation0 [shape = 'u32[]', space=smem, size = 0x4, offset = 0x4, fixed_abs, tag = 'smem constant byte address 0x4 - core index']
  #allocation1 [shape = 'u32[144,128]{1,0:T(1,128)}', space=vmem, size = 0x12000, scoped, tag = 'internal scratch']
  %s0 = inlined_call_operand.vmem [shape: bf16[40,16], index: 0, kind: input, shape index: {}]
  %s1 = inlined_call_operand.vmem [shape: bf16[40,16], index: 1, kind: input, shape index: {}]
  %s2 = inlined_call_operand.vmem [shape: bf16[40,16], index: 2, kind: input, shape index: {}]
  %s3 = inlined_call_operand.vmem [shape: bf16[40,16], index: 3, kind: input, shape index: {}]
  %s4 = inlined_call_operand.vmem [shape: bf16[40,16], index: 4, kind: output, shape index: {}]
  %s5 = sld [smem:[#allocation0]]
  $region26: #{resnet_feature_extractor.49} parent=0
    _
  %s7 = ssub.s32 1, %s5
  %s8 = scalar_select 0, %s7, %s5
  // Predicated region
  $region2: #{resnet_feature_extractor.49} parent=0 // pred_check
    _
  $region3: #{resnet_feature_extractor.49} parent=0 // pred_check_branch
    %10 = sbr.rel (0) target = $region5
  $region4: #{resnet_feature_extractor.49} parent=0 // pred_region
    _
  $region5: #{resnet_feature_extractor.49} parent=0 // pred_fallthru
    _
  // Predicated region
  $region6: #{resnet_feature_extractor.49} parent=0 // pred_check
    _
  $region7: #{resnet_feature_extractor.49} parent=0 // pred_check_branch
    %12 = sbr.rel (0) target = $region9
  $region8: #{resnet_feature_extractor.49} parent=0 // pred_region
    _
  $region9: #{resnet_feature_extractor.49} parent=0 // pred_fallthru
    _
  // Predicated region
  $region10: #{resnet_feature_extractor.49} parent=0 // pred_check
    _
  $region11: #{resnet_feature_extractor.49} parent=0 // pred_check_branch
    %14 = sbr.rel (0) target = $region13
  $region12: #{resnet_feature_extractor.49} parent=0 // pred_region
    _
  $region13: #{resnet_feature_extractor.49} parent=0 // pred_fallthru
    _
  // Predicated region
  $region14: #{resnet_feature_extractor.49} parent=0 // pred_check
    _
  $region15: #{resnet_feature_extractor.49} parent=0 // pred_check_branch
    %16 = sbr.rel (0) target = $region17
  $region16: #{resnet_feature_extractor.49} parent=0 // pred_region
    _
  $region17: #{resnet_feature_extractor.49} parent=0 // pred_fallthru
    _
  %v17 = vld [vmem:[%s0] sm:$0xf]
  %v18 = vld [vmem:[%s0 + $0x4] sm:$0xf]
  %v19 = vld [vmem:[%s0 + $0x8] sm:$0xf]
  %v20 = vld [vmem:[%s0 + $0xc] sm:$0xf]
  %v21 = vld [vmem:[%s0 + $0x10] sm:$0xf]
  %v22 = vld [vmem:[%s1] sm:$0xf]
  %v23 = vld [vmem:[%s1 + $0x4] sm:$0xf]
  %v24 = vld [vmem:[%s1 + $0x8] sm:$0xf]
  %v25 = vld [vmem:[%s1 + $0xc] sm:$0xf]
  %v26 = vld [vmem:[%s1 + $0x10] sm:$0xf]
  %v27 = vmax.bf16 %v17, %v22
  %v28 = vmax.bf16 %v18, %v23
  %v29 = vmax.bf16 %v19, %v24
  %v30 = vmax.bf16 %v20, %v25
  %v31 = vmax.bf16 %v21, %v26
  %v32 = vld [vmem:[%s2] sm:$0xf]
  %v33 = vld [vmem:[%s2 + $0x4] sm:$0xf]
  %v34 = vld [vmem:[%s2 + $0x8] sm:$0xf]
  %v35 = vld [vmem:[%s2 + $0xc] sm:$0xf]
  %v36 = vld [vmem:[%s2 + $0x10] sm:$0xf]
  %v37 = vmax.bf16 %v27, %v32
  %v38 = vmax.bf16 %v28, %v33
  %v39 = vmax.bf16 %v29, %v34
  %v40 = vmax.bf16 %v30, %v35
  %v41 = vmax.bf16 %v31, %v36
  %v42 = vld [vmem:[%s3] sm:$0xf]
  %v43 = vld [vmem:[%s3 + $0x4] sm:$0xf]
  %v44 = vld [vmem:[%s3 + $0x8] sm:$0xf]
  %v45 = vld [vmem:[%s3 + $0xc] sm:$0xf]
  %v46 = vld [vmem:[%s3 + $0x10] sm:$0xf]
  %v47 = vmax.bf16 %v37, %v42
  %v48 = vmax.bf16 %v38, %v43
  %v49 = vmax.bf16 %v39, %v44
  %v50 = vmax.bf16 %v40, %v45
  %v51 = vmax.bf16 %v41, %v46
  %vm52 = vcmask 125952
  %53 = vst.msk [vmem:[%s4] sm:$0xf] %vm52, %v47
  %54 = vst.msk [vmem:[%s4 + $0x4] sm:$0xf] %vm52, %v48
  %55 = vst.msk [vmem:[%s4 + $0x8] sm:$0xf] %vm52, %v49
  %56 = vst.msk [vmem:[%s4 + $0xc] sm:$0xf] %vm52, %v50
  %57 = vst.msk [vmem:[%s4 + $0x10] sm:$0xf] %vm52, %v51
  // Predicated region
  $region18: #{resnet_feature_extractor.49} parent=0 // pred_check
    _
  $region19: #{resnet_feature_extractor.49} parent=0 // pred_check_branch
    %59 = sbr.rel (0) target = $region21
  $region20: #{resnet_feature_extractor.49} parent=0 // pred_region
    _
  $region21: #{resnet_feature_extractor.49} parent=0 // pred_fallthru
    _
  // Predicated region
  $region22: #{resnet_feature_extractor.49} parent=0 // pred_check
    _
  $region23: #{resnet_feature_extractor.49} parent=0 // pred_check_branch
    %61 = sbr.rel (0) target = $region25
  $region24: #{resnet_feature_extractor.49} parent=0 // pred_region
    _
  $region25: #{resnet_feature_extractor.49} parent=0 // pred_fallthru
    _

// kernel: resnet_feature_extractor.45
$region0: #{resnet_feature_extractor.45}
  #allocation0 [shape = 'u32[]', space=smem, size = 0x4, offset = 0x4, fixed_abs, tag = 'smem constant byte address 0x4 - core index']
  #allocation1 [shape = 'u32[144,128]{1,0:T(1,128)}', space=vmem, size = 0x12000, scoped, tag = 'internal scratch']
  #allocation2 [shape = 'f32[64,128]{1,0:T(8,128)}', space=vmem, size = 0x8000, scoped, tag = 'scratch operand']
  %s0 = inlined_call_operand.vmem [shape: bf16[64,256], index: 0, kind: input, shape index: {}]
  %s1 = inlined_call_operand.vmem [shape: bf16[256,128], index: 1, kind: input, shape index: {}]
  %s2 = inlined_call_operand.vmem [shape: f32[1,128], index: 2, kind: input, shape index: {}]
  %s3 = inlined_call_operand.vmem [shape: bf16[64,128], index: 3, kind: input, shape index: {}]
  %s4 = inlined_call_operand.vmem [shape: bf16[64,128], index: 4, kind: output, shape index: {}]
  %s5 = sld [smem:[#allocation0]]
  $region34: #{resnet_feature_extractor.45} parent=0
    _
  %s7 = ssub.s32 1, %s5
  %s8 = scalar_select 0, %s7, %s5
  // Predicated region
  $region2: #{resnet_feature_extractor.45} parent=0 // pred_check
    _
  $region3: #{resnet_feature_extractor.45} parent=0 // pred_check_branch
    %10 = sbr.rel (0) target = $region5
  $region4: #{resnet_feature_extractor.45} parent=0 // pred_region
    _
  $region5: #{resnet_feature_extractor.45} parent=0 // pred_fallthru
    _
  // Predicated region
  $region6: #{resnet_feature_extractor.45} parent=0 // pred_check
    _
  $region7: #{resnet_feature_extractor.45} parent=0 // pred_check_branch
    %12 = sbr.rel (0) target = $region9
  $region8: #{resnet_feature_extractor.45} parent=0 // pred_region
    _
  $region9: #{resnet_feature_extractor.45} parent=0 // pred_fallthru
    _
  // Predicated region
  $region10: #{resnet_feature_extractor.45} parent=0 // pred_check
    _
  $region11: #{resnet_feature_extractor.45} parent=0 // pred_check_branch
    %14 = sbr.rel (0) target = $region13
  $region12: #{resnet_feature_extractor.45} parent=0 // pred_region
    _
  $region13: #{resnet_feature_extractor.45} parent=0 // pred_fallthru
    _
  // Predicated region
  $region14: #{resnet_feature_extractor.45} parent=0 // pred_check
    _
  $region15: #{resnet_feature_extractor.45} parent=0 // pred_check_branch
    %16 = sbr.rel (0) target = $region17
  $region16: #{resnet_feature_extractor.45} parent=0 // pred_region
    _
  $region17: #{resnet_feature_extractor.45} parent=0 // pred_fallthru
    _
  %p18 = scmp.eq.s32.totalorder 0, 0
  // Predicated region
  $region18: #{resnet_feature_extractor.45} parent=0 // pred_check
    %p19 = pneg %p18
  $region19: #{resnet_feature_extractor.45} parent=0 // pred_check_branch
    %21 = sbr.rel (%p19) target = $region21
  $region20: #{resnet_feature_extractor.45} parent=0 // pred_region
    %22 = vst [vmem:[#allocation2] sm:$0xff] 0.0
    %23 = vst [vmem:[#allocation2 + $0x8] sm:$0xff] 0.0
    %24 = vst [vmem:[#allocation2 + $0x10] sm:$0xff] 0.0
    %25 = vst [vmem:[#allocation2 + $0x18] sm:$0xff] 0.0
    %26 = vst [vmem:[#allocation2 + $0x20] sm:$0xff] 0.0
    %27 = vst [vmem:[#allocation2 + $0x28] sm:$0xff] 0.0
    %28 = vst [vmem:[#allocation2 + $0x30] sm:$0xff] 0.0
    %29 = vst [vmem:[#allocation2 + $0x38] sm:$0xff] 0.0
  $region21: #{resnet_feature_extractor.45} parent=0 // pred_fallthru
    _
  %v30 = vld [vmem:[#allocation2] sm:$0xff]
  %v31 = vld [vmem:[#allocation2 + $0x8] sm:$0xff]
  %v32 = vld [vmem:[#allocation2 + $0x10] sm:$0xff]
  %v33 = vld [vmem:[#allocation2 + $0x18] sm:$0xff]
  %v34 = vld [vmem:[#allocation2 + $0x20] sm:$0xff]
  %v35 = vld [vmem:[#allocation2 + $0x28] sm:$0xff]
  %v36 = vld [vmem:[#allocation2 + $0x30] sm:$0xff]
  %v37 = vld [vmem:[#allocation2 + $0x38] sm:$0xff]
  %v38 = vld [vmem:[%s0] sm:$0xff]
  %v39 = vld [vmem:[%s0 + $0x8] sm:$0xff]
  %v40 = vld [vmem:[%s0 + $0x10] sm:$0xff]
  %v41 = vld [vmem:[%s0 + $0x18] sm:$0xff]
  %v42 = vld [vmem:[%s0 + $0x20] sm:$0xff]
  %v43 = vld [vmem:[%s0 + $0x28] sm:$0xff]
  %v44 = vld [vmem:[%s0 + $0x30] sm:$0xff]
  %v45 = vld [vmem:[%s0 + $0x38] sm:$0xff]
  %v46 = vld [vmem:[%s1] sm:$0xf]
  %v47 = vld [vmem:[%s1 + $0x4] sm:$0xf]
  %v48 = vld [vmem:[%s1 + $0x8] sm:$0xf]
  %v49 = vld [vmem:[%s1 + $0xc] sm:$0xf]
  %v50 = vld [vmem:[%s1 + $0x10] sm:$0xf]
  %v51 = vld [vmem:[%s1 + $0x14] sm:$0xf]
  %v52 = vld [vmem:[%s1 + $0x18] sm:$0xf]
  %v53 = vld [vmem:[%s1 + $0x1c] sm:$0xf]
  %v54 = vld [vmem:[%s1 + $0x20] sm:$0xf]
  %v55 = vld [vmem:[%s1 + $0x24] sm:$0xf]
  %v56 = vld [vmem:[%s1 + $0x28] sm:$0xf]
  %v57 = vld [vmem:[%s1 + $0x2c] sm:$0xf]
  %v58 = vld [vmem:[%s1 + $0x30] sm:$0xf]
  %v59 = vld [vmem:[%s1 + $0x34] sm:$0xf]
  %v60 = vld [vmem:[%s1 + $0x38] sm:$0xf]
  %v61 = vld [vmem:[%s1 + $0x3c] sm:$0xf]
  %v62 = vld [vmem:[%s1 + $0x40] sm:$0xf]
  %v63 = vld [vmem:[%s1 + $0x44] sm:$0xf]
  %v64 = vld [vmem:[%s1 + $0x48] sm:$0xf]
  %v65 = vld [vmem:[%s1 + $0x4c] sm:$0xf]
  %v66 = vld [vmem:[%s1 + $0x50] sm:$0xf]
  %v67 = vld [vmem:[%s1 + $0x54] sm:$0xf]
  %v68 = vld [vmem:[%s1 + $0x58] sm:$0xf]
  %v69 = vld [vmem:[%s1 + $0x5c] sm:$0xf]
  %v70 = vld [vmem:[%s1 + $0x60] sm:$0xf]
  %v71 = vld [vmem:[%s1 + $0x64] sm:$0xf]
  %v72 = vld [vmem:[%s1 + $0x68] sm:$0xf]
  %v73 = vld [vmem:[%s1 + $0x6c] sm:$0xf]
  %v74 = vld [vmem:[%s1 + $0x70] sm:$0xf]
  %v75 = vld [vmem:[%s1 + $0x74] sm:$0xf]
  %v76 = vld [vmem:[%s1 + $0x78] sm:$0xf]
  %v77 = vld [vmem:[%s1 + $0x7c] sm:$0xf]
  %v86 = vunpack.c.l.b16 %v38
  %v87 = vunpack.c.h.b16 %v38
  %v88 = vunpack.c.l.b16 %v39
  %v89 = vunpack.c.h.b16 %v39
  %v90 = vunpack.c.l.b16 %v40
  %v91 = vunpack.c.h.b16 %v40
  %v92 = vunpack.c.l.b16 %v41
  %v93 = vunpack.c.h.b16 %v41
  %v94 = vunpack.c.l.b16 %v42
  %v95 = vunpack.c.h.b16 %v42
  %v96 = vunpack.c.l.b16 %v43
  %v97 = vunpack.c.h.b16 %v43
  %v98 = vunpack.c.l.b16 %v44
  %v99 = vunpack.c.h.b16 %v44
  %v100 = vunpack.c.l.b16 %v45
  %v101 = vunpack.c.h.b16 %v45
  %v102 = vpack.c.b16 %v88, %v86
  %v103 = vpack.c.b16 %v89, %v87
  %v104 = vpack.c.b16 %v92, %v90
  %v105 = vpack.c.b16 %v93, %v91
  %v106 = vpack.c.b16 %v96, %v94
  %v107 = vpack.c.b16 %v97, %v95
  %v108 = vpack.c.b16 %v100, %v98
  %v109 = vpack.c.b16 %v101, %v99
  %v150 = vunpack.c.l.b16 %v46
  %v151 = vunpack.c.l.b16 %v47
  %v152 = vunpack.c.l.b16 %v48
  %v153 = vunpack.c.l.b16 %v49
  %v154 = vunpack.c.l.b16 %v50
  %v155 = vunpack.c.l.b16 %v51
  %v156 = vunpack.c.l.b16 %v52
  %v157 = vunpack.c.l.b16 %v53
  %v158 = vunpack.c.l.b16 %v54
  %v159 = vunpack.c.l.b16 %v55
  %v160 = vunpack.c.l.b16 %v56
  %v161 = vunpack.c.l.b16 %v57
  %v162 = vunpack.c.l.b16 %v58
  %v163 = vunpack.c.l.b16 %v59
  %v164 = vunpack.c.l.b16 %v60
  %v165 = vunpack.c.l.b16 %v61
  %v166 = vunpack.c.l.b16 %v62
  %v167 = vunpack.c.l.b16 %v63
  %v168 = vunpack.c.l.b16 %v64
  %v169 = vunpack.c.l.b16 %v65
  %v170 = vunpack.c.l.b16 %v66
  %v171 = vunpack.c.l.b16 %v67
  %v172 = vunpack.c.l.b16 %v68
  %v173 = vunpack.c.l.b16 %v69
  %v174 = vunpack.c.l.b16 %v70
  %v175 = vunpack.c.l.b16 %v71
  %v176 = vunpack.c.l.b16 %v72
  %v177 = vunpack.c.l.b16 %v73
  %v178 = vunpack.c.l.b16 %v74
  %v179 = vunpack.c.l.b16 %v75
  %v180 = vunpack.c.l.b16 %v76
  %v181 = vunpack.c.l.b16 %v77
  %v182 = vpack.c.b16 %v151, %v150
  %v183 = vpack.c.b16 %v153, %v152
  %v184 = vpack.c.b16 %v155, %v154
  %v185 = vpack.c.b16 %v157, %v156
  %v186 = vpack.c.b16 %v159, %v158
  %v187 = vpack.c.b16 %v161, %v160
  %v188 = vpack.c.b16 %v163, %v162
  %v189 = vpack.c.b16 %v165, %v164
  %v190 = vpack.c.b16 %v167, %v166
  %v191 = vpack.c.b16 %v169, %v168
  %v192 = vpack.c.b16 %v171, %v170
  %v193 = vpack.c.b16 %v173, %v172
  %v194 = vpack.c.b16 %v175, %v174
  %v195 = vpack.c.b16 %v177, %v176
  %v196 = vpack.c.b16 %v179, %v178
  %v197 = vpack.c.b16 %v181, %v180
  %214 = vmatprep.subr.bf16.mxu0 0
  %215 = vmatpush1.bf16.msra.mxu0 %v182
  %216 = vmatprep.subr.bf16.mxu0 0
  %217 = vmatpush1.bf16.msra.mxu0 %v183
  %218 = vmatprep.subr.bf16.mxu0 0
  %219 = vmatpush1.bf16.msra.mxu0 %v184
  %220 = vmatprep.subr.bf16.mxu0 0
  %221 = vmatpush1.bf16.msra.mxu0 %v185
  %222 = vmatprep.subr.bf16.mxu0 0
  %223 = vmatpush1.bf16.msra.mxu0 %v186
  %224 = vmatprep.subr.bf16.mxu0 0
  %225 = vmatpush1.bf16.msra.mxu0 %v187
  %226 = vmatprep.subr.bf16.mxu0 0
  %227 = vmatpush1.bf16.msra.mxu0 %v188
  %228 = vmatprep.subr.bf16.mxu0 0
  %229 = vmatpush1.bf16.msra.mxu0 %v189
  %230 = vmatprep.subr.bf16.mxu0 0
  %231 = vmatpush1.bf16.msra.mxu0 %v190
  %232 = vmatprep.subr.bf16.mxu0 0
  %233 = vmatpush1.bf16.msra.mxu0 %v191
  %234 = vmatprep.subr.bf16.mxu0 0
  %235 = vmatpush1.bf16.msra.mxu0 %v192
  %236 = vmatprep.subr.bf16.mxu0 0
  %237 = vmatpush1.bf16.msra.mxu0 %v193
  %238 = vmatprep.subr.bf16.mxu0 0
  %239 = vmatpush1.bf16.msra.mxu0 %v194
  %240 = vmatprep.subr.bf16.mxu0 0
  %241 = vmatpush1.bf16.msra.mxu0 %v195
  %242 = vmatprep.subr.bf16.mxu0 0
  %243 = vmatpush1.bf16.msra.mxu0 %v196
  %244 = vmatprep.subr.bf16.mxu0 0
  %245 = vmatpush1.bf16.msra.mxu0 %v197
  %246 = vmatprep.mubr.bf16.mxu0 %v103
  %247 = vmatmul.mubr.bf16.gmra.mrb[0].mxu0 %v102
  %v248 = vpop.f32.mrb[0].mxu0
  %v249 = vadd.f32 0.0, %v248
  %v250 = vpop.f32.mrb[0].mxu0
  %v251 = vpop.f32.mrb[0].mxu0
  %v252 = vadd.f32 0.0, %v251
  %v253 = vpop.f32.mrb[0].mxu0
  %254 = vmatprep.mubr.bf16.mxu0 %v105
  %255 = vmatmul.mubr.bf16.gmra.mrb[0].mxu0 %v104
  %v256 = vpop.f32.mrb[0].mxu0
  %v257 = vadd.f32 0.0, %v256
  %v258 = vpop.f32.mrb[0].mxu0
  %v259 = vpop.f32.mrb[0].mxu0
  %v260 = vadd.f32 0.0, %v259
  %v261 = vpop.f32.mrb[0].mxu0
  %262 = vmatprep.mubr.bf16.mxu0 %v107
  %263 = vmatmul.mubr.bf16.gmra.mrb[0].mxu0 %v106
  %v264 = vpop.f32.mrb[0].mxu0
  %v265 = vadd.f32 0.0, %v264
  %v266 = vpop.f32.mrb[0].mxu0
  %v267 = vpop.f32.mrb[0].mxu0
  %v268 = vadd.f32 0.0, %v267
  %v269 = vpop.f32.mrb[0].mxu0
  %270 = vmatprep.mubr.bf16.mxu0 %v109
  %271 = vmatmul.mubr.bf16.gmra.mrb[0].mxu0 %v108
  %v272 = vpop.f32.mrb[0].mxu0
  %v273 = vadd.f32 0.0, %v272
  %v274 = vpop.f32.mrb[0].mxu0
  %v275 = vpop.f32.mrb[0].mxu0
  %v276 = vadd.f32 0.0, %v275
  %v277 = vpop.f32.mrb[0].mxu0
  %278 = vdwg.mxu0
  %v279 = vadd.f32 %v30, %v249
  %v280 = vadd.f32 %v31, %v252
  %v281 = vadd.f32 %v32, %v257
  %v282 = vadd.f32 %v33, %v260
  %v283 = vadd.f32 %v34, %v265
  %v284 = vadd.f32 %v35, %v268
  %v285 = vadd.f32 %v36, %v273
  %v286 = vadd.f32 %v37, %v276
  %287 = vst [vmem:[#allocation2] sm:$0xff] %v279
  %288 = vst [vmem:[#allocation2 + $0x8] sm:$0xff] %v280
  %289 = vst [vmem:[#allocation2 + $0x10] sm:$0xff] %v281
  %290 = vst [vmem:[#allocation2 + $0x18] sm:$0xff] %v282
  %291 = vst [vmem:[#allocation2 + $0x20] sm:$0xff] %v283
  %292 = vst [vmem:[#allocation2 + $0x28] sm:$0xff] %v284
  %293 = vst [vmem:[#allocation2 + $0x30] sm:$0xff] %v285
  %294 = vst [vmem:[#allocation2 + $0x38] sm:$0xff] %v286
  // Predicated region
  $region22: #{resnet_feature_extractor.45} parent=0 // pred_check
    %p295 = pneg %p18
  $region23: #{resnet_feature_extractor.45} parent=0 // pred_check_branch
    %297 = sbr.rel (%p295) target = $region25
  $region24: #{resnet_feature_extractor.45} parent=0 // pred_region
    %v298 = vld [vmem:[#allocation2] sm:$0xff]
    %v299 = vld [vmem:[#allocation2 + $0x8] sm:$0xff]
    %v300 = vld [vmem:[#allocation2 + $0x10] sm:$0xff]
    %v301 = vld [vmem:[#allocation2 + $0x18] sm:$0xff]
    %v302 = vld [vmem:[#allocation2 + $0x20] sm:$0xff]
    %v303 = vld [vmem:[#allocation2 + $0x28] sm:$0xff]
    %v304 = vld [vmem:[#allocation2 + $0x30] sm:$0xff]
    %v305 = vld [vmem:[#allocation2 + $0x38] sm:$0xff]
    %v306 = vld [vmem:[%s2] sm:$0x1]
    %v308 = vlaneseq
    %v309 = vshrl.u32 %v308, 7
    %v310 = vsub.s32 0, %v309
    %v311 = vrot.slane %v306, %v310
    %v313 = vadd.f32 %v298, %v311
    %v314 = vadd.f32 %v299, %v311
    %v315 = vadd.f32 %v300, %v311
    %v316 = vadd.f32 %v301, %v311
    %v317 = vadd.f32 %v302, %v311
    %v318 = vadd.f32 %v303, %v311
    %v319 = vadd.f32 %v304, %v311
    %v320 = vadd.f32 %v305, %v311
    %v321 = vld [vmem:[%s3] sm:$0xf]
    %v322 = vld [vmem:[%s3 + $0x4] sm:$0xf]
    %v323 = vld [vmem:[%s3 + $0x8] sm:$0xf]
    %v324 = vld [vmem:[%s3 + $0xc] sm:$0xf]
    %v325 = vld [vmem:[%s3 + $0x10] sm:$0xf]
    %v326 = vld [vmem:[%s3 + $0x14] sm:$0xf]
    %v327 = vld [vmem:[%s3 + $0x18] sm:$0xf]
    %v328 = vld [vmem:[%s3 + $0x1c] sm:$0xf]
    %v329 = vunpack.c.l.bf16 %v321
    %v330 = vunpack.c.l.bf16 %v322
    %v331 = vunpack.c.l.bf16 %v323
    %v332 = vunpack.c.l.bf16 %v324
    %v333 = vunpack.c.l.bf16 %v325
    %v334 = vunpack.c.l.bf16 %v326
    %v335 = vunpack.c.l.bf16 %v327
    %v336 = vunpack.c.l.bf16 %v328
    %v337 = vadd.f32 %v313, %v329
    %v338 = vadd.f32 %v314, %v330
    %v339 = vadd.f32 %v315, %v331
    %v340 = vadd.f32 %v316, %v332
    %v341 = vadd.f32 %v317, %v333
    %v342 = vadd.f32 %v318, %v334
    %v343 = vadd.f32 %v319, %v335
    %v344 = vadd.f32 %v320, %v336
    %v345 = vmax.f32 %v337, 0.0
    %v346 = vmax.f32 %v338, 0.0
    %v347 = vmax.f32 %v339, 0.0
    %v348 = vmax.f32 %v340, 0.0
    %v349 = vmax.f32 %v341, 0.0
    %v350 = vmax.f32 %v342, 0.0
    %v351 = vmax.f32 %v343, 0.0
    %v352 = vmax.f32 %v344, 0.0
    %v353 = vpack.c.bf16 %v346, %v345
    %v354 = vpack.c.bf16 %v348, %v347
    %v355 = vpack.c.bf16 %v350, %v349
    %v356 = vpack.c.bf16 %v352, %v351
    %v361 = vunpack.c.l.b16 %v353
    %v362 = vunpack.c.h.b16 %v353
    %v363 = vunpack.c.l.b16 %v354
    %v364 = vunpack.c.h.b16 %v354
    %v365 = vunpack.c.l.b16 %v355
    %v366 = vunpack.c.h.b16 %v355
    %v367 = vunpack.c.l.b16 %v356
    %v368 = vunpack.c.h.b16 %v356
    %v369 = vpack.c.b16 %v361, %v361
    %v370 = vpack.c.b16 %v362, %v362
    %v371 = vpack.c.b16 %v363, %v363
    %v372 = vpack.c.b16 %v364, %v364
    %v373 = vpack.c.b16 %v365, %v365
    %v374 = vpack.c.b16 %v366, %v366
    %v375 = vpack.c.b16 %v367, %v367
    %v376 = vpack.c.b16 %v368, %v368
    %385 = vst [vmem:[%s4] sm:$0xf] %v369
    %386 = vst [vmem:[%s4 + $0x4] sm:$0xf] %v370
    %387 = vst [vmem:[%s4 + $0x8] sm:$0xf] %v371
    %388 = vst [vmem:[%s4 + $0xc] sm:$0xf] %v372
    %389 = vst [vmem:[%s4 + $0x10] sm:$0xf] %v373
    %390 = vst [vmem:[%s4 + $0x14] sm:$0xf] %v374
    %391 = vst [vmem:[%s4 + $0x18] sm:$0xf] %v375
    %392 = vst [vmem:[%s4 + $0x1c] sm:$0xf] %v376
  $region25: #{resnet_feature_extractor.45} parent=0 // pred_fallthru
    _
  // Predicated region
  $region26: #{resnet_feature_extractor.45} parent=0 // pred_check
    _
  $region27: #{resnet_feature_extractor.45} parent=0 // pred_check_branch
    %394 = sbr.rel (0) target = $region29
  $region28: #{resnet_feature_extractor.45} parent=0 // pred_region
    _
  $region29: #{resnet_feature_extractor.45} parent=0 // pred_fallthru
    _
  // Predicated region
  $region30: #{resnet_feature_extractor.45} parent=0 // pred_check
    _
  $region31: #{resnet_feature_extractor.45} parent=0 // pred_check_branch
    %396 = sbr.rel (0) target = $region33
  $region32: #{resnet_feature_extractor.45} parent=0 // pred_region
    _
  $region33: #{resnet_feature_extractor.45} parent=0 // pred_fallthru
    _

// kernel: resnet_feature_extractor.46
$region0: #{resnet_feature_extractor.46}
  #allocation0 [shape = 'u32[]', space=smem, size = 0x4, offset = 0x4, fixed_abs, tag = 'smem constant byte address 0x4 - core index']
  #allocation1 [shape = 'u32[144,128]{1,0:T(1,128)}', space=vmem, size = 0x12000, scoped, tag = 'internal scratch']
  #allocation2 [shape = 'f32[64,128]{1,0:T(8,128)}', space=vmem, size = 0x8000, scoped, tag = 'scratch operand']
  %s0 = inlined_call_operand.vmem [shape: bf16[64,256], index: 0, kind: input, shape index: {}]
  %s1 = inlined_call_operand.vmem [shape: bf16[256,128], index: 1, kind: input, shape index: {}]
  %s2 = inlined_call_operand.vmem [shape: f32[1,128], index: 2, kind: input, shape index: {}]
  %s3 = inlined_call_operand.vmem [shape: bf16[64,128], index: 3, kind: output, shape index: {}]
  %s4 = sld [smem:[#allocation0]]
  $region30: #{resnet_feature_extractor.46} parent=0
    _
  %s6 = ssub.s32 1, %s4
  %s7 = scalar_select 0, %s6, %s4
  // Predicated region
  $region2: #{resnet_feature_extractor.46} parent=0 // pred_check
    _
  $region3: #{resnet_feature_extractor.46} parent=0 // pred_check_branch
    %9 = sbr.rel (0) target = $region5
  $region4: #{resnet_feature_extractor.46} parent=0 // pred_region
    _
  $region5: #{resnet_feature_extractor.46} parent=0 // pred_fallthru
    _
  // Predicated region
  $region6: #{resnet_feature_extractor.46} parent=0 // pred_check
    _
  $region7: #{resnet_feature_extractor.46} parent=0 // pred_check_branch
    %11 = sbr.rel (0) target = $region9
  $region8: #{resnet_feature_extractor.46} parent=0 // pred_region
    _
  $region9: #{resnet_feature_extractor.46} parent=0 // pred_fallthru
    _
  // Predicated region
  $region10: #{resnet_feature_extractor.46} parent=0 // pred_check
    _
  $region11: #{resnet_feature_extractor.46} parent=0 // pred_check_branch
    %13 = sbr.rel (0) target = $region13
  $region12: #{resnet_feature_extractor.46} parent=0 // pred_region
    _
  $region13: #{resnet_feature_extractor.46} parent=0 // pred_fallthru
    _
  %p15 = scmp.eq.s32.totalorder 0, 0
  // Predicated region
  $region14: #{resnet_feature_extractor.46} parent=0 // pred_check
    %p16 = pneg %p15
  $region15: #{resnet_feature_extractor.46} parent=0 // pred_check_branch
    %18 = sbr.rel (%p16) target = $region17
  $region16: #{resnet_feature_extractor.46} parent=0 // pred_region
    %19 = vst [vmem:[#allocation2] sm:$0xff] 0.0
    %20 = vst [vmem:[#allocation2 + $0x8] sm:$0xff] 0.0
    %21 = vst [vmem:[#allocation2 + $0x10] sm:$0xff] 0.0
    %22 = vst [vmem:[#allocation2 + $0x18] sm:$0xff] 0.0
    %23 = vst [vmem:[#allocation2 + $0x20] sm:$0xff] 0.0
    %24 = vst [vmem:[#allocation2 + $0x28] sm:$0xff] 0.0
    %25 = vst [vmem:[#allocation2 + $0x30] sm:$0xff] 0.0
    %26 = vst [vmem:[#allocation2 + $0x38] sm:$0xff] 0.0
  $region17: #{resnet_feature_extractor.46} parent=0 // pred_fallthru
    _
  %v27 = vld [vmem:[#allocation2] sm:$0xff]
  %v28 = vld [vmem:[#allocation2 + $0x8] sm:$0xff]
  %v29 = vld [vmem:[#allocation2 + $0x10] sm:$0xff]
  %v30 = vld [vmem:[#allocation2 + $0x18] sm:$0xff]
  %v31 = vld [vmem:[#allocation2 + $0x20] sm:$0xff]
  %v32 = vld [vmem:[#allocation2 + $0x28] sm:$0xff]
  %v33 = vld [vmem:[#allocation2 + $0x30] sm:$0xff]
  %v34 = vld [vmem:[#allocation2 + $0x38] sm:$0xff]
  %v35 = vld [vmem:[%s0] sm:$0xff]
  %v36 = vld [vmem:[%s0 + $0x8] sm:$0xff]
  %v37 = vld [vmem:[%s0 + $0x10] sm:$0xff]
  %v38 = vld [vmem:[%s0 + $0x18] sm:$0xff]
  %v39 = vld [vmem:[%s0 + $0x20] sm:$0xff]
  %v40 = vld [vmem:[%s0 + $0x28] sm:$0xff]
  %v41 = vld [vmem:[%s0 + $0x30] sm:$0xff]
  %v42 = vld [vmem:[%s0 + $0x38] sm:$0xff]
  %v43 = vld [vmem:[%s1] sm:$0xf]
  %v44 = vld [vmem:[%s1 + $0x4] sm:$0xf]
  %v45 = vld [vmem:[%s1 + $0x8] sm:$0xf]
  %v46 = vld [vmem:[%s1 + $0xc] sm:$0xf]
  %v47 = vld [vmem:[%s1 + $0x10] sm:$0xf]
  %v48 = vld [vmem:[%s1 + $0x14] sm:$0xf]
  %v49 = vld [vmem:[%s1 + $0x18] sm:$0xf]
  %v50 = vld [vmem:[%s1 + $0x1c] sm:$0xf]
  %v51 = vld [vmem:[%s1 + $0x20] sm:$0xf]
  %v52 = vld [vmem:[%s1 + $0x24] sm:$0xf]
  %v53 = vld [vmem:[%s1 + $0x28] sm:$0xf]
  %v54 = vld [vmem:[%s1 + $0x2c] sm:$0xf]
  %v55 = vld [vmem:[%s1 + $0x30] sm:$0xf]
  %v56 = vld [vmem:[%s1 + $0x34] sm:$0xf]
  %v57 = vld [vmem:[%s1 + $0x38] sm:$0xf]
  %v58 = vld [vmem:[%s1 + $0x3c] sm:$0xf]
  %v59 = vld [vmem:[%s1 + $0x40] sm:$0xf]
  %v60 = vld [vmem:[%s1 + $0x44] sm:$0xf]
  %v61 = vld [vmem:[%s1 + $0x48] sm:$0xf]
  %v62 = vld [vmem:[%s1 + $0x4c] sm:$0xf]
  %v63 = vld [vmem:[%s1 + $0x50] sm:$0xf]
  %v64 = vld [vmem:[%s1 + $0x54] sm:$0xf]
  %v65 = vld [vmem:[%s1 + $0x58] sm:$0xf]
  %v66 = vld [vmem:[%s1 + $0x5c] sm:$0xf]
  %v67 = vld [vmem:[%s1 + $0x60] sm:$0xf]
  %v68 = vld [vmem:[%s1 + $0x64] sm:$0xf]
  %v69 = vld [vmem:[%s1 + $0x68] sm:$0xf]
  %v70 = vld [vmem:[%s1 + $0x6c] sm:$0xf]
  %v71 = vld [vmem:[%s1 + $0x70] sm:$0xf]
  %v72 = vld [vmem:[%s1 + $0x74] sm:$0xf]
  %v73 = vld [vmem:[%s1 + $0x78] sm:$0xf]
  %v74 = vld [vmem:[%s1 + $0x7c] sm:$0xf]
  %v83 = vunpack.c.l.b16 %v35
  %v84 = vunpack.c.h.b16 %v35
  %v85 = vunpack.c.l.b16 %v36
  %v86 = vunpack.c.h.b16 %v36
  %v87 = vunpack.c.l.b16 %v37
  %v88 = vunpack.c.h.b16 %v37
  %v89 = vunpack.c.l.b16 %v38
  %v90 = vunpack.c.h.b16 %v38
  %v91 = vunpack.c.l.b16 %v39
  %v92 = vunpack.c.h.b16 %v39
  %v93 = vunpack.c.l.b16 %v40
  %v94 = vunpack.c.h.b16 %v40
  %v95 = vunpack.c.l.b16 %v41
  %v96 = vunpack.c.h.b16 %v41
  %v97 = vunpack.c.l.b16 %v42
  %v98 = vunpack.c.h.b16 %v42
  %v99 = vpack.c.b16 %v85, %v83
  %v100 = vpack.c.b16 %v86, %v84
  %v101 = vpack.c.b16 %v89, %v87
  %v102 = vpack.c.b16 %v90, %v88
  %v103 = vpack.c.b16 %v93, %v91
  %v104 = vpack.c.b16 %v94, %v92
  %v105 = vpack.c.b16 %v97, %v95
  %v106 = vpack.c.b16 %v98, %v96
  %v147 = vunpack.c.l.b16 %v43
  %v148 = vunpack.c.l.b16 %v44
  %v149 = vunpack.c.l.b16 %v45
  %v150 = vunpack.c.l.b16 %v46
  %v151 = vunpack.c.l.b16 %v47
  %v152 = vunpack.c.l.b16 %v48
  %v153 = vunpack.c.l.b16 %v49
  %v154 = vunpack.c.l.b16 %v50
  %v155 = vunpack.c.l.b16 %v51
  %v156 = vunpack.c.l.b16 %v52
  %v157 = vunpack.c.l.b16 %v53
  %v158 = vunpack.c.l.b16 %v54
  %v159 = vunpack.c.l.b16 %v55
  %v160 = vunpack.c.l.b16 %v56
  %v161 = vunpack.c.l.b16 %v57
  %v162 = vunpack.c.l.b16 %v58
  %v163 = vunpack.c.l.b16 %v59
  %v164 = vunpack.c.l.b16 %v60
  %v165 = vunpack.c.l.b16 %v61
  %v166 = vunpack.c.l.b16 %v62
  %v167 = vunpack.c.l.b16 %v63
  %v168 = vunpack.c.l.b16 %v64
  %v169 = vunpack.c.l.b16 %v65
  %v170 = vunpack.c.l.b16 %v66
  %v171 = vunpack.c.l.b16 %v67
  %v172 = vunpack.c.l.b16 %v68
  %v173 = vunpack.c.l.b16 %v69
  %v174 = vunpack.c.l.b16 %v70
  %v175 = vunpack.c.l.b16 %v71
  %v176 = vunpack.c.l.b16 %v72
  %v177 = vunpack.c.l.b16 %v73
  %v178 = vunpack.c.l.b16 %v74
  %v179 = vpack.c.b16 %v148, %v147
  %v180 = vpack.c.b16 %v150, %v149
  %v181 = vpack.c.b16 %v152, %v151
  %v182 = vpack.c.b16 %v154, %v153
  %v183 = vpack.c.b16 %v156, %v155
  %v184 = vpack.c.b16 %v158, %v157
  %v185 = vpack.c.b16 %v160, %v159
  %v186 = vpack.c.b16 %v162, %v161
  %v187 = vpack.c.b16 %v164, %v163
  %v188 = vpack.c.b16 %v166, %v165
  %v189 = vpack.c.b16 %v168, %v167
  %v190 = vpack.c.b16 %v170, %v169
  %v191 = vpack.c.b16 %v172, %v171
  %v192 = vpack.c.b16 %v174, %v173
  %v193 = vpack.c.b16 %v176, %v175
  %v194 = vpack.c.b16 %v178, %v177
  %211 = vmatprep.subr.bf16.mxu0 0
  %212 = vmatpush1.bf16.msra.mxu0 %v179
  %213 = vmatprep.subr.bf16.mxu0 0
  %214 = vmatpush1.bf16.msra.mxu0 %v180
  %215 = vmatprep.subr.bf16.mxu0 0
  %216 = vmatpush1.bf16.msra.mxu0 %v181
  %217 = vmatprep.subr.bf16.mxu0 0
  %218 = vmatpush1.bf16.msra.mxu0 %v182
  %219 = vmatprep.subr.bf16.mxu0 0
  %220 = vmatpush1.bf16.msra.mxu0 %v183
  %221 = vmatprep.subr.bf16.mxu0 0
  %222 = vmatpush1.bf16.msra.mxu0 %v184
  %223 = vmatprep.subr.bf16.mxu0 0
  %224 = vmatpush1.bf16.msra.mxu0 %v185
  %225 = vmatprep.subr.bf16.mxu0 0
  %226 = vmatpush1.bf16.msra.mxu0 %v186
  %227 = vmatprep.subr.bf16.mxu0 0
  %228 = vmatpush1.bf16.msra.mxu0 %v187
  %229 = vmatprep.subr.bf16.mxu0 0
  %230 = vmatpush1.bf16.msra.mxu0 %v188
  %231 = vmatprep.subr.bf16.mxu0 0
  %232 = vmatpush1.bf16.msra.mxu0 %v189
  %233 = vmatprep.subr.bf16.mxu0 0
  %234 = vmatpush1.bf16.msra.mxu0 %v190
  %235 = vmatprep.subr.bf16.mxu0 0
  %236 = vmatpush1.bf16.msra.mxu0 %v191
  %237 = vmatprep.subr.bf16.mxu0 0
  %238 = vmatpush1.bf16.msra.mxu0 %v192
  %239 = vmatprep.subr.bf16.mxu0 0
  %240 = vmatpush1.bf16.msra.mxu0 %v193
  %241 = vmatprep.subr.bf16.mxu0 0
  %242 = vmatpush1.bf16.msra.mxu0 %v194
  %243 = vmatprep.mubr.bf16.mxu0 %v100
  %244 = vmatmul.mubr.bf16.gmra.mrb[0].mxu0 %v99
  %v245 = vpop.f32.mrb[0].mxu0
  %v246 = vadd.f32 0.0, %v245
  %v247 = vpop.f32.mrb[0].mxu0
  %v248 = vpop.f32.mrb[0].mxu0
  %v249 = vadd.f32 0.0, %v248
  %v250 = vpop.f32.mrb[0].mxu0
  %251 = vmatprep.mubr.bf16.mxu0 %v102
  %252 = vmatmul.mubr.bf16.gmra.mrb[0].mxu0 %v101
  %v253 = vpop.f32.mrb[0].mxu0
  %v254 = vadd.f32 0.0, %v253
  %v255 = vpop.f32.mrb[0].mxu0
  %v256 = vpop.f32.mrb[0].mxu0
  %v257 = vadd.f32 0.0, %v256
  %v258 = vpop.f32.mrb[0].mxu0
  %259 = vmatprep.mubr.bf16.mxu0 %v104
  %260 = vmatmul.mubr.bf16.gmra.mrb[0].mxu0 %v103
  %v261 = vpop.f32.mrb[0].mxu0
  %v262 = vadd.f32 0.0, %v261
  %v263 = vpop.f32.mrb[0].mxu0
  %v264 = vpop.f32.mrb[0].mxu0
  %v265 = vadd.f32 0.0, %v264
  %v266 = vpop.f32.mrb[0].mxu0
  %267 = vmatprep.mubr.bf16.mxu0 %v106
  %268 = vmatmul.mubr.bf16.gmra.mrb[0].mxu0 %v105
  %v269 = vpop.f32.mrb[0].mxu0
  %v270 = vadd.f32 0.0, %v269
  %v271 = vpop.f32.mrb[0].mxu0
  %v272 = vpop.f32.mrb[0].mxu0
  %v273 = vadd.f32 0.0, %v272
  %v274 = vpop.f32.mrb[0].mxu0
  %275 = vdwg.mxu0
  %v276 = vadd.f32 %v27, %v246
  %v277 = vadd.f32 %v28, %v249
  %v278 = vadd.f32 %v29, %v254
  %v279 = vadd.f32 %v30, %v257
  %v280 = vadd.f32 %v31, %v262
  %v281 = vadd.f32 %v32, %v265
  %v282 = vadd.f32 %v33, %v270
  %v283 = vadd.f32 %v34, %v273
  %284 = vst [vmem:[#allocation2] sm:$0xff] %v276
  %285 = vst [vmem:[#allocation2 + $0x8] sm:$0xff] %v277
  %286 = vst [vmem:[#allocation2 + $0x10] sm:$0xff] %v278
  %287 = vst [vmem:[#allocation2 + $0x18] sm:$0xff] %v279
  %288 = vst [vmem:[#allocation2 + $0x20] sm:$0xff] %v280
  %289 = vst [vmem:[#allocation2 + $0x28] sm:$0xff] %v281
  %290 = vst [vmem:[#allocation2 + $0x30] sm:$0xff] %v282
  %291 = vst [vmem:[#allocation2 + $0x38] sm:$0xff] %v283
  // Predicated region
  $region18: #{resnet_feature_extractor.46} parent=0 // pred_check
    %p292 = pneg %p15
  $region19: #{resnet_feature_extractor.46} parent=0 // pred_check_branch
    %294 = sbr.rel (%p292) target = $region21
  $region20: #{resnet_feature_extractor.46} parent=0 // pred_region
    %v295 = vld [vmem:[#allocation2] sm:$0xff]
    %v296 = vld [vmem:[#allocation2 + $0x8] sm:$0xff]
    %v297 = vld [vmem:[#allocation2 + $0x10] sm:$0xff]
    %v298 = vld [vmem:[#allocation2 + $0x18] sm:$0xff]
    %v299 = vld [vmem:[#allocation2 + $0x20] sm:$0xff]
    %v300 = vld [vmem:[#allocation2 + $0x28] sm:$0xff]
    %v301 = vld [vmem:[#allocation2 + $0x30] sm:$0xff]
    %v302 = vld [vmem:[#allocation2 + $0x38] sm:$0xff]
    %v303 = vld [vmem:[%s2] sm:$0x1]
    %v305 = vlaneseq
    %v306 = vshrl.u32 %v305, 7
    %v307 = vsub.s32 0, %v306
    %v308 = vrot.slane %v303, %v307
    %v310 = vadd.f32 %v295, %v308
    %v311 = vadd.f32 %v296, %v308
    %v312 = vadd.f32 %v297, %v308
    %v313 = vadd.f32 %v298, %v308
    %v314 = vadd.f32 %v299, %v308
    %v315 = vadd.f32 %v300, %v308
    %v316 = vadd.f32 %v301, %v308
    %v317 = vadd.f32 %v302, %v308
    %v318 = vmax.f32 %v310, 0.0
    %v319 = vmax.f32 %v311, 0.0
    %v320 = vmax.f32 %v312, 0.0
    %v321 = vmax.f32 %v313, 0.0
    %v322 = vmax.f32 %v314, 0.0
    %v323 = vmax.f32 %v315, 0.0
    %v324 = vmax.f32 %v316, 0.0
    %v325 = vmax.f32 %v317, 0.0
    %v326 = vpack.c.bf16 %v319, %v318
    %v327 = vpack.c.bf16 %v321, %v320
    %v328 = vpack.c.bf16 %v323, %v322
    %v329 = vpack.c.bf16 %v325, %v324
    %v334 = vunpack.c.l.b16 %v326
    %v335 = vunpack.c.h.b16 %v326
    %v336 = vunpack.c.l.b16 %v327
    %v337 = vunpack.c.h.b16 %v327
    %v338 = vunpack.c.l.b16 %v328
    %v339 = vunpack.c.h.b16 %v328
    %v340 = vunpack.c.l.b16 %v329
    %v341 = vunpack.c.h.b16 %v329
    %v342 = vpack.c.b16 %v334, %v334
    %v343 = vpack.c.b16 %v335, %v335
    %v344 = vpack.c.b16 %v336, %v336
    %v345 = vpack.c.b16 %v337, %v337
    %v346 = vpack.c.b16 %v338, %v338
    %v347 = vpack.c.b16 %v339, %v339
    %v348 = vpack.c.b16 %v340, %v340
    %v349 = vpack.c.b16 %v341, %v341
    %358 = vst [vmem:[%s3] sm:$0xf] %v342
    %359 = vst [vmem:[%s3 + $0x4] sm:$0xf] %v343
    %360 = vst [vmem:[%s3 + $0x8] sm:$0xf] %v344
    %361 = vst [vmem:[%s3 + $0xc] sm:$0xf] %v345
    %362 = vst [vmem:[%s3 + $0x10] sm:$0xf] %v346
    %363 = vst [vmem:[%s3 + $0x14] sm:$0xf] %v347
    %364 = vst [vmem:[%s3 + $0x18] sm:$0xf] %v348
    %365 = vst [vmem:[%s3 + $0x1c] sm:$0xf] %v349
  $region21: #{resnet_feature_extractor.46} parent=0 // pred_fallthru
    _
  // Predicated region
  $region22: #{resnet_feature_extractor.46} parent=0 // pred_check
    _
  $region23: #{resnet_feature_extractor.46} parent=0 // pred_check_branch
    %367 = sbr.rel (0) target = $region25
  $region24: #{resnet_feature_extractor.46} parent=0 // pred_region
    _
  $region25: #{resnet_feature_extractor.46} parent=0 // pred_fallthru
    _
  // Predicated region
  $region26: #{resnet_feature_extractor.46} parent=0 // pred_check
    _
  $region27: #{resnet_feature_extractor.46} parent=0 // pred_check_branch
    %369 = sbr.rel (0) target = $region29
  $region28: #{resnet_feature_extractor.46} parent=0 // pred_region
    _
  $region29: #{resnet_feature_extractor.46} parent=0 // pred_fallthru
    _

// kernel: resnet_feature_extractor.51
$region0: #{resnet_feature_extractor.51}
  #allocation0 [shape = 'u32[]', space=smem, size = 0x4, offset = 0x4, fixed_abs, tag = 'smem constant byte address 0x4 - core index']
  #allocation1 [shape = 'u32[144,128]{1,0:T(1,128)}', space=vmem, size = 0x12000, scoped, tag = 'internal scratch']
  #allocation2 [shape = 'f32[40,128]{1,0:T(8,128)}', space=vmem, size = 0x5000, scoped, tag = 'scratch operand']
  %s0 = inlined_call_operand.vmem [shape: bf16[40,256], index: 0, kind: input, shape index: {}]
  %s1 = inlined_call_operand.vmem [shape: bf16[256,128], index: 1, kind: input, shape index: {}]
  %s2 = inlined_call_operand.vmem [shape: f32[1,128], index: 2, kind: input, shape index: {}]
  %s3 = inlined_call_operand.vmem [shape: bf16[40,128], index: 3, kind: output, shape index: {}]
  %s4 = sld [smem:[#allocation0]]
  $region30: #{resnet_feature_extractor.51} parent=0
    _
  %s6 = ssub.s32 1, %s4
  %s7 = scalar_select 0, %s6, %s4
  // Predicated region
  $region2: #{resnet_feature_extractor.51} parent=0 // pred_check
    _
  $region3: #{resnet_feature_extractor.51} parent=0 // pred_check_branch
    %9 = sbr.rel (0) target = $region5
  $region4: #{resnet_feature_extractor.51} parent=0 // pred_region
    _
  $region5: #{resnet_feature_extractor.51} parent=0 // pred_fallthru
    _
  // Predicated region
  $region6: #{resnet_feature_extractor.51} parent=0 // pred_check
    _
  $region7: #{resnet_feature_extractor.51} parent=0 // pred_check_branch
    %11 = sbr.rel (0) target = $region9
  $region8: #{resnet_feature_extractor.51} parent=0 // pred_region
    _
  $region9: #{resnet_feature_extractor.51} parent=0 // pred_fallthru
    _
  // Predicated region
  $region10: #{resnet_feature_extractor.51} parent=0 // pred_check
    _
  $region11: #{resnet_feature_extractor.51} parent=0 // pred_check_branch
    %13 = sbr.rel (0) target = $region13
  $region12: #{resnet_feature_extractor.51} parent=0 // pred_region
    _
  $region13: #{resnet_feature_extractor.51} parent=0 // pred_fallthru
    _
  %p15 = scmp.eq.s32.totalorder 0, 0
  // Predicated region
  $region14: #{resnet_feature_extractor.51} parent=0 // pred_check
    %p16 = pneg %p15
  $region15: #{resnet_feature_extractor.51} parent=0 // pred_check_branch
    %18 = sbr.rel (%p16) target = $region17
  $region16: #{resnet_feature_extractor.51} parent=0 // pred_region
    %19 = vst [vmem:[#allocation2] sm:$0xff] 0.0
    %20 = vst [vmem:[#allocation2 + $0x8] sm:$0xff] 0.0
    %21 = vst [vmem:[#allocation2 + $0x10] sm:$0xff] 0.0
    %22 = vst [vmem:[#allocation2 + $0x18] sm:$0xff] 0.0
    %23 = vst [vmem:[#allocation2 + $0x20] sm:$0xff] 0.0
  $region17: #{resnet_feature_extractor.51} parent=0 // pred_fallthru
    _
  %v24 = vld [vmem:[#allocation2] sm:$0xff]
  %v25 = vld [vmem:[#allocation2 + $0x8] sm:$0xff]
  %v26 = vld [vmem:[#allocation2 + $0x10] sm:$0xff]
  %v27 = vld [vmem:[#allocation2 + $0x18] sm:$0xff]
  %v28 = vld [vmem:[#allocation2 + $0x20] sm:$0xff]
  %v29 = vld [vmem:[%s0] sm:$0xff]
  %v30 = vld [vmem:[%s0 + $0x8] sm:$0xff]
  %v31 = vld [vmem:[%s0 + $0x10] sm:$0xff]
  %v32 = vld [vmem:[%s0 + $0x18] sm:$0xff]
  %v33 = vld [vmem:[%s0 + $0x20] sm:$0xff]
  %v34 = vld [vmem:[%s1] sm:$0xf]
  %v35 = vld [vmem:[%s1 + $0x4] sm:$0xf]
  %v36 = vld [vmem:[%s1 + $0x8] sm:$0xf]
  %v37 = vld [vmem:[%s1 + $0xc] sm:$0xf]
  %v38 = vld [vmem:[%s1 + $0x10] sm:$0xf]
  %v39 = vld [vmem:[%s1 + $0x14] sm:$0xf]
  %v40 = vld [vmem:[%s1 + $0x18] sm:$0xf]
  %v41 = vld [vmem:[%s1 + $0x1c] sm:$0xf]
  %v42 = vld [vmem:[%s1 + $0x20] sm:$0xf]
  %v43 = vld [vmem:[%s1 + $0x24] sm:$0xf]
  %v44 = vld [vmem:[%s1 + $0x28] sm:$0xf]
  %v45 = vld [vmem:[%s1 + $0x2c] sm:$0xf]
  %v46 = vld [vmem:[%s1 + $0x30] sm:$0xf]
  %v47 = vld [vmem:[%s1 + $0x34] sm:$0xf]
  %v48 = vld [vmem:[%s1 + $0x38] sm:$0xf]
  %v49 = vld [vmem:[%s1 + $0x3c] sm:$0xf]
  %v50 = vld [vmem:[%s1 + $0x40] sm:$0xf]
  %v51 = vld [vmem:[%s1 + $0x44] sm:$0xf]
  %v52 = vld [vmem:[%s1 + $0x48] sm:$0xf]
  %v53 = vld [vmem:[%s1 + $0x4c] sm:$0xf]
  %v54 = vld [vmem:[%s1 + $0x50] sm:$0xf]
  %v55 = vld [vmem:[%s1 + $0x54] sm:$0xf]
  %v56 = vld [vmem:[%s1 + $0x58] sm:$0xf]
  %v57 = vld [vmem:[%s1 + $0x5c] sm:$0xf]
  %v58 = vld [vmem:[%s1 + $0x60] sm:$0xf]
  %v59 = vld [vmem:[%s1 + $0x64] sm:$0xf]
  %v60 = vld [vmem:[%s1 + $0x68] sm:$0xf]
  %v61 = vld [vmem:[%s1 + $0x6c] sm:$0xf]
  %v62 = vld [vmem:[%s1 + $0x70] sm:$0xf]
  %v63 = vld [vmem:[%s1 + $0x74] sm:$0xf]
  %v64 = vld [vmem:[%s1 + $0x78] sm:$0xf]
  %v65 = vld [vmem:[%s1 + $0x7c] sm:$0xf]
  %v71 = vunpack.c.l.b16 %v29
  %v72 = vunpack.c.h.b16 %v29
  %v73 = vunpack.c.l.b16 %v30
  %v74 = vunpack.c.h.b16 %v30
  %v75 = vunpack.c.l.b16 %v31
  %v76 = vunpack.c.h.b16 %v31
  %v77 = vunpack.c.l.b16 %v32
  %v78 = vunpack.c.h.b16 %v32
  %v79 = vunpack.c.l.b16 %v33
  %v80 = vunpack.c.h.b16 %v33
  %v81 = vpack.c.b16 %v73, %v71
  %v82 = vpack.c.b16 %v74, %v72
  %v83 = vpack.c.b16 %v77, %v75
  %v84 = vpack.c.b16 %v78, %v76
  %v85 = vpack.c.b16 %v79, %v79
  %v86 = vpack.c.b16 %v80, %v80
  %v125 = vunpack.c.l.b16 %v34
  %v126 = vunpack.c.l.b16 %v35
  %v127 = vunpack.c.l.b16 %v36
  %v128 = vunpack.c.l.b16 %v37
  %v129 = vunpack.c.l.b16 %v38
  %v130 = vunpack.c.l.b16 %v39
  %v131 = vunpack.c.l.b16 %v40
  %v132 = vunpack.c.l.b16 %v41
  %v133 = vunpack.c.l.b16 %v42
  %v134 = vunpack.c.l.b16 %v43
  %v135 = vunpack.c.l.b16 %v44
  %v136 = vunpack.c.l.b16 %v45
  %v137 = vunpack.c.l.b16 %v46
  %v138 = vunpack.c.l.b16 %v47
  %v139 = vunpack.c.l.b16 %v48
  %v140 = vunpack.c.l.b16 %v49
  %v141 = vunpack.c.l.b16 %v50
  %v142 = vunpack.c.l.b16 %v51
  %v143 = vunpack.c.l.b16 %v52
  %v144 = vunpack.c.l.b16 %v53
  %v145 = vunpack.c.l.b16 %v54
  %v146 = vunpack.c.l.b16 %v55
  %v147 = vunpack.c.l.b16 %v56
  %v148 = vunpack.c.l.b16 %v57
  %v149 = vunpack.c.l.b16 %v58
  %v150 = vunpack.c.l.b16 %v59
  %v151 = vunpack.c.l.b16 %v60
  %v152 = vunpack.c.l.b16 %v61
  %v153 = vunpack.c.l.b16 %v62
  %v154 = vunpack.c.l.b16 %v63
  %v155 = vunpack.c.l.b16 %v64
  %v156 = vunpack.c.l.b16 %v65
  %v157 = vpack.c.b16 %v126, %v125
  %v158 = vpack.c.b16 %v128, %v127
  %v159 = vpack.c.b16 %v130, %v129
  %v160 = vpack.c.b16 %v132, %v131
  %v161 = vpack.c.b16 %v134, %v133
  %v162 = vpack.c.b16 %v136, %v135
  %v163 = vpack.c.b16 %v138, %v137
  %v164 = vpack.c.b16 %v140, %v139
  %v165 = vpack.c.b16 %v142, %v141
  %v166 = vpack.c.b16 %v144, %v143
  %v167 = vpack.c.b16 %v146, %v145
  %v168 = vpack.c.b16 %v148, %v147
  %v169 = vpack.c.b16 %v150, %v149
  %v170 = vpack.c.b16 %v152, %v151
  %v171 = vpack.c.b16 %v154, %v153
  %v172 = vpack.c.b16 %v156, %v155
  %189 = vmatprep.subr.bf16.mxu0 0
  %190 = vmatpush1.bf16.msra.mxu0 %v157
  %191 = vmatprep.subr.bf16.mxu0 0
  %192 = vmatpush1.bf16.msra.mxu0 %v158
  %193 = vmatprep.subr.bf16.mxu0 0
  %194 = vmatpush1.bf16.msra.mxu0 %v159
  %195 = vmatprep.subr.bf16.mxu0 0
  %196 = vmatpush1.bf16.msra.mxu0 %v160
  %197 = vmatprep.subr.bf16.mxu0 0
  %198 = vmatpush1.bf16.msra.mxu0 %v161
  %199 = vmatprep.subr.bf16.mxu0 0
  %200 = vmatpush1.bf16.msra.mxu0 %v162
  %201 = vmatprep.subr.bf16.mxu0 0
  %202 = vmatpush1.bf16.msra.mxu0 %v163
  %203 = vmatprep.subr.bf16.mxu0 0
  %204 = vmatpush1.bf16.msra.mxu0 %v164
  %205 = vmatprep.subr.bf16.mxu0 0
  %206 = vmatpush1.bf16.msra.mxu0 %v165
  %207 = vmatprep.subr.bf16.mxu0 0
  %208 = vmatpush1.bf16.msra.mxu0 %v166
  %209 = vmatprep.subr.bf16.mxu0 0
  %210 = vmatpush1.bf16.msra.mxu0 %v167
  %211 = vmatprep.subr.bf16.mxu0 0
  %212 = vmatpush1.bf16.msra.mxu0 %v168
  %213 = vmatprep.subr.bf16.mxu0 0
  %214 = vmatpush1.bf16.msra.mxu0 %v169
  %215 = vmatprep.subr.bf16.mxu0 0
  %216 = vmatpush1.bf16.msra.mxu0 %v170
  %217 = vmatprep.subr.bf16.mxu0 0
  %218 = vmatpush1.bf16.msra.mxu0 %v171
  %219 = vmatprep.subr.bf16.mxu0 0
  %220 = vmatpush1.bf16.msra.mxu0 %v172
  %221 = vmatprep.mubr.bf16.mxu0 %v82
  %222 = vmatmul.mubr.bf16.gmra.mrb[0].mxu0 %v81
  %v223 = vpop.f32.mrb[0].mxu0
  %v224 = vadd.f32 0.0, %v223
  %v225 = vpop.f32.mrb[0].mxu0
  %v226 = vpop.f32.mrb[0].mxu0
  %v227 = vadd.f32 0.0, %v226
  %v228 = vpop.f32.mrb[0].mxu0
  %229 = vmatprep.mubr.bf16.mxu0 %v84
  %230 = vmatmul.mubr.bf16.gmra.mrb[0].mxu0 %v83
  %v231 = vpop.f32.mrb[0].mxu0
  %v232 = vadd.f32 0.0, %v231
  %v233 = vpop.f32.mrb[0].mxu0
  %v234 = vpop.f32.mrb[0].mxu0
  %v235 = vadd.f32 0.0, %v234
  %v236 = vpop.f32.mrb[0].mxu0
  %237 = vmatprep.mubr.bf16.mxu0 %v86
  %238 = vmatmul.mubr.bf16.gmra.mrb[0].mxu0 %v85
  %v239 = vpop.f32.mrb[0].mxu0
  %v240 = vadd.f32 0.0, %v239
  %v241 = vpop.f32.mrb[0].mxu0
  %v242 = vpop.f32.mrb[0].mxu0
  %v243 = vpop.f32.mrb[0].mxu0
  %244 = vdwg.mxu0
  %v245 = vadd.f32 %v24, %v224
  %v246 = vadd.f32 %v25, %v227
  %v247 = vadd.f32 %v26, %v232
  %v248 = vadd.f32 %v27, %v235
  %v249 = vadd.f32 %v28, %v240
  %250 = vst [vmem:[#allocation2] sm:$0xff] %v245
  %251 = vst [vmem:[#allocation2 + $0x8] sm:$0xff] %v246
  %252 = vst [vmem:[#allocation2 + $0x10] sm:$0xff] %v247
  %253 = vst [vmem:[#allocation2 + $0x18] sm:$0xff] %v248
  %254 = vst [vmem:[#allocation2 + $0x20] sm:$0xff] %v249
  // Predicated region
  $region18: #{resnet_feature_extractor.51} parent=0 // pred_check
    %p255 = pneg %p15
  $region19: #{resnet_feature_extractor.51} parent=0 // pred_check_branch
    %257 = sbr.rel (%p255) target = $region21
  $region20: #{resnet_feature_extractor.51} parent=0 // pred_region
    %v258 = vld [vmem:[#allocation2] sm:$0xff]
    %v259 = vld [vmem:[#allocation2 + $0x8] sm:$0xff]
    %v260 = vld [vmem:[#allocation2 + $0x10] sm:$0xff]
    %v261 = vld [vmem:[#allocation2 + $0x18] sm:$0xff]
    %v262 = vld [vmem:[#allocation2 + $0x20] sm:$0xff]
    %v263 = vld [vmem:[%s2] sm:$0x1]
    %v265 = vlaneseq
    %v266 = vshrl.u32 %v265, 7
    %v267 = vsub.s32 0, %v266
    %v268 = vrot.slane %v263, %v267
    %v270 = vadd.f32 %v258, %v268
    %v271 = vadd.f32 %v259, %v268
    %v272 = vadd.f32 %v260, %v268
    %v273 = vadd.f32 %v261, %v268
    %v274 = vadd.f32 %v262, %v268
    %v275 = vmax.f32 %v270, 0.0
    %v276 = vmax.f32 %v271, 0.0
    %v277 = vmax.f32 %v272, 0.0
    %v278 = vmax.f32 %v273, 0.0
    %v279 = vmax.f32 %v274, 0.0
    %v280 = vpack.c.bf16 %v276, %v275
    %v281 = vpack.c.bf16 %v278, %v277
    %v282 = vpack.c.bf16 %v279, %v279
    %v286 = vunpack.c.l.b16 %v280
    %v287 = vunpack.c.h.b16 %v280
    %v288 = vunpack.c.l.b16 %v281
    %v289 = vunpack.c.h.b16 %v281
    %v290 = vunpack.c.l.b16 %v282
    %v291 = vpack.c.b16 %v286, %v286
    %v292 = vpack.c.b16 %v287, %v287
    %v293 = vpack.c.b16 %v288, %v288
    %v294 = vpack.c.b16 %v289, %v289
    %v295 = vpack.c.b16 %v290, %v290
    %301 = vst [vmem:[%s3] sm:$0xf] %v291
    %302 = vst [vmem:[%s3 + $0x4] sm:$0xf] %v292
    %303 = vst [vmem:[%s3 + $0x8] sm:$0xf] %v293
    %304 = vst [vmem:[%s3 + $0xc] sm:$0xf] %v294
    %305 = vst [vmem:[%s3 + $0x10] sm:$0xf] %v295
  $region21: #{resnet_feature_extractor.51} parent=0 // pred_fallthru
    _
  // Predicated region
  $region22: #{resnet_feature_extractor.51} parent=0 // pred_check
    _
  $region23: #{resnet_feature_extractor.51} parent=0 // pred_check_branch
    %307 = sbr.rel (0) target = $region25
  $region24: #{resnet_feature_extractor.51} parent=0 // pred_region
    _
  $region25: #{resnet_feature_extractor.51} parent=0 // pred_fallthru
    _
  // Predicated region
  $region26: #{resnet_feature_extractor.51} parent=0 // pred_check
    _
  $region27: #{resnet_feature_extractor.51} parent=0 // pred_check_branch
    %309 = sbr.rel (0) target = $region29
  $region28: #{resnet_feature_extractor.51} parent=0 // pred_region
    _
  $region29: #{resnet_feature_extractor.51} parent=0 // pred_fallthru
    _

// kernel: resnet_feature_extractor.50
$region0: #{resnet_feature_extractor.50}
  #allocation0 [shape = 'u32[]', space=smem, size = 0x4, offset = 0x4, fixed_abs, tag = 'smem constant byte address 0x4 - core index']
  #allocation1 [shape = 'u32[144,128]{1,0:T(1,128)}', space=vmem, size = 0x12000, scoped, tag = 'internal scratch']
  #allocation2 [shape = 'f32[40,128]{1,0:T(8,128)}', space=vmem, size = 0x5000, scoped, tag = 'scratch operand']
  %s0 = inlined_call_operand.vmem [shape: bf16[40,128], index: 0, kind: input, shape index: {}]
  %s1 = inlined_call_operand.vmem [shape: bf16[128,128], index: 1, kind: input, shape index: {}]
  %s2 = inlined_call_operand.vmem [shape: f32[1,128], index: 2, kind: input, shape index: {}]
  %s3 = inlined_call_operand.vmem [shape: bf16[40,128], index: 3, kind: output, shape index: {}]
  %s4 = sld [smem:[#allocation0]]
  $region30: #{resnet_feature_extractor.50} parent=0
    _
  %s6 = ssub.s32 1, %s4
  %s7 = scalar_select 0, %s6, %s4
  // Predicated region
  $region2: #{resnet_feature_extractor.50} parent=0 // pred_check
    _
  $region3: #{resnet_feature_extractor.50} parent=0 // pred_check_branch
    %9 = sbr.rel (0) target = $region5
  $region4: #{resnet_feature_extractor.50} parent=0 // pred_region
    _
  $region5: #{resnet_feature_extractor.50} parent=0 // pred_fallthru
    _
  // Predicated region
  $region6: #{resnet_feature_extractor.50} parent=0 // pred_check
    _
  $region7: #{resnet_feature_extractor.50} parent=0 // pred_check_branch
    %11 = sbr.rel (0) target = $region9
  $region8: #{resnet_feature_extractor.50} parent=0 // pred_region
    _
  $region9: #{resnet_feature_extractor.50} parent=0 // pred_fallthru
    _
  // Predicated region
  $region10: #{resnet_feature_extractor.50} parent=0 // pred_check
    _
  $region11: #{resnet_feature_extractor.50} parent=0 // pred_check_branch
    %13 = sbr.rel (0) target = $region13
  $region12: #{resnet_feature_extractor.50} parent=0 // pred_region
    _
  $region13: #{resnet_feature_extractor.50} parent=0 // pred_fallthru
    _
  %p15 = scmp.eq.s32.totalorder 0, 0
  // Predicated region
  $region14: #{resnet_feature_extractor.50} parent=0 // pred_check
    %p16 = pneg %p15
  $region15: #{resnet_feature_extractor.50} parent=0 // pred_check_branch
    %18 = sbr.rel (%p16) target = $region17
  $region16: #{resnet_feature_extractor.50} parent=0 // pred_region
    %19 = vst [vmem:[#allocation2] sm:$0xff] 0.0
    %20 = vst [vmem:[#allocation2 + $0x8] sm:$0xff] 0.0
    %21 = vst [vmem:[#allocation2 + $0x10] sm:$0xff] 0.0
    %22 = vst [vmem:[#allocation2 + $0x18] sm:$0xff] 0.0
    %23 = vst [vmem:[#allocation2 + $0x20] sm:$0xff] 0.0
  $region17: #{resnet_feature_extractor.50} parent=0 // pred_fallthru
    _
  %v24 = vld [vmem:[#allocation2] sm:$0xff]
  %v25 = vld [vmem:[#allocation2 + $0x8] sm:$0xff]
  %v26 = vld [vmem:[#allocation2 + $0x10] sm:$0xff]
  %v27 = vld [vmem:[#allocation2 + $0x18] sm:$0xff]
  %v28 = vld [vmem:[#allocation2 + $0x20] sm:$0xff]
  %v29 = vld [vmem:[%s0] sm:$0xf]
  %v30 = vld [vmem:[%s0 + $0x4] sm:$0xf]
  %v31 = vld [vmem:[%s0 + $0x8] sm:$0xf]
  %v32 = vld [vmem:[%s0 + $0xc] sm:$0xf]
  %v33 = vld [vmem:[%s0 + $0x10] sm:$0xf]
  %v34 = vld [vmem:[%s1] sm:$0xf]
  %v35 = vld [vmem:[%s1 + $0x4] sm:$0xf]
  %v36 = vld [vmem:[%s1 + $0x8] sm:$0xf]
  %v37 = vld [vmem:[%s1 + $0xc] sm:$0xf]
  %v38 = vld [vmem:[%s1 + $0x10] sm:$0xf]
  %v39 = vld [vmem:[%s1 + $0x14] sm:$0xf]
  %v40 = vld [vmem:[%s1 + $0x18] sm:$0xf]
  %v41 = vld [vmem:[%s1 + $0x1c] sm:$0xf]
  %v42 = vld [vmem:[%s1 + $0x20] sm:$0xf]
  %v43 = vld [vmem:[%s1 + $0x24] sm:$0xf]
  %v44 = vld [vmem:[%s1 + $0x28] sm:$0xf]
  %v45 = vld [vmem:[%s1 + $0x2c] sm:$0xf]
  %v46 = vld [vmem:[%s1 + $0x30] sm:$0xf]
  %v47 = vld [vmem:[%s1 + $0x34] sm:$0xf]
  %v48 = vld [vmem:[%s1 + $0x38] sm:$0xf]
  %v49 = vld [vmem:[%s1 + $0x3c] sm:$0xf]
  %v55 = vunpack.c.l.b16 %v29
  %v56 = vunpack.c.l.b16 %v30
  %v57 = vunpack.c.l.b16 %v31
  %v58 = vunpack.c.l.b16 %v32
  %v59 = vunpack.c.l.b16 %v33
  %v60 = vpack.c.b16 %v56, %v55
  %v61 = vpack.c.b16 %v58, %v57
  %v62 = vpack.c.b16 %v59, %v59
  %v82 = vunpack.c.l.b16 %v34
  %v83 = vunpack.c.l.b16 %v35
  %v84 = vunpack.c.l.b16 %v36
  %v85 = vunpack.c.l.b16 %v37
  %v86 = vunpack.c.l.b16 %v38
  %v87 = vunpack.c.l.b16 %v39
  %v88 = vunpack.c.l.b16 %v40
  %v89 = vunpack.c.l.b16 %v41
  %v90 = vunpack.c.l.b16 %v42
  %v91 = vunpack.c.l.b16 %v43
  %v92 = vunpack.c.l.b16 %v44
  %v93 = vunpack.c.l.b16 %v45
  %v94 = vunpack.c.l.b16 %v46
  %v95 = vunpack.c.l.b16 %v47
  %v96 = vunpack.c.l.b16 %v48
  %v97 = vunpack.c.l.b16 %v49
  %v98 = vpack.c.b16 %v83, %v82
  %v99 = vpack.c.b16 %v85, %v84
  %v100 = vpack.c.b16 %v87, %v86
  %v101 = vpack.c.b16 %v89, %v88
  %v102 = vpack.c.b16 %v91, %v90
  %v103 = vpack.c.b16 %v93, %v92
  %v104 = vpack.c.b16 %v95, %v94
  %v105 = vpack.c.b16 %v97, %v96
  %114 = vmatprep.subr.bf16.mxu0 0
  %115 = vmatpush1.bf16.msra.mxu0 %v98
  %116 = vmatprep.subr.bf16.mxu0 0
  %117 = vmatpush1.bf16.msra.mxu0 %v99
  %118 = vmatprep.subr.bf16.mxu0 0
  %119 = vmatpush1.bf16.msra.mxu0 %v100
  %120 = vmatprep.subr.bf16.mxu0 0
  %121 = vmatpush1.bf16.msra.mxu0 %v101
  %122 = vmatprep.subr.bf16.mxu0 0
  %123 = vmatpush1.bf16.msra.mxu0 %v102
  %124 = vmatprep.subr.bf16.mxu0 0
  %125 = vmatpush1.bf16.msra.mxu0 %v103
  %126 = vmatprep.subr.bf16.mxu0 0
  %127 = vmatpush1.bf16.msra.mxu0 %v104
  %128 = vmatprep.subr.bf16.mxu0 0
  %129 = vmatpush1.bf16.msra.mxu0 %v105
  %130 = vmatprep.subr.bf16.mxu0 0
  %131 = vmatpush1.bf16.msra.mxu0 0
  %132 = vmatprep.subr.bf16.mxu0 0
  %133 = vmatpush1.bf16.msra.mxu0 0
  %134 = vmatprep.subr.bf16.mxu0 0
  %135 = vmatpush1.bf16.msra.mxu0 0
  %136 = vmatprep.subr.bf16.mxu0 0
  %137 = vmatpush1.bf16.msra.mxu0 0
  %138 = vmatprep.subr.bf16.mxu0 0
  %139 = vmatpush1.bf16.msra.mxu0 0
  %140 = vmatprep.subr.bf16.mxu0 0
  %141 = vmatpush1.bf16.msra.mxu0 0
  %142 = vmatprep.subr.bf16.mxu0 0
  %143 = vmatpush1.bf16.msra.mxu0 0
  %144 = vmatprep.subr.bf16.mxu0 0
  %145 = vmatpush1.bf16.msra.mxu0 0
  %146 = vmatprep.mubr.bf16.mxu0 0
  %147 = vmatmul.mubr.bf16.gmra.mrb[0].mxu0 %v60
  %v148 = vpop.f32.mrb[0].mxu0
  %v149 = vadd.f32 0.0, %v148
  %v150 = vpop.f32.mrb[0].mxu0
  %v151 = vpop.f32.mrb[0].mxu0
  %v152 = vadd.f32 0.0, %v151
  %v153 = vpop.f32.mrb[0].mxu0
  %154 = vmatprep.mubr.bf16.mxu0 0
  %155 = vmatmul.mubr.bf16.gmra.mrb[0].mxu0 %v61
  %v156 = vpop.f32.mrb[0].mxu0
  %v157 = vadd.f32 0.0, %v156
  %v158 = vpop.f32.mrb[0].mxu0
  %v159 = vpop.f32.mrb[0].mxu0
  %v160 = vadd.f32 0.0, %v159
  %v161 = vpop.f32.mrb[0].mxu0
  %162 = vmatprep.mubr.bf16.mxu0 0
  %163 = vmatmul.mubr.bf16.gmra.mrb[0].mxu0 %v62
  %v164 = vpop.f32.mrb[0].mxu0
  %v165 = vadd.f32 0.0, %v164
  %v166 = vpop.f32.mrb[0].mxu0
  %v167 = vpop.f32.mrb[0].mxu0
  %v168 = vpop.f32.mrb[0].mxu0
  %169 = vdwg.mxu0
  %v170 = vadd.f32 %v24, %v149
  %v171 = vadd.f32 %v25, %v152
  %v172 = vadd.f32 %v26, %v157
  %v173 = vadd.f32 %v27, %v160
  %v174 = vadd.f32 %v28, %v165
  %175 = vst [vmem:[#allocation2] sm:$0xff] %v170
  %176 = vst [vmem:[#allocation2 + $0x8] sm:$0xff] %v171
  %177 = vst [vmem:[#allocation2 + $0x10] sm:$0xff] %v172
  %178 = vst [vmem:[#allocation2 + $0x18] sm:$0xff] %v173
  %179 = vst [vmem:[#allocation2 + $0x20] sm:$0xff] %v174
  // Predicated region
  $region18: #{resnet_feature_extractor.50} parent=0 // pred_check
    %p180 = pneg %p15
  $region19: #{resnet_feature_extractor.50} parent=0 // pred_check_branch
    %182 = sbr.rel (%p180) target = $region21
  $region20: #{resnet_feature_extractor.50} parent=0 // pred_region
    %v183 = vld [vmem:[#allocation2] sm:$0xff]
    %v184 = vld [vmem:[#allocation2 + $0x8] sm:$0xff]
    %v185 = vld [vmem:[#allocation2 + $0x10] sm:$0xff]
    %v186 = vld [vmem:[#allocation2 + $0x18] sm:$0xff]
    %v187 = vld [vmem:[#allocation2 + $0x20] sm:$0xff]
    %v188 = vld [vmem:[%s2] sm:$0x1]
    %v190 = vlaneseq
    %v191 = vshrl.u32 %v190, 7
    %v192 = vsub.s32 0, %v191
    %v193 = vrot.slane %v188, %v192
    %v195 = vadd.f32 %v183, %v193
    %v196 = vadd.f32 %v184, %v193
    %v197 = vadd.f32 %v185, %v193
    %v198 = vadd.f32 %v186, %v193
    %v199 = vadd.f32 %v187, %v193
    %v200 = vpack.c.bf16 %v196, %v195
    %v201 = vpack.c.bf16 %v198, %v197
    %v202 = vpack.c.bf16 %v199, %v199
    %v206 = vunpack.c.l.b16 %v200
    %v207 = vunpack.c.h.b16 %v200
    %v208 = vunpack.c.l.b16 %v201
    %v209 = vunpack.c.h.b16 %v201
    %v210 = vunpack.c.l.b16 %v202
    %v211 = vpack.c.b16 %v206, %v206
    %v212 = vpack.c.b16 %v207, %v207
    %v213 = vpack.c.b16 %v208, %v208
    %v214 = vpack.c.b16 %v209, %v209
    %v215 = vpack.c.b16 %v210, %v210
    %221 = vst [vmem:[%s3] sm:$0xf] %v211
    %222 = vst [vmem:[%s3 + $0x4] sm:$0xf] %v212
    %223 = vst [vmem:[%s3 + $0x8] sm:$0xf] %v213
    %224 = vst [vmem:[%s3 + $0xc] sm:$0xf] %v214
    %225 = vst [vmem:[%s3 + $0x10] sm:$0xf] %v215
  $region21: #{resnet_feature_extractor.50} parent=0 // pred_fallthru
    _
  // Predicated region
  $region22: #{resnet_feature_extractor.50} parent=0 // pred_check
    _
  $region23: #{resnet_feature_extractor.50} parent=0 // pred_check_branch
    %227 = sbr.rel (0) target = $region25
  $region24: #{resnet_feature_extractor.50} parent=0 // pred_region
    _
  $region25: #{resnet_feature_extractor.50} parent=0 // pred_fallthru
    _
  // Predicated region
  $region26: #{resnet_feature_extractor.50} parent=0 // pred_check
    _
  $region27: #{resnet_feature_extractor.50} parent=0 // pred_check_branch
    %229 = sbr.rel (0) target = $region29
  $region28: #{resnet_feature_extractor.50} parent=0 // pred_region
    _
  $region29: #{resnet_feature_extractor.50} parent=0 // pred_fallthru
    _

// kernel: resnet_feature_extractor.53
$region0: #{resnet_feature_extractor.53}
  #allocation0 [shape = 'u32[]', space=smem, size = 0x4, offset = 0x4, fixed_abs, tag = 'smem constant byte address 0x4 - core index']
  #allocation1 [shape = 'u32[144,128]{1,0:T(1,128)}', space=vmem, size = 0x12000, scoped, tag = 'internal scratch']
  #allocation2 [shape = 'f32[40,128]{1,0:T(8,128)}', space=vmem, size = 0x5000, scoped, tag = 'scratch operand']
  %s0 = inlined_call_operand.vmem [shape: bf16[40,384], index: 0, kind: input, shape index: {}]
  %s1 = inlined_call_operand.vmem [shape: bf16[384,128], index: 1, kind: input, shape index: {}]
  %s2 = inlined_call_operand.vmem [shape: f32[1,128], index: 2, kind: input, shape index: {}]
  %s3 = inlined_call_operand.vmem [shape: bf16[40,128], index: 3, kind: output, shape index: {}]
  %s4 = sld [smem:[#allocation0]]
  $region30: #{resnet_feature_extractor.53} parent=0
    _
  %s6 = ssub.s32 1, %s4
  %s7 = scalar_select 0, %s6, %s4
  // Predicated region
  $region2: #{resnet_feature_extractor.53} parent=0 // pred_check
    _
  $region3: #{resnet_feature_extractor.53} parent=0 // pred_check_branch
    %9 = sbr.rel (0) target = $region5
  $region4: #{resnet_feature_extractor.53} parent=0 // pred_region
    _
  $region5: #{resnet_feature_extractor.53} parent=0 // pred_fallthru
    _
  // Predicated region
  $region6: #{resnet_feature_extractor.53} parent=0 // pred_check
    _
  $region7: #{resnet_feature_extractor.53} parent=0 // pred_check_branch
    %11 = sbr.rel (0) target = $region9
  $region8: #{resnet_feature_extractor.53} parent=0 // pred_region
    _
  $region9: #{resnet_feature_extractor.53} parent=0 // pred_fallthru
    _
  // Predicated region
  $region10: #{resnet_feature_extractor.53} parent=0 // pred_check
    _
  $region11: #{resnet_feature_extractor.53} parent=0 // pred_check_branch
    %13 = sbr.rel (0) target = $region13
  $region12: #{resnet_feature_extractor.53} parent=0 // pred_region
    _
  $region13: #{resnet_feature_extractor.53} parent=0 // pred_fallthru
    _
  %p15 = scmp.eq.s32.totalorder 0, 0
  // Predicated region
  $region14: #{resnet_feature_extractor.53} parent=0 // pred_check
    %p16 = pneg %p15
  $region15: #{resnet_feature_extractor.53} parent=0 // pred_check_branch
    %18 = sbr.rel (%p16) target = $region17
  $region16: #{resnet_feature_extractor.53} parent=0 // pred_region
    %19 = vst [vmem:[#allocation2] sm:$0xff] 0.0
    %20 = vst [vmem:[#allocation2 + $0x8] sm:$0xff] 0.0
    %21 = vst [vmem:[#allocation2 + $0x10] sm:$0xff] 0.0
    %22 = vst [vmem:[#allocation2 + $0x18] sm:$0xff] 0.0
    %23 = vst [vmem:[#allocation2 + $0x20] sm:$0xff] 0.0
  $region17: #{resnet_feature_extractor.53} parent=0 // pred_fallthru
    _
  %v24 = vld [vmem:[#allocation2] sm:$0xff]
  %v25 = vld [vmem:[#allocation2 + $0x8] sm:$0xff]
  %v26 = vld [vmem:[#allocation2 + $0x10] sm:$0xff]
  %v27 = vld [vmem:[#allocation2 + $0x18] sm:$0xff]
  %v28 = vld [vmem:[#allocation2 + $0x20] sm:$0xff]
  %v29 = vld [vmem:[%s0] sm:$0xff]
  %v30 = vld [vmem:[%s0 + $0x8] sm:$0xf]
  %v31 = vld [vmem:[%s0 + $0xc] sm:$0xff]
  %v32 = vld [vmem:[%s0 + $0x14] sm:$0xf]
  %v33 = vld [vmem:[%s0 + $0x18] sm:$0xff]
  %v34 = vld [vmem:[%s0 + $0x20] sm:$0xf]
  %v35 = vld [vmem:[%s0 + $0x24] sm:$0xff]
  %v36 = vld [vmem:[%s0 + $0x2c] sm:$0xf]
  %v37 = vld [vmem:[%s0 + $0x30] sm:$0xff]
  %v38 = vld [vmem:[%s0 + $0x38] sm:$0xf]
  %v39 = vld [vmem:[%s1] sm:$0xf]
  %v40 = vld [vmem:[%s1 + $0x4] sm:$0xf]
  %v41 = vld [vmem:[%s1 + $0x8] sm:$0xf]
  %v42 = vld [vmem:[%s1 + $0xc] sm:$0xf]
  %v43 = vld [vmem:[%s1 + $0x10] sm:$0xf]
  %v44 = vld [vmem:[%s1 + $0x14] sm:$0xf]
  %v45 = vld [vmem:[%s1 + $0x18] sm:$0xf]
  %v46 = vld [vmem:[%s1 + $0x1c] sm:$0xf]
  %v47 = vld [vmem:[%s1 + $0x20] sm:$0xf]
  %v48 = vld [vmem:[%s1 + $0x24] sm:$0xf]
  %v49 = vld [vmem:[%s1 + $0x28] sm:$0xf]
  %v50 = vld [vmem:[%s1 + $0x2c] sm:$0xf]
  %v51 = vld [vmem:[%s1 + $0x30] sm:$0xf]
  %v52 = vld [vmem:[%s1 + $0x34] sm:$0xf]
  %v53 = vld [vmem:[%s1 + $0x38] sm:$0xf]
  %v54 = vld [vmem:[%s1 + $0x3c] sm:$0xf]
  %v55 = vld [vmem:[%s1 + $0x40] sm:$0xf]
  %v56 = vld [vmem:[%s1 + $0x44] sm:$0xf]
  %v57 = vld [vmem:[%s1 + $0x48] sm:$0xf]
  %v58 = vld [vmem:[%s1 + $0x4c] sm:$0xf]
  %v59 = vld [vmem:[%s1 + $0x50] sm:$0xf]
  %v60 = vld [vmem:[%s1 + $0x54] sm:$0xf]
  %v61 = vld [vmem:[%s1 + $0x58] sm:$0xf]
  %v62 = vld [vmem:[%s1 + $0x5c] sm:$0xf]
  %v63 = vld [vmem:[%s1 + $0x60] sm:$0xf]
  %v64 = vld [vmem:[%s1 + $0x64] sm:$0xf]
  %v65 = vld [vmem:[%s1 + $0x68] sm:$0xf]
  %v66 = vld [vmem:[%s1 + $0x6c] sm:$0xf]
  %v67 = vld [vmem:[%s1 + $0x70] sm:$0xf]
  %v68 = vld [vmem:[%s1 + $0x74] sm:$0xf]
  %v69 = vld [vmem:[%s1 + $0x78] sm:$0xf]
  %v70 = vld [vmem:[%s1 + $0x7c] sm:$0xf]
  %v71 = vld [vmem:[%s1 + $0x80] sm:$0xf]
  %v72 = vld [vmem:[%s1 + $0x84] sm:$0xf]
  %v73 = vld [vmem:[%s1 + $0x88] sm:$0xf]
  %v74 = vld [vmem:[%s1 + $0x8c] sm:$0xf]
  %v75 = vld [vmem:[%s1 + $0x90] sm:$0xf]
  %v76 = vld [vmem:[%s1 + $0x94] sm:$0xf]
  %v77 = vld [vmem:[%s1 + $0x98] sm:$0xf]
  %v78 = vld [vmem:[%s1 + $0x9c] sm:$0xf]
  %v79 = vld [vmem:[%s1 + $0xa0] sm:$0xf]
  %v80 = vld [vmem:[%s1 + $0xa4] sm:$0xf]
  %v81 = vld [vmem:[%s1 + $0xa8] sm:$0xf]
  %v82 = vld [vmem:[%s1 + $0xac] sm:$0xf]
  %v83 = vld [vmem:[%s1 + $0xb0] sm:$0xf]
  %v84 = vld [vmem:[%s1 + $0xb4] sm:$0xf]
  %v85 = vld [vmem:[%s1 + $0xb8] sm:$0xf]
  %v86 = vld [vmem:[%s1 + $0xbc] sm:$0xf]
  %v97 = vunpack.c.l.b16 %v29
  %v98 = vunpack.c.h.b16 %v29
  %v99 = vunpack.c.l.b16 %v30
  %v100 = vunpack.c.l.b16 %v31
  %v101 = vunpack.c.h.b16 %v31
  %v102 = vunpack.c.l.b16 %v32
  %v103 = vunpack.c.l.b16 %v33
  %v104 = vunpack.c.h.b16 %v33
  %v105 = vunpack.c.l.b16 %v34
  %v106 = vunpack.c.l.b16 %v35
  %v107 = vunpack.c.h.b16 %v35
  %v108 = vunpack.c.l.b16 %v36
  %v109 = vunpack.c.l.b16 %v37
  %v110 = vunpack.c.h.b16 %v37
  %v111 = vunpack.c.l.b16 %v38
  %v112 = vpack.c.b16 %v100, %v97
  %v113 = vpack.c.b16 %v101, %v98
  %v114 = vpack.c.b16 %v102, %v99
  %v115 = vpack.c.b16 %v106, %v103
  %v116 = vpack.c.b16 %v107, %v104
  %v117 = vpack.c.b16 %v108, %v105
  %v118 = vpack.c.b16 %v109, %v109
  %v119 = vpack.c.b16 %v110, %v110
  %v120 = vpack.c.b16 %v111, %v111
  %v178 = vunpack.c.l.b16 %v39
  %v179 = vunpack.c.l.b16 %v40
  %v180 = vunpack.c.l.b16 %v41
  %v181 = vunpack.c.l.b16 %v42
  %v182 = vunpack.c.l.b16 %v43
  %v183 = vunpack.c.l.b16 %v44
  %v184 = vunpack.c.l.b16 %v45
  %v185 = vunpack.c.l.b16 %v46
  %v186 = vunpack.c.l.b16 %v47
  %v187 = vunpack.c.l.b16 %v48
  %v188 = vunpack.c.l.b16 %v49
  %v189 = vunpack.c.l.b16 %v50
  %v190 = vunpack.c.l.b16 %v51
  %v191 = vunpack.c.l.b16 %v52
  %v192 = vunpack.c.l.b16 %v53
  %v193 = vunpack.c.l.b16 %v54
  %v194 = vunpack.c.l.b16 %v55
  %v195 = vunpack.c.l.b16 %v56
  %v196 = vunpack.c.l.b16 %v57
  %v197 = vunpack.c.l.b16 %v58
  %v198 = vunpack.c.l.b16 %v59
  %v199 = vunpack.c.l.b16 %v60
  %v200 = vunpack.c.l.b16 %v61
  %v201 = vunpack.c.l.b16 %v62
  %v202 = vunpack.c.l.b16 %v63
  %v203 = vunpack.c.l.b16 %v64
  %v204 = vunpack.c.l.b16 %v65
  %v205 = vunpack.c.l.b16 %v66
  %v206 = vunpack.c.l.b16 %v67
  %v207 = vunpack.c.l.b16 %v68
  %v208 = vunpack.c.l.b16 %v69
  %v209 = vunpack.c.l.b16 %v70
  %v210 = vunpack.c.l.b16 %v71
  %v211 = vunpack.c.l.b16 %v72
  %v212 = vunpack.c.l.b16 %v73
  %v213 = vunpack.c.l.b16 %v74
  %v214 = vunpack.c.l.b16 %v75
  %v215 = vunpack.c.l.b16 %v76
  %v216 = vunpack.c.l.b16 %v77
  %v217 = vunpack.c.l.b16 %v78
  %v218 = vunpack.c.l.b16 %v79
  %v219 = vunpack.c.l.b16 %v80
  %v220 = vunpack.c.l.b16 %v81
  %v221 = vunpack.c.l.b16 %v82
  %v222 = vunpack.c.l.b16 %v83
  %v223 = vunpack.c.l.b16 %v84
  %v224 = vunpack.c.l.b16 %v85
  %v225 = vunpack.c.l.b16 %v86
  %v226 = vpack.c.b16 %v179, %v178
  %v227 = vpack.c.b16 %v181, %v180
  %v228 = vpack.c.b16 %v183, %v182
  %v229 = vpack.c.b16 %v185, %v184
  %v230 = vpack.c.b16 %v187, %v186
  %v231 = vpack.c.b16 %v189, %v188
  %v232 = vpack.c.b16 %v191, %v190
  %v233 = vpack.c.b16 %v193, %v192
  %v234 = vpack.c.b16 %v195, %v194
  %v235 = vpack.c.b16 %v197, %v196
  %v236 = vpack.c.b16 %v199, %v198
  %v237 = vpack.c.b16 %v201, %v200
  %v238 = vpack.c.b16 %v203, %v202
  %v239 = vpack.c.b16 %v205, %v204
  %v240 = vpack.c.b16 %v207, %v206
  %v241 = vpack.c.b16 %v209, %v208
  %v242 = vpack.c.b16 %v211, %v210
  %v243 = vpack.c.b16 %v213, %v212
  %v244 = vpack.c.b16 %v215, %v214
  %v245 = vpack.c.b16 %v217, %v216
  %v246 = vpack.c.b16 %v219, %v218
  %v247 = vpack.c.b16 %v221, %v220
  %v248 = vpack.c.b16 %v223, %v222
  %v249 = vpack.c.b16 %v225, %v224
  %274 = vmatprep.subr.bf16.mxu0 0
  %275 = vmatpush1.bf16.msra.mxu0 %v226
  %276 = vmatprep.subr.bf16.mxu0 0
  %277 = vmatpush1.bf16.msra.mxu0 %v227
  %278 = vmatprep.subr.bf16.mxu0 0
  %279 = vmatpush1.bf16.msra.mxu0 %v228
  %280 = vmatprep.subr.bf16.mxu0 0
  %281 = vmatpush1.bf16.msra.mxu0 %v229
  %282 = vmatprep.subr.bf16.mxu0 0
  %283 = vmatpush1.bf16.msra.mxu0 %v230
  %284 = vmatprep.subr.bf16.mxu0 0
  %285 = vmatpush1.bf16.msra.mxu0 %v231
  %286 = vmatprep.subr.bf16.mxu0 0
  %287 = vmatpush1.bf16.msra.mxu0 %v232
  %288 = vmatprep.subr.bf16.mxu0 0
  %289 = vmatpush1.bf16.msra.mxu0 %v233
  %290 = vmatprep.subr.bf16.mxu0 0
  %291 = vmatpush1.bf16.msra.mxu0 %v234
  %292 = vmatprep.subr.bf16.mxu0 0
  %293 = vmatpush1.bf16.msra.mxu0 %v235
  %294 = vmatprep.subr.bf16.mxu0 0
  %295 = vmatpush1.bf16.msra.mxu0 %v236
  %296 = vmatprep.subr.bf16.mxu0 0
  %297 = vmatpush1.bf16.msra.mxu0 %v237
  %298 = vmatprep.subr.bf16.mxu0 0
  %299 = vmatpush1.bf16.msra.mxu0 %v238
  %300 = vmatprep.subr.bf16.mxu0 0
  %301 = vmatpush1.bf16.msra.mxu0 %v239
  %302 = vmatprep.subr.bf16.mxu0 0
  %303 = vmatpush1.bf16.msra.mxu0 %v240
  %304 = vmatprep.subr.bf16.mxu0 0
  %305 = vmatpush1.bf16.msra.mxu0 %v241
  %306 = vmatprep.mubr.bf16.mxu0 %v113
  %307 = vmatmul.mubr.bf16.gmra.mrb[0].mxu0 %v112
  %v308 = vpop.f32.mrb[0].mxu0
  %v309 = vadd.f32 0.0, %v308
  %v310 = vpop.f32.mrb[0].mxu0
  %v311 = vpop.f32.mrb[0].mxu0
  %v312 = vadd.f32 0.0, %v311
  %v313 = vpop.f32.mrb[0].mxu0
  %314 = vmatprep.mubr.bf16.mxu0 %v116
  %315 = vmatmul.mubr.bf16.gmra.mrb[0].mxu0 %v115
  %v316 = vpop.f32.mrb[0].mxu0
  %v317 = vadd.f32 0.0, %v316
  %v318 = vpop.f32.mrb[0].mxu0
  %v319 = vpop.f32.mrb[0].mxu0
  %v320 = vadd.f32 0.0, %v319
  %v321 = vpop.f32.mrb[0].mxu0
  %322 = vmatprep.mubr.bf16.mxu0 %v119
  %323 = vmatmul.mubr.bf16.gmra.mrb[0].mxu0 %v118
  %v324 = vpop.f32.mrb[0].mxu0
  %v325 = vadd.f32 0.0, %v324
  %v326 = vpop.f32.mrb[0].mxu0
  %v327 = vpop.f32.mrb[0].mxu0
  %v328 = vpop.f32.mrb[0].mxu0
  %329 = vdwg.mxu0
  %330 = vmatprep.subr.bf16.mxu0 0
  %331 = vmatpush1.bf16.msra.mxu0 %v242
  %332 = vmatprep.subr.bf16.mxu0 0
  %333 = vmatpush1.bf16.msra.mxu0 %v243
  %334 = vmatprep.subr.bf16.mxu0 0
  %335 = vmatpush1.bf16.msra.mxu0 %v244
  %336 = vmatprep.subr.bf16.mxu0 0
  %337 = vmatpush1.bf16.msra.mxu0 %v245
  %338 = vmatprep.subr.bf16.mxu0 0
  %339 = vmatpush1.bf16.msra.mxu0 %v246
  %340 = vmatprep.subr.bf16.mxu0 0
  %341 = vmatpush1.bf16.msra.mxu0 %v247
  %342 = vmatprep.subr.bf16.mxu0 0
  %343 = vmatpush1.bf16.msra.mxu0 %v248
  %344 = vmatprep.subr.bf16.mxu0 0
  %345 = vmatpush1.bf16.msra.mxu0 %v249
  %346 = vmatprep.subr.bf16.mxu0 0
  %347 = vmatpush1.bf16.msra.mxu0 0
  %348 = vmatprep.subr.bf16.mxu0 0
  %349 = vmatpush1.bf16.msra.mxu0 0
  %350 = vmatprep.subr.bf16.mxu0 0
  %351 = vmatpush1.bf16.msra.mxu0 0
  %352 = vmatprep.subr.bf16.mxu0 0
  %353 = vmatpush1.bf16.msra.mxu0 0
  %354 = vmatprep.subr.bf16.mxu0 0
  %355 = vmatpush1.bf16.msra.mxu0 0
  %356 = vmatprep.subr.bf16.mxu0 0
  %357 = vmatpush1.bf16.msra.mxu0 0
  %358 = vmatprep.subr.bf16.mxu0 0
  %359 = vmatpush1.bf16.msra.mxu0 0
  %360 = vmatprep.subr.bf16.mxu0 0
  %361 = vmatpush1.bf16.msra.mxu0 0
  %362 = vmatprep.mubr.bf16.mxu0 0
  %363 = vmatmul.mubr.bf16.gmra.mrb[0].mxu0 %v114
  %v364 = vpop.f32.mrb[0].mxu0
  %v365 = vadd.f32 %v309, %v364
  %v366 = vpop.f32.mrb[0].mxu0
  %v367 = vpop.f32.mrb[0].mxu0
  %v368 = vadd.f32 %v312, %v367
  %v369 = vpop.f32.mrb[0].mxu0
  %370 = vmatprep.mubr.bf16.mxu0 0
  %371 = vmatmul.mubr.bf16.gmra.mrb[0].mxu0 %v117
  %v372 = vpop.f32.mrb[0].mxu0
  %v373 = vadd.f32 %v317, %v372
  %v374 = vpop.f32.mrb[0].mxu0
  %v375 = vpop.f32.mrb[0].mxu0
  %v376 = vadd.f32 %v320, %v375
  %v377 = vpop.f32.mrb[0].mxu0
  %378 = vmatprep.mubr.bf16.mxu0 0
  %379 = vmatmul.mubr.bf16.gmra.mrb[0].mxu0 %v120
  %v380 = vpop.f32.mrb[0].mxu0
  %v381 = vadd.f32 %v325, %v380
  %v382 = vpop.f32.mrb[0].mxu0
  %v383 = vpop.f32.mrb[0].mxu0
  %v384 = vpop.f32.mrb[0].mxu0
  %385 = vdwg.mxu0
  %v386 = vadd.f32 %v24, %v365
  %v387 = vadd.f32 %v25, %v368
  %v388 = vadd.f32 %v26, %v373
  %v389 = vadd.f32 %v27, %v376
  %v390 = vadd.f32 %v28, %v381
  %391 = vst [vmem:[#allocation2] sm:$0xff] %v386
  %392 = vst [vmem:[#allocation2 + $0x8] sm:$0xff] %v387
  %393 = vst [vmem:[#allocation2 + $0x10] sm:$0xff] %v388
  %394 = vst [vmem:[#allocation2 + $0x18] sm:$0xff] %v389
  %395 = vst [vmem:[#allocation2 + $0x20] sm:$0xff] %v390
  // Predicated region
  $region18: #{resnet_feature_extractor.53} parent=0 // pred_check
    %p396 = pneg %p15
  $region19: #{resnet_feature_extractor.53} parent=0 // pred_check_branch
    %398 = sbr.rel (%p396) target = $region21
  $region20: #{resnet_feature_extractor.53} parent=0 // pred_region
    %v399 = vld [vmem:[#allocation2] sm:$0xff]
    %v400 = vld [vmem:[#allocation2 + $0x8] sm:$0xff]
    %v401 = vld [vmem:[#allocation2 + $0x10] sm:$0xff]
    %v402 = vld [vmem:[#allocation2 + $0x18] sm:$0xff]
    %v403 = vld [vmem:[#allocation2 + $0x20] sm:$0xff]
    %v404 = vld [vmem:[%s2] sm:$0x1]
    %v406 = vlaneseq
    %v407 = vshrl.u32 %v406, 7
    %v408 = vsub.s32 0, %v407
    %v409 = vrot.slane %v404, %v408
    %v411 = vadd.f32 %v399, %v409
    %v412 = vadd.f32 %v400, %v409
    %v413 = vadd.f32 %v401, %v409
    %v414 = vadd.f32 %v402, %v409
    %v415 = vadd.f32 %v403, %v409
    %v416 = vmax.f32 %v411, 0.0
    %v417 = vmax.f32 %v412, 0.0
    %v418 = vmax.f32 %v413, 0.0
    %v419 = vmax.f32 %v414, 0.0
    %v420 = vmax.f32 %v415, 0.0
    %v421 = vpack.c.bf16 %v417, %v416
    %v422 = vpack.c.bf16 %v419, %v418
    %v423 = vpack.c.bf16 %v420, %v420
    %v427 = vunpack.c.l.b16 %v421
    %v428 = vunpack.c.h.b16 %v421
    %v429 = vunpack.c.l.b16 %v422
    %v430 = vunpack.c.h.b16 %v422
    %v431 = vunpack.c.l.b16 %v423
    %v432 = vpack.c.b16 %v427, %v427
    %v433 = vpack.c.b16 %v428, %v428
    %v434 = vpack.c.b16 %v429, %v429
    %v435 = vpack.c.b16 %v430, %v430
    %v436 = vpack.c.b16 %v431, %v431
    %442 = vst [vmem:[%s3] sm:$0xf] %v432
    %443 = vst [vmem:[%s3 + $0x4] sm:$0xf] %v433
    %444 = vst [vmem:[%s3 + $0x8] sm:$0xf] %v434
    %445 = vst [vmem:[%s3 + $0xc] sm:$0xf] %v435
    %446 = vst [vmem:[%s3 + $0x10] sm:$0xf] %v436
  $region21: #{resnet_feature_extractor.53} parent=0 // pred_fallthru
    _
  // Predicated region
  $region22: #{resnet_feature_extractor.53} parent=0 // pred_check
    _
  $region23: #{resnet_feature_extractor.53} parent=0 // pred_check_branch
    %448 = sbr.rel (0) target = $region25
  $region24: #{resnet_feature_extractor.53} parent=0 // pred_region
    _
  $region25: #{resnet_feature_extractor.53} parent=0 // pred_fallthru
    _
  // Predicated region
  $region26: #{resnet_feature_extractor.53} parent=0 // pred_check
    _
  $region27: #{resnet_feature_extractor.53} parent=0 // pred_check_branch
    %450 = sbr.rel (0) target = $region29
  $region28: #{resnet_feature_extractor.53} parent=0 // pred_region
    _
  $region29: #{resnet_feature_extractor.53} parent=0 // pred_fallthru
    _

// kernel: resnet_feature_extractor.52
$region0: #{resnet_feature_extractor.52}
  #allocation0 [shape = 'u32[]', space=smem, size = 0x4, offset = 0x4, fixed_abs, tag = 'smem constant byte address 0x4 - core index']
  #allocation1 [shape = 'u32[144,128]{1,0:T(1,128)}', space=vmem, size = 0x12000, scoped, tag = 'internal scratch']
  #allocation2 [shape = 'f32[40,128]{1,0:T(8,128)}', space=vmem, size = 0x5000, scoped, tag = 'scratch operand']
  %s0 = inlined_call_operand.vmem [shape: bf16[40,384], index: 0, kind: input, shape index: {}]
  %s1 = inlined_call_operand.vmem [shape: bf16[384,128], index: 1, kind: input, shape index: {}]
  %s2 = inlined_call_operand.vmem [shape: f32[1,128], index: 2, kind: input, shape index: {}]
  %s3 = inlined_call_operand.vmem [shape: bf16[40,128], index: 3, kind: input, shape index: {}]
  %s4 = inlined_call_operand.vmem [shape: bf16[40,128], index: 4, kind: output, shape index: {}]
  %s5 = sld [smem:[#allocation0]]
  $region34: #{resnet_feature_extractor.52} parent=0
    _
  %s7 = ssub.s32 1, %s5
  %s8 = scalar_select 0, %s7, %s5
  // Predicated region
  $region2: #{resnet_feature_extractor.52} parent=0 // pred_check
    _
  $region3: #{resnet_feature_extractor.52} parent=0 // pred_check_branch
    %10 = sbr.rel (0) target = $region5
  $region4: #{resnet_feature_extractor.52} parent=0 // pred_region
    _
  $region5: #{resnet_feature_extractor.52} parent=0 // pred_fallthru
    _
  // Predicated region
  $region6: #{resnet_feature_extractor.52} parent=0 // pred_check
    _
  $region7: #{resnet_feature_extractor.52} parent=0 // pred_check_branch
    %12 = sbr.rel (0) target = $region9
  $region8: #{resnet_feature_extractor.52} parent=0 // pred_region
    _
  $region9: #{resnet_feature_extractor.52} parent=0 // pred_fallthru
    _
  // Predicated region
  $region10: #{resnet_feature_extractor.52} parent=0 // pred_check
    _
  $region11: #{resnet_feature_extractor.52} parent=0 // pred_check_branch
    %14 = sbr.rel (0) target = $region13
  $region12: #{resnet_feature_extractor.52} parent=0 // pred_region
    _
  $region13: #{resnet_feature_extractor.52} parent=0 // pred_fallthru
    _
  // Predicated region
  $region14: #{resnet_feature_extractor.52} parent=0 // pred_check
    _
  $region15: #{resnet_feature_extractor.52} parent=0 // pred_check_branch
    %16 = sbr.rel (0) target = $region17
  $region16: #{resnet_feature_extractor.52} parent=0 // pred_region
    _
  $region17: #{resnet_feature_extractor.52} parent=0 // pred_fallthru
    _
  %p18 = scmp.eq.s32.totalorder 0, 0
  // Predicated region
  $region18: #{resnet_feature_extractor.52} parent=0 // pred_check
    %p19 = pneg %p18
  $region19: #{resnet_feature_extractor.52} parent=0 // pred_check_branch
    %21 = sbr.rel (%p19) target = $region21
  $region20: #{resnet_feature_extractor.52} parent=0 // pred_region
    %22 = vst [vmem:[#allocation2] sm:$0xff] 0.0
    %23 = vst [vmem:[#allocation2 + $0x8] sm:$0xff] 0.0
    %24 = vst [vmem:[#allocation2 + $0x10] sm:$0xff] 0.0
    %25 = vst [vmem:[#allocation2 + $0x18] sm:$0xff] 0.0
    %26 = vst [vmem:[#allocation2 + $0x20] sm:$0xff] 0.0
  $region21: #{resnet_feature_extractor.52} parent=0 // pred_fallthru
    _
  %v27 = vld [vmem:[#allocation2] sm:$0xff]
  %v28 = vld [vmem:[#allocation2 + $0x8] sm:$0xff]
  %v29 = vld [vmem:[#allocation2 + $0x10] sm:$0xff]
  %v30 = vld [vmem:[#allocation2 + $0x18] sm:$0xff]
  %v31 = vld [vmem:[#allocation2 + $0x20] sm:$0xff]
  %v32 = vld [vmem:[%s0] sm:$0xff]
  %v33 = vld [vmem:[%s0 + $0x8] sm:$0xf]
  %v34 = vld [vmem:[%s0 + $0xc] sm:$0xff]
  %v35 = vld [vmem:[%s0 + $0x14] sm:$0xf]
  %v36 = vld [vmem:[%s0 + $0x18] sm:$0xff]
  %v37 = vld [vmem:[%s0 + $0x20] sm:$0xf]
  %v38 = vld [vmem:[%s0 + $0x24] sm:$0xff]
  %v39 = vld [vmem:[%s0 + $0x2c] sm:$0xf]
  %v40 = vld [vmem:[%s0 + $0x30] sm:$0xff]
  %v41 = vld [vmem:[%s0 + $0x38] sm:$0xf]
  %v42 = vld [vmem:[%s1] sm:$0xf]
  %v43 = vld [vmem:[%s1 + $0x4] sm:$0xf]
  %v44 = vld [vmem:[%s1 + $0x8] sm:$0xf]
  %v45 = vld [vmem:[%s1 + $0xc] sm:$0xf]
  %v46 = vld [vmem:[%s1 + $0x10] sm:$0xf]
  %v47 = vld [vmem:[%s1 + $0x14] sm:$0xf]
  %v48 = vld [vmem:[%s1 + $0x18] sm:$0xf]
  %v49 = vld [vmem:[%s1 + $0x1c] sm:$0xf]
  %v50 = vld [vmem:[%s1 + $0x20] sm:$0xf]
  %v51 = vld [vmem:[%s1 + $0x24] sm:$0xf]
  %v52 = vld [vmem:[%s1 + $0x28] sm:$0xf]
  %v53 = vld [vmem:[%s1 + $0x2c] sm:$0xf]
  %v54 = vld [vmem:[%s1 + $0x30] sm:$0xf]
  %v55 = vld [vmem:[%s1 + $0x34] sm:$0xf]
  %v56 = vld [vmem:[%s1 + $0x38] sm:$0xf]
  %v57 = vld [vmem:[%s1 + $0x3c] sm:$0xf]
  %v58 = vld [vmem:[%s1 + $0x40] sm:$0xf]
  %v59 = vld [vmem:[%s1 + $0x44] sm:$0xf]
  %v60 = vld [vmem:[%s1 + $0x48] sm:$0xf]
  %v61 = vld [vmem:[%s1 + $0x4c] sm:$0xf]
  %v62 = vld [vmem:[%s1 + $0x50] sm:$0xf]
  %v63 = vld [vmem:[%s1 + $0x54] sm:$0xf]
  %v64 = vld [vmem:[%s1 + $0x58] sm:$0xf]
  %v65 = vld [vmem:[%s1 + $0x5c] sm:$0xf]
  %v66 = vld [vmem:[%s1 + $0x60] sm:$0xf]
  %v67 = vld [vmem:[%s1 + $0x64] sm:$0xf]
  %v68 = vld [vmem:[%s1 + $0x68] sm:$0xf]
  %v69 = vld [vmem:[%s1 + $0x6c] sm:$0xf]
  %v70 = vld [vmem:[%s1 + $0x70] sm:$0xf]
  %v71 = vld [vmem:[%s1 + $0x74] sm:$0xf]
  %v72 = vld [vmem:[%s1 + $0x78] sm:$0xf]
  %v73 = vld [vmem:[%s1 + $0x7c] sm:$0xf]
  %v74 = vld [vmem:[%s1 + $0x80] sm:$0xf]
  %v75 = vld [vmem:[%s1 + $0x84] sm:$0xf]
  %v76 = vld [vmem:[%s1 + $0x88] sm:$0xf]
  %v77 = vld [vmem:[%s1 + $0x8c] sm:$0xf]
  %v78 = vld [vmem:[%s1 + $0x90] sm:$0xf]
  %v79 = vld [vmem:[%s1 + $0x94] sm:$0xf]
  %v80 = vld [vmem:[%s1 + $0x98] sm:$0xf]
  %v81 = vld [vmem:[%s1 + $0x9c] sm:$0xf]
  %v82 = vld [vmem:[%s1 + $0xa0] sm:$0xf]
  %v83 = vld [vmem:[%s1 + $0xa4] sm:$0xf]
  %v84 = vld [vmem:[%s1 + $0xa8] sm:$0xf]
  %v85 = vld [vmem:[%s1 + $0xac] sm:$0xf]
  %v86 = vld [vmem:[%s1 + $0xb0] sm:$0xf]
  %v87 = vld [vmem:[%s1 + $0xb4] sm:$0xf]
  %v88 = vld [vmem:[%s1 + $0xb8] sm:$0xf]
  %v89 = vld [vmem:[%s1 + $0xbc] sm:$0xf]
  %v100 = vunpack.c.l.b16 %v32
  %v101 = vunpack.c.h.b16 %v32
  %v102 = vunpack.c.l.b16 %v33
  %v103 = vunpack.c.l.b16 %v34
  %v104 = vunpack.c.h.b16 %v34
  %v105 = vunpack.c.l.b16 %v35
  %v106 = vunpack.c.l.b16 %v36
  %v107 = vunpack.c.h.b16 %v36
  %v108 = vunpack.c.l.b16 %v37
  %v109 = vunpack.c.l.b16 %v38
  %v110 = vunpack.c.h.b16 %v38
  %v111 = vunpack.c.l.b16 %v39
  %v112 = vunpack.c.l.b16 %v40
  %v113 = vunpack.c.h.b16 %v40
  %v114 = vunpack.c.l.b16 %v41
  %v115 = vpack.c.b16 %v103, %v100
  %v116 = vpack.c.b16 %v104, %v101
  %v117 = vpack.c.b16 %v105, %v102
  %v118 = vpack.c.b16 %v109, %v106
  %v119 = vpack.c.b16 %v110, %v107
  %v120 = vpack.c.b16 %v111, %v108
  %v121 = vpack.c.b16 %v112, %v112
  %v122 = vpack.c.b16 %v113, %v113
  %v123 = vpack.c.b16 %v114, %v114
  %v181 = vunpack.c.l.b16 %v42
  %v182 = vunpack.c.l.b16 %v43
  %v183 = vunpack.c.l.b16 %v44
  %v184 = vunpack.c.l.b16 %v45
  %v185 = vunpack.c.l.b16 %v46
  %v186 = vunpack.c.l.b16 %v47
  %v187 = vunpack.c.l.b16 %v48
  %v188 = vunpack.c.l.b16 %v49
  %v189 = vunpack.c.l.b16 %v50
  %v190 = vunpack.c.l.b16 %v51
  %v191 = vunpack.c.l.b16 %v52
  %v192 = vunpack.c.l.b16 %v53
  %v193 = vunpack.c.l.b16 %v54
  %v194 = vunpack.c.l.b16 %v55
  %v195 = vunpack.c.l.b16 %v56
  %v196 = vunpack.c.l.b16 %v57
  %v197 = vunpack.c.l.b16 %v58
  %v198 = vunpack.c.l.b16 %v59
  %v199 = vunpack.c.l.b16 %v60
  %v200 = vunpack.c.l.b16 %v61
  %v201 = vunpack.c.l.b16 %v62
  %v202 = vunpack.c.l.b16 %v63
  %v203 = vunpack.c.l.b16 %v64
  %v204 = vunpack.c.l.b16 %v65
  %v205 = vunpack.c.l.b16 %v66
  %v206 = vunpack.c.l.b16 %v67
  %v207 = vunpack.c.l.b16 %v68
  %v208 = vunpack.c.l.b16 %v69
  %v209 = vunpack.c.l.b16 %v70
  %v210 = vunpack.c.l.b16 %v71
  %v211 = vunpack.c.l.b16 %v72
  %v212 = vunpack.c.l.b16 %v73
  %v213 = vunpack.c.l.b16 %v74
  %v214 = vunpack.c.l.b16 %v75
  %v215 = vunpack.c.l.b16 %v76
  %v216 = vunpack.c.l.b16 %v77
  %v217 = vunpack.c.l.b16 %v78
  %v218 = vunpack.c.l.b16 %v79
  %v219 = vunpack.c.l.b16 %v80
  %v220 = vunpack.c.l.b16 %v81
  %v221 = vunpack.c.l.b16 %v82
  %v222 = vunpack.c.l.b16 %v83
  %v223 = vunpack.c.l.b16 %v84
  %v224 = vunpack.c.l.b16 %v85
  %v225 = vunpack.c.l.b16 %v86
  %v226 = vunpack.c.l.b16 %v87
  %v227 = vunpack.c.l.b16 %v88
  %v228 = vunpack.c.l.b16 %v89
  %v229 = vpack.c.b16 %v182, %v181
  %v230 = vpack.c.b16 %v184, %v183
  %v231 = vpack.c.b16 %v186, %v185
  %v232 = vpack.c.b16 %v188, %v187
  %v233 = vpack.c.b16 %v190, %v189
  %v234 = vpack.c.b16 %v192, %v191
  %v235 = vpack.c.b16 %v194, %v193
  %v236 = vpack.c.b16 %v196, %v195
  %v237 = vpack.c.b16 %v198, %v197
  %v238 = vpack.c.b16 %v200, %v199
  %v239 = vpack.c.b16 %v202, %v201
  %v240 = vpack.c.b16 %v204, %v203
  %v241 = vpack.c.b16 %v206, %v205
  %v242 = vpack.c.b16 %v208, %v207
  %v243 = vpack.c.b16 %v210, %v209
  %v244 = vpack.c.b16 %v212, %v211
  %v245 = vpack.c.b16 %v214, %v213
  %v246 = vpack.c.b16 %v216, %v215
  %v247 = vpack.c.b16 %v218, %v217
  %v248 = vpack.c.b16 %v220, %v219
  %v249 = vpack.c.b16 %v222, %v221
  %v250 = vpack.c.b16 %v224, %v223
  %v251 = vpack.c.b16 %v226, %v225
  %v252 = vpack.c.b16 %v228, %v227
  %277 = vmatprep.subr.bf16.mxu0 0
  %278 = vmatpush1.bf16.msra.mxu0 %v229
  %279 = vmatprep.subr.bf16.mxu0 0
  %280 = vmatpush1.bf16.msra.mxu0 %v230
  %281 = vmatprep.subr.bf16.mxu0 0
  %282 = vmatpush1.bf16.msra.mxu0 %v231
  %283 = vmatprep.subr.bf16.mxu0 0
  %284 = vmatpush1.bf16.msra.mxu0 %v232
  %285 = vmatprep.subr.bf16.mxu0 0
  %286 = vmatpush1.bf16.msra.mxu0 %v233
  %287 = vmatprep.subr.bf16.mxu0 0
  %288 = vmatpush1.bf16.msra.mxu0 %v234
  %289 = vmatprep.subr.bf16.mxu0 0
  %290 = vmatpush1.bf16.msra.mxu0 %v235
  %291 = vmatprep.subr.bf16.mxu0 0
  %292 = vmatpush1.bf16.msra.mxu0 %v236
  %293 = vmatprep.subr.bf16.mxu0 0
  %294 = vmatpush1.bf16.msra.mxu0 %v237
  %295 = vmatprep.subr.bf16.mxu0 0
  %296 = vmatpush1.bf16.msra.mxu0 %v238
  %297 = vmatprep.subr.bf16.mxu0 0
  %298 = vmatpush1.bf16.msra.mxu0 %v239
  %299 = vmatprep.subr.bf16.mxu0 0
  %300 = vmatpush1.bf16.msra.mxu0 %v240
  %301 = vmatprep.subr.bf16.mxu0 0
  %302 = vmatpush1.bf16.msra.mxu0 %v241
  %303 = vmatprep.subr.bf16.mxu0 0
  %304 = vmatpush1.bf16.msra.mxu0 %v242
  %305 = vmatprep.subr.bf16.mxu0 0
  %306 = vmatpush1.bf16.msra.mxu0 %v243
  %307 = vmatprep.subr.bf16.mxu0 0
  %308 = vmatpush1.bf16.msra.mxu0 %v244
  %309 = vmatprep.mubr.bf16.mxu0 %v116
  %310 = vmatmul.mubr.bf16.gmra.mrb[0].mxu0 %v115
  %v311 = vpop.f32.mrb[0].mxu0
  %v312 = vadd.f32 0.0, %v311
  %v313 = vpop.f32.mrb[0].mxu0
  %v314 = vpop.f32.mrb[0].mxu0
  %v315 = vadd.f32 0.0, %v314
  %v316 = vpop.f32.mrb[0].mxu0
  %317 = vmatprep.mubr.bf16.mxu0 %v119
  %318 = vmatmul.mubr.bf16.gmra.mrb[0].mxu0 %v118
  %v319 = vpop.f32.mrb[0].mxu0
  %v320 = vadd.f32 0.0, %v319
  %v321 = vpop.f32.mrb[0].mxu0
  %v322 = vpop.f32.mrb[0].mxu0
  %v323 = vadd.f32 0.0, %v322
  %v324 = vpop.f32.mrb[0].mxu0
  %325 = vmatprep.mubr.bf16.mxu0 %v122
  %326 = vmatmul.mubr.bf16.gmra.mrb[0].mxu0 %v121
  %v327 = vpop.f32.mrb[0].mxu0
  %v328 = vadd.f32 0.0, %v327
  %v329 = vpop.f32.mrb[0].mxu0
  %v330 = vpop.f32.mrb[0].mxu0
  %v331 = vpop.f32.mrb[0].mxu0
  %332 = vdwg.mxu0
  %333 = vmatprep.subr.bf16.mxu0 0
  %334 = vmatpush1.bf16.msra.mxu0 %v245
  %335 = vmatprep.subr.bf16.mxu0 0
  %336 = vmatpush1.bf16.msra.mxu0 %v246
  %337 = vmatprep.subr.bf16.mxu0 0
  %338 = vmatpush1.bf16.msra.mxu0 %v247
  %339 = vmatprep.subr.bf16.mxu0 0
  %340 = vmatpush1.bf16.msra.mxu0 %v248
  %341 = vmatprep.subr.bf16.mxu0 0
  %342 = vmatpush1.bf16.msra.mxu0 %v249
  %343 = vmatprep.subr.bf16.mxu0 0
  %344 = vmatpush1.bf16.msra.mxu0 %v250
  %345 = vmatprep.subr.bf16.mxu0 0
  %346 = vmatpush1.bf16.msra.mxu0 %v251
  %347 = vmatprep.subr.bf16.mxu0 0
  %348 = vmatpush1.bf16.msra.mxu0 %v252
  %349 = vmatprep.subr.bf16.mxu0 0
  %350 = vmatpush1.bf16.msra.mxu0 0
  %351 = vmatprep.subr.bf16.mxu0 0
  %352 = vmatpush1.bf16.msra.mxu0 0
  %353 = vmatprep.subr.bf16.mxu0 0
  %354 = vmatpush1.bf16.msra.mxu0 0
  %355 = vmatprep.subr.bf16.mxu0 0
  %356 = vmatpush1.bf16.msra.mxu0 0
  %357 = vmatprep.subr.bf16.mxu0 0
  %358 = vmatpush1.bf16.msra.mxu0 0
  %359 = vmatprep.subr.bf16.mxu0 0
  %360 = vmatpush1.bf16.msra.mxu0 0
  %361 = vmatprep.subr.bf16.mxu0 0
  %362 = vmatpush1.bf16.msra.mxu0 0
  %363 = vmatprep.subr.bf16.mxu0 0
  %364 = vmatpush1.bf16.msra.mxu0 0
  %365 = vmatprep.mubr.bf16.mxu0 0
  %366 = vmatmul.mubr.bf16.gmra.mrb[0].mxu0 %v117
  %v367 = vpop.f32.mrb[0].mxu0
  %v368 = vadd.f32 %v312, %v367
  %v369 = vpop.f32.mrb[0].mxu0
  %v370 = vpop.f32.mrb[0].mxu0
  %v371 = vadd.f32 %v315, %v370
  %v372 = vpop.f32.mrb[0].mxu0
  %373 = vmatprep.mubr.bf16.mxu0 0
  %374 = vmatmul.mubr.bf16.gmra.mrb[0].mxu0 %v120
  %v375 = vpop.f32.mrb[0].mxu0
  %v376 = vadd.f32 %v320, %v375
  %v377 = vpop.f32.mrb[0].mxu0
  %v378 = vpop.f32.mrb[0].mxu0
  %v379 = vadd.f32 %v323, %v378
  %v380 = vpop.f32.mrb[0].mxu0
  %381 = vmatprep.mubr.bf16.mxu0 0
  %382 = vmatmul.mubr.bf16.gmra.mrb[0].mxu0 %v123
  %v383 = vpop.f32.mrb[0].mxu0
  %v384 = vadd.f32 %v328, %v383
  %v385 = vpop.f32.mrb[0].mxu0
  %v386 = vpop.f32.mrb[0].mxu0
  %v387 = vpop.f32.mrb[0].mxu0
  %388 = vdwg.mxu0
  %v389 = vadd.f32 %v27, %v368
  %v390 = vadd.f32 %v28, %v371
  %v391 = vadd.f32 %v29, %v376
  %v392 = vadd.f32 %v30, %v379
  %v393 = vadd.f32 %v31, %v384
  %394 = vst [vmem:[#allocation2] sm:$0xff] %v389
  %395 = vst [vmem:[#allocation2 + $0x8] sm:$0xff] %v390
  %396 = vst [vmem:[#allocation2 + $0x10] sm:$0xff] %v391
  %397 = vst [vmem:[#allocation2 + $0x18] sm:$0xff] %v392
  %398 = vst [vmem:[#allocation2 + $0x20] sm:$0xff] %v393
  // Predicated region
  $region22: #{resnet_feature_extractor.52} parent=0 // pred_check
    %p399 = pneg %p18
  $region23: #{resnet_feature_extractor.52} parent=0 // pred_check_branch
    %401 = sbr.rel (%p399) target = $region25
  $region24: #{resnet_feature_extractor.52} parent=0 // pred_region
    %v402 = vld [vmem:[#allocation2] sm:$0xff]
    %v403 = vld [vmem:[#allocation2 + $0x8] sm:$0xff]
    %v404 = vld [vmem:[#allocation2 + $0x10] sm:$0xff]
    %v405 = vld [vmem:[#allocation2 + $0x18] sm:$0xff]
    %v406 = vld [vmem:[#allocation2 + $0x20] sm:$0xff]
    %v407 = vld [vmem:[%s2] sm:$0x1]
    %v409 = vlaneseq
    %v410 = vshrl.u32 %v409, 7
    %v411 = vsub.s32 0, %v410
    %v412 = vrot.slane %v407, %v411
    %v414 = vadd.f32 %v402, %v412
    %v415 = vadd.f32 %v403, %v412
    %v416 = vadd.f32 %v404, %v412
    %v417 = vadd.f32 %v405, %v412
    %v418 = vadd.f32 %v406, %v412
    %v419 = vld [vmem:[%s3] sm:$0xf]
    %v420 = vld [vmem:[%s3 + $0x4] sm:$0xf]
    %v421 = vld [vmem:[%s3 + $0x8] sm:$0xf]
    %v422 = vld [vmem:[%s3 + $0xc] sm:$0xf]
    %v423 = vld [vmem:[%s3 + $0x10] sm:$0xf]
    %v424 = vunpack.c.l.bf16 %v419
    %v425 = vunpack.c.l.bf16 %v420
    %v426 = vunpack.c.l.bf16 %v421
    %v427 = vunpack.c.l.bf16 %v422
    %v428 = vunpack.c.l.bf16 %v423
    %v429 = vadd.f32 %v414, %v424
    %v430 = vadd.f32 %v415, %v425
    %v431 = vadd.f32 %v416, %v426
    %v432 = vadd.f32 %v417, %v427
    %v433 = vadd.f32 %v418, %v428
    %v434 = vmax.f32 %v429, 0.0
    %v435 = vmax.f32 %v430, 0.0
    %v436 = vmax.f32 %v431, 0.0
    %v437 = vmax.f32 %v432, 0.0
    %v438 = vmax.f32 %v433, 0.0
    %v439 = vpack.c.bf16 %v435, %v434
    %v440 = vpack.c.bf16 %v437, %v436
    %v441 = vpack.c.bf16 %v438, %v438
    %v445 = vunpack.c.l.b16 %v439
    %v446 = vunpack.c.h.b16 %v439
    %v447 = vunpack.c.l.b16 %v440
    %v448 = vunpack.c.h.b16 %v440
    %v449 = vunpack.c.l.b16 %v441
    %v450 = vpack.c.b16 %v445, %v445
    %v451 = vpack.c.b16 %v446, %v446
    %v452 = vpack.c.b16 %v447, %v447
    %v453 = vpack.c.b16 %v448, %v448
    %v454 = vpack.c.b16 %v449, %v449
    %460 = vst [vmem:[%s4] sm:$0xf] %v450
    %461 = vst [vmem:[%s4 + $0x4] sm:$0xf] %v451
    %462 = vst [vmem:[%s4 + $0x8] sm:$0xf] %v452
    %463 = vst [vmem:[%s4 + $0xc] sm:$0xf] %v453
    %464 = vst [vmem:[%s4 + $0x10] sm:$0xf] %v454
  $region25: #{resnet_feature_extractor.52} parent=0 // pred_fallthru
    _
  // Predicated region
  $region26: #{resnet_feature_extractor.52} parent=0 // pred_check
    _
  $region27: #{resnet_feature_extractor.52} parent=0 // pred_check_branch
    %466 = sbr.rel (0) target = $region29
  $region28: #{resnet_feature_extractor.52} parent=0 // pred_region
    _
  $region29: #{resnet_feature_extractor.52} parent=0 // pred_fallthru
    _
  // Predicated region
  $region30: #{resnet_feature_extractor.52} parent=0 // pred_check
    _
  $region31: #{resnet_feature_extractor.52} parent=0 // pred_check_branch
    %468 = sbr.rel (0) target = $region33
  $region32: #{resnet_feature_extractor.52} parent=0 // pred_region
    _
  $region33: #{resnet_feature_extractor.52} parent=0 // pred_fallthru
    _

// kernel: resnet_feature_extractor.68
$region0: #{resnet_feature_extractor.68}
  #allocation0 [shape = 'u32[]', space=smem, size = 0x4, offset = 0x4, fixed_abs, tag = 'smem constant byte address 0x4 - core index']
  #allocation1 [shape = 'u32[144,128]{1,0:T(1,128)}', space=vmem, size = 0x12000, scoped, tag = 'internal scratch']
  #allocation2 [shape = 'f32[24,128]{1,0:T(8,128)}', space=vmem, size = 0x3000, scoped, tag = 'scratch operand']
  %s0 = inlined_call_operand.vmem [shape: bf16[24,128], index: 0, kind: input, shape index: {}]
  %s1 = inlined_call_operand.vmem [shape: bf16[128,128], index: 1, kind: input, shape index: {}]
  %s2 = inlined_call_operand.vmem [shape: f32[1,128], index: 2, kind: input, shape index: {}]
  %s3 = inlined_call_operand.vmem [shape: bf16[24,128], index: 3, kind: output, shape index: {}]
  %s4 = sld [smem:[#allocation0]]
  $region30: #{resnet_feature_extractor.68} parent=0
    _
  %s6 = ssub.s32 1, %s4
  %s7 = scalar_select 0, %s6, %s4
  // Predicated region
  $region2: #{resnet_feature_extractor.68} parent=0 // pred_check
    _
  $region3: #{resnet_feature_extractor.68} parent=0 // pred_check_branch
    %9 = sbr.rel (0) target = $region5
  $region4: #{resnet_feature_extractor.68} parent=0 // pred_region
    _
  $region5: #{resnet_feature_extractor.68} parent=0 // pred_fallthru
    _
  // Predicated region
  $region6: #{resnet_feature_extractor.68} parent=0 // pred_check
    _
  $region7: #{resnet_feature_extractor.68} parent=0 // pred_check_branch
    %11 = sbr.rel (0) target = $region9
  $region8: #{resnet_feature_extractor.68} parent=0 // pred_region
    _
  $region9: #{resnet_feature_extractor.68} parent=0 // pred_fallthru
    _
  // Predicated region
  $region10: #{resnet_feature_extractor.68} parent=0 // pred_check
    _
  $region11: #{resnet_feature_extractor.68} parent=0 // pred_check_branch
    %13 = sbr.rel (0) target = $region13
  $region12: #{resnet_feature_extractor.68} parent=0 // pred_region
    _
  $region13: #{resnet_feature_extractor.68} parent=0 // pred_fallthru
    _
  %p15 = scmp.eq.s32.totalorder 0, 0
  // Predicated region
  $region14: #{resnet_feature_extractor.68} parent=0 // pred_check
    %p16 = pneg %p15
  $region15: #{resnet_feature_extractor.68} parent=0 // pred_check_branch
    %18 = sbr.rel (%p16) target = $region17
  $region16: #{resnet_feature_extractor.68} parent=0 // pred_region
    %19 = vst [vmem:[#allocation2] sm:$0xff] 0.0
    %20 = vst [vmem:[#allocation2 + $0x8] sm:$0xff] 0.0
    %21 = vst [vmem:[#allocation2 + $0x10] sm:$0xff] 0.0
  $region17: #{resnet_feature_extractor.68} parent=0 // pred_fallthru
    _
  %v22 = vld [vmem:[#allocation2] sm:$0xff]
  %v23 = vld [vmem:[#allocation2 + $0x8] sm:$0xff]
  %v24 = vld [vmem:[#allocation2 + $0x10] sm:$0xff]
  %v25 = vld [vmem:[%s0] sm:$0xf]
  %v26 = vld [vmem:[%s0 + $0x4] sm:$0xf]
  %v27 = vld [vmem:[%s0 + $0x8] sm:$0xf]
  %v28 = vld [vmem:[%s1] sm:$0xf]
  %v29 = vld [vmem:[%s1 + $0x4] sm:$0xf]
  %v30 = vld [vmem:[%s1 + $0x8] sm:$0xf]
  %v31 = vld [vmem:[%s1 + $0xc] sm:$0xf]
  %v32 = vld [vmem:[%s1 + $0x10] sm:$0xf]
  %v33 = vld [vmem:[%s1 + $0x14] sm:$0xf]
  %v34 = vld [vmem:[%s1 + $0x18] sm:$0xf]
  %v35 = vld [vmem:[%s1 + $0x1c] sm:$0xf]
  %v36 = vld [vmem:[%s1 + $0x20] sm:$0xf]
  %v37 = vld [vmem:[%s1 + $0x24] sm:$0xf]
  %v38 = vld [vmem:[%s1 + $0x28] sm:$0xf]
  %v39 = vld [vmem:[%s1 + $0x2c] sm:$0xf]
  %v40 = vld [vmem:[%s1 + $0x30] sm:$0xf]
  %v41 = vld [vmem:[%s1 + $0x34] sm:$0xf]
  %v42 = vld [vmem:[%s1 + $0x38] sm:$0xf]
  %v43 = vld [vmem:[%s1 + $0x3c] sm:$0xf]
  %v47 = vunpack.c.l.b16 %v25
  %v48 = vunpack.c.l.b16 %v26
  %v49 = vunpack.c.l.b16 %v27
  %v50 = vpack.c.b16 %v48, %v47
  %v51 = vpack.c.b16 %v49, %v49
  %v70 = vunpack.c.l.b16 %v28
  %v71 = vunpack.c.l.b16 %v29
  %v72 = vunpack.c.l.b16 %v30
  %v73 = vunpack.c.l.b16 %v31
  %v74 = vunpack.c.l.b16 %v32
  %v75 = vunpack.c.l.b16 %v33
  %v76 = vunpack.c.l.b16 %v34
  %v77 = vunpack.c.l.b16 %v35
  %v78 = vunpack.c.l.b16 %v36
  %v79 = vunpack.c.l.b16 %v37
  %v80 = vunpack.c.l.b16 %v38
  %v81 = vunpack.c.l.b16 %v39
  %v82 = vunpack.c.l.b16 %v40
  %v83 = vunpack.c.l.b16 %v41
  %v84 = vunpack.c.l.b16 %v42
  %v85 = vunpack.c.l.b16 %v43
  %v86 = vpack.c.b16 %v71, %v70
  %v87 = vpack.c.b16 %v73, %v72
  %v88 = vpack.c.b16 %v75, %v74
  %v89 = vpack.c.b16 %v77, %v76
  %v90 = vpack.c.b16 %v79, %v78
  %v91 = vpack.c.b16 %v81, %v80
  %v92 = vpack.c.b16 %v83, %v82
  %v93 = vpack.c.b16 %v85, %v84
  %102 = vmatprep.subr.bf16.mxu0 0
  %103 = vmatpush1.bf16.msra.mxu0 %v86
  %104 = vmatprep.subr.bf16.mxu0 0
  %105 = vmatpush1.bf16.msra.mxu0 %v87
  %106 = vmatprep.subr.bf16.mxu0 0
  %107 = vmatpush1.bf16.msra.mxu0 %v88
  %108 = vmatprep.subr.bf16.mxu0 0
  %109 = vmatpush1.bf16.msra.mxu0 %v89
  %110 = vmatprep.subr.bf16.mxu0 0
  %111 = vmatpush1.bf16.msra.mxu0 %v90
  %112 = vmatprep.subr.bf16.mxu0 0
  %113 = vmatpush1.bf16.msra.mxu0 %v91
  %114 = vmatprep.subr.bf16.mxu0 0
  %115 = vmatpush1.bf16.msra.mxu0 %v92
  %116 = vmatprep.subr.bf16.mxu0 0
  %117 = vmatpush1.bf16.msra.mxu0 %v93
  %118 = vmatprep.subr.bf16.mxu0 0
  %119 = vmatpush1.bf16.msra.mxu0 0
  %120 = vmatprep.subr.bf16.mxu0 0
  %121 = vmatpush1.bf16.msra.mxu0 0
  %122 = vmatprep.subr.bf16.mxu0 0
  %123 = vmatpush1.bf16.msra.mxu0 0
  %124 = vmatprep.subr.bf16.mxu0 0
  %125 = vmatpush1.bf16.msra.mxu0 0
  %126 = vmatprep.subr.bf16.mxu0 0
  %127 = vmatpush1.bf16.msra.mxu0 0
  %128 = vmatprep.subr.bf16.mxu0 0
  %129 = vmatpush1.bf16.msra.mxu0 0
  %130 = vmatprep.subr.bf16.mxu0 0
  %131 = vmatpush1.bf16.msra.mxu0 0
  %132 = vmatprep.subr.bf16.mxu0 0
  %133 = vmatpush1.bf16.msra.mxu0 0
  %134 = vmatprep.mubr.bf16.mxu0 0
  %135 = vmatmul.mubr.bf16.gmra.mrb[0].mxu0 %v50
  %v136 = vpop.f32.mrb[0].mxu0
  %v137 = vadd.f32 0.0, %v136
  %v138 = vpop.f32.mrb[0].mxu0
  %v139 = vpop.f32.mrb[0].mxu0
  %v140 = vadd.f32 0.0, %v139
  %v141 = vpop.f32.mrb[0].mxu0
  %142 = vmatprep.mubr.bf16.mxu0 0
  %143 = vmatmul.mubr.bf16.gmra.mrb[0].mxu0 %v51
  %v144 = vpop.f32.mrb[0].mxu0
  %v145 = vadd.f32 0.0, %v144
  %v146 = vpop.f32.mrb[0].mxu0
  %v147 = vpop.f32.mrb[0].mxu0
  %v148 = vpop.f32.mrb[0].mxu0
  %149 = vdwg.mxu0
  %v150 = vadd.f32 %v22, %v137
  %v151 = vadd.f32 %v23, %v140
  %v152 = vadd.f32 %v24, %v145
  %153 = vst [vmem:[#allocation2] sm:$0xff] %v150
  %154 = vst [vmem:[#allocation2 + $0x8] sm:$0xff] %v151
  %155 = vst [vmem:[#allocation2 + $0x10] sm:$0xff] %v152
  // Predicated region
  $region18: #{resnet_feature_extractor.68} parent=0 // pred_check
    %p156 = pneg %p15
  $region19: #{resnet_feature_extractor.68} parent=0 // pred_check_branch
    %158 = sbr.rel (%p156) target = $region21
  $region20: #{resnet_feature_extractor.68} parent=0 // pred_region
    %v159 = vld [vmem:[#allocation2] sm:$0xff]
    %v160 = vld [vmem:[#allocation2 + $0x8] sm:$0xff]
    %v161 = vld [vmem:[#allocation2 + $0x10] sm:$0xff]
    %v162 = vld [vmem:[%s2] sm:$0x1]
    %v164 = vlaneseq
    %v165 = vshrl.u32 %v164, 7
    %v166 = vsub.s32 0, %v165
    %v167 = vrot.slane %v162, %v166
    %v169 = vadd.f32 %v159, %v167
    %v170 = vadd.f32 %v160, %v167
    %v171 = vadd.f32 %v161, %v167
    %v172 = vmax.f32 %v169, 0.0
    %v173 = vmax.f32 %v170, 0.0
    %v174 = vmax.f32 %v171, 0.0
    %v175 = vpack.c.bf16 %v173, %v172
    %v176 = vpack.c.bf16 %v174, %v174
    %v179 = vunpack.c.l.b16 %v175
    %v180 = vunpack.c.h.b16 %v175
    %v181 = vunpack.c.l.b16 %v176
    %v182 = vpack.c.b16 %v179, %v179
    %v183 = vpack.c.b16 %v180, %v180
    %v184 = vpack.c.b16 %v181, %v181
    %188 = vst [vmem:[%s3] sm:$0xf] %v182
    %189 = vst [vmem:[%s3 + $0x4] sm:$0xf] %v183
    %190 = vst [vmem:[%s3 + $0x8] sm:$0xf] %v184
  $region21: #{resnet_feature_extractor.68} parent=0 // pred_fallthru
    _
  // Predicated region
  $region22: #{resnet_feature_extractor.68} parent=0 // pred_check
    _
  $region23: #{resnet_feature_extractor.68} parent=0 // pred_check_branch
    %192 = sbr.rel (0) target = $region25
  $region24: #{resnet_feature_extractor.68} parent=0 // pred_region
    _
  $region25: #{resnet_feature_extractor.68} parent=0 // pred_fallthru
    _
  // Predicated region
  $region26: #{resnet_feature_extractor.68} parent=0 // pred_check
    _
  $region27: #{resnet_feature_extractor.68} parent=0 // pred_check_branch
    %194 = sbr.rel (0) target = $region29
  $region28: #{resnet_feature_extractor.68} parent=0 // pred_region
    _
  $region29: #{resnet_feature_extractor.68} parent=0 // pred_fallthru
    _

// kernel: resnet_feature_extractor.69
$region0: #{resnet_feature_extractor.69}
  #allocation0 [shape = 'u32[]', space=smem, size = 0x4, offset = 0x4, fixed_abs, tag = 'smem constant byte address 0x4 - core index']
  #allocation1 [shape = 'u32[144,128]{1,0:T(1,128)}', space=vmem, size = 0x12000, scoped, tag = 'internal scratch']
  #allocation2 [shape = 'f32[16,128]{1,0:T(8,128)}', space=vmem, size = 0x2000, scoped, tag = 'scratch operand']
  %s0 = inlined_call_operand.vmem [shape: bf16[16,128], index: 0, kind: input, shape index: {}]
  %s1 = inlined_call_operand.vmem [shape: bf16[128,128], index: 1, kind: input, shape index: {}]
  %s2 = inlined_call_operand.vmem [shape: f32[1,128], index: 2, kind: input, shape index: {}]
  %s3 = inlined_call_operand.vmem [shape: bf16[16,128], index: 3, kind: output, shape index: {}]
  %s4 = sld [smem:[#allocation0]]
  $region30: #{resnet_feature_extractor.69} parent=0
    _
  %s6 = ssub.s32 1, %s4
  %s7 = scalar_select 0, %s6, %s4
  // Predicated region
  $region2: #{resnet_feature_extractor.69} parent=0 // pred_check
    _
  $region3: #{resnet_feature_extractor.69} parent=0 // pred_check_branch
    %9 = sbr.rel (0) target = $region5
  $region4: #{resnet_feature_extractor.69} parent=0 // pred_region
    _
  $region5: #{resnet_feature_extractor.69} parent=0 // pred_fallthru
    _
  // Predicated region
  $region6: #{resnet_feature_extractor.69} parent=0 // pred_check
    _
  $region7: #{resnet_feature_extractor.69} parent=0 // pred_check_branch
    %11 = sbr.rel (0) target = $region9
  $region8: #{resnet_feature_extractor.69} parent=0 // pred_region
    _
  $region9: #{resnet_feature_extractor.69} parent=0 // pred_fallthru
    _
  // Predicated region
  $region10: #{resnet_feature_extractor.69} parent=0 // pred_check
    _
  $region11: #{resnet_feature_extractor.69} parent=0 // pred_check_branch
    %13 = sbr.rel (0) target = $region13
  $region12: #{resnet_feature_extractor.69} parent=0 // pred_region
    _
  $region13: #{resnet_feature_extractor.69} parent=0 // pred_fallthru
    _
  %p15 = scmp.eq.s32.totalorder 0, 0
  // Predicated region
  $region14: #{resnet_feature_extractor.69} parent=0 // pred_check
    %p16 = pneg %p15
  $region15: #{resnet_feature_extractor.69} parent=0 // pred_check_branch
    %18 = sbr.rel (%p16) target = $region17
  $region16: #{resnet_feature_extractor.69} parent=0 // pred_region
    %19 = vst [vmem:[#allocation2] sm:$0xff] 0.0
    %20 = vst [vmem:[#allocation2 + $0x8] sm:$0xff] 0.0
  $region17: #{resnet_feature_extractor.69} parent=0 // pred_fallthru
    _
  %v21 = vld [vmem:[#allocation2] sm:$0xff]
  %v22 = vld [vmem:[#allocation2 + $0x8] sm:$0xff]
  %v23 = vld [vmem:[%s0] sm:$0xf]
  %v24 = vld [vmem:[%s0 + $0x4] sm:$0xf]
  %v25 = vld [vmem:[%s1] sm:$0xf]
  %v26 = vld [vmem:[%s1 + $0x4] sm:$0xf]
  %v27 = vld [vmem:[%s1 + $0x8] sm:$0xf]
  %v28 = vld [vmem:[%s1 + $0xc] sm:$0xf]
  %v29 = vld [vmem:[%s1 + $0x10] sm:$0xf]
  %v30 = vld [vmem:[%s1 + $0x14] sm:$0xf]
  %v31 = vld [vmem:[%s1 + $0x18] sm:$0xf]
  %v32 = vld [vmem:[%s1 + $0x1c] sm:$0xf]
  %v33 = vld [vmem:[%s1 + $0x20] sm:$0xf]
  %v34 = vld [vmem:[%s1 + $0x24] sm:$0xf]
  %v35 = vld [vmem:[%s1 + $0x28] sm:$0xf]
  %v36 = vld [vmem:[%s1 + $0x2c] sm:$0xf]
  %v37 = vld [vmem:[%s1 + $0x30] sm:$0xf]
  %v38 = vld [vmem:[%s1 + $0x34] sm:$0xf]
  %v39 = vld [vmem:[%s1 + $0x38] sm:$0xf]
  %v40 = vld [vmem:[%s1 + $0x3c] sm:$0xf]
  %v43 = vunpack.c.l.b16 %v23
  %v44 = vunpack.c.l.b16 %v24
  %v45 = vpack.c.b16 %v44, %v43
  %v63 = vunpack.c.l.b16 %v25
  %v64 = vunpack.c.l.b16 %v26
  %v65 = vunpack.c.l.b16 %v27
  %v66 = vunpack.c.l.b16 %v28
  %v67 = vunpack.c.l.b16 %v29
  %v68 = vunpack.c.l.b16 %v30
  %v69 = vunpack.c.l.b16 %v31
  %v70 = vunpack.c.l.b16 %v32
  %v71 = vunpack.c.l.b16 %v33
  %v72 = vunpack.c.l.b16 %v34
  %v73 = vunpack.c.l.b16 %v35
  %v74 = vunpack.c.l.b16 %v36
  %v75 = vunpack.c.l.b16 %v37
  %v76 = vunpack.c.l.b16 %v38
  %v77 = vunpack.c.l.b16 %v39
  %v78 = vunpack.c.l.b16 %v40
  %v79 = vpack.c.b16 %v64, %v63
  %v80 = vpack.c.b16 %v66, %v65
  %v81 = vpack.c.b16 %v68, %v67
  %v82 = vpack.c.b16 %v70, %v69
  %v83 = vpack.c.b16 %v72, %v71
  %v84 = vpack.c.b16 %v74, %v73
  %v85 = vpack.c.b16 %v76, %v75
  %v86 = vpack.c.b16 %v78, %v77
  %95 = vmatprep.subr.bf16.mxu0 0
  %96 = vmatpush1.bf16.msra.mxu0 %v79
  %97 = vmatprep.subr.bf16.mxu0 0
  %98 = vmatpush1.bf16.msra.mxu0 %v80
  %99 = vmatprep.subr.bf16.mxu0 0
  %100 = vmatpush1.bf16.msra.mxu0 %v81
  %101 = vmatprep.subr.bf16.mxu0 0
  %102 = vmatpush1.bf16.msra.mxu0 %v82
  %103 = vmatprep.subr.bf16.mxu0 0
  %104 = vmatpush1.bf16.msra.mxu0 %v83
  %105 = vmatprep.subr.bf16.mxu0 0
  %106 = vmatpush1.bf16.msra.mxu0 %v84
  %107 = vmatprep.subr.bf16.mxu0 0
  %108 = vmatpush1.bf16.msra.mxu0 %v85
  %109 = vmatprep.subr.bf16.mxu0 0
  %110 = vmatpush1.bf16.msra.mxu0 %v86
  %111 = vmatprep.subr.bf16.mxu0 0
  %112 = vmatpush1.bf16.msra.mxu0 0
  %113 = vmatprep.subr.bf16.mxu0 0
  %114 = vmatpush1.bf16.msra.mxu0 0
  %115 = vmatprep.subr.bf16.mxu0 0
  %116 = vmatpush1.bf16.msra.mxu0 0
  %117 = vmatprep.subr.bf16.mxu0 0
  %118 = vmatpush1.bf16.msra.mxu0 0
  %119 = vmatprep.subr.bf16.mxu0 0
  %120 = vmatpush1.bf16.msra.mxu0 0
  %121 = vmatprep.subr.bf16.mxu0 0
  %122 = vmatpush1.bf16.msra.mxu0 0
  %123 = vmatprep.subr.bf16.mxu0 0
  %124 = vmatpush1.bf16.msra.mxu0 0
  %125 = vmatprep.subr.bf16.mxu0 0
  %126 = vmatpush1.bf16.msra.mxu0 0
  %127 = vmatprep.mubr.bf16.mxu0 0
  %128 = vmatmul.mubr.bf16.gmra.mrb[0].mxu0 %v45
  %v129 = vpop.f32.mrb[0].mxu0
  %v130 = vadd.f32 0.0, %v129
  %v131 = vpop.f32.mrb[0].mxu0
  %v132 = vpop.f32.mrb[0].mxu0
  %v133 = vadd.f32 0.0, %v132
  %v134 = vpop.f32.mrb[0].mxu0
  %135 = vdwg.mxu0
  %v136 = vadd.f32 %v21, %v130
  %v137 = vadd.f32 %v22, %v133
  %138 = vst [vmem:[#allocation2] sm:$0xff] %v136
  %139 = vst [vmem:[#allocation2 + $0x8] sm:$0xff] %v137
  // Predicated region
  $region18: #{resnet_feature_extractor.69} parent=0 // pred_check
    %p140 = pneg %p15
  $region19: #{resnet_feature_extractor.69} parent=0 // pred_check_branch
    %142 = sbr.rel (%p140) target = $region21
  $region20: #{resnet_feature_extractor.69} parent=0 // pred_region
    %v143 = vld [vmem:[#allocation2] sm:$0xff]
    %v144 = vld [vmem:[#allocation2 + $0x8] sm:$0xff]
    %v145 = vld [vmem:[%s2] sm:$0x1]
    %v147 = vlaneseq
    %v148 = vshrl.u32 %v147, 7
    %v149 = vsub.s32 0, %v148
    %v150 = vrot.slane %v145, %v149
    %v152 = vadd.f32 %v143, %v150
    %v153 = vadd.f32 %v144, %v150
    %v154 = vmax.f32 %v152, 0.0
    %v155 = vmax.f32 %v153, 0.0
    %v156 = vpack.c.bf16 %v155, %v154
    %v158 = vunpack.c.l.b16 %v156
    %v159 = vunpack.c.h.b16 %v156
    %v160 = vpack.c.b16 %v158, %v158
    %v161 = vpack.c.b16 %v159, %v159
    %164 = vst [vmem:[%s3] sm:$0xf] %v160
    %165 = vst [vmem:[%s3 + $0x4] sm:$0xf] %v161
  $region21: #{resnet_feature_extractor.69} parent=0 // pred_fallthru
    _
  // Predicated region
  $region22: #{resnet_feature_extractor.69} parent=0 // pred_check
    _
  $region23: #{resnet_feature_extractor.69} parent=0 // pred_check_branch
    %167 = sbr.rel (0) target = $region25
  $region24: #{resnet_feature_extractor.69} parent=0 // pred_region
    _
  $region25: #{resnet_feature_extractor.69} parent=0 // pred_fallthru
    _
  // Predicated region
  $region26: #{resnet_feature_extractor.69} parent=0 // pred_check
    _
  $region27: #{resnet_feature_extractor.69} parent=0 // pred_check_branch
    %169 = sbr.rel (0) target = $region29
  $region28: #{resnet_feature_extractor.69} parent=0 // pred_region
    _
  $region29: #{resnet_feature_extractor.69} parent=0 // pred_fallthru
    _

</llo_original>
